<compile_context>
chip_gen: v7x
topology: tpu7x:2x2x1
jax: 0.10.0
libtpu: 0.0.40
codegen_flags: <defaults>
</compile_context>

<pallas_src>
import functools

import jax
import jax.numpy as jnp
import numpy as np
from jax import lax
from jax.experimental import pallas as pl
from jax.experimental.pallas import tpu as pltpu

EPS = 1e-5
_VMEM_BUDGET = 24 * 1024 * 1024   # per-call working-set target (double-buffered)
_VMEM_LIMIT = 40 * 1024 * 1024    # explicit scoped-VMEM limit (fits v7x's 64 MiB)
_MAX_TILE_ROWS = 1024


def _round_up(x, m):
    return ((x + m - 1) // m) * m


def _pick_tile_rows(rows, row_bytes, budget, cap=_MAX_TILE_ROWS):
    """Largest multiple-of-8 row tile whose buffers fit `budget` bytes."""
    t = budget // max(int(row_bytes), 1)
    t = max(8, min(int(t), cap))
    t = (t // 8) * 8
    return rows if rows <= t else t


# --------------------------- Pallas kernels ---------------------------------
def _matmul_kernel(x_ref, w_ref, o_ref):
    # (tm, K) bf16 @ (K, Nc) bf16 -> f32 on the MXU, stored as bf16 (halves
    # the writeback of the 16x tap-expanded `cols` tensor).  Weight block is
    # resident across the whole M grid (index_map returns (0, 0)).
    o_ref[...] = jnp.dot(x_ref[...], w_ref[...],
                         preferred_element_type=jnp.float32).astype(o_ref.dtype)


def _colstats_kernel(y_ref, sum_ref, sq_ref, *, rows_total, mask_rows):
    # Fused BN statistics: per-column sum and sum-of-squares accumulated in
    # f32 across the row grid (axis 1, "arbitrary").  Axis 0 splits columns
    # ("parallel") so v7x's two TensorCores share the reduction.
    i = pl.program_id(1)

    @pl.when(i == 0)
    def _():
        sum_ref[...] = jnp.zeros_like(sum_ref)
        sq_ref[...] = jnp.zeros_like(sq_ref)

    y = y_ref[...].astype(jnp.float32)
    if mask_rows:  # only emitted when rows_total % tile != 0
        tr = y_ref.shape[0]
        row = lax.broadcasted_iota(jnp.int32, y.shape, 0) + i * tr
        y = jnp.where(row < rows_total, y, 0.0)
    sum_ref[...] += jnp.sum(y, axis=0, keepdims=True)
    sq_ref[...] += jnp.sum(y * y, axis=0, keepdims=True)


def _affine_act_kernel(y_ref, scale_ref, shift_ref, o_ref, *, act):
    # Fused per-channel affine (BN normalize) + activation; scale/shift blocks
    # are VMEM-resident across the row grid.  bf16 reads, f32 math.
    y = y_ref[...].astype(jnp.float32) * scale_ref[...] + shift_ref[...]
    y = jnp.maximum(y, 0.0) if act == "relu" else jnp.tanh(y)
    o_ref[...] = y.astype(o_ref.dtype)


# --------------------------- pallas_call wrappers ----------------------------
def _tiled_matmul(x_bf16, w_bf16):
    M, K = x_bf16.shape
    _, Nc = w_bf16.shape
    weight_bytes = 2 * (K * Nc * 2)             # resident bf16 weight (x2 buffers)
    row_bytes = 2 * (K * 2) + 2 * (Nc * 2)      # double-buffered bf16 in + out row
    budget = max(_VMEM_BUDGET - weight_bytes, 2 * 1024 * 1024)
    tm = _pick_tile_rows(M, row_bytes, budget)
    return pl.pallas_call(
        _matmul_kernel,
        out_shape=jax.ShapeDtypeStruct((M, Nc), jnp.bfloat16),
        grid=(pl.cdiv(M, tm),),
        in_specs=[pl.BlockSpec((tm, K), lambda i: (i, 0)),
                  pl.BlockSpec((K, Nc), lambda i: (0, 0))],    # weight resident
        out_specs=pl.BlockSpec((tm, Nc), lambda i: (i, 0)),
        compiler_params=pltpu.CompilerParams(
            dimension_semantics=("parallel",),
            vmem_limit_bytes=_VMEM_LIMIT),
    )(x_bf16, w_bf16)


def _column_stats(y2):
    """One pass over y2 (bf16) -> per-column (sum, sum of squares) in f32."""
    R, C = y2.shape
    row_bytes = 2 * (C * 2)                      # double-buffered bf16 input row
    tr = _pick_tile_rows(R, row_bytes, _VMEM_BUDGET)
    ncb = 2 if C % 256 == 0 else 1               # lane split for v7x's 2 cores
    cb = C // ncb
    mask_rows = (R % tr) != 0
    kernel = functools.partial(_colstats_kernel, rows_total=R,
                               mask_rows=mask_rows)
    return pl.pallas_call(
        kernel,
        out_shape=(jax.ShapeDtypeStruct((1, C), jnp.float32),
                   jax.ShapeDtypeStruct((1, C), jnp.float32)),
        grid=(ncb, pl.cdiv(R, tr)),
        in_specs=[pl.BlockSpec((tr, cb), lambda j, i: (i, j))],
        out_specs=[pl.BlockSpec((1, cb), lambda j, i: (0, j)),   # accumulators
                   pl.BlockSpec((1, cb), lambda j, i: (0, j))],
        compiler_params=pltpu.CompilerParams(
            dimension_semantics=("parallel", "arbitrary"),
            vmem_limit_bytes=_VMEM_LIMIT),
    )(y2)


def _affine_act(y2, scale_cols, shift_cols, *, act, out_dtype):
    R, C = y2.shape
    out_bytes = jnp.dtype(out_dtype).itemsize
    row_bytes = 2 * (C * 2) + 2 * (C * out_bytes)
    tr = _pick_tile_rows(R, row_bytes, _VMEM_BUDGET)
    return pl.pallas_call(
        functools.partial(_affine_act_kernel, act=act),
        out_shape=jax.ShapeDtypeStruct((R, C), out_dtype),
        grid=(pl.cdiv(R, tr),),
        in_specs=[pl.BlockSpec((tr, C), lambda i: (i, 0)),
                  pl.BlockSpec((1, C), lambda i: (0, 0)),
                  pl.BlockSpec((1, C), lambda i: (0, 0))],
        out_specs=pl.BlockSpec((tr, C), lambda i: (i, 0)),
        compiler_params=pltpu.CompilerParams(
            dimension_semantics=("parallel",),
            vmem_limit_bytes=_VMEM_LIMIT),
    )(y2, scale_cols, shift_cols)


# --------------------------- glue (plain JAX) --------------------------------
def _col2im_stride2_pad1(cols6):
    """col2im for k=4, stride=2, pad=1 via parity planes (no scatter-add).

    Output pixel (2a+dr, 2b+dc) receives taps with 2*ih + kh = 2a+dr+1 and
    2*iw + kw = 2b+dc+1, i.e. exactly 2x2 = 4 shifted tap slabs per parity
    plane.  Taps are read in bf16, accumulated in f32, stored in bf16.
    """
    N, H, W, k, _, C = cols6.shape
    assert k == 4

    def tap(kh, kw, dh, dw):
        t = cols6[:, :, :, kh, kw, :].astype(jnp.float32)
        # out[a, b] = t[a - dh, b - dw], zero outside.
        t = jnp.pad(t, ((0, 0),
                        (max(dh, 0), max(-dh, 0)),
                        (max(dw, 0), max(-dw, 0)),
                        (0, 0)))
        return t[:, max(-dh, 0):max(-dh, 0) + H,
                 max(-dw, 0):max(-dw, 0) + W, :]

    # (tap index, shift) pairs feeding even / odd output rows; same for cols.
    h_taps = (((1, 0), (3, 1)),      # output row 2a   : kh=1@a, kh=3@a-1
              ((0, -1), (2, 0)))     # output row 2a+1 : kh=0@a+1, kh=2@a
    w_taps = (((1, 0), (3, 1)),
              ((0, -1), (2, 0)))

    planes = []
    for dr in (0, 1):
        row_planes = []
        for dc in (0, 1):
            acc = None
            for kh, dh in h_taps[dr]:
                for kw, dw in w_taps[dc]:
                    t = tap(kh, kw, dh, dw)
                    acc = t if acc is None else acc + t
            row_planes.append(acc)
        planes.append(jnp.stack(row_planes, axis=3))       # (N, H, W, 2, C)
    out = jnp.stack(planes, axis=2)                        # (N, H, 2, W, 2, C)
    return out.reshape(N, 2 * H, 2 * W, C).astype(jnp.bfloat16)


def conv_transpose_bn_act(x_nhwc, w_pt, gamma, beta, *, stride, padding, act,
                          out_dtype):
    """ConvTranspose2d(bias=False) [+ BatchNorm2d (train stats)] + activation."""
    N, H, W, ci = x_nhwc.shape
    _, co, k, _ = w_pt.shape
    co_p = _round_up(co, 16)                   # Nc = k*k*co_p multiple of 256
    ci_p = _round_up(ci, 128 if (H == 1 and W == 1) else 16)

    # Weight -> (Cin_p, k*k*co_p) with column order (kh, kw, c); bf16 for MXU.
    w_pad = jnp.pad(w_pt, ((0, ci_p - ci), (0, co_p - co), (0, 0), (0, 0)))
    w_mat = w_pad.transpose(0, 2, 3, 1).reshape(ci_p, k * k * co_p)
    w_mat = w_mat.astype(jnp.bfloat16)

    x_mat = x_nhwc.reshape(N * H * W, ci)
    if ci_p != ci:
        x_mat = jnp.pad(x_mat, ((0, 0), (0, ci_p - ci)))
    x_mat = x_mat.astype(jnp.bfloat16)

    cols = _tiled_matmul(x_mat, w_mat)                      # (M, k*k*co_p) bf16
    cols6 = cols.reshape(N, H, W, k, k, co_p)

    if stride == 1 and padding == 0 and H == 1 and W == 1:
        y = cols6.reshape(N, k, k, co_p)                    # pure reshape
    else:
        y = _col2im_stride2_pad1(cols6)                     # (N, 2H, 2W, co_p)
    Ho, Wo = y.shape[1], y.shape[2]

    if gamma is not None and co_p != co:
        y = y[..., :co]                                     # exact channels for BN
    cw = co if gamma is not None else co_p                  # keep pad thru tanh
    y2 = y.reshape(N * Ho, Wo * cw)                         # bf16, lane-dense

    if gamma is not None:
        count = float(N * Ho * Wo)
        csum, csq = _column_stats(y2)                       # (1, Wo*co) f32 each
        mean = csum.reshape(Wo, co).sum(axis=0) / count
        ex2 = csq.reshape(Wo, co).sum(axis=0) / count
        var = jnp.maximum(ex2 - mean * mean, 0.0)           # biased, train-mode BN
        scale = gamma * lax.rsqrt(var + EPS)
        shift = beta - mean * scale
    else:
        scale = jnp.ones((cw,), jnp.float32)
        shift = jnp.zeros((cw,), jnp.float32)

    scale_cols = jnp.tile(scale, Wo).reshape(1, Wo * cw)
    shift_cols = jnp.tile(shift, Wo).reshape(1, Wo * cw)
    out2 = _affine_act(y2, scale_cols, shift_cols, act=act, out_dtype=out_dtype)
    out = out2.reshape(N, Ho, Wo, cw)
    return out if cw == co else out[..., :co]


# --------------------------- NetG -------------------------------------------
_STRIDES = (1, 2, 2, 2, 2)
_PADS = (0, 1, 1, 1, 1)


def init_netg_params(key, nz, ngf, nc):
    chans = [(nz, ngf * 8), (ngf * 8, ngf * 4), (ngf * 4, ngf * 2),
             (ngf * 2, ngf), (ngf, nc)]
    params = []
    for i, (ci, co) in enumerate(chans):
        key, kw, kg = jax.random.split(key, 3)
        w = 0.02 * jax.random.normal(kw, (ci, co, 4, 4), jnp.float32)  # DCGAN init
        if i < 4:
            gamma = 1.0 + 0.02 * jax.random.normal(kg, (co,), jnp.float32)
            beta = jnp.zeros((co,), jnp.float32)
        else:
            gamma = beta = None
        params.append((w, gamma, beta))
    return params


@jax.jit
def netg_forward(x_nchw, params):
    # TODO(synk): ngpu / nn.parallel.data_parallel branch is execution-placement
    # only and has no numerical effect; single-device path implemented.
    h = jnp.transpose(x_nchw, (0, 2, 3, 1))          # NCHW -> NHWC
    n_layers = len(params)
    for i, (w, g, b) in enumerate(params):
        last = (i == n_layers - 1)
        h = conv_transpose_bn_act(
            h, w, g, b, stride=_STRIDES[i], padding=_PADS[i],
            act="tanh" if last else "relu",
            out_dtype=jnp.float32 if last else jnp.bfloat16)
    return jnp.transpose(h, (0, 3, 1, 2))            # NHWC -> NCHW


# --------------------------- reference (matches bf16 MXU inputs) -------------
def netg_forward_ref(x_nchw, params):
    h = x_nchw
    for i, (w, g, b) in enumerate(params):
        pad = 4 - 1 - _PADS[i]
        w_conv = jnp.flip(w, axis=(2, 3)).transpose(1, 0, 2, 3)  # (Cout,Cin,kH,kW)
        h = lax.conv_general_dilated(
            h.astype(jnp.bfloat16), w_conv.astype(jnp.bfloat16),
            window_strides=(1, 1),
            padding=[(pad, pad), (pad, pad)],
            lhs_dilation=(_STRIDES[i], _STRIDES[i]),
            dimension_numbers=("NCHW", "OIHW", "NCHW"),
            preferred_element_type=jnp.float32)
        if g is not None:
            mu = h.mean(axis=(0, 2, 3), keepdims=True)
            var = jnp.square(h - mu).mean(axis=(0, 2, 3), keepdims=True)
            h = (h - mu) * lax.rsqrt(var + EPS) * g.reshape(1, -1, 1, 1) \
                + b.reshape(1, -1, 1, 1)
            h = jnp.maximum(h, 0.0)
        else:
            h = jnp.tanh(h)
    return h


# --------------------------- main --------------------------------------------
if __name__ == "__main__":
    nz, ngf, nc, batch = 16, 8, 3, 2
    key = jax.random.PRNGKey(0)
    kx, kp = jax.random.split(key)
    x = jax.random.normal(kx, (batch, nz, 1, 1), jnp.float32)
    params = init_netg_params(kp, nz, ngf, nc)

    out = jax.block_until_ready(netg_forward(x, params))
    assert out.shape == (batch, nc, 64, 64), out.shape

    ref = jax.block_until_ready(netg_forward_ref(x, params))
    np.testing.assert_allclose(np.asarray(out), np.asarray(ref),
                               rtol=1e-2, atol=1e-2)
    print("KERNEL_OK")
</pallas_src>

<mosaic_0001>
module attributes {stable_mosaic.version = 11 : i64} {
  func.func @_matmul_kernel(%arg0: i32, %arg1: memref<2x128xbf16, #tpu.memory_space<vmem>>, %arg2: memref<128x1024xbf16, #tpu.memory_space<vmem>>, %arg3: memref<2x1024xbf16, #tpu.memory_space<vmem>>) attributes {dimension_semantics = [#tpu.dimension_semantics<parallel>], iteration_bounds = array<i64: 1>, scalar_prefetch = 0 : i64, scratch_operands = 0 : i64, tpu.core_type = #tpu.core_type<tc>, window_params = [{transform_indices = @transform_0, window_bounds = array<i64: 2, 128>}, {pipeline_mode = #tpu.pipeline_mode<synchronous>, transform_indices = @transform_1, window_bounds = array<i64: 128, 1024>}, {transform_indices = @transform_2, window_bounds = array<i64: 2, 1024>}]} {
    %c0 = arith.constant 0 : index
    %c0_0 = arith.constant 0 : index
    %0 = vector.load %arg1[%c0, %c0_0] : memref<2x128xbf16, #tpu.memory_space<vmem>>, vector<2x128xbf16>
    %c0_1 = arith.constant 0 : index
    %c0_2 = arith.constant 0 : index
    %1 = vector.load %arg2[%c0_1, %c0_2] : memref<128x1024xbf16, #tpu.memory_space<vmem>>, vector<128x1024xbf16>
    %cst = arith.constant dense<0.000000e+00> : vector<2x1024xf32>
    %2 = tpu.matmul %0, %1, %cst {dimension_numbers = #tpu.dot_dimension_numbers<[1], [0], [0], [1], [0, 0, 1, 1], [], []>} : vector<2x128xbf16>, vector<128x1024xbf16>, vector<2x1024xf32> -> vector<2x1024xf32>
    %3 = arith.truncf %2 : vector<2x1024xf32> to vector<2x1024xbf16>
    %c0_3 = arith.constant 0 : index
    %c0_4 = arith.constant 0 : index
    %4 = vector.load %arg3[%c0_3, %c0_4] : memref<2x1024xbf16, #tpu.memory_space<vmem>>, vector<2x1024xbf16>
    tpu.vector_store %arg3[%c0_3, %c0_4], %3 {strides = array<i32>} : memref<2x1024xbf16, #tpu.memory_space<vmem>>, vector<2x1024xbf16>,
    return
  }
  func.func @transform_0(%arg0: i32) -> (i32, i32) {
    %c0_i32 = arith.constant 0 : i32
    %c0_i32_0 = arith.constant 0 : i32
    return %arg0, %c0_i32 : i32, i32
  }
  func.func @transform_1(%arg0: i32) -> (i32, i32) {
    %c0_i32 = arith.constant 0 : i32
    %c0_i32_0 = arith.constant 0 : i32
    %c0_i32_1 = arith.constant 0 : i32
    return %c0_i32, %c0_i32_0 : i32, i32
  }
  func.func @transform_2(%arg0: i32) -> (i32, i32) {
    %c0_i32 = arith.constant 0 : i32
    %c0_i32_0 = arith.constant 0 : i32
    return %arg0, %c0_i32 : i32, i32
  }
}

module attributes {stable_mosaic.version = 11 : i64} {
  func.func @_colstats_kernel(%arg0: i32, %arg1: i32, %arg2: memref<8x128xbf16, #tpu.memory_space<vmem>>, %arg3: memref<1x128xf32, #tpu.memory_space<vmem>>, %arg4: memref<1x128xf32, #tpu.memory_space<vmem>>) attributes {dimension_semantics = [#tpu.dimension_semantics<parallel>, #tpu.dimension_semantics<arbitrary>], iteration_bounds = array<i64: 2, 1>, scalar_prefetch = 0 : i64, scratch_operands = 0 : i64, tpu.core_type = #tpu.core_type<tc>, window_params = [{transform_indices = @transform_0, window_bounds = array<i64: 8, 128>}, {transform_indices = @transform_1, window_bounds = array<i64: 1, 128>}, {transform_indices = @transform_2, window_bounds = array<i64: 1, 128>}]} {
    %c0_i32 = arith.constant 0 : i32
    %0 = arith.cmpi eq, %arg1, %c0_i32 : i32
    %1 = arith.extui %0 : i1 to i32
    %c0_i32_0 = arith.constant 0 : i32
    %2 = arith.cmpi ne, %1, %c0_i32_0 : i32
    scf.if %2 {
      %cst_11 = arith.constant 0.000000e+00 : f32
      %16 = vector.broadcast %cst_11 : f32 to vector<1x128xf32>
      %c0_12 = arith.constant 0 : index
      %c0_13 = arith.constant 0 : index
      %17 = vector.load %arg3[%c0_12, %c0_13] : memref<1x128xf32, #tpu.memory_space<vmem>>, vector<1x128xf32>
      tpu.vector_store %arg3[%c0_12, %c0_13], %16 {strides = array<i32>} : memref<1x128xf32, #tpu.memory_space<vmem>>, vector<1x128xf32>,
      %cst_14 = arith.constant 0.000000e+00 : f32
      %18 = vector.broadcast %cst_14 : f32 to vector<1x128xf32>
      %c0_15 = arith.constant 0 : index
      %c0_16 = arith.constant 0 : index
      %19 = vector.load %arg4[%c0_15, %c0_16] : memref<1x128xf32, #tpu.memory_space<vmem>>, vector<1x128xf32>
      tpu.vector_store %arg4[%c0_15, %c0_16], %18 {strides = array<i32>} : memref<1x128xf32, #tpu.memory_space<vmem>>, vector<1x128xf32>,
    } else {
    }
    %c0 = arith.constant 0 : index
    %c0_1 = arith.constant 0 : index
    %3 = vector.load %arg2[%c0, %c0_1] : memref<8x128xbf16, #tpu.memory_space<vmem>>, vector<8x128xbf16>
    %4 = arith.extf %3 : vector<8x128xbf16> to vector<8x128xf32>
    %c0_2 = arith.constant 0 : index
    %c0_3 = arith.constant 0 : index
    %5 = vector.load %arg3[%c0_2, %c0_3] : memref<1x128xf32, #tpu.memory_space<vmem>>, vector<1x128xf32>
    %cst = arith.constant dense<0.000000e+00> : vector<128xf32>
    %6 = vector.multi_reduction <add>, %4, %cst [0] : vector<8x128xf32> to vector<128xf32>
    %7 = vector.shape_cast %6 : vector<128xf32> to vector<1x128xf32>
    %8 = arith.addf %5, %7 : vector<1x128xf32>
    %c0_4 = arith.constant 0 : index
    %c0_5 = arith.constant 0 : index
    %9 = vector.load %arg3[%c0_4, %c0_5] : memref<1x128xf32, #tpu.memory_space<vmem>>, vector<1x128xf32>
    tpu.vector_store %arg3[%c0_4, %c0_5], %8 {strides = array<i32>} : memref<1x128xf32, #tpu.memory_space<vmem>>, vector<1x128xf32>,
    %c0_6 = arith.constant 0 : index
    %c0_7 = arith.constant 0 : index
    %10 = vector.load %arg4[%c0_6, %c0_7] : memref<1x128xf32, #tpu.memory_space<vmem>>, vector<1x128xf32>
    %11 = arith.mulf %4, %4 : vector<8x128xf32>
    %cst_8 = arith.constant dense<0.000000e+00> : vector<128xf32>
    %12 = vector.multi_reduction <add>, %11, %cst_8 [0] : vector<8x128xf32> to vector<128xf32>
    %13 = vector.shape_cast %12 : vector<128xf32> to vector<1x128xf32>
    %14 = arith.addf %10, %13 : vector<1x128xf32>
    %c0_9 = arith.constant 0 : index
    %c0_10 = arith.constant 0 : index
    %15 = vector.load %arg4[%c0_9, %c0_10] : memref<1x128xf32, #tpu.memory_space<vmem>>, vector<1x128xf32>
    tpu.vector_store %arg4[%c0_9, %c0_10], %14 {strides = array<i32>} : memref<1x128xf32, #tpu.memory_space<vmem>>, vector<1x128xf32>,
    return
  }
  func.func @transform_0(%arg0: i32, %arg1: i32) -> (i32, i32) {
    %c0_i32 = arith.constant 0 : i32
    return %arg1, %arg0 : i32, i32
  }
  func.func @transform_1(%arg0: i32, %arg1: i32) -> (i32, i32) {
    %c0_i32 = arith.constant 0 : i32
    %c0_i32_0 = arith.constant 0 : i32
    return %c0_i32, %arg0 : i32, i32
  }
  func.func @transform_2(%arg0: i32, %arg1: i32) -> (i32, i32) {
    %c0_i32 = arith.constant 0 : i32
    %c0_i32_0 = arith.constant 0 : i32
    return %c0_i32, %arg0 : i32, i32
  }
}

module attributes {stable_mosaic.version = 11 : i64} {
  func.func @_affine_act_kernel(%arg0: i32, %arg1: memref<8x256xbf16, #tpu.memory_space<vmem>>, %arg2: memref<1x256xf32, #tpu.memory_space<vmem>>, %arg3: memref<1x256xf32, #tpu.memory_space<vmem>>, %arg4: memref<8x256xbf16, #tpu.memory_space<vmem>>) attributes {dimension_semantics = [#tpu.dimension_semantics<parallel>], iteration_bounds = array<i64: 1>, scalar_prefetch = 0 : i64, scratch_operands = 0 : i64, tpu.core_type = #tpu.core_type<tc>, window_params = [{transform_indices = @transform_0, window_bounds = array<i64: 8, 256>}, {pipeline_mode = #tpu.pipeline_mode<synchronous>, transform_indices = @transform_1, window_bounds = array<i64: 1, 256>}, {pipeline_mode = #tpu.pipeline_mode<synchronous>, transform_indices = @transform_2, window_bounds = array<i64: 1, 256>}, {transform_indices = @transform_3, window_bounds = array<i64: 8, 256>}]} {
    %c0 = arith.constant 0 : index
    %c0_0 = arith.constant 0 : index
    %0 = vector.load %arg1[%c0, %c0_0] : memref<8x256xbf16, #tpu.memory_space<vmem>>, vector<8x256xbf16>
    %1 = arith.extf %0 : vector<8x256xbf16> to vector<8x256xf32>
    %c0_1 = arith.constant 0 : index
    %c0_2 = arith.constant 0 : index
    %2 = vector.load %arg2[%c0_1, %c0_2] : memref<1x256xf32, #tpu.memory_space<vmem>>, vector<1x256xf32>
    %3 = vector.broadcast %2 : vector<1x256xf32> to vector<8x256xf32>
    %4 = arith.mulf %1, %3 : vector<8x256xf32>
    %c0_3 = arith.constant 0 : index
    %c0_4 = arith.constant 0 : index
    %5 = vector.load %arg3[%c0_3, %c0_4] : memref<1x256xf32, #tpu.memory_space<vmem>>, vector<1x256xf32>
    %6 = vector.broadcast %5 : vector<1x256xf32> to vector<8x256xf32>
    %7 = arith.addf %4, %6 : vector<8x256xf32>
    %cst = arith.constant 0.000000e+00 : f32
    %8 = vector.broadcast %cst : f32 to vector<8x256xf32>
    %9 = arith.maximumf %7, %8 : vector<8x256xf32>
    %10 = arith.truncf %9 : vector<8x256xf32> to vector<8x256xbf16>
    %c0_5 = arith.constant 0 : index
    %c0_6 = arith.constant 0 : index
    %11 = vector.load %arg4[%c0_5, %c0_6] : memref<8x256xbf16, #tpu.memory_space<vmem>>, vector<8x256xbf16>
    tpu.vector_store %arg4[%c0_5, %c0_6], %10 {strides = array<i32>} : memref<8x256xbf16, #tpu.memory_space<vmem>>, vector<8x256xbf16>,
    return
  }
  func.func @transform_0(%arg0: i32) -> (i32, i32) {
    %c0_i32 = arith.constant 0 : i32
    %c0_i32_0 = arith.constant 0 : i32
    return %arg0, %c0_i32 : i32, i32
  }
  func.func @transform_1(%arg0: i32) -> (i32, i32) {
    %c0_i32 = arith.constant 0 : i32
    %c0_i32_0 = arith.constant 0 : i32
    %c0_i32_1 = arith.constant 0 : i32
    return %c0_i32, %c0_i32_0 : i32, i32
  }
  func.func @transform_2(%arg0: i32) -> (i32, i32) {
    %c0_i32 = arith.constant 0 : i32
    %c0_i32_0 = arith.constant 0 : i32
    %c0_i32_1 = arith.constant 0 : i32
    return %c0_i32, %c0_i32_0 : i32, i32
  }
  func.func @transform_3(%arg0: i32) -> (i32, i32) {
    %c0_i32 = arith.constant 0 : i32
    %c0_i32_0 = arith.constant 0 : i32
    return %arg0, %c0_i32 : i32, i32
  }
}

module attributes {stable_mosaic.version = 11 : i64} {
  func.func @_matmul_kernel(%arg0: i32, %arg1: memref<32x64xbf16, #tpu.memory_space<vmem>>, %arg2: memref<64x512xbf16, #tpu.memory_space<vmem>>, %arg3: memref<32x512xbf16, #tpu.memory_space<vmem>>) attributes {dimension_semantics = [#tpu.dimension_semantics<parallel>], iteration_bounds = array<i64: 1>, scalar_prefetch = 0 : i64, scratch_operands = 0 : i64, tpu.core_type = #tpu.core_type<tc>, window_params = [{transform_indices = @transform_0, window_bounds = array<i64: 32, 64>}, {pipeline_mode = #tpu.pipeline_mode<synchronous>, transform_indices = @transform_1, window_bounds = array<i64: 64, 512>}, {transform_indices = @transform_2, window_bounds = array<i64: 32, 512>}]} {
    %c0 = arith.constant 0 : index
    %c0_0 = arith.constant 0 : index
    %0 = vector.load %arg1[%c0, %c0_0] : memref<32x64xbf16, #tpu.memory_space<vmem>>, vector<32x64xbf16>
    %c0_1 = arith.constant 0 : index
    %c0_2 = arith.constant 0 : index
    %1 = vector.load %arg2[%c0_1, %c0_2] : memref<64x512xbf16, #tpu.memory_space<vmem>>, vector<64x512xbf16>
    %cst = arith.constant dense<0.000000e+00> : vector<32x512xf32>
    %2 = tpu.matmul %0, %1, %cst {dimension_numbers = #tpu.dot_dimension_numbers<[1], [0], [0], [1], [0, 0, 1, 1], [], []>} : vector<32x64xbf16>, vector<64x512xbf16>, vector<32x512xf32> -> vector<32x512xf32>
    %3 = arith.truncf %2 : vector<32x512xf32> to vector<32x512xbf16>
    %c0_3 = arith.constant 0 : index
    %c0_4 = arith.constant 0 : index
    %4 = vector.load %arg3[%c0_3, %c0_4] : memref<32x512xbf16, #tpu.memory_space<vmem>>, vector<32x512xbf16>
    tpu.vector_store %arg3[%c0_3, %c0_4], %3 {strides = array<i32>} : memref<32x512xbf16, #tpu.memory_space<vmem>>, vector<32x512xbf16>,
    return
  }
  func.func @transform_0(%arg0: i32) -> (i32, i32) {
    %c0_i32 = arith.constant 0 : i32
    %c0_i32_0 = arith.constant 0 : i32
    return %arg0, %c0_i32 : i32, i32
  }
  func.func @transform_1(%arg0: i32) -> (i32, i32) {
    %c0_i32 = arith.constant 0 : i32
    %c0_i32_0 = arith.constant 0 : i32
    %c0_i32_1 = arith.constant 0 : i32
    return %c0_i32, %c0_i32_0 : i32, i32
  }
  func.func @transform_2(%arg0: i32) -> (i32, i32) {
    %c0_i32 = arith.constant 0 : i32
    %c0_i32_0 = arith.constant 0 : i32
    return %arg0, %c0_i32 : i32, i32
  }
}

module attributes {stable_mosaic.version = 11 : i64} {
  func.func @_colstats_kernel(%arg0: i32, %arg1: i32, %arg2: memref<16x128xbf16, #tpu.memory_space<vmem>>, %arg3: memref<1x128xf32, #tpu.memory_space<vmem>>, %arg4: memref<1x128xf32, #tpu.memory_space<vmem>>) attributes {dimension_semantics = [#tpu.dimension_semantics<parallel>, #tpu.dimension_semantics<arbitrary>], iteration_bounds = array<i64: 2, 1>, scalar_prefetch = 0 : i64, scratch_operands = 0 : i64, tpu.core_type = #tpu.core_type<tc>, window_params = [{transform_indices = @transform_0, window_bounds = array<i64: 16, 128>}, {transform_indices = @transform_1, window_bounds = array<i64: 1, 128>}, {transform_indices = @transform_2, window_bounds = array<i64: 1, 128>}]} {
    %c0_i32 = arith.constant 0 : i32
    %0 = arith.cmpi eq, %arg1, %c0_i32 : i32
    %1 = arith.extui %0 : i1 to i32
    %c0_i32_0 = arith.constant 0 : i32
    %2 = arith.cmpi ne, %1, %c0_i32_0 : i32
    scf.if %2 {
      %cst_11 = arith.constant 0.000000e+00 : f32
      %16 = vector.broadcast %cst_11 : f32 to vector<1x128xf32>
      %c0_12 = arith.constant 0 : index
      %c0_13 = arith.constant 0 : index
      %17 = vector.load %arg3[%c0_12, %c0_13] : memref<1x128xf32, #tpu.memory_space<vmem>>, vector<1x128xf32>
      tpu.vector_store %arg3[%c0_12, %c0_13], %16 {strides = array<i32>} : memref<1x128xf32, #tpu.memory_space<vmem>>, vector<1x128xf32>,
      %cst_14 = arith.constant 0.000000e+00 : f32
      %18 = vector.broadcast %cst_14 : f32 to vector<1x128xf32>
      %c0_15 = arith.constant 0 : index
      %c0_16 = arith.constant 0 : index
      %19 = vector.load %arg4[%c0_15, %c0_16] : memref<1x128xf32, #tpu.memory_space<vmem>>, vector<1x128xf32>
      tpu.vector_store %arg4[%c0_15, %c0_16], %18 {strides = array<i32>} : memref<1x128xf32, #tpu.memory_space<vmem>>, vector<1x128xf32>,
    } else {
    }
    %c0 = arith.constant 0 : index
    %c0_1 = arith.constant 0 : index
    %3 = vector.load %arg2[%c0, %c0_1] : memref<16x128xbf16, #tpu.memory_space<vmem>>, vector<16x128xbf16>
    %4 = arith.extf %3 : vector<16x128xbf16> to vector<16x128xf32>
    %c0_2 = arith.constant 0 : index
    %c0_3 = arith.constant 0 : index
    %5 = vector.load %arg3[%c0_2, %c0_3] : memref<1x128xf32, #tpu.memory_space<vmem>>, vector<1x128xf32>
    %cst = arith.constant dense<0.000000e+00> : vector<128xf32>
    %6 = vector.multi_reduction <add>, %4, %cst [0] : vector<16x128xf32> to vector<128xf32>
    %7 = vector.shape_cast %6 : vector<128xf32> to vector<1x128xf32>
    %8 = arith.addf %5, %7 : vector<1x128xf32>
    %c0_4 = arith.constant 0 : index
    %c0_5 = arith.constant 0 : index
    %9 = vector.load %arg3[%c0_4, %c0_5] : memref<1x128xf32, #tpu.memory_space<vmem>>, vector<1x128xf32>
    tpu.vector_store %arg3[%c0_4, %c0_5], %8 {strides = array<i32>} : memref<1x128xf32, #tpu.memory_space<vmem>>, vector<1x128xf32>,
    %c0_6 = arith.constant 0 : index
    %c0_7 = arith.constant 0 : index
    %10 = vector.load %arg4[%c0_6, %c0_7] : memref<1x128xf32, #tpu.memory_space<vmem>>, vector<1x128xf32>
    %11 = arith.mulf %4, %4 : vector<16x128xf32>
    %cst_8 = arith.constant dense<0.000000e+00> : vector<128xf32>
    %12 = vector.multi_reduction <add>, %11, %cst_8 [0] : vector<16x128xf32> to vector<128xf32>
    %13 = vector.shape_cast %12 : vector<128xf32> to vector<1x128xf32>
    %14 = arith.addf %10, %13 : vector<1x128xf32>
    %c0_9 = arith.constant 0 : index
    %c0_10 = arith.constant 0 : index
    %15 = vector.load %arg4[%c0_9, %c0_10] : memref<1x128xf32, #tpu.memory_space<vmem>>, vector<1x128xf32>
    tpu.vector_store %arg4[%c0_9, %c0_10], %14 {strides = array<i32>} : memref<1x128xf32, #tpu.memory_space<vmem>>, vector<1x128xf32>,
    return
  }
  func.func @transform_0(%arg0: i32, %arg1: i32) -> (i32, i32) {
    %c0_i32 = arith.constant 0 : i32
    return %arg1, %arg0 : i32, i32
  }
  func.func @transform_1(%arg0: i32, %arg1: i32) -> (i32, i32) {
    %c0_i32 = arith.constant 0 : i32
    %c0_i32_0 = arith.constant 0 : i32
    return %c0_i32, %arg0 : i32, i32
  }
  func.func @transform_2(%arg0: i32, %arg1: i32) -> (i32, i32) {
    %c0_i32 = arith.constant 0 : i32
    %c0_i32_0 = arith.constant 0 : i32
    return %c0_i32, %arg0 : i32, i32
  }
}

module attributes {stable_mosaic.version = 11 : i64} {
  func.func @_affine_act_kernel(%arg0: i32, %arg1: memref<16x256xbf16, #tpu.memory_space<vmem>>, %arg2: memref<1x256xf32, #tpu.memory_space<vmem>>, %arg3: memref<1x256xf32, #tpu.memory_space<vmem>>, %arg4: memref<16x256xbf16, #tpu.memory_space<vmem>>) attributes {dimension_semantics = [#tpu.dimension_semantics<parallel>], iteration_bounds = array<i64: 1>, scalar_prefetch = 0 : i64, scratch_operands = 0 : i64, tpu.core_type = #tpu.core_type<tc>, window_params = [{transform_indices = @transform_0, window_bounds = array<i64: 16, 256>}, {pipeline_mode = #tpu.pipeline_mode<synchronous>, transform_indices = @transform_1, window_bounds = array<i64: 1, 256>}, {pipeline_mode = #tpu.pipeline_mode<synchronous>, transform_indices = @transform_2, window_bounds = array<i64: 1, 256>}, {transform_indices = @transform_3, window_bounds = array<i64: 16, 256>}]} {
    %c0 = arith.constant 0 : index
    %c0_0 = arith.constant 0 : index
    %0 = vector.load %arg1[%c0, %c0_0] : memref<16x256xbf16, #tpu.memory_space<vmem>>, vector<16x256xbf16>
    %1 = arith.extf %0 : vector<16x256xbf16> to vector<16x256xf32>
    %c0_1 = arith.constant 0 : index
    %c0_2 = arith.constant 0 : index
    %2 = vector.load %arg2[%c0_1, %c0_2] : memref<1x256xf32, #tpu.memory_space<vmem>>, vector<1x256xf32>
    %3 = vector.broadcast %2 : vector<1x256xf32> to vector<16x256xf32>
    %4 = arith.mulf %1, %3 : vector<16x256xf32>
    %c0_3 = arith.constant 0 : index
    %c0_4 = arith.constant 0 : index
    %5 = vector.load %arg3[%c0_3, %c0_4] : memref<1x256xf32, #tpu.memory_space<vmem>>, vector<1x256xf32>
    %6 = vector.broadcast %5 : vector<1x256xf32> to vector<16x256xf32>
    %7 = arith.addf %4, %6 : vector<16x256xf32>
    %cst = arith.constant 0.000000e+00 : f32
    %8 = vector.broadcast %cst : f32 to vector<16x256xf32>
    %9 = arith.maximumf %7, %8 : vector<16x256xf32>
    %10 = arith.truncf %9 : vector<16x256xf32> to vector<16x256xbf16>
    %c0_5 = arith.constant 0 : index
    %c0_6 = arith.constant 0 : index
    %11 = vector.load %arg4[%c0_5, %c0_6] : memref<16x256xbf16, #tpu.memory_space<vmem>>, vector<16x256xbf16>
    tpu.vector_store %arg4[%c0_5, %c0_6], %10 {strides = array<i32>} : memref<16x256xbf16, #tpu.memory_space<vmem>>, vector<16x256xbf16>,
    return
  }
  func.func @transform_0(%arg0: i32) -> (i32, i32) {
    %c0_i32 = arith.constant 0 : i32
    %c0_i32_0 = arith.constant 0 : i32
    return %arg0, %c0_i32 : i32, i32
  }
  func.func @transform_1(%arg0: i32) -> (i32, i32) {
    %c0_i32 = arith.constant 0 : i32
    %c0_i32_0 = arith.constant 0 : i32
    %c0_i32_1 = arith.constant 0 : i32
    return %c0_i32, %c0_i32_0 : i32, i32
  }
  func.func @transform_2(%arg0: i32) -> (i32, i32) {
    %c0_i32 = arith.constant 0 : i32
    %c0_i32_0 = arith.constant 0 : i32
    %c0_i32_1 = arith.constant 0 : i32
    return %c0_i32, %c0_i32_0 : i32, i32
  }
  func.func @transform_3(%arg0: i32) -> (i32, i32) {
    %c0_i32 = arith.constant 0 : i32
    %c0_i32_0 = arith.constant 0 : i32
    return %arg0, %c0_i32 : i32, i32
  }
}

module attributes {stable_mosaic.version = 11 : i64} {
  func.func @_matmul_kernel(%arg0: i32, %arg1: memref<128x32xbf16, #tpu.memory_space<vmem>>, %arg2: memref<32x256xbf16, #tpu.memory_space<vmem>>, %arg3: memref<128x256xbf16, #tpu.memory_space<vmem>>) attributes {dimension_semantics = [#tpu.dimension_semantics<parallel>], iteration_bounds = array<i64: 1>, scalar_prefetch = 0 : i64, scratch_operands = 0 : i64, tpu.core_type = #tpu.core_type<tc>, window_params = [{transform_indices = @transform_0, window_bounds = array<i64: 128, 32>}, {pipeline_mode = #tpu.pipeline_mode<synchronous>, transform_indices = @transform_1, window_bounds = array<i64: 32, 256>}, {transform_indices = @transform_2, window_bounds = array<i64: 128, 256>}]} {
    %c0 = arith.constant 0 : index
    %c0_0 = arith.constant 0 : index
    %0 = vector.load %arg1[%c0, %c0_0] : memref<128x32xbf16, #tpu.memory_space<vmem>>, vector<128x32xbf16>
    %c0_1 = arith.constant 0 : index
    %c0_2 = arith.constant 0 : index
    %1 = vector.load %arg2[%c0_1, %c0_2] : memref<32x256xbf16, #tpu.memory_space<vmem>>, vector<32x256xbf16>
    %cst = arith.constant dense<0.000000e+00> : vector<128x256xf32>
    %2 = tpu.matmul %0, %1, %cst {dimension_numbers = #tpu.dot_dimension_numbers<[1], [0], [0], [1], [0, 0, 1, 1], [], []>} : vector<128x32xbf16>, vector<32x256xbf16>, vector<128x256xf32> -> vector<128x256xf32>
    %3 = arith.truncf %2 : vector<128x256xf32> to vector<128x256xbf16>
    %c0_3 = arith.constant 0 : index
    %c0_4 = arith.constant 0 : index
    %4 = vector.load %arg3[%c0_3, %c0_4] : memref<128x256xbf16, #tpu.memory_space<vmem>>, vector<128x256xbf16>
    tpu.vector_store %arg3[%c0_3, %c0_4], %3 {strides = array<i32>} : memref<128x256xbf16, #tpu.memory_space<vmem>>, vector<128x256xbf16>,
    return
  }
  func.func @transform_0(%arg0: i32) -> (i32, i32) {
    %c0_i32 = arith.constant 0 : i32
    %c0_i32_0 = arith.constant 0 : i32
    return %arg0, %c0_i32 : i32, i32
  }
  func.func @transform_1(%arg0: i32) -> (i32, i32) {
    %c0_i32 = arith.constant 0 : i32
    %c0_i32_0 = arith.constant 0 : i32
    %c0_i32_1 = arith.constant 0 : i32
    return %c0_i32, %c0_i32_0 : i32, i32
  }
  func.func @transform_2(%arg0: i32) -> (i32, i32) {
    %c0_i32 = arith.constant 0 : i32
    %c0_i32_0 = arith.constant 0 : i32
    return %arg0, %c0_i32 : i32, i32
  }
}

module attributes {stable_mosaic.version = 11 : i64} {
  func.func @_colstats_kernel(%arg0: i32, %arg1: i32, %arg2: memref<32x128xbf16, #tpu.memory_space<vmem>>, %arg3: memref<1x128xf32, #tpu.memory_space<vmem>>, %arg4: memref<1x128xf32, #tpu.memory_space<vmem>>) attributes {dimension_semantics = [#tpu.dimension_semantics<parallel>, #tpu.dimension_semantics<arbitrary>], iteration_bounds = array<i64: 2, 1>, scalar_prefetch = 0 : i64, scratch_operands = 0 : i64, tpu.core_type = #tpu.core_type<tc>, window_params = [{transform_indices = @transform_0, window_bounds = array<i64: 32, 128>}, {transform_indices = @transform_1, window_bounds = array<i64: 1, 128>}, {transform_indices = @transform_2, window_bounds = array<i64: 1, 128>}]} {
    %c0_i32 = arith.constant 0 : i32
    %0 = arith.cmpi eq, %arg1, %c0_i32 : i32
    %1 = arith.extui %0 : i1 to i32
    %c0_i32_0 = arith.constant 0 : i32
    %2 = arith.cmpi ne, %1, %c0_i32_0 : i32
    scf.if %2 {
      %cst_11 = arith.constant 0.000000e+00 : f32
      %16 = vector.broadcast %cst_11 : f32 to vector<1x128xf32>
      %c0_12 = arith.constant 0 : index
      %c0_13 = arith.constant 0 : index
      %17 = vector.load %arg3[%c0_12, %c0_13] : memref<1x128xf32, #tpu.memory_space<vmem>>, vector<1x128xf32>
      tpu.vector_store %arg3[%c0_12, %c0_13], %16 {strides = array<i32>} : memref<1x128xf32, #tpu.memory_space<vmem>>, vector<1x128xf32>,
      %cst_14 = arith.constant 0.000000e+00 : f32
      %18 = vector.broadcast %cst_14 : f32 to vector<1x128xf32>
      %c0_15 = arith.constant 0 : index
      %c0_16 = arith.constant 0 : index
      %19 = vector.load %arg4[%c0_15, %c0_16] : memref<1x128xf32, #tpu.memory_space<vmem>>, vector<1x128xf32>
      tpu.vector_store %arg4[%c0_15, %c0_16], %18 {strides = array<i32>} : memref<1x128xf32, #tpu.memory_space<vmem>>, vector<1x128xf32>,
    } else {
    }
    %c0 = arith.constant 0 : index
    %c0_1 = arith.constant 0 : index
    %3 = vector.load %arg2[%c0, %c0_1] : memref<32x128xbf16, #tpu.memory_space<vmem>>, vector<32x128xbf16>
    %4 = arith.extf %3 : vector<32x128xbf16> to vector<32x128xf32>
    %c0_2 = arith.constant 0 : index
    %c0_3 = arith.constant 0 : index
    %5 = vector.load %arg3[%c0_2, %c0_3] : memref<1x128xf32, #tpu.memory_space<vmem>>, vector<1x128xf32>
    %cst = arith.constant dense<0.000000e+00> : vector<128xf32>
    %6 = vector.multi_reduction <add>, %4, %cst [0] : vector<32x128xf32> to vector<128xf32>
    %7 = vector.shape_cast %6 : vector<128xf32> to vector<1x128xf32>
    %8 = arith.addf %5, %7 : vector<1x128xf32>
    %c0_4 = arith.constant 0 : index
    %c0_5 = arith.constant 0 : index
    %9 = vector.load %arg3[%c0_4, %c0_5] : memref<1x128xf32, #tpu.memory_space<vmem>>, vector<1x128xf32>
    tpu.vector_store %arg3[%c0_4, %c0_5], %8 {strides = array<i32>} : memref<1x128xf32, #tpu.memory_space<vmem>>, vector<1x128xf32>,
    %c0_6 = arith.constant 0 : index
    %c0_7 = arith.constant 0 : index
    %10 = vector.load %arg4[%c0_6, %c0_7] : memref<1x128xf32, #tpu.memory_space<vmem>>, vector<1x128xf32>
    %11 = arith.mulf %4, %4 : vector<32x128xf32>
    %cst_8 = arith.constant dense<0.000000e+00> : vector<128xf32>
    %12 = vector.multi_reduction <add>, %11, %cst_8 [0] : vector<32x128xf32> to vector<128xf32>
    %13 = vector.shape_cast %12 : vector<128xf32> to vector<1x128xf32>
    %14 = arith.addf %10, %13 : vector<1x128xf32>
    %c0_9 = arith.constant 0 : index
    %c0_10 = arith.constant 0 : index
    %15 = vector.load %arg4[%c0_9, %c0_10] : memref<1x128xf32, #tpu.memory_space<vmem>>, vector<1x128xf32>
    tpu.vector_store %arg4[%c0_9, %c0_10], %14 {strides = array<i32>} : memref<1x128xf32, #tpu.memory_space<vmem>>, vector<1x128xf32>,
    return
  }
  func.func @transform_0(%arg0: i32, %arg1: i32) -> (i32, i32) {
    %c0_i32 = arith.constant 0 : i32
    return %arg1, %arg0 : i32, i32
  }
  func.func @transform_1(%arg0: i32, %arg1: i32) -> (i32, i32) {
    %c0_i32 = arith.constant 0 : i32
    %c0_i32_0 = arith.constant 0 : i32
    return %c0_i32, %arg0 : i32, i32
  }
  func.func @transform_2(%arg0: i32, %arg1: i32) -> (i32, i32) {
    %c0_i32 = arith.constant 0 : i32
    %c0_i32_0 = arith.constant 0 : i32
    return %c0_i32, %arg0 : i32, i32
  }
}

module attributes {stable_mosaic.version = 11 : i64} {
  func.func @_affine_act_kernel(%arg0: i32, %arg1: memref<32x256xbf16, #tpu.memory_space<vmem>>, %arg2: memref<1x256xf32, #tpu.memory_space<vmem>>, %arg3: memref<1x256xf32, #tpu.memory_space<vmem>>, %arg4: memref<32x256xbf16, #tpu.memory_space<vmem>>) attributes {dimension_semantics = [#tpu.dimension_semantics<parallel>], iteration_bounds = array<i64: 1>, scalar_prefetch = 0 : i64, scratch_operands = 0 : i64, tpu.core_type = #tpu.core_type<tc>, window_params = [{transform_indices = @transform_0, window_bounds = array<i64: 32, 256>}, {pipeline_mode = #tpu.pipeline_mode<synchronous>, transform_indices = @transform_1, window_bounds = array<i64: 1, 256>}, {pipeline_mode = #tpu.pipeline_mode<synchronous>, transform_indices = @transform_2, window_bounds = array<i64: 1, 256>}, {transform_indices = @transform_3, window_bounds = array<i64: 32, 256>}]} {
    %c0 = arith.constant 0 : index
    %c0_0 = arith.constant 0 : index
    %0 = vector.load %arg1[%c0, %c0_0] : memref<32x256xbf16, #tpu.memory_space<vmem>>, vector<32x256xbf16>
    %1 = arith.extf %0 : vector<32x256xbf16> to vector<32x256xf32>
    %c0_1 = arith.constant 0 : index
    %c0_2 = arith.constant 0 : index
    %2 = vector.load %arg2[%c0_1, %c0_2] : memref<1x256xf32, #tpu.memory_space<vmem>>, vector<1x256xf32>
    %3 = vector.broadcast %2 : vector<1x256xf32> to vector<32x256xf32>
    %4 = arith.mulf %1, %3 : vector<32x256xf32>
    %c0_3 = arith.constant 0 : index
    %c0_4 = arith.constant 0 : index
    %5 = vector.load %arg3[%c0_3, %c0_4] : memref<1x256xf32, #tpu.memory_space<vmem>>, vector<1x256xf32>
    %6 = vector.broadcast %5 : vector<1x256xf32> to vector<32x256xf32>
    %7 = arith.addf %4, %6 : vector<32x256xf32>
    %cst = arith.constant 0.000000e+00 : f32
    %8 = vector.broadcast %cst : f32 to vector<32x256xf32>
    %9 = arith.maximumf %7, %8 : vector<32x256xf32>
    %10 = arith.truncf %9 : vector<32x256xf32> to vector<32x256xbf16>
    %c0_5 = arith.constant 0 : index
    %c0_6 = arith.constant 0 : index
    %11 = vector.load %arg4[%c0_5, %c0_6] : memref<32x256xbf16, #tpu.memory_space<vmem>>, vector<32x256xbf16>
    tpu.vector_store %arg4[%c0_5, %c0_6], %10 {strides = array<i32>} : memref<32x256xbf16, #tpu.memory_space<vmem>>, vector<32x256xbf16>,
    return
  }
  func.func @transform_0(%arg0: i32) -> (i32, i32) {
    %c0_i32 = arith.constant 0 : i32
    %c0_i32_0 = arith.constant 0 : i32
    return %arg0, %c0_i32 : i32, i32
  }
  func.func @transform_1(%arg0: i32) -> (i32, i32) {
    %c0_i32 = arith.constant 0 : i32
    %c0_i32_0 = arith.constant 0 : i32
    %c0_i32_1 = arith.constant 0 : i32
    return %c0_i32, %c0_i32_0 : i32, i32
  }
  func.func @transform_2(%arg0: i32) -> (i32, i32) {
    %c0_i32 = arith.constant 0 : i32
    %c0_i32_0 = arith.constant 0 : i32
    %c0_i32_1 = arith.constant 0 : i32
    return %c0_i32, %c0_i32_0 : i32, i32
  }
  func.func @transform_3(%arg0: i32) -> (i32, i32) {
    %c0_i32 = arith.constant 0 : i32
    %c0_i32_0 = arith.constant 0 : i32
    return %arg0, %c0_i32 : i32, i32
  }
}

module attributes {stable_mosaic.version = 11 : i64} {
  func.func @_matmul_kernel(%arg0: i32, %arg1: memref<512x16xbf16, #tpu.memory_space<vmem>>, %arg2: memref<16x256xbf16, #tpu.memory_space<vmem>>, %arg3: memref<512x256xbf16, #tpu.memory_space<vmem>>) attributes {dimension_semantics = [#tpu.dimension_semantics<parallel>], iteration_bounds = array<i64: 1>, scalar_prefetch = 0 : i64, scratch_operands = 0 : i64, tpu.core_type = #tpu.core_type<tc>, window_params = [{transform_indices = @transform_0, window_bounds = array<i64: 512, 16>}, {pipeline_mode = #tpu.pipeline_mode<synchronous>, transform_indices = @transform_1, window_bounds = array<i64: 16, 256>}, {transform_indices = @transform_2, window_bounds = array<i64: 512, 256>}]} {
    %c0 = arith.constant 0 : index
    %c0_0 = arith.constant 0 : index
    %0 = vector.load %arg1[%c0, %c0_0] : memref<512x16xbf16, #tpu.memory_space<vmem>>, vector<512x16xbf16>
    %c0_1 = arith.constant 0 : index
    %c0_2 = arith.constant 0 : index
    %1 = vector.load %arg2[%c0_1, %c0_2] : memref<16x256xbf16, #tpu.memory_space<vmem>>, vector<16x256xbf16>
    %cst = arith.constant dense<0.000000e+00> : vector<512x256xf32>
    %2 = tpu.matmul %0, %1, %cst {dimension_numbers = #tpu.dot_dimension_numbers<[1], [0], [0], [1], [0, 0, 1, 1], [], []>} : vector<512x16xbf16>, vector<16x256xbf16>, vector<512x256xf32> -> vector<512x256xf32>
    %3 = arith.truncf %2 : vector<512x256xf32> to vector<512x256xbf16>
    %c0_3 = arith.constant 0 : index
    %c0_4 = arith.constant 0 : index
    %4 = vector.load %arg3[%c0_3, %c0_4] : memref<512x256xbf16, #tpu.memory_space<vmem>>, vector<512x256xbf16>
    tpu.vector_store %arg3[%c0_3, %c0_4], %3 {strides = array<i32>} : memref<512x256xbf16, #tpu.memory_space<vmem>>, vector<512x256xbf16>,
    return
  }
  func.func @transform_0(%arg0: i32) -> (i32, i32) {
    %c0_i32 = arith.constant 0 : i32
    %c0_i32_0 = arith.constant 0 : i32
    return %arg0, %c0_i32 : i32, i32
  }
  func.func @transform_1(%arg0: i32) -> (i32, i32) {
    %c0_i32 = arith.constant 0 : i32
    %c0_i32_0 = arith.constant 0 : i32
    %c0_i32_1 = arith.constant 0 : i32
    return %c0_i32, %c0_i32_0 : i32, i32
  }
  func.func @transform_2(%arg0: i32) -> (i32, i32) {
    %c0_i32 = arith.constant 0 : i32
    %c0_i32_0 = arith.constant 0 : i32
    return %arg0, %c0_i32 : i32, i32
  }
}

module attributes {stable_mosaic.version = 11 : i64} {
  func.func @_colstats_kernel(%arg0: i32, %arg1: i32, %arg2: memref<64x128xbf16, #tpu.memory_space<vmem>>, %arg3: memref<1x128xf32, #tpu.memory_space<vmem>>, %arg4: memref<1x128xf32, #tpu.memory_space<vmem>>) attributes {dimension_semantics = [#tpu.dimension_semantics<parallel>, #tpu.dimension_semantics<arbitrary>], iteration_bounds = array<i64: 2, 1>, scalar_prefetch = 0 : i64, scratch_operands = 0 : i64, tpu.core_type = #tpu.core_type<tc>, window_params = [{transform_indices = @transform_0, window_bounds = array<i64: 64, 128>}, {transform_indices = @transform_1, window_bounds = array<i64: 1, 128>}, {transform_indices = @transform_2, window_bounds = array<i64: 1, 128>}]} {
    %c0_i32 = arith.constant 0 : i32
    %0 = arith.cmpi eq, %arg1, %c0_i32 : i32
    %1 = arith.extui %0 : i1 to i32
    %c0_i32_0 = arith.constant 0 : i32
    %2 = arith.cmpi ne, %1, %c0_i32_0 : i32
    scf.if %2 {
      %cst_11 = arith.constant 0.000000e+00 : f32
      %16 = vector.broadcast %cst_11 : f32 to vector<1x128xf32>
      %c0_12 = arith.constant 0 : index
      %c0_13 = arith.constant 0 : index
      %17 = vector.load %arg3[%c0_12, %c0_13] : memref<1x128xf32, #tpu.memory_space<vmem>>, vector<1x128xf32>
      tpu.vector_store %arg3[%c0_12, %c0_13], %16 {strides = array<i32>} : memref<1x128xf32, #tpu.memory_space<vmem>>, vector<1x128xf32>,
      %cst_14 = arith.constant 0.000000e+00 : f32
      %18 = vector.broadcast %cst_14 : f32 to vector<1x128xf32>
      %c0_15 = arith.constant 0 : index
      %c0_16 = arith.constant 0 : index
      %19 = vector.load %arg4[%c0_15, %c0_16] : memref<1x128xf32, #tpu.memory_space<vmem>>, vector<1x128xf32>
      tpu.vector_store %arg4[%c0_15, %c0_16], %18 {strides = array<i32>} : memref<1x128xf32, #tpu.memory_space<vmem>>, vector<1x128xf32>,
    } else {
    }
    %c0 = arith.constant 0 : index
    %c0_1 = arith.constant 0 : index
    %3 = vector.load %arg2[%c0, %c0_1] : memref<64x128xbf16, #tpu.memory_space<vmem>>, vector<64x128xbf16>
    %4 = arith.extf %3 : vector<64x128xbf16> to vector<64x128xf32>
    %c0_2 = arith.constant 0 : index
    %c0_3 = arith.constant 0 : index
    %5 = vector.load %arg3[%c0_2, %c0_3] : memref<1x128xf32, #tpu.memory_space<vmem>>, vector<1x128xf32>
    %cst = arith.constant dense<0.000000e+00> : vector<128xf32>
    %6 = vector.multi_reduction <add>, %4, %cst [0] : vector<64x128xf32> to vector<128xf32>
    %7 = vector.shape_cast %6 : vector<128xf32> to vector<1x128xf32>
    %8 = arith.addf %5, %7 : vector<1x128xf32>
    %c0_4 = arith.constant 0 : index
    %c0_5 = arith.constant 0 : index
    %9 = vector.load %arg3[%c0_4, %c0_5] : memref<1x128xf32, #tpu.memory_space<vmem>>, vector<1x128xf32>
    tpu.vector_store %arg3[%c0_4, %c0_5], %8 {strides = array<i32>} : memref<1x128xf32, #tpu.memory_space<vmem>>, vector<1x128xf32>,
    %c0_6 = arith.constant 0 : index
    %c0_7 = arith.constant 0 : index
    %10 = vector.load %arg4[%c0_6, %c0_7] : memref<1x128xf32, #tpu.memory_space<vmem>>, vector<1x128xf32>
    %11 = arith.mulf %4, %4 : vector<64x128xf32>
    %cst_8 = arith.constant dense<0.000000e+00> : vector<128xf32>
    %12 = vector.multi_reduction <add>, %11, %cst_8 [0] : vector<64x128xf32> to vector<128xf32>
    %13 = vector.shape_cast %12 : vector<128xf32> to vector<1x128xf32>
    %14 = arith.addf %10, %13 : vector<1x128xf32>
    %c0_9 = arith.constant 0 : index
    %c0_10 = arith.constant 0 : index
    %15 = vector.load %arg4[%c0_9, %c0_10] : memref<1x128xf32, #tpu.memory_space<vmem>>, vector<1x128xf32>
    tpu.vector_store %arg4[%c0_9, %c0_10], %14 {strides = array<i32>} : memref<1x128xf32, #tpu.memory_space<vmem>>, vector<1x128xf32>,
    return
  }
  func.func @transform_0(%arg0: i32, %arg1: i32) -> (i32, i32) {
    %c0_i32 = arith.constant 0 : i32
    return %arg1, %arg0 : i32, i32
  }
  func.func @transform_1(%arg0: i32, %arg1: i32) -> (i32, i32) {
    %c0_i32 = arith.constant 0 : i32
    %c0_i32_0 = arith.constant 0 : i32
    return %c0_i32, %arg0 : i32, i32
  }
  func.func @transform_2(%arg0: i32, %arg1: i32) -> (i32, i32) {
    %c0_i32 = arith.constant 0 : i32
    %c0_i32_0 = arith.constant 0 : i32
    return %c0_i32, %arg0 : i32, i32
  }
}

module attributes {stable_mosaic.version = 11 : i64} {
  func.func @_affine_act_kernel(%arg0: i32, %arg1: memref<64x256xbf16, #tpu.memory_space<vmem>>, %arg2: memref<1x256xf32, #tpu.memory_space<vmem>>, %arg3: memref<1x256xf32, #tpu.memory_space<vmem>>, %arg4: memref<64x256xbf16, #tpu.memory_space<vmem>>) attributes {dimension_semantics = [#tpu.dimension_semantics<parallel>], iteration_bounds = array<i64: 1>, scalar_prefetch = 0 : i64, scratch_operands = 0 : i64, tpu.core_type = #tpu.core_type<tc>, window_params = [{transform_indices = @transform_0, window_bounds = array<i64: 64, 256>}, {pipeline_mode = #tpu.pipeline_mode<synchronous>, transform_indices = @transform_1, window_bounds = array<i64: 1, 256>}, {pipeline_mode = #tpu.pipeline_mode<synchronous>, transform_indices = @transform_2, window_bounds = array<i64: 1, 256>}, {transform_indices = @transform_3, window_bounds = array<i64: 64, 256>}]} {
    %c0 = arith.constant 0 : index
    %c0_0 = arith.constant 0 : index
    %0 = vector.load %arg1[%c0, %c0_0] : memref<64x256xbf16, #tpu.memory_space<vmem>>, vector<64x256xbf16>
    %1 = arith.extf %0 : vector<64x256xbf16> to vector<64x256xf32>
    %c0_1 = arith.constant 0 : index
    %c0_2 = arith.constant 0 : index
    %2 = vector.load %arg2[%c0_1, %c0_2] : memref<1x256xf32, #tpu.memory_space<vmem>>, vector<1x256xf32>
    %3 = vector.broadcast %2 : vector<1x256xf32> to vector<64x256xf32>
    %4 = arith.mulf %1, %3 : vector<64x256xf32>
    %c0_3 = arith.constant 0 : index
    %c0_4 = arith.constant 0 : index
    %5 = vector.load %arg3[%c0_3, %c0_4] : memref<1x256xf32, #tpu.memory_space<vmem>>, vector<1x256xf32>
    %6 = vector.broadcast %5 : vector<1x256xf32> to vector<64x256xf32>
    %7 = arith.addf %4, %6 : vector<64x256xf32>
    %cst = arith.constant 0.000000e+00 : f32
    %8 = vector.broadcast %cst : f32 to vector<64x256xf32>
    %9 = arith.maximumf %7, %8 : vector<64x256xf32>
    %10 = arith.truncf %9 : vector<64x256xf32> to vector<64x256xbf16>
    %c0_5 = arith.constant 0 : index
    %c0_6 = arith.constant 0 : index
    %11 = vector.load %arg4[%c0_5, %c0_6] : memref<64x256xbf16, #tpu.memory_space<vmem>>, vector<64x256xbf16>
    tpu.vector_store %arg4[%c0_5, %c0_6], %10 {strides = array<i32>} : memref<64x256xbf16, #tpu.memory_space<vmem>>, vector<64x256xbf16>,
    return
  }
  func.func @transform_0(%arg0: i32) -> (i32, i32) {
    %c0_i32 = arith.constant 0 : i32
    %c0_i32_0 = arith.constant 0 : i32
    return %arg0, %c0_i32 : i32, i32
  }
  func.func @transform_1(%arg0: i32) -> (i32, i32) {
    %c0_i32 = arith.constant 0 : i32
    %c0_i32_0 = arith.constant 0 : i32
    %c0_i32_1 = arith.constant 0 : i32
    return %c0_i32, %c0_i32_0 : i32, i32
  }
  func.func @transform_2(%arg0: i32) -> (i32, i32) {
    %c0_i32 = arith.constant 0 : i32
    %c0_i32_0 = arith.constant 0 : i32
    %c0_i32_1 = arith.constant 0 : i32
    return %c0_i32, %c0_i32_0 : i32, i32
  }
  func.func @transform_3(%arg0: i32) -> (i32, i32) {
    %c0_i32 = arith.constant 0 : i32
    %c0_i32_0 = arith.constant 0 : i32
    return %arg0, %c0_i32 : i32, i32
  }
}

module attributes {stable_mosaic.version = 11 : i64} {
  func.func @_matmul_kernel(%arg0: i32, %arg1: memref<1024x16xbf16, #tpu.memory_space<vmem>>, %arg2: memref<16x256xbf16, #tpu.memory_space<vmem>>, %arg3: memref<1024x256xbf16, #tpu.memory_space<vmem>>) attributes {dimension_semantics = [#tpu.dimension_semantics<parallel>], iteration_bounds = array<i64: 2>, scalar_prefetch = 0 : i64, scratch_operands = 0 : i64, tpu.core_type = #tpu.core_type<tc>, window_params = [{transform_indices = @transform_0, window_bounds = array<i64: 1024, 16>}, {pipeline_mode = #tpu.pipeline_mode<synchronous>, transform_indices = @transform_1, window_bounds = array<i64: 16, 256>}, {transform_indices = @transform_2, window_bounds = array<i64: 1024, 256>}]} {
    %c0 = arith.constant 0 : index
    %c0_0 = arith.constant 0 : index
    %0 = vector.load %arg1[%c0, %c0_0] : memref<1024x16xbf16, #tpu.memory_space<vmem>>, vector<1024x16xbf16>
    %c0_1 = arith.constant 0 : index
    %c0_2 = arith.constant 0 : index
    %1 = vector.load %arg2[%c0_1, %c0_2] : memref<16x256xbf16, #tpu.memory_space<vmem>>, vector<16x256xbf16>
    %cst = arith.constant dense<0.000000e+00> : vector<1024x256xf32>
    %2 = tpu.matmul %0, %1, %cst {dimension_numbers = #tpu.dot_dimension_numbers<[1], [0], [0], [1], [0, 0, 1, 1], [], []>} : vector<1024x16xbf16>, vector<16x256xbf16>, vector<1024x256xf32> -> vector<1024x256xf32>
    %3 = arith.truncf %2 : vector<1024x256xf32> to vector<1024x256xbf16>
    %c0_3 = arith.constant 0 : index
    %c0_4 = arith.constant 0 : index
    %4 = vector.load %arg3[%c0_3, %c0_4] : memref<1024x256xbf16, #tpu.memory_space<vmem>>, vector<1024x256xbf16>
    tpu.vector_store %arg3[%c0_3, %c0_4], %3 {strides = array<i32>} : memref<1024x256xbf16, #tpu.memory_space<vmem>>, vector<1024x256xbf16>,
    return
  }
  func.func @transform_0(%arg0: i32) -> (i32, i32) {
    %c0_i32 = arith.constant 0 : i32
    %c0_i32_0 = arith.constant 0 : i32
    return %arg0, %c0_i32 : i32, i32
  }
  func.func @transform_1(%arg0: i32) -> (i32, i32) {
    %c0_i32 = arith.constant 0 : i32
    %c0_i32_0 = arith.constant 0 : i32
    %c0_i32_1 = arith.constant 0 : i32
    return %c0_i32, %c0_i32_0 : i32, i32
  }
  func.func @transform_2(%arg0: i32) -> (i32, i32) {
    %c0_i32 = arith.constant 0 : i32
    %c0_i32_0 = arith.constant 0 : i32
    return %arg0, %c0_i32 : i32, i32
  }
}

module attributes {stable_mosaic.version = 11 : i64} {
  func.func @_affine_act_kernel(%arg0: i32, %arg1: memref<128x1024xbf16, #tpu.memory_space<vmem>>, %arg2: memref<1x1024xf32, #tpu.memory_space<vmem>>, %arg3: memref<1x1024xf32, #tpu.memory_space<vmem>>, %arg4: memref<128x1024xf32, #tpu.memory_space<vmem>>) attributes {dimension_semantics = [#tpu.dimension_semantics<parallel>], iteration_bounds = array<i64: 1>, scalar_prefetch = 0 : i64, scratch_operands = 0 : i64, tpu.core_type = #tpu.core_type<tc>, window_params = [{transform_indices = @transform_0, window_bounds = array<i64: 128, 1024>}, {pipeline_mode = #tpu.pipeline_mode<synchronous>, transform_indices = @transform_1, window_bounds = array<i64: 1, 1024>}, {pipeline_mode = #tpu.pipeline_mode<synchronous>, transform_indices = @transform_2, window_bounds = array<i64: 1, 1024>}, {transform_indices = @transform_3, window_bounds = array<i64: 128, 1024>}]} {
    %c0 = arith.constant 0 : index
    %c0_0 = arith.constant 0 : index
    %0 = vector.load %arg1[%c0, %c0_0] : memref<128x1024xbf16, #tpu.memory_space<vmem>>, vector<128x1024xbf16>
    %1 = arith.extf %0 : vector<128x1024xbf16> to vector<128x1024xf32>
    %c0_1 = arith.constant 0 : index
    %c0_2 = arith.constant 0 : index
    %2 = vector.load %arg2[%c0_1, %c0_2] : memref<1x1024xf32, #tpu.memory_space<vmem>>, vector<1x1024xf32>
    %3 = vector.broadcast %2 : vector<1x1024xf32> to vector<128x1024xf32>
    %4 = arith.mulf %1, %3 : vector<128x1024xf32>
    %c0_3 = arith.constant 0 : index
    %c0_4 = arith.constant 0 : index
    %5 = vector.load %arg3[%c0_3, %c0_4] : memref<1x1024xf32, #tpu.memory_space<vmem>>, vector<1x1024xf32>
    %6 = vector.broadcast %5 : vector<1x1024xf32> to vector<128x1024xf32>
    %7 = arith.addf %4, %6 : vector<128x1024xf32>
    %8 = math.tanh %7 : vector<128x1024xf32>
    %c0_5 = arith.constant 0 : index
    %c0_6 = arith.constant 0 : index
    %9 = vector.load %arg4[%c0_5, %c0_6] : memref<128x1024xf32, #tpu.memory_space<vmem>>, vector<128x1024xf32>
    tpu.vector_store %arg4[%c0_5, %c0_6], %8 {strides = array<i32>} : memref<128x1024xf32, #tpu.memory_space<vmem>>, vector<128x1024xf32>,
    return
  }
  func.func @transform_0(%arg0: i32) -> (i32, i32) {
    %c0_i32 = arith.constant 0 : i32
    %c0_i32_0 = arith.constant 0 : i32
    return %arg0, %c0_i32 : i32, i32
  }
  func.func @transform_1(%arg0: i32) -> (i32, i32) {
    %c0_i32 = arith.constant 0 : i32
    %c0_i32_0 = arith.constant 0 : i32
    %c0_i32_1 = arith.constant 0 : i32
    return %c0_i32, %c0_i32_0 : i32, i32
  }
  func.func @transform_2(%arg0: i32) -> (i32, i32) {
    %c0_i32 = arith.constant 0 : i32
    %c0_i32_0 = arith.constant 0 : i32
    %c0_i32_1 = arith.constant 0 : i32
    return %c0_i32, %c0_i32_0 : i32, i32
  }
  func.func @transform_3(%arg0: i32) -> (i32, i32) {
    %c0_i32 = arith.constant 0 : i32
    %c0_i32_0 = arith.constant 0 : i32
    return %arg0, %c0_i32 : i32, i32
  }
}

</mosaic_0001>

<llo_original>
// kernel: tile.47
$region0: #{tile.47}
  #allocation0 [shape = 's32[1]{0}', space=sflag, size = 0x4, scoped, tag = 'scoped memory for tile.47']
  %s0 = inlined_call_operand.vmem [shape: f32[64], index: 0, kind: input, shape index: {}]
  %s1 = inlined_call_operand.vmem [shape: f32[4,64], index: 1, kind: output, shape index: {}]
  // Predicated region
  $region2: #{tile.47} parent=0 // pred_check
    _
  $region3: #{tile.47} parent=0 // pred_check_branch
    %3 = sbr.rel (0) target = $region5
  $region4: #{tile.47} parent=0 // pred_region
    _
  $region5: #{tile.47} parent=0 // pred_fallthru
    _
  %v4 = vld [vmem:[%s0] ss:$0 sm:$0xff]
  %5 = vst [vmem:[%s1] sm:$0xf] %v4

// kernel: tile.48
$region0: #{tile.48}
  %s0 = inlined_call_operand.vmem [shape: f32[4,64], index: 0, kind: input, shape index: {}]
  %s1 = inlined_call_operand.vmem [shape: f32[1,256], index: 1, kind: output, shape index: {}]
  $region1: #{tile.48} parent=0
    #allocation0 [shape = 'u8[8192]{0}', space=vmem, size = 0x2000, scoped, tag = 'scoped mem for output reshape']
    #allocation1 [shape = 'u8[4096]{0}', space=vmem, size = 0x1000, scoped, tag = 'scoped mem for input reshape']
    %s3 = sshllo.u32 0, 4
    %v4 = vld [vmem:[%s0] sm:%s3]
    %5 = vst [vmem:[#allocation1] sm:%s3] %v4
    %s6 = smov 3
    %v7 = vld [vmem:[#allocation1] ss:$2 sm:%s6]
    %vm8 = vcmask 523264
    %9 = vst.msk [vmem:[#allocation0] ss:$8 sm:$0x3] %vm8, %v7
    %s10 = scalar_lea.vmem [#allocation1], 1
    %s11 = smov 3
    %v12 = vld [vmem:[%s10] ss:$2 sm:%s11]
    %13 = vrot.lane.b32.xlu0 %v12, 64
    %v14 = vpop.permute.xlu0 %13
    %vm15 = vcmask 1048064
    %16 = vst.msk [vmem:[#allocation0] ss:$8 sm:$0x3] %vm15, %v14
    %s18 = sshllo.u32 0, 1
    %v20 = vld [vmem:[#allocation0] sm:%s18]
    %s21 = sshllo.u32 0, 1
    %22 = vst [vmem:[%s1] sm:%s21] %v20
    %s23 = scalar_lea.vmem [#allocation0], 8
    %v24 = vld [vmem:[%s23] sm:%s18]
    %s25 = sshllo.u32 0, 1
    %s26 = scalar_lea.vmem %s1, 1
    %27 = vst [vmem:[%s26] sm:%s25] %v24

// kernel: netg_forward.15
$region0: #{netg_forward.15}
  #allocation0 [shape = 'u32[]', space=smem, size = 0x4, offset = 0x4, fixed_abs, tag = 'smem constant byte address 0x4 - core index']
  #allocation1 [shape = 'u32[144,128]{1,0:T(1,128)}', space=vmem, size = 0x12000, scoped, tag = 'internal scratch']
  %s0 = inlined_call_operand.vmem [shape: bf16[8,256], index: 0, kind: input, shape index: {}]
  %s1 = inlined_call_operand.vmem [shape: f32[1,256], index: 1, kind: output, shape index: {0}]
  %s2 = inlined_call_operand.vmem [shape: f32[1,256], index: 2, kind: output, shape index: {1}]
  %3 = xla_tuple %s1, %s2
  %s4 = sld [smem:[#allocation0]]
  $region49: #{netg_forward.15} parent=0
    _
  %s6 = ssub.s32 1, %s4
  %s7 = scalar_select 0, %s6, %s4
  loop: start=0, step=1, limit=4
  $region2: #{netg_forward.15} parent=0 // loop_pre_header
    _
  $region3: #{netg_forward.15} parent=0 // loop_header
    %s9 = sphi 0, %s13
    %p10 = scmp.ge.s32.totalorder %s9, 4
    %s16 = sphi 0, %s28
    %s17 = sphi 0, %s24
    %s18 = sphi 0, %s16
    %s19 = sphi 0, %s17
    %s20 = sphi 0, %s18
    %s21 = sphi 0, %s19
    %s33 = sphi 0, %s35
    %s36 = sphi 0, %s33
    %s37 = sphi 0, %s36
    %s53 = sphi 0, %s37
    %s59 = sphi 0, %s61
    %s62 = sphi 0, %s59
    %s63 = sphi 0, %s62
    %s79 = sphi 0, %s63
    %s85 = sphi 0, %s87
    %s88 = sphi 0, %s85
    %s89 = sphi 0, %s88
    %s105 = sphi 0, %s89
  $region4: #{netg_forward.15} parent=0 // loop_header_branch
    %12 = sbr.rel (%p10) target = $region8
  $region5: #{netg_forward.15} parent=0 // loop_body
    %s14 = ssub.s32 %s9, 1
    %s15 = ssub.s32 %s9, 2
    %s22 = sadd.s32 1, %s17
    %p23 = scmp.ge.s32.totalorder %s22, 1
    %s24 = scalar_select %p23, 0, %s22
    %s25 = sadd.s32 1, %s16
    %s26 = scalar_select %p23, %s25, %s16
    %p27 = scmp.ge.s32.totalorder %s26, 2
    %s28 = scalar_select %p27, 0, %s26
    %s29 = ssub.s32 %s17, %s24
    %s30 = ssub.s32 %s16, %s28
    %s31 = sor.u32 %s29, %s30
    %p32 = scmp.eq.s32.totalorder %s31, 0
    %s34 = sadd.s32 %s33, 1
    %s35 = scalar_select %p32, %s33, %s34
    %p38 = pneg %p32
    %p39 = scmp.eq.s32.totalorder %s9, 1
    %p40 = por %p38, %p39
    %p41 = scmp.ne.s32.totalorder %s33, %s36
    %p42 = scmp.eq.s32.totalorder %s9, 0
    %p43 = por %p41, %p42
    %p44 = scmp.ne.s32.totalorder %s33, %s36
    %p45 = scmp.eq.s32.totalorder %s14, 1
    %p46 = por %p44, %p45
    %p47 = scmp.ne.s32.totalorder %s36, %s37
    %p48 = scmp.eq.s32.totalorder %s14, 0
    %p49 = por %p47, %p48
    %p50 = scmp.ne.s32.totalorder %s36, %s37
    %p51 = scmp.eq.s32.totalorder %s15, 1
    %p52 = por %p50, %p51
    %p54 = scmp.ne.s32.totalorder %s37, %s53
    %p55 = scmp.eq.s32.totalorder %s15, 0
    %p56 = por %p54, %p55
    %s57 = ssub.s32 %s16, %s28
    %p58 = scmp.eq.s32.totalorder %s57, 0
    %s60 = sadd.s32 %s59, 1
    %s61 = scalar_select %p58, %s59, %s60
    %p64 = pneg %p58
    %p65 = scmp.eq.s32.totalorder %s9, 1
    %p66 = por %p64, %p65
    %p67 = scmp.ne.s32.totalorder %s59, %s62
    %p68 = scmp.eq.s32.totalorder %s9, 0
    %p69 = por %p67, %p68
    %p70 = scmp.ne.s32.totalorder %s59, %s62
    %p71 = scmp.eq.s32.totalorder %s14, 1
    %p72 = por %p70, %p71
    %p73 = scmp.ne.s32.totalorder %s62, %s63
    %p74 = scmp.eq.s32.totalorder %s14, 0
    %p75 = por %p73, %p74
    %p76 = scmp.ne.s32.totalorder %s62, %s63
    %p77 = scmp.eq.s32.totalorder %s15, 1
    %p78 = por %p76, %p77
    %p80 = scmp.ne.s32.totalorder %s63, %s79
    %p81 = scmp.eq.s32.totalorder %s15, 0
    %p82 = por %p80, %p81
    %s83 = ssub.s32 %s16, %s28
    %p84 = scmp.eq.s32.totalorder %s83, 0
    %s86 = sadd.s32 %s85, 1
    %s87 = scalar_select %p84, %s85, %s86
    %p90 = pneg %p84
    %p91 = scmp.eq.s32.totalorder %s9, 1
    %p92 = por %p90, %p91
    %p93 = scmp.ne.s32.totalorder %s85, %s88
    %p94 = scmp.eq.s32.totalorder %s9, 0
    %p95 = por %p93, %p94
    %p96 = scmp.ne.s32.totalorder %s85, %s88
    %p97 = scmp.eq.s32.totalorder %s14, 1
    %p98 = por %p96, %p97
    %p99 = scmp.ne.s32.totalorder %s88, %s89
    %p100 = scmp.eq.s32.totalorder %s14, 0
    %p101 = por %p99, %p100
    %p102 = scmp.ne.s32.totalorder %s88, %s89
    %p103 = scmp.eq.s32.totalorder %s15, 1
    %p104 = por %p102, %p103
    %p106 = scmp.ne.s32.totalorder %s89, %s105
    %p107 = scmp.eq.s32.totalorder %s15, 0
    %p108 = por %p106, %p107
    %p109 = scmp.le.s32.totalorder 1, %s9
    %p110 = scmp.lt.s32.totalorder %s9, 3
    %p111 = pnand %p109, %p110
    %p112 = pneg %p111
    // Predicated region
    $region9: #{netg_forward.15} parent=5 // pred_check
      _
    $region10: #{netg_forward.15} parent=5 // pred_check_branch
      %114 = sbr.rel (%p111) target = $region12
    $region11: #{netg_forward.15} parent=5 // pred_region
      %s115 = ssub.s32 %s9, 1
    $region12: #{netg_forward.15} parent=5 // pred_fallthru
      _
    %p116 = scmp.lt.s32.totalorder %s9, 2
    // Predicated region
    $region13: #{netg_forward.15} parent=5 // pred_check
      %p117 = pneg %p116
    $region14: #{netg_forward.15} parent=5 // pred_check_branch
      %119 = sbr.rel (%p117) target = $region16
    $region15: #{netg_forward.15} parent=5 // pred_region
      // Predicated region
      $region17: #{netg_forward.15} parent=15 // pred_check
        %p120 = pneg %p43
      $region18: #{netg_forward.15} parent=15 // pred_check_branch
        %122 = sbr.rel (%p120) target = $region20
      $region19: #{netg_forward.15} parent=15 // pred_region
        %p123 = scmp.lt.s32.totalorder %s17, 0
        %s124 = scalar_select %p123, %s17, 0
        %p125 = scmp.lt.s32.totalorder %s16, 1
        %s126 = scalar_select %p125, %s16, 1
        %s127 = smul.addr %s124, 2
        %s128 = sadd.s32 %s126, %s127
        %s129 = smul.addr %s128, 4
        %s130 = scalar_lea.vmem %s0, %s129
      $region20: #{netg_forward.15} parent=15 // pred_fallthru
        _
    $region16: #{netg_forward.15} parent=5 // pred_fallthru
      _
    %p131 = scmp.le.s32.totalorder 1, %s9
    %p132 = scmp.lt.s32.totalorder %s9, 3
    %p133 = pnand %p131, %p132
    %p134 = pneg %p133
    // Predicated region
    $region21: #{netg_forward.15} parent=5 // pred_check
      _
    $region22: #{netg_forward.15} parent=5 // pred_check_branch
      %136 = sbr.rel (%p133) target = $region24
    $region23: #{netg_forward.15} parent=5 // pred_region
      %s137 = ssub.s32 %s9, 1
      %p138 = scmp.lt.s32.totalorder %s19, 0
      %s139 = scalar_select %p138, %s19, 0
      %p140 = scmp.lt.s32.totalorder %s18, 1
      %s141 = scalar_select %p140, %s18, 1
      %s142 = smul.addr %s139, 2
      %s143 = sadd.s32 %s141, %s142
      %s144 = smul.addr %s143, 4
      %s145 = scalar_lea.vmem %s0, %s144
      %p146 = pneg %p49
      %p147 = pneg %p46
      %p148 = pneg %p75
      %p149 = pneg %p72
      %p150 = scmp.lt.s32.totalorder %s18, 1
      %s151 = scalar_select %p150, %s18, 1
      %s152 = scalar_lea.vmem %s1, %s151
      %p153 = pneg %p101
      %p154 = pneg %p98
      %p155 = scmp.lt.s32.totalorder %s18, 1
      %s156 = scalar_select %p155, %s18, 1
      %s157 = scalar_lea.vmem %s2, %s156
      %p158 = scmp.lt.s32.totalorder %s19, 0
      %s159 = scalar_select %p158, %s19, 0
      %p160 = scmp.lt.s32.totalorder %s18, 1
      %s161 = scalar_select %p160, %s18, 1
      %s162 = smul.addr %s159, 2
      %s163 = sadd.s32 %s161, %s162
      %s164 = smul.addr %s163, 4
      %s165 = scalar_lea.vmem %s0, %s164
      %p166 = scmp.lt.s32.totalorder %s18, 1
      %s167 = scalar_select %p166, %s18, 1
      %s168 = scalar_lea.vmem %s1, %s167
      %p169 = scmp.lt.s32.totalorder %s18, 1
      %s170 = scalar_select %p169, %s18, 1
      %s171 = scalar_lea.vmem %s2, %s170
      %p172 = scmp.eq.s32.totalorder %s19, 0
      // Predicated region
      $region25: #{netg_forward.15} parent=23 // pred_check
        %p173 = pneg %p172
      $region26: #{netg_forward.15} parent=23 // pred_check_branch
        %175 = sbr.rel (%p173) target = $region28
      $region27: #{netg_forward.15} parent=23 // pred_region
        %176 = vst [vmem:[%s168] sm:$0x1] 0.0
        %177 = vst [vmem:[%s171] sm:$0x1] 0.0
      $region28: #{netg_forward.15} parent=23 // pred_fallthru
        _
      %v178 = vld [vmem:[%s165] sm:$0xf]
      %v179 = vunpack.c.l.bf16 %v178
      %v180 = vld [vmem:[%s168] sm:$0x1]
      %v181 = vrot.slane %v179, 4
      %v182 = vadd.f32 %v179, %v181
      %v183 = vrot.slane %v182, 2
      %v184 = vadd.f32 %v182, %v183
      %v185 = vrot.slane %v184, 1
      %v186 = vadd.f32 %v184, %v185
      %v187 = vadd.f32 %v180, %v186
      %188 = vst [vmem:[%s168] sm:$0x1] %v187
      %v189 = vld [vmem:[%s171] sm:$0x1]
      %v190 = vmul.f32 %v179, %v179
      %v191 = vrot.slane %v190, 4
      %v192 = vadd.f32 %v190, %v191
      %v193 = vrot.slane %v192, 2
      %v194 = vadd.f32 %v192, %v193
      %v195 = vrot.slane %v194, 1
      %v196 = vadd.f32 %v194, %v195
      %v197 = vadd.f32 %v189, %v196
      %198 = vst [vmem:[%s171] sm:$0x1] %v197
      %p199 = scmp.lt.s32.totalorder %s18, 1
      %s200 = scalar_select %p199, %s18, 1
      %s201 = scalar_lea.vmem %s1, %s200
      %p202 = scmp.lt.s32.totalorder %s18, 1
      %s203 = scalar_select %p202, %s18, 1
      %s204 = scalar_lea.vmem %s2, %s203
      // Predicated region
      $region29: #{netg_forward.15} parent=23 // pred_check
        %p205 = pneg %p72
      $region30: #{netg_forward.15} parent=23 // pred_check_branch
        %207 = sbr.rel (%p205) target = $region32
      $region31: #{netg_forward.15} parent=23 // pred_region
        _
      $region32: #{netg_forward.15} parent=23 // pred_fallthru
        _
      // Predicated region
      $region33: #{netg_forward.15} parent=23 // pred_check
        %p208 = pneg %p98
      $region34: #{netg_forward.15} parent=23 // pred_check_branch
        %210 = sbr.rel (%p208) target = $region36
      $region35: #{netg_forward.15} parent=23 // pred_region
        _
      $region36: #{netg_forward.15} parent=23 // pred_fallthru
        _
    $region24: #{netg_forward.15} parent=5 // pred_fallthru
      _
    %p211 = scmp.le.s32.totalorder 2, %s9
    // Predicated region
    $region37: #{netg_forward.15} parent=5 // pred_check
      %p212 = pneg %p211
    $region38: #{netg_forward.15} parent=5 // pred_check_branch
      %214 = sbr.rel (%p212) target = $region40
    $region39: #{netg_forward.15} parent=5 // pred_region
      %s215 = ssub.s32 %s9, 2
      // Predicated region
      $region41: #{netg_forward.15} parent=39 // pred_check
        %p216 = pneg %p78
      $region42: #{netg_forward.15} parent=39 // pred_check_branch
        %218 = sbr.rel (%p216) target = $region44
      $region43: #{netg_forward.15} parent=39 // pred_region
        %p219 = scmp.lt.s32.totalorder %s20, 1
        %s220 = scalar_select %p219, %s20, 1
        %s221 = scalar_lea.vmem %s1, %s220
      $region44: #{netg_forward.15} parent=39 // pred_fallthru
        _
      // Predicated region
      $region45: #{netg_forward.15} parent=39 // pred_check
        %p222 = pneg %p104
      $region46: #{netg_forward.15} parent=39 // pred_check_branch
        %224 = sbr.rel (%p222) target = $region48
      $region47: #{netg_forward.15} parent=39 // pred_region
        %p225 = scmp.lt.s32.totalorder %s20, 1
        %s226 = scalar_select %p225, %s20, 1
        %s227 = scalar_lea.vmem %s2, %s226
      $region48: #{netg_forward.15} parent=39 // pred_fallthru
        _
    $region40: #{netg_forward.15} parent=5 // pred_fallthru
      _
  $region6: #{netg_forward.15} parent=0 // loop_footer
    %s13 = sadd.s32 1, %s9
  $region7: #{netg_forward.15} parent=0 // loop_footer_branch
    %8 = sbr.rel target = $region3
  $region8: #{netg_forward.15} parent=0 // loop_exit
    _

// kernel: netg_forward.16
$region0: #{netg_forward.16}
  #allocation0 [shape = 'u32[]', space=smem, size = 0x4, offset = 0x4, fixed_abs, tag = 'smem constant byte address 0x4 - core index']
  #allocation1 [shape = 'u32[144,128]{1,0:T(1,128)}', space=vmem, size = 0x12000, scoped, tag = 'internal scratch']
  %s0 = inlined_call_operand.vmem [shape: bf16[8,256], index: 0, kind: input, shape index: {}]
  %s1 = inlined_call_operand.vmem [shape: f32[1,256], index: 1, kind: input, shape index: {}]
  %s2 = inlined_call_operand.vmem [shape: f32[1,256], index: 2, kind: input, shape index: {}]
  %s3 = inlined_call_operand.vmem [shape: bf16[8,256], index: 3, kind: output, shape index: {}]
  %s4 = sld [smem:[#allocation0]]
  $region22: #{netg_forward.16} parent=0
    _
  %s6 = ssub.s32 1, %s4
  %s7 = scalar_select 0, %s6, %s4
  // Predicated region
  $region2: #{netg_forward.16} parent=0 // pred_check
    _
  $region3: #{netg_forward.16} parent=0 // pred_check_branch
    %9 = sbr.rel (0) target = $region5
  $region4: #{netg_forward.16} parent=0 // pred_region
    _
  $region5: #{netg_forward.16} parent=0 // pred_fallthru
    _
  // Predicated region
  $region6: #{netg_forward.16} parent=0 // pred_check
    _
  $region7: #{netg_forward.16} parent=0 // pred_check_branch
    %11 = sbr.rel (0) target = $region9
  $region8: #{netg_forward.16} parent=0 // pred_region
    _
  $region9: #{netg_forward.16} parent=0 // pred_fallthru
    _
  // Predicated region
  $region10: #{netg_forward.16} parent=0 // pred_check
    _
  $region11: #{netg_forward.16} parent=0 // pred_check_branch
    %13 = sbr.rel (0) target = $region13
  $region12: #{netg_forward.16} parent=0 // pred_region
    _
  $region13: #{netg_forward.16} parent=0 // pred_fallthru
    _
  %v14 = vld [vmem:[%s0] sm:$0xff]
  %v15 = vunpack.c.l.bf16 %v14
  %v16 = vunpack.c.h.bf16 %v14
  %v17 = vld [vmem:[%s1] sm:$0x3]
  %v19 = vlaneseq
  %v20 = vshrl.u32 %v19, 7
  %v21 = vsub.s32 0, %v20
  %v22 = vrot.slane %v17, %v21
  %v23 = vlaneseq
  %v24 = vshrl.u32 %v23, 7
  %v25 = vsub.s32 1, %v24
  %v26 = vrot.slane %v17, %v25
  %v29 = vmul.f32 %v15, %v22
  %v30 = vmul.f32 %v16, %v26
  %v31 = vld [vmem:[%s2] sm:$0x3]
  %v33 = vlaneseq
  %v34 = vshrl.u32 %v33, 7
  %v35 = vsub.s32 0, %v34
  %v36 = vrot.slane %v31, %v35
  %v37 = vlaneseq
  %v38 = vshrl.u32 %v37, 7
  %v39 = vsub.s32 1, %v38
  %v40 = vrot.slane %v31, %v39
  %v43 = vadd.f32 %v29, %v36
  %v44 = vadd.f32 %v30, %v40
  %v45 = vmax.f32 %v43, 0.0
  %v46 = vmax.f32 %v44, 0.0
  %v47 = vpack.c.bf16 %v45, %v45
  %v48 = vpack.c.bf16 %v46, %v46
  %v51 = vunpack.c.l.b16 %v47
  %v52 = vunpack.c.l.b16 %v48
  %v53 = vpack.c.b16 %v52, %v51
  %55 = vst [vmem:[%s3] sm:$0xff] %v53
  // Predicated region
  $region14: #{netg_forward.16} parent=0 // pred_check
    _
  $region15: #{netg_forward.16} parent=0 // pred_check_branch
    %57 = sbr.rel (0) target = $region17
  $region16: #{netg_forward.16} parent=0 // pred_region
    _
  $region17: #{netg_forward.16} parent=0 // pred_fallthru
    _
  // Predicated region
  $region18: #{netg_forward.16} parent=0 // pred_check
    _
  $region19: #{netg_forward.16} parent=0 // pred_check_branch
    %59 = sbr.rel (0) target = $region21
  $region20: #{netg_forward.16} parent=0 // pred_region
    _
  $region21: #{netg_forward.16} parent=0 // pred_fallthru
    _

// kernel: netg_forward.14
$region0: #{netg_forward.14}
  #allocation0 [shape = 'u32[]', space=smem, size = 0x4, offset = 0x4, fixed_abs, tag = 'smem constant byte address 0x4 - core index']
  #allocation1 [shape = 'u32[144,128]{1,0:T(1,128)}', space=vmem, size = 0x12000, scoped, tag = 'internal scratch']
  %s0 = inlined_call_operand.vmem [shape: bf16[2,128], index: 0, kind: input, shape index: {}]
  %s1 = inlined_call_operand.vmem [shape: bf16[128,1024], index: 1, kind: input, shape index: {}]
  %s2 = inlined_call_operand.vmem [shape: bf16[2,1024], index: 2, kind: output, shape index: {}]
  %s3 = sld [smem:[#allocation0]]
  $region18: #{netg_forward.14} parent=0
    _
  %s5 = ssub.s32 1, %s3
  %s6 = scalar_select 0, %s5, %s3
  // Predicated region
  $region2: #{netg_forward.14} parent=0 // pred_check
    _
  $region3: #{netg_forward.14} parent=0 // pred_check_branch
    %8 = sbr.rel (0) target = $region5
  $region4: #{netg_forward.14} parent=0 // pred_region
    _
  $region5: #{netg_forward.14} parent=0 // pred_fallthru
    _
  // Predicated region
  $region6: #{netg_forward.14} parent=0 // pred_check
    _
  $region7: #{netg_forward.14} parent=0 // pred_check_branch
    %10 = sbr.rel (0) target = $region9
  $region8: #{netg_forward.14} parent=0 // pred_region
    _
  $region9: #{netg_forward.14} parent=0 // pred_fallthru
    _
  %v12 = vld [vmem:[%s0] sm:$0x1]
  %v13 = vld [vmem:[%s1] sm:$0xff]
  %v14 = vld [vmem:[%s1 + $0x8] sm:$0xff]
  %v15 = vld [vmem:[%s1 + $0x10] sm:$0xff]
  %v16 = vld [vmem:[%s1 + $0x18] sm:$0xff]
  %v17 = vld [vmem:[%s1 + $0x20] sm:$0xff]
  %v18 = vld [vmem:[%s1 + $0x28] sm:$0xff]
  %v19 = vld [vmem:[%s1 + $0x30] sm:$0xff]
  %v20 = vld [vmem:[%s1 + $0x38] sm:$0xff]
  %v21 = vld [vmem:[%s1 + $0x40] sm:$0xff]
  %v22 = vld [vmem:[%s1 + $0x48] sm:$0xff]
  %v23 = vld [vmem:[%s1 + $0x50] sm:$0xff]
  %v24 = vld [vmem:[%s1 + $0x58] sm:$0xff]
  %v25 = vld [vmem:[%s1 + $0x60] sm:$0xff]
  %v26 = vld [vmem:[%s1 + $0x68] sm:$0xff]
  %v27 = vld [vmem:[%s1 + $0x70] sm:$0xff]
  %v28 = vld [vmem:[%s1 + $0x78] sm:$0xff]
  %v29 = vld [vmem:[%s1 + $0x80] sm:$0xff]
  %v30 = vld [vmem:[%s1 + $0x88] sm:$0xff]
  %v31 = vld [vmem:[%s1 + $0x90] sm:$0xff]
  %v32 = vld [vmem:[%s1 + $0x98] sm:$0xff]
  %v33 = vld [vmem:[%s1 + $0xa0] sm:$0xff]
  %v34 = vld [vmem:[%s1 + $0xa8] sm:$0xff]
  %v35 = vld [vmem:[%s1 + $0xb0] sm:$0xff]
  %v36 = vld [vmem:[%s1 + $0xb8] sm:$0xff]
  %v37 = vld [vmem:[%s1 + $0xc0] sm:$0xff]
  %v38 = vld [vmem:[%s1 + $0xc8] sm:$0xff]
  %v39 = vld [vmem:[%s1 + $0xd0] sm:$0xff]
  %v40 = vld [vmem:[%s1 + $0xd8] sm:$0xff]
  %v41 = vld [vmem:[%s1 + $0xe0] sm:$0xff]
  %v42 = vld [vmem:[%s1 + $0xe8] sm:$0xff]
  %v43 = vld [vmem:[%s1 + $0xf0] sm:$0xff]
  %v44 = vld [vmem:[%s1 + $0xf8] sm:$0xff]
  %v45 = vld [vmem:[%s1 + $0x100] sm:$0xff]
  %v46 = vld [vmem:[%s1 + $0x108] sm:$0xff]
  %v47 = vld [vmem:[%s1 + $0x110] sm:$0xff]
  %v48 = vld [vmem:[%s1 + $0x118] sm:$0xff]
  %v49 = vld [vmem:[%s1 + $0x120] sm:$0xff]
  %v50 = vld [vmem:[%s1 + $0x128] sm:$0xff]
  %v51 = vld [vmem:[%s1 + $0x130] sm:$0xff]
  %v52 = vld [vmem:[%s1 + $0x138] sm:$0xff]
  %v53 = vld [vmem:[%s1 + $0x140] sm:$0xff]
  %v54 = vld [vmem:[%s1 + $0x148] sm:$0xff]
  %v55 = vld [vmem:[%s1 + $0x150] sm:$0xff]
  %v56 = vld [vmem:[%s1 + $0x158] sm:$0xff]
  %v57 = vld [vmem:[%s1 + $0x160] sm:$0xff]
  %v58 = vld [vmem:[%s1 + $0x168] sm:$0xff]
  %v59 = vld [vmem:[%s1 + $0x170] sm:$0xff]
  %v60 = vld [vmem:[%s1 + $0x178] sm:$0xff]
  %v61 = vld [vmem:[%s1 + $0x180] sm:$0xff]
  %v62 = vld [vmem:[%s1 + $0x188] sm:$0xff]
  %v63 = vld [vmem:[%s1 + $0x190] sm:$0xff]
  %v64 = vld [vmem:[%s1 + $0x198] sm:$0xff]
  %v65 = vld [vmem:[%s1 + $0x1a0] sm:$0xff]
  %v66 = vld [vmem:[%s1 + $0x1a8] sm:$0xff]
  %v67 = vld [vmem:[%s1 + $0x1b0] sm:$0xff]
  %v68 = vld [vmem:[%s1 + $0x1b8] sm:$0xff]
  %v69 = vld [vmem:[%s1 + $0x1c0] sm:$0xff]
  %v70 = vld [vmem:[%s1 + $0x1c8] sm:$0xff]
  %v71 = vld [vmem:[%s1 + $0x1d0] sm:$0xff]
  %v72 = vld [vmem:[%s1 + $0x1d8] sm:$0xff]
  %v73 = vld [vmem:[%s1 + $0x1e0] sm:$0xff]
  %v74 = vld [vmem:[%s1 + $0x1e8] sm:$0xff]
  %v75 = vld [vmem:[%s1 + $0x1f0] sm:$0xff]
  %v76 = vld [vmem:[%s1 + $0x1f8] sm:$0xff]
  %v141 = vunpack.c.l.b16 %v13
  %v142 = vunpack.c.h.b16 %v13
  %v143 = vunpack.c.l.b16 %v14
  %v144 = vunpack.c.h.b16 %v14
  %v145 = vunpack.c.l.b16 %v15
  %v146 = vunpack.c.h.b16 %v15
  %v147 = vunpack.c.l.b16 %v16
  %v148 = vunpack.c.h.b16 %v16
  %v149 = vunpack.c.l.b16 %v17
  %v150 = vunpack.c.h.b16 %v17
  %v151 = vunpack.c.l.b16 %v18
  %v152 = vunpack.c.h.b16 %v18
  %v153 = vunpack.c.l.b16 %v19
  %v154 = vunpack.c.h.b16 %v19
  %v155 = vunpack.c.l.b16 %v20
  %v156 = vunpack.c.h.b16 %v20
  %v157 = vunpack.c.l.b16 %v21
  %v158 = vunpack.c.h.b16 %v21
  %v159 = vunpack.c.l.b16 %v22
  %v160 = vunpack.c.h.b16 %v22
  %v161 = vunpack.c.l.b16 %v23
  %v162 = vunpack.c.h.b16 %v23
  %v163 = vunpack.c.l.b16 %v24
  %v164 = vunpack.c.h.b16 %v24
  %v165 = vunpack.c.l.b16 %v25
  %v166 = vunpack.c.h.b16 %v25
  %v167 = vunpack.c.l.b16 %v26
  %v168 = vunpack.c.h.b16 %v26
  %v169 = vunpack.c.l.b16 %v27
  %v170 = vunpack.c.h.b16 %v27
  %v171 = vunpack.c.l.b16 %v28
  %v172 = vunpack.c.h.b16 %v28
  %v173 = vunpack.c.l.b16 %v29
  %v174 = vunpack.c.h.b16 %v29
  %v175 = vunpack.c.l.b16 %v30
  %v176 = vunpack.c.h.b16 %v30
  %v177 = vunpack.c.l.b16 %v31
  %v178 = vunpack.c.h.b16 %v31
  %v179 = vunpack.c.l.b16 %v32
  %v180 = vunpack.c.h.b16 %v32
  %v181 = vunpack.c.l.b16 %v33
  %v182 = vunpack.c.h.b16 %v33
  %v183 = vunpack.c.l.b16 %v34
  %v184 = vunpack.c.h.b16 %v34
  %v185 = vunpack.c.l.b16 %v35
  %v186 = vunpack.c.h.b16 %v35
  %v187 = vunpack.c.l.b16 %v36
  %v188 = vunpack.c.h.b16 %v36
  %v189 = vunpack.c.l.b16 %v37
  %v190 = vunpack.c.h.b16 %v37
  %v191 = vunpack.c.l.b16 %v38
  %v192 = vunpack.c.h.b16 %v38
  %v193 = vunpack.c.l.b16 %v39
  %v194 = vunpack.c.h.b16 %v39
  %v195 = vunpack.c.l.b16 %v40
  %v196 = vunpack.c.h.b16 %v40
  %v197 = vunpack.c.l.b16 %v41
  %v198 = vunpack.c.h.b16 %v41
  %v199 = vunpack.c.l.b16 %v42
  %v200 = vunpack.c.h.b16 %v42
  %v201 = vunpack.c.l.b16 %v43
  %v202 = vunpack.c.h.b16 %v43
  %v203 = vunpack.c.l.b16 %v44
  %v204 = vunpack.c.h.b16 %v44
  %v205 = vunpack.c.l.b16 %v45
  %v206 = vunpack.c.h.b16 %v45
  %v207 = vunpack.c.l.b16 %v46
  %v208 = vunpack.c.h.b16 %v46
  %v209 = vunpack.c.l.b16 %v47
  %v210 = vunpack.c.h.b16 %v47
  %v211 = vunpack.c.l.b16 %v48
  %v212 = vunpack.c.h.b16 %v48
  %v213 = vunpack.c.l.b16 %v49
  %v214 = vunpack.c.h.b16 %v49
  %v215 = vunpack.c.l.b16 %v50
  %v216 = vunpack.c.h.b16 %v50
  %v217 = vunpack.c.l.b16 %v51
  %v218 = vunpack.c.h.b16 %v51
  %v219 = vunpack.c.l.b16 %v52
  %v220 = vunpack.c.h.b16 %v52
  %v221 = vunpack.c.l.b16 %v53
  %v222 = vunpack.c.h.b16 %v53
  %v223 = vunpack.c.l.b16 %v54
  %v224 = vunpack.c.h.b16 %v54
  %v225 = vunpack.c.l.b16 %v55
  %v226 = vunpack.c.h.b16 %v55
  %v227 = vunpack.c.l.b16 %v56
  %v228 = vunpack.c.h.b16 %v56
  %v229 = vunpack.c.l.b16 %v57
  %v230 = vunpack.c.h.b16 %v57
  %v231 = vunpack.c.l.b16 %v58
  %v232 = vunpack.c.h.b16 %v58
  %v233 = vunpack.c.l.b16 %v59
  %v234 = vunpack.c.h.b16 %v59
  %v235 = vunpack.c.l.b16 %v60
  %v236 = vunpack.c.h.b16 %v60
  %v237 = vunpack.c.l.b16 %v61
  %v238 = vunpack.c.h.b16 %v61
  %v239 = vunpack.c.l.b16 %v62
  %v240 = vunpack.c.h.b16 %v62
  %v241 = vunpack.c.l.b16 %v63
  %v242 = vunpack.c.h.b16 %v63
  %v243 = vunpack.c.l.b16 %v64
  %v244 = vunpack.c.h.b16 %v64
  %v245 = vunpack.c.l.b16 %v65
  %v246 = vunpack.c.h.b16 %v65
  %v247 = vunpack.c.l.b16 %v66
  %v248 = vunpack.c.h.b16 %v66
  %v249 = vunpack.c.l.b16 %v67
  %v250 = vunpack.c.h.b16 %v67
  %v251 = vunpack.c.l.b16 %v68
  %v252 = vunpack.c.h.b16 %v68
  %v253 = vunpack.c.l.b16 %v69
  %v254 = vunpack.c.h.b16 %v69
  %v255 = vunpack.c.l.b16 %v70
  %v256 = vunpack.c.h.b16 %v70
  %v257 = vunpack.c.l.b16 %v71
  %v258 = vunpack.c.h.b16 %v71
  %v259 = vunpack.c.l.b16 %v72
  %v260 = vunpack.c.h.b16 %v72
  %v261 = vunpack.c.l.b16 %v73
  %v262 = vunpack.c.h.b16 %v73
  %v263 = vunpack.c.l.b16 %v74
  %v264 = vunpack.c.h.b16 %v74
  %v265 = vunpack.c.l.b16 %v75
  %v266 = vunpack.c.h.b16 %v75
  %v267 = vunpack.c.l.b16 %v76
  %v268 = vunpack.c.h.b16 %v76
  %v269 = vpack.c.b16 %v149, %v141
  %v270 = vpack.c.b16 %v150, %v142
  %v271 = vpack.c.b16 %v151, %v143
  %v272 = vpack.c.b16 %v152, %v144
  %v273 = vpack.c.b16 %v153, %v145
  %v274 = vpack.c.b16 %v154, %v146
  %v275 = vpack.c.b16 %v155, %v147
  %v276 = vpack.c.b16 %v156, %v148
  %v277 = vpack.c.b16 %v165, %v157
  %v278 = vpack.c.b16 %v166, %v158
  %v279 = vpack.c.b16 %v167, %v159
  %v280 = vpack.c.b16 %v168, %v160
  %v281 = vpack.c.b16 %v169, %v161
  %v282 = vpack.c.b16 %v170, %v162
  %v283 = vpack.c.b16 %v171, %v163
  %v284 = vpack.c.b16 %v172, %v164
  %v285 = vpack.c.b16 %v181, %v173
  %v286 = vpack.c.b16 %v182, %v174
  %v287 = vpack.c.b16 %v183, %v175
  %v288 = vpack.c.b16 %v184, %v176
  %v289 = vpack.c.b16 %v185, %v177
  %v290 = vpack.c.b16 %v186, %v178
  %v291 = vpack.c.b16 %v187, %v179
  %v292 = vpack.c.b16 %v188, %v180
  %v293 = vpack.c.b16 %v197, %v189
  %v294 = vpack.c.b16 %v198, %v190
  %v295 = vpack.c.b16 %v199, %v191
  %v296 = vpack.c.b16 %v200, %v192
  %v297 = vpack.c.b16 %v201, %v193
  %v298 = vpack.c.b16 %v202, %v194
  %v299 = vpack.c.b16 %v203, %v195
  %v300 = vpack.c.b16 %v204, %v196
  %v301 = vpack.c.b16 %v213, %v205
  %v302 = vpack.c.b16 %v214, %v206
  %v303 = vpack.c.b16 %v215, %v207
  %v304 = vpack.c.b16 %v216, %v208
  %v305 = vpack.c.b16 %v217, %v209
  %v306 = vpack.c.b16 %v218, %v210
  %v307 = vpack.c.b16 %v219, %v211
  %v308 = vpack.c.b16 %v220, %v212
  %v309 = vpack.c.b16 %v229, %v221
  %v310 = vpack.c.b16 %v230, %v222
  %v311 = vpack.c.b16 %v231, %v223
  %v312 = vpack.c.b16 %v232, %v224
  %v313 = vpack.c.b16 %v233, %v225
  %v314 = vpack.c.b16 %v234, %v226
  %v315 = vpack.c.b16 %v235, %v227
  %v316 = vpack.c.b16 %v236, %v228
  %v317 = vpack.c.b16 %v245, %v237
  %v318 = vpack.c.b16 %v246, %v238
  %v319 = vpack.c.b16 %v247, %v239
  %v320 = vpack.c.b16 %v248, %v240
  %v321 = vpack.c.b16 %v249, %v241
  %v322 = vpack.c.b16 %v250, %v242
  %v323 = vpack.c.b16 %v251, %v243
  %v324 = vpack.c.b16 %v252, %v244
  %v325 = vpack.c.b16 %v261, %v253
  %v326 = vpack.c.b16 %v262, %v254
  %v327 = vpack.c.b16 %v263, %v255
  %v328 = vpack.c.b16 %v264, %v256
  %v329 = vpack.c.b16 %v265, %v257
  %v330 = vpack.c.b16 %v266, %v258
  %v331 = vpack.c.b16 %v267, %v259
  %v332 = vpack.c.b16 %v268, %v260
  %397 = vmatprep.subr.bf16.mxu0 %v270
  %398 = vmatpush1.bf16.msra.mxu0 %v269
  %399 = vmatprep.subr.bf16.mxu0 %v278
  %400 = vmatpush1.bf16.msra.mxu0 %v277
  %401 = vmatprep.subr.bf16.mxu0 %v286
  %402 = vmatpush1.bf16.msra.mxu0 %v285
  %403 = vmatprep.subr.bf16.mxu0 %v294
  %404 = vmatpush1.bf16.msra.mxu0 %v293
  %405 = vmatprep.subr.bf16.mxu0 %v302
  %406 = vmatpush1.bf16.msra.mxu0 %v301
  %407 = vmatprep.subr.bf16.mxu0 %v310
  %408 = vmatpush1.bf16.msra.mxu0 %v309
  %409 = vmatprep.subr.bf16.mxu0 %v318
  %410 = vmatpush1.bf16.msra.mxu0 %v317
  %411 = vmatprep.subr.bf16.mxu0 %v326
  %412 = vmatpush1.bf16.msra.mxu0 %v325
  %413 = vmatprep.subr.bf16.mxu0 0
  %414 = vmatpush1.bf16.msra.mxu0 0
  %415 = vmatprep.subr.bf16.mxu0 0
  %416 = vmatpush1.bf16.msra.mxu0 0
  %417 = vmatprep.subr.bf16.mxu0 0
  %418 = vmatpush1.bf16.msra.mxu0 0
  %419 = vmatprep.subr.bf16.mxu0 0
  %420 = vmatpush1.bf16.msra.mxu0 0
  %421 = vmatprep.subr.bf16.mxu0 0
  %422 = vmatpush1.bf16.msra.mxu0 0
  %423 = vmatprep.subr.bf16.mxu0 0
  %424 = vmatpush1.bf16.msra.mxu0 0
  %425 = vmatprep.subr.bf16.mxu0 0
  %426 = vmatpush1.bf16.msra.mxu0 0
  %427 = vmatprep.subr.bf16.mxu0 0
  %428 = vmatpush1.bf16.msra.mxu0 0
  %429 = vmatprep.mubr.bf16.mxu0 0
  %430 = vmatmul.mubr.bf16.gmra.mrb[0].mxu0 %v12
  %v431 = vpop.f32.mrb[0].mxu0
  %v432 = vadd.f32 0.0, %v431
  %v433 = vpop.f32.mrb[0].mxu0
  %v434 = vadd.f32 0.0, %v433
  %v435 = vpop.f32.mrb[0].mxu0
  %v436 = vpop.f32.mrb[0].mxu0
  %437 = vdwg.mxu0
  %438 = vmatprep.subr.bf16.mxu0 %v272
  %439 = vmatpush1.bf16.msra.mxu0 %v271
  %440 = vmatprep.subr.bf16.mxu0 %v280
  %441 = vmatpush1.bf16.msra.mxu0 %v279
  %442 = vmatprep.subr.bf16.mxu0 %v288
  %443 = vmatpush1.bf16.msra.mxu0 %v287
  %444 = vmatprep.subr.bf16.mxu0 %v296
  %445 = vmatpush1.bf16.msra.mxu0 %v295
  %446 = vmatprep.subr.bf16.mxu0 %v304
  %447 = vmatpush1.bf16.msra.mxu0 %v303
  %448 = vmatprep.subr.bf16.mxu0 %v312
  %449 = vmatpush1.bf16.msra.mxu0 %v311
  %450 = vmatprep.subr.bf16.mxu0 %v320
  %451 = vmatpush1.bf16.msra.mxu0 %v319
  %452 = vmatprep.subr.bf16.mxu0 %v328
  %453 = vmatpush1.bf16.msra.mxu0 %v327
  %454 = vmatprep.subr.bf16.mxu0 0
  %455 = vmatpush1.bf16.msra.mxu0 0
  %456 = vmatprep.subr.bf16.mxu0 0
  %457 = vmatpush1.bf16.msra.mxu0 0
  %458 = vmatprep.subr.bf16.mxu0 0
  %459 = vmatpush1.bf16.msra.mxu0 0
  %460 = vmatprep.subr.bf16.mxu0 0
  %461 = vmatpush1.bf16.msra.mxu0 0
  %462 = vmatprep.subr.bf16.mxu0 0
  %463 = vmatpush1.bf16.msra.mxu0 0
  %464 = vmatprep.subr.bf16.mxu0 0
  %465 = vmatpush1.bf16.msra.mxu0 0
  %466 = vmatprep.subr.bf16.mxu0 0
  %467 = vmatpush1.bf16.msra.mxu0 0
  %468 = vmatprep.subr.bf16.mxu0 0
  %469 = vmatpush1.bf16.msra.mxu0 0
  %470 = vmatprep.mubr.bf16.mxu0 0
  %471 = vmatmul.mubr.bf16.gmra.mrb[0].mxu0 %v12
  %v472 = vpop.f32.mrb[0].mxu0
  %v473 = vadd.f32 0.0, %v472
  %v474 = vpop.f32.mrb[0].mxu0
  %v475 = vadd.f32 0.0, %v474
  %v476 = vpop.f32.mrb[0].mxu0
  %v477 = vpop.f32.mrb[0].mxu0
  %478 = vdwg.mxu0
  %479 = vmatprep.subr.bf16.mxu0 %v274
  %480 = vmatpush1.bf16.msra.mxu0 %v273
  %481 = vmatprep.subr.bf16.mxu0 %v282
  %482 = vmatpush1.bf16.msra.mxu0 %v281
  %483 = vmatprep.subr.bf16.mxu0 %v290
  %484 = vmatpush1.bf16.msra.mxu0 %v289
  %485 = vmatprep.subr.bf16.mxu0 %v298
  %486 = vmatpush1.bf16.msra.mxu0 %v297
  %487 = vmatprep.subr.bf16.mxu0 %v306
  %488 = vmatpush1.bf16.msra.mxu0 %v305
  %489 = vmatprep.subr.bf16.mxu0 %v314
  %490 = vmatpush1.bf16.msra.mxu0 %v313
  %491 = vmatprep.subr.bf16.mxu0 %v322
  %492 = vmatpush1.bf16.msra.mxu0 %v321
  %493 = vmatprep.subr.bf16.mxu0 %v330
  %494 = vmatpush1.bf16.msra.mxu0 %v329
  %495 = vmatprep.subr.bf16.mxu0 0
  %496 = vmatpush1.bf16.msra.mxu0 0
  %497 = vmatprep.subr.bf16.mxu0 0
  %498 = vmatpush1.bf16.msra.mxu0 0
  %499 = vmatprep.subr.bf16.mxu0 0
  %500 = vmatpush1.bf16.msra.mxu0 0
  %501 = vmatprep.subr.bf16.mxu0 0
  %502 = vmatpush1.bf16.msra.mxu0 0
  %503 = vmatprep.subr.bf16.mxu0 0
  %504 = vmatpush1.bf16.msra.mxu0 0
  %505 = vmatprep.subr.bf16.mxu0 0
  %506 = vmatpush1.bf16.msra.mxu0 0
  %507 = vmatprep.subr.bf16.mxu0 0
  %508 = vmatpush1.bf16.msra.mxu0 0
  %509 = vmatprep.subr.bf16.mxu0 0
  %510 = vmatpush1.bf16.msra.mxu0 0
  %511 = vmatprep.mubr.bf16.mxu0 0
  %512 = vmatmul.mubr.bf16.gmra.mrb[0].mxu0 %v12
  %v513 = vpop.f32.mrb[0].mxu0
  %v514 = vadd.f32 0.0, %v513
  %v515 = vpop.f32.mrb[0].mxu0
  %v516 = vadd.f32 0.0, %v515
  %v517 = vpop.f32.mrb[0].mxu0
  %v518 = vpop.f32.mrb[0].mxu0
  %519 = vdwg.mxu0
  %520 = vmatprep.subr.bf16.mxu0 %v276
  %521 = vmatpush1.bf16.msra.mxu0 %v275
  %522 = vmatprep.subr.bf16.mxu0 %v284
  %523 = vmatpush1.bf16.msra.mxu0 %v283
  %524 = vmatprep.subr.bf16.mxu0 %v292
  %525 = vmatpush1.bf16.msra.mxu0 %v291
  %526 = vmatprep.subr.bf16.mxu0 %v300
  %527 = vmatpush1.bf16.msra.mxu0 %v299
  %528 = vmatprep.subr.bf16.mxu0 %v308
  %529 = vmatpush1.bf16.msra.mxu0 %v307
  %530 = vmatprep.subr.bf16.mxu0 %v316
  %531 = vmatpush1.bf16.msra.mxu0 %v315
  %532 = vmatprep.subr.bf16.mxu0 %v324
  %533 = vmatpush1.bf16.msra.mxu0 %v323
  %534 = vmatprep.subr.bf16.mxu0 %v332
  %535 = vmatpush1.bf16.msra.mxu0 %v331
  %536 = vmatprep.subr.bf16.mxu0 0
  %537 = vmatpush1.bf16.msra.mxu0 0
  %538 = vmatprep.subr.bf16.mxu0 0
  %539 = vmatpush1.bf16.msra.mxu0 0
  %540 = vmatprep.subr.bf16.mxu0 0
  %541 = vmatpush1.bf16.msra.mxu0 0
  %542 = vmatprep.subr.bf16.mxu0 0
  %543 = vmatpush1.bf16.msra.mxu0 0
  %544 = vmatprep.subr.bf16.mxu0 0
  %545 = vmatpush1.bf16.msra.mxu0 0
  %546 = vmatprep.subr.bf16.mxu0 0
  %547 = vmatpush1.bf16.msra.mxu0 0
  %548 = vmatprep.subr.bf16.mxu0 0
  %549 = vmatpush1.bf16.msra.mxu0 0
  %550 = vmatprep.subr.bf16.mxu0 0
  %551 = vmatpush1.bf16.msra.mxu0 0
  %552 = vmatprep.mubr.bf16.mxu0 0
  %553 = vmatmul.mubr.bf16.gmra.mrb[0].mxu0 %v12
  %v554 = vpop.f32.mrb[0].mxu0
  %v555 = vadd.f32 0.0, %v554
  %v556 = vpop.f32.mrb[0].mxu0
  %v557 = vadd.f32 0.0, %v556
  %v558 = vpop.f32.mrb[0].mxu0
  %v559 = vpop.f32.mrb[0].mxu0
  %560 = vdwg.mxu0
  %v561 = vpack.c.bf16 %v432, %v432
  %v562 = vpack.c.bf16 %v434, %v434
  %v563 = vpack.c.bf16 %v473, %v473
  %v564 = vpack.c.bf16 %v475, %v475
  %v565 = vpack.c.bf16 %v514, %v514
  %v566 = vpack.c.bf16 %v516, %v516
  %v567 = vpack.c.bf16 %v555, %v555
  %v568 = vpack.c.bf16 %v557, %v557
  %v577 = vcombine.low %v561, %v562
  %v578 = vcombine.low %v563, %v564
  %v579 = vcombine.low %v565, %v566
  %v580 = vcombine.low %v567, %v568
  %v582 = vunpack.c.l.s4 1966171168
  %v583 = vunpack.c.0.s8 %v582
  %v584 = vlaneseq
  %v585 = vshrl.u32 %v584, 7
  %v586 = vsub.s32 %v583, %v585
  %v587 = vrot.slane %v577, %v586
  %v589 = vunpack.c.l.s4 1966171168
  %v590 = vunpack.c.0.s8 %v589
  %v591 = vlaneseq
  %v592 = vshrl.u32 %v591, 7
  %v593 = vsub.s32 %v590, %v592
  %v594 = vrot.slane %v578, %v593
  %v596 = vunpack.c.l.s4 1966171168
  %v597 = vunpack.c.0.s8 %v596
  %v598 = vlaneseq
  %v599 = vshrl.u32 %v598, 7
  %v600 = vsub.s32 %v597, %v599
  %v601 = vrot.slane %v579, %v600
  %v603 = vunpack.c.l.s4 1966171168
  %v604 = vunpack.c.0.s8 %v603
  %v605 = vlaneseq
  %v606 = vshrl.u32 %v605, 7
  %v607 = vsub.s32 %v604, %v606
  %v608 = vrot.slane %v580, %v607
  %v609 = vcombine.low %v587, %v594
  %v610 = vcombine.low %v601, %v608
  %v612 = vunpack.c.l.s4 1966171168
  %v613 = vunpack.c.0.s8 %v612
  %v614 = vlaneseq
  %v615 = vshrl.u32 %v614, 7
  %v616 = vsub.s32 %v613, %v615
  %v617 = vrot.slane %v609, %v616
  %v619 = vunpack.c.l.s4 1966171168
  %v620 = vunpack.c.0.s8 %v619
  %v621 = vlaneseq
  %v622 = vshrl.u32 %v621, 7
  %v623 = vsub.s32 %v620, %v622
  %v624 = vrot.slane %v610, %v623
  %v625 = vcombine.low %v617, %v624
  %627 = vst [vmem:[%s2] sm:$0xff] %v625
  // Predicated region
  $region10: #{netg_forward.14} parent=0 // pred_check
    _
  $region11: #{netg_forward.14} parent=0 // pred_check_branch
    %629 = sbr.rel (0) target = $region13
  $region12: #{netg_forward.14} parent=0 // pred_region
    _
  $region13: #{netg_forward.14} parent=0 // pred_fallthru
    _
  // Predicated region
  $region14: #{netg_forward.14} parent=0 // pred_check
    _
  $region15: #{netg_forward.14} parent=0 // pred_check_branch
    %631 = sbr.rel (0) target = $region17
  $region16: #{netg_forward.14} parent=0 // pred_region
    _
  $region17: #{netg_forward.14} parent=0 // pred_fallthru
    _

// kernel: netg_forward.17
$region0: #{netg_forward.17}
  #allocation0 [shape = 'u32[]', space=smem, size = 0x4, offset = 0x4, fixed_abs, tag = 'smem constant byte address 0x4 - core index']
  #allocation1 [shape = 'u32[144,128]{1,0:T(1,128)}', space=vmem, size = 0x12000, scoped, tag = 'internal scratch']
  %s0 = inlined_call_operand.vmem [shape: bf16[32,64], index: 0, kind: input, shape index: {}]
  %s1 = inlined_call_operand.vmem [shape: bf16[64,512], index: 1, kind: input, shape index: {}]
  %s2 = inlined_call_operand.vmem [shape: bf16[32,512], index: 2, kind: output, shape index: {}]
  %s3 = sld [smem:[#allocation0]]
  $region18: #{netg_forward.17} parent=0
    _
  %s5 = ssub.s32 1, %s3
  %s6 = scalar_select 0, %s5, %s3
  // Predicated region
  $region2: #{netg_forward.17} parent=0 // pred_check
    _
  $region3: #{netg_forward.17} parent=0 // pred_check_branch
    %8 = sbr.rel (0) target = $region5
  $region4: #{netg_forward.17} parent=0 // pred_region
    _
  $region5: #{netg_forward.17} parent=0 // pred_fallthru
    _
  // Predicated region
  $region6: #{netg_forward.17} parent=0 // pred_check
    _
  $region7: #{netg_forward.17} parent=0 // pred_check_branch
    %10 = sbr.rel (0) target = $region9
  $region8: #{netg_forward.17} parent=0 // pred_region
    _
  $region9: #{netg_forward.17} parent=0 // pred_fallthru
    _
  %v12 = vld [vmem:[%s0] sm:$0xf]
  %v13 = vld [vmem:[%s0 + $0x4] sm:$0xf]
  %v14 = vld [vmem:[%s0 + $0x8] sm:$0xf]
  %v15 = vld [vmem:[%s0 + $0xc] sm:$0xf]
  %v16 = vld [vmem:[%s1] sm:$0xff]
  %v17 = vld [vmem:[%s1 + $0x8] sm:$0xff]
  %v18 = vld [vmem:[%s1 + $0x10] sm:$0xff]
  %v19 = vld [vmem:[%s1 + $0x18] sm:$0xff]
  %v20 = vld [vmem:[%s1 + $0x20] sm:$0xff]
  %v21 = vld [vmem:[%s1 + $0x28] sm:$0xff]
  %v22 = vld [vmem:[%s1 + $0x30] sm:$0xff]
  %v23 = vld [vmem:[%s1 + $0x38] sm:$0xff]
  %v24 = vld [vmem:[%s1 + $0x40] sm:$0xff]
  %v25 = vld [vmem:[%s1 + $0x48] sm:$0xff]
  %v26 = vld [vmem:[%s1 + $0x50] sm:$0xff]
  %v27 = vld [vmem:[%s1 + $0x58] sm:$0xff]
  %v28 = vld [vmem:[%s1 + $0x60] sm:$0xff]
  %v29 = vld [vmem:[%s1 + $0x68] sm:$0xff]
  %v30 = vld [vmem:[%s1 + $0x70] sm:$0xff]
  %v31 = vld [vmem:[%s1 + $0x78] sm:$0xff]
  %v36 = vunpack.c.l.b16 %v12
  %v37 = vunpack.c.l.b16 %v13
  %v38 = vunpack.c.l.b16 %v14
  %v39 = vunpack.c.l.b16 %v15
  %v40 = vpack.c.b16 %v37, %v36
  %v41 = vpack.c.b16 %v39, %v38
  %v58 = vunpack.c.l.b16 %v16
  %v59 = vunpack.c.h.b16 %v16
  %v60 = vunpack.c.l.b16 %v17
  %v61 = vunpack.c.h.b16 %v17
  %v62 = vunpack.c.l.b16 %v18
  %v63 = vunpack.c.h.b16 %v18
  %v64 = vunpack.c.l.b16 %v19
  %v65 = vunpack.c.h.b16 %v19
  %v66 = vunpack.c.l.b16 %v20
  %v67 = vunpack.c.h.b16 %v20
  %v68 = vunpack.c.l.b16 %v21
  %v69 = vunpack.c.h.b16 %v21
  %v70 = vunpack.c.l.b16 %v22
  %v71 = vunpack.c.h.b16 %v22
  %v72 = vunpack.c.l.b16 %v23
  %v73 = vunpack.c.h.b16 %v23
  %v74 = vunpack.c.l.b16 %v24
  %v75 = vunpack.c.h.b16 %v24
  %v76 = vunpack.c.l.b16 %v25
  %v77 = vunpack.c.h.b16 %v25
  %v78 = vunpack.c.l.b16 %v26
  %v79 = vunpack.c.h.b16 %v26
  %v80 = vunpack.c.l.b16 %v27
  %v81 = vunpack.c.h.b16 %v27
  %v82 = vunpack.c.l.b16 %v28
  %v83 = vunpack.c.h.b16 %v28
  %v84 = vunpack.c.l.b16 %v29
  %v85 = vunpack.c.h.b16 %v29
  %v86 = vunpack.c.l.b16 %v30
  %v87 = vunpack.c.h.b16 %v30
  %v88 = vunpack.c.l.b16 %v31
  %v89 = vunpack.c.h.b16 %v31
  %v90 = vpack.c.b16 %v62, %v58
  %v91 = vpack.c.b16 %v63, %v59
  %v92 = vpack.c.b16 %v64, %v60
  %v93 = vpack.c.b16 %v65, %v61
  %v94 = vpack.c.b16 %v70, %v66
  %v95 = vpack.c.b16 %v71, %v67
  %v96 = vpack.c.b16 %v72, %v68
  %v97 = vpack.c.b16 %v73, %v69
  %v98 = vpack.c.b16 %v78, %v74
  %v99 = vpack.c.b16 %v79, %v75
  %v100 = vpack.c.b16 %v80, %v76
  %v101 = vpack.c.b16 %v81, %v77
  %v102 = vpack.c.b16 %v86, %v82
  %v103 = vpack.c.b16 %v87, %v83
  %v104 = vpack.c.b16 %v88, %v84
  %v105 = vpack.c.b16 %v89, %v85
  %vm122 = vcmask 523264
  %v124 = vsel %vm122, %v40, 0
  %v127 = vsel %vm122, %v41, 0
  %129 = vmatprep.subr.bf16.mxu0 %v91
  %130 = vmatpush1.bf16.msra.mxu0 %v90
  %131 = vmatprep.subr.bf16.mxu0 %v95
  %132 = vmatpush1.bf16.msra.mxu0 %v94
  %133 = vmatprep.subr.bf16.mxu0 %v99
  %134 = vmatpush1.bf16.msra.mxu0 %v98
  %135 = vmatprep.subr.bf16.mxu0 %v103
  %136 = vmatpush1.bf16.msra.mxu0 %v102
  %137 = vmatprep.subr.bf16.mxu0 0
  %138 = vmatpush1.bf16.msra.mxu0 0
  %139 = vmatprep.subr.bf16.mxu0 0
  %140 = vmatpush1.bf16.msra.mxu0 0
  %141 = vmatprep.subr.bf16.mxu0 0
  %142 = vmatpush1.bf16.msra.mxu0 0
  %143 = vmatprep.subr.bf16.mxu0 0
  %144 = vmatpush1.bf16.msra.mxu0 0
  %145 = vmatprep.subr.bf16.mxu0 0
  %146 = vmatpush1.bf16.msra.mxu0 0
  %147 = vmatprep.subr.bf16.mxu0 0
  %148 = vmatpush1.bf16.msra.mxu0 0
  %149 = vmatprep.subr.bf16.mxu0 0
  %150 = vmatpush1.bf16.msra.mxu0 0
  %151 = vmatprep.subr.bf16.mxu0 0
  %152 = vmatpush1.bf16.msra.mxu0 0
  %153 = vmatprep.subr.bf16.mxu0 0
  %154 = vmatpush1.bf16.msra.mxu0 0
  %155 = vmatprep.subr.bf16.mxu0 0
  %156 = vmatpush1.bf16.msra.mxu0 0
  %157 = vmatprep.subr.bf16.mxu0 0
  %158 = vmatpush1.bf16.msra.mxu0 0
  %159 = vmatprep.subr.bf16.mxu0 0
  %160 = vmatpush1.bf16.msra.mxu0 0
  %161 = vmatprep.mubr.bf16.mxu0 0
  %162 = vmatmul.mubr.bf16.gmra.mrb[0].mxu0 %v124
  %v163 = vpop.f32.mrb[0].mxu0
  %v164 = vadd.f32 0.0, %v163
  %v165 = vpop.f32.mrb[0].mxu0
  %v166 = vadd.f32 0.0, %v165
  %v167 = vpop.f32.mrb[0].mxu0
  %v168 = vadd.f32 0.0, %v167
  %v169 = vpop.f32.mrb[0].mxu0
  %v170 = vadd.f32 0.0, %v169
  %171 = vmatprep.mubr.bf16.mxu0 0
  %172 = vmatmul.mubr.bf16.gmra.mrb[0].mxu0 %v127
  %v173 = vpop.f32.mrb[0].mxu0
  %v174 = vadd.f32 0.0, %v173
  %v175 = vpop.f32.mrb[0].mxu0
  %v176 = vadd.f32 0.0, %v175
  %v177 = vpop.f32.mrb[0].mxu0
  %v178 = vadd.f32 0.0, %v177
  %v179 = vpop.f32.mrb[0].mxu0
  %v180 = vadd.f32 0.0, %v179
  %181 = vdwg.mxu0
  %182 = vmatprep.subr.bf16.mxu0 %v93
  %183 = vmatpush1.bf16.msra.mxu0 %v92
  %184 = vmatprep.subr.bf16.mxu0 %v97
  %185 = vmatpush1.bf16.msra.mxu0 %v96
  %186 = vmatprep.subr.bf16.mxu0 %v101
  %187 = vmatpush1.bf16.msra.mxu0 %v100
  %188 = vmatprep.subr.bf16.mxu0 %v105
  %189 = vmatpush1.bf16.msra.mxu0 %v104
  %190 = vmatprep.subr.bf16.mxu0 0
  %191 = vmatpush1.bf16.msra.mxu0 0
  %192 = vmatprep.subr.bf16.mxu0 0
  %193 = vmatpush1.bf16.msra.mxu0 0
  %194 = vmatprep.subr.bf16.mxu0 0
  %195 = vmatpush1.bf16.msra.mxu0 0
  %196 = vmatprep.subr.bf16.mxu0 0
  %197 = vmatpush1.bf16.msra.mxu0 0
  %198 = vmatprep.subr.bf16.mxu0 0
  %199 = vmatpush1.bf16.msra.mxu0 0
  %200 = vmatprep.subr.bf16.mxu0 0
  %201 = vmatpush1.bf16.msra.mxu0 0
  %202 = vmatprep.subr.bf16.mxu0 0
  %203 = vmatpush1.bf16.msra.mxu0 0
  %204 = vmatprep.subr.bf16.mxu0 0
  %205 = vmatpush1.bf16.msra.mxu0 0
  %206 = vmatprep.subr.bf16.mxu0 0
  %207 = vmatpush1.bf16.msra.mxu0 0
  %208 = vmatprep.subr.bf16.mxu0 0
  %209 = vmatpush1.bf16.msra.mxu0 0
  %210 = vmatprep.subr.bf16.mxu0 0
  %211 = vmatpush1.bf16.msra.mxu0 0
  %212 = vmatprep.subr.bf16.mxu0 0
  %213 = vmatpush1.bf16.msra.mxu0 0
  %214 = vmatprep.mubr.bf16.mxu0 0
  %215 = vmatmul.mubr.bf16.gmra.mrb[0].mxu0 %v124
  %v216 = vpop.f32.mrb[0].mxu0
  %v217 = vadd.f32 0.0, %v216
  %v218 = vpop.f32.mrb[0].mxu0
  %v219 = vadd.f32 0.0, %v218
  %v220 = vpop.f32.mrb[0].mxu0
  %v221 = vadd.f32 0.0, %v220
  %v222 = vpop.f32.mrb[0].mxu0
  %v223 = vadd.f32 0.0, %v222
  %224 = vmatprep.mubr.bf16.mxu0 0
  %225 = vmatmul.mubr.bf16.gmra.mrb[0].mxu0 %v127
  %v226 = vpop.f32.mrb[0].mxu0
  %v227 = vadd.f32 0.0, %v226
  %v228 = vpop.f32.mrb[0].mxu0
  %v229 = vadd.f32 0.0, %v228
  %v230 = vpop.f32.mrb[0].mxu0
  %v231 = vadd.f32 0.0, %v230
  %v232 = vpop.f32.mrb[0].mxu0
  %v233 = vadd.f32 0.0, %v232
  %234 = vdwg.mxu0
  %v235 = vpack.c.bf16 %v168, %v164
  %v236 = vpack.c.bf16 %v170, %v166
  %v237 = vpack.c.bf16 %v221, %v217
  %v238 = vpack.c.bf16 %v223, %v219
  %v239 = vpack.c.bf16 %v178, %v174
  %v240 = vpack.c.bf16 %v180, %v176
  %v241 = vpack.c.bf16 %v231, %v227
  %v242 = vpack.c.bf16 %v233, %v229
  %v251 = vunpack.c.l.b16 %v235
  %v252 = vunpack.c.l.b16 %v236
  %v253 = vunpack.c.l.b16 %v237
  %v254 = vunpack.c.l.b16 %v238
  %v255 = vunpack.c.h.b16 %v235
  %v256 = vunpack.c.h.b16 %v236
  %v257 = vunpack.c.h.b16 %v237
  %v258 = vunpack.c.h.b16 %v238
  %v259 = vunpack.c.l.b16 %v239
  %v260 = vunpack.c.l.b16 %v240
  %v261 = vunpack.c.l.b16 %v241
  %v262 = vunpack.c.l.b16 %v242
  %v263 = vunpack.c.h.b16 %v239
  %v264 = vunpack.c.h.b16 %v240
  %v265 = vunpack.c.h.b16 %v241
  %v266 = vunpack.c.h.b16 %v242
  %v267 = vpack.c.b16 %v252, %v251
  %v268 = vpack.c.b16 %v254, %v253
  %v269 = vpack.c.b16 %v256, %v255
  %v270 = vpack.c.b16 %v258, %v257
  %v271 = vpack.c.b16 %v260, %v259
  %v272 = vpack.c.b16 %v262, %v261
  %v273 = vpack.c.b16 %v264, %v263
  %v274 = vpack.c.b16 %v266, %v265
  %283 = vst [vmem:[%s2] sm:$0xff] %v267
  %284 = vst [vmem:[%s2 + $0x8] sm:$0xff] %v268
  %285 = vst [vmem:[%s2 + $0x10] sm:$0xff] %v269
  %286 = vst [vmem:[%s2 + $0x18] sm:$0xff] %v270
  %287 = vst [vmem:[%s2 + $0x20] sm:$0xff] %v271
  %288 = vst [vmem:[%s2 + $0x28] sm:$0xff] %v272
  %289 = vst [vmem:[%s2 + $0x30] sm:$0xff] %v273
  %290 = vst [vmem:[%s2 + $0x38] sm:$0xff] %v274
  // Predicated region
  $region10: #{netg_forward.17} parent=0 // pred_check
    _
  $region11: #{netg_forward.17} parent=0 // pred_check_branch
    %292 = sbr.rel (0) target = $region13
  $region12: #{netg_forward.17} parent=0 // pred_region
    _
  $region13: #{netg_forward.17} parent=0 // pred_fallthru
    _
  // Predicated region
  $region14: #{netg_forward.17} parent=0 // pred_check
    _
  $region15: #{netg_forward.17} parent=0 // pred_check_branch
    %294 = sbr.rel (0) target = $region17
  $region16: #{netg_forward.17} parent=0 // pred_region
    _
  $region17: #{netg_forward.17} parent=0 // pred_fallthru
    _

// kernel: tile.57
$region0: #{tile.57}
  #allocation0 [shape = 's32[1]{0}', space=sflag, size = 0x4, scoped, tag = 'scoped memory for tile.57']
  %s0 = inlined_call_operand.vmem [shape: f32[32], index: 0, kind: input, shape index: {}]
  %s1 = inlined_call_operand.vmem [shape: f32[8,32], index: 1, kind: output, shape index: {}]
  // Predicated region
  $region2: #{tile.57} parent=0 // pred_check
    _
  $region3: #{tile.57} parent=0 // pred_check_branch
    %3 = sbr.rel (0) target = $region5
  $region4: #{tile.57} parent=0 // pred_region
    _
  $region5: #{tile.57} parent=0 // pred_fallthru
    _
  %v4 = vld [vmem:[%s0] ss:$0 sm:$0xff]
  %5 = vst [vmem:[%s1] sm:$0xff] %v4

// kernel: tile.58
$region0: #{tile.58}
  %s0 = inlined_call_operand.vmem [shape: f32[8,32], index: 0, kind: input, shape index: {}]
  %s1 = inlined_call_operand.vmem [shape: f32[1,256], index: 1, kind: output, shape index: {}]
  $region1: #{tile.58} parent=0
    #allocation0 [shape = 'u8[8192]{0}', space=vmem, size = 0x2000, scoped, tag = 'scoped mem for output reshape']
    %s2 = smov 3
    %v3 = vld [vmem:[%s0] ss:$4 sm:%s2]
    %vm4 = vcmask 261120
    %5 = vst.msk [vmem:[#allocation0] ss:$8 sm:$0x3] %vm4, %v3
    %s6 = scalar_lea.vmem %s0, 3
    %s7 = smov 3
    %v8 = vld [vmem:[%s6] ss:$4 sm:%s7]
    %9 = vrot.lane.b32.xlu0 %v8, 96
    %v10 = vpop.permute.xlu0 %9
    %vm11 = vcmask 1048320
    %12 = vst.msk [vmem:[#allocation0] ss:$8 sm:$0x3] %vm11, %v10
    %s13 = scalar_lea.vmem %s0, 2
    %s14 = smov 3
    %v15 = vld [vmem:[%s13] ss:$4 sm:%s14]
    %16 = vrot.lane.b32.xlu0 %v15, 64
    %v17 = vpop.permute.xlu0 %16
    %vm18 = vcmask 785920
    %19 = vst.msk [vmem:[#allocation0] ss:$8 sm:$0x3] %vm18, %v17
    %s20 = scalar_lea.vmem %s0, 1
    %s21 = smov 3
    %v22 = vld [vmem:[%s20] ss:$4 sm:%s21]
    %23 = vrot.lane.b32.xlu0 %v22, 32
    %v24 = vpop.permute.xlu0 %23
    %vm25 = vcmask 523520
    %26 = vst.msk [vmem:[#allocation0] ss:$8 sm:$0x3] %vm25, %v24
    %s28 = sshllo.u32 0, 1
    %v30 = vld [vmem:[#allocation0] sm:%s28]
    %s31 = sshllo.u32 0, 1
    %32 = vst [vmem:[%s1] sm:%s31] %v30
    %s33 = scalar_lea.vmem [#allocation0], 8
    %v34 = vld [vmem:[%s33] sm:%s28]
    %s35 = sshllo.u32 0, 1
    %s36 = scalar_lea.vmem %s1, 1
    %37 = vst [vmem:[%s36] sm:%s35] %v34

// kernel: netg_forward.18
$region0: #{netg_forward.18}
  #allocation0 [shape = 'u32[]', space=smem, size = 0x4, offset = 0x4, fixed_abs, tag = 'smem constant byte address 0x4 - core index']
  #allocation1 [shape = 'u32[144,128]{1,0:T(1,128)}', space=vmem, size = 0x12000, scoped, tag = 'internal scratch']
  %s0 = inlined_call_operand.vmem [shape: bf16[16,256], index: 0, kind: input, shape index: {}]
  %s1 = inlined_call_operand.vmem [shape: f32[1,256], index: 1, kind: output, shape index: {0}]
  %s2 = inlined_call_operand.vmem [shape: f32[1,256], index: 2, kind: output, shape index: {1}]
  %3 = xla_tuple %s1, %s2
  %s4 = sld [smem:[#allocation0]]
  $region90: #{netg_forward.18} parent=0
    _
  %s6 = ssub.s32 1, %s4
  %s7 = scalar_select 0, %s6, %s4
  $region1: #{netg_forward.18} parent=0
    #allocation2 [shape = 'u8[8192]{0}', space=vmem, size = 0x2000, scoped, tag = 'input window, operand 0']
    loop: start=0, step=1, limit=4
    $region2: #{netg_forward.18} parent=1 // loop_pre_header
      _
    $region3: #{netg_forward.18} parent=1 // loop_header
      %s9 = sphi 0, %s13
      %p10 = scmp.ge.s32.totalorder %s9, 4
      %s16 = sphi 0, %s28
      %s17 = sphi 0, %s24
      %s18 = sphi 0, %s16
      %s19 = sphi 0, %s17
      %s20 = sphi 0, %s18
      %s21 = sphi 0, %s19
      %s33 = sphi 0, %s35
      %s36 = sphi 0, %s33
      %s37 = sphi 0, %s36
      %s53 = sphi 0, %s37
      %s59 = sphi 0, %s61
      %s62 = sphi 0, %s59
      %s63 = sphi 0, %s62
      %s79 = sphi 0, %s63
      %s85 = sphi 0, %s87
      %s88 = sphi 0, %s85
      %s89 = sphi 0, %s88
      %s105 = sphi 0, %s89
    $region4: #{netg_forward.18} parent=1 // loop_header_branch
      %12 = sbr.rel (%p10) target = $region8
    $region5: #{netg_forward.18} parent=1 // loop_body
      %s14 = ssub.s32 %s9, 1
      %s15 = ssub.s32 %s9, 2
      %s22 = sadd.s32 1, %s17
      %p23 = scmp.ge.s32.totalorder %s22, 1
      %s24 = scalar_select %p23, 0, %s22
      %s25 = sadd.s32 1, %s16
      %s26 = scalar_select %p23, %s25, %s16
      %p27 = scmp.ge.s32.totalorder %s26, 2
      %s28 = scalar_select %p27, 0, %s26
      %s29 = ssub.s32 %s17, %s24
      %s30 = ssub.s32 %s16, %s28
      %s31 = sor.u32 %s29, %s30
      %p32 = scmp.eq.s32.totalorder %s31, 0
      %s34 = sadd.s32 %s33, 1
      %s35 = scalar_select %p32, %s33, %s34
      %p38 = pneg %p32
      %p39 = scmp.eq.s32.totalorder %s9, 1
      %p40 = por %p38, %p39
      %p41 = scmp.ne.s32.totalorder %s33, %s36
      %p42 = scmp.eq.s32.totalorder %s9, 0
      %p43 = por %p41, %p42
      %p44 = scmp.ne.s32.totalorder %s33, %s36
      %p45 = scmp.eq.s32.totalorder %s14, 1
      %p46 = por %p44, %p45
      %p47 = scmp.ne.s32.totalorder %s36, %s37
      %p48 = scmp.eq.s32.totalorder %s14, 0
      %p49 = por %p47, %p48
      %p50 = scmp.ne.s32.totalorder %s36, %s37
      %p51 = scmp.eq.s32.totalorder %s15, 1
      %p52 = por %p50, %p51
      %p54 = scmp.ne.s32.totalorder %s37, %s53
      %p55 = scmp.eq.s32.totalorder %s15, 0
      %p56 = por %p54, %p55
      %s57 = ssub.s32 %s16, %s28
      %p58 = scmp.eq.s32.totalorder %s57, 0
      %s60 = sadd.s32 %s59, 1
      %s61 = scalar_select %p58, %s59, %s60
      %p64 = pneg %p58
      %p65 = scmp.eq.s32.totalorder %s9, 1
      %p66 = por %p64, %p65
      %p67 = scmp.ne.s32.totalorder %s59, %s62
      %p68 = scmp.eq.s32.totalorder %s9, 0
      %p69 = por %p67, %p68
      %p70 = scmp.ne.s32.totalorder %s59, %s62
      %p71 = scmp.eq.s32.totalorder %s14, 1
      %p72 = por %p70, %p71
      %p73 = scmp.ne.s32.totalorder %s62, %s63
      %p74 = scmp.eq.s32.totalorder %s14, 0
      %p75 = por %p73, %p74
      %p76 = scmp.ne.s32.totalorder %s62, %s63
      %p77 = scmp.eq.s32.totalorder %s15, 1
      %p78 = por %p76, %p77
      %p80 = scmp.ne.s32.totalorder %s63, %s79
      %p81 = scmp.eq.s32.totalorder %s15, 0
      %p82 = por %p80, %p81
      %s83 = ssub.s32 %s16, %s28
      %p84 = scmp.eq.s32.totalorder %s83, 0
      %s86 = sadd.s32 %s85, 1
      %s87 = scalar_select %p84, %s85, %s86
      %p90 = pneg %p84
      %p91 = scmp.eq.s32.totalorder %s9, 1
      %p92 = por %p90, %p91
      %p93 = scmp.ne.s32.totalorder %s85, %s88
      %p94 = scmp.eq.s32.totalorder %s9, 0
      %p95 = por %p93, %p94
      %p96 = scmp.ne.s32.totalorder %s85, %s88
      %p97 = scmp.eq.s32.totalorder %s14, 1
      %p98 = por %p96, %p97
      %p99 = scmp.ne.s32.totalorder %s88, %s89
      %p100 = scmp.eq.s32.totalorder %s14, 0
      %p101 = por %p99, %p100
      %p102 = scmp.ne.s32.totalorder %s88, %s89
      %p103 = scmp.eq.s32.totalorder %s15, 1
      %p104 = por %p102, %p103
      %p106 = scmp.ne.s32.totalorder %s89, %s105
      %p107 = scmp.eq.s32.totalorder %s15, 0
      %p108 = por %p106, %p107
      %p109 = scmp.le.s32.totalorder 1, %s9
      %p110 = scmp.lt.s32.totalorder %s9, 3
      %p111 = pnand %p109, %p110
      %p112 = pneg %p111
      // Predicated region
      $region9: #{netg_forward.18} parent=5 // pred_check
        _
      $region10: #{netg_forward.18} parent=5 // pred_check_branch
        %114 = sbr.rel (%p111) target = $region12
      $region11: #{netg_forward.18} parent=5 // pred_region
        %s115 = ssub.s32 %s9, 1
      $region12: #{netg_forward.18} parent=5 // pred_fallthru
        _
      %p116 = scmp.lt.s32.totalorder %s9, 2
      // Predicated region
      $region13: #{netg_forward.18} parent=5 // pred_check
        %p117 = pneg %p116
      $region14: #{netg_forward.18} parent=5 // pred_check_branch
        %119 = sbr.rel (%p117) target = $region16
      $region15: #{netg_forward.18} parent=5 // pred_region
        // Predicated region
        $region17: #{netg_forward.18} parent=15 // pred_check
          %p120 = pneg %p43
        $region18: #{netg_forward.18} parent=15 // pred_check_branch
          %122 = sbr.rel (%p120) target = $region20
        $region19: #{netg_forward.18} parent=15 // pred_region
          %s123 = sand.u32 %s33, 1
          %s124 = sand.u32 %s33, 1
          %s125 = smul.addr %s124, 8
          %s126 = scalar_lea.vmem [#allocation2], %s125
          %s127 = smul.u32 2, %s17
          %s128 = smul.addr %s127, 2
          %s129 = sadd.s32 %s16, %s128
          %s130 = smul.addr %s129, 4
          %s131 = scalar_lea.vmem %s0, %s130
          // Predicated region
          $region21: #{netg_forward.18} parent=19 // pred_check
            _
          $region22: #{netg_forward.18} parent=19 // pred_check_branch
            %133 = sbr.rel (0) target = $region24
          $region23: #{netg_forward.18} parent=19 // pred_region
            // Predicated region
            $region25: #{netg_forward.18} parent=23 // pred_check
              _
            $region26: #{netg_forward.18} parent=23 // pred_check_branch
              %135 = sbr.rel target = $region28
            $region27: #{netg_forward.18} parent=23 // pred_region
              // Predicated region
              $region40: #{netg_forward.18} parent=27 // pred_check
                _
              $region41: #{netg_forward.18} parent=27 // pred_check_branch
                %152 = sbr.rel (0) target = $region43
              $region42: #{netg_forward.18} parent=27 // pred_region
                loop: start=0, step=1, limit=1
                $region44: #{netg_forward.18} parent=42 // loop_pre_header
                  _
                $region45: #{netg_forward.18} parent=42 // loop_header
                  %s154 = sphi 0, %s158
                  %p155 = scmp.ge.s32.totalorder %s154, 1
                  %s159 = sphi %s131, %s131
                  %s160 = sphi %s126, %s126
                $region46: #{netg_forward.18} parent=42 // loop_header_branch
                  %157 = sbr.rel (%p155) target = $region50
                $region47: #{netg_forward.18} parent=42 // loop_body
                  _
                $region48: #{netg_forward.18} parent=42 // loop_footer
                  %s158 = sadd.s32 1, %s154
                $region49: #{netg_forward.18} parent=42 // loop_footer_branch
                  %153 = sbr.rel target = $region45
                $region50: #{netg_forward.18} parent=42 // loop_exit
                  _
                loop: start=0, step=1, limit=1
                $region51: #{netg_forward.18} parent=42 // loop_pre_header
                  _
                $region52: #{netg_forward.18} parent=42 // loop_header
                  %s163 = sphi 0, %s167
                  %p164 = scmp.ge.s32.totalorder %s163, 1
                  %s168 = sphi %s131, %s131
                  %s169 = sphi %s126, %s126
                $region53: #{netg_forward.18} parent=42 // loop_header_branch
                  %166 = sbr.rel (%p164) target = $region57
                $region54: #{netg_forward.18} parent=42 // loop_body
                  %v170 = vld [vmem:[%s168] sm:$0xf]
                  %171 = vst [vmem:[%s169] sm:$0xf] %v170
                  %v172 = vld [vmem:[%s168 + $0x8] sm:$0xf]
                  %173 = vst [vmem:[%s169 + $0x4] sm:$0xf] %v172
                $region55: #{netg_forward.18} parent=42 // loop_footer
                  %s167 = sadd.s32 1, %s163
                $region56: #{netg_forward.18} parent=42 // loop_footer_branch
                  %162 = sbr.rel target = $region52
                $region57: #{netg_forward.18} parent=42 // loop_exit
                  _
              $region43: #{netg_forward.18} parent=27 // pred_fallthru
                _
            $region28: #{netg_forward.18} parent=23 // pred_fallthru
              _
            // Predicated region
            $region29: #{netg_forward.18} parent=23 // pred_check
              _
            $region30: #{netg_forward.18} parent=23 // pred_check_branch
              %137 = sbr.rel (0) target = $region32
            $region31: #{netg_forward.18} parent=23 // pred_region
              loop: start=0, step=1, limit=1
              $region33: #{netg_forward.18} parent=31 // loop_pre_header
                _
              $region34: #{netg_forward.18} parent=31 // loop_header
                %s140 = sphi 0, %s144
                %p141 = scmp.ge.s32.totalorder %s140, 1
                %s145 = sphi %s131, %s131
                %s146 = sphi %s126, %s126
              $region35: #{netg_forward.18} parent=31 // loop_header_branch
                %143 = sbr.rel (%p141) target = $region39
              $region36: #{netg_forward.18} parent=31 // loop_body
                %v147 = vld [vmem:[%s145] sm:$0xf]
                %148 = vst [vmem:[%s146] sm:$0xf] %v147
                %v149 = vld [vmem:[%s145 + $0x8] sm:$0xf]
                %150 = vst [vmem:[%s146 + $0x4] sm:$0xf] %v149
              $region37: #{netg_forward.18} parent=31 // loop_footer
                %s144 = sadd.s32 1, %s140
              $region38: #{netg_forward.18} parent=31 // loop_footer_branch
                %139 = sbr.rel target = $region34
              $region39: #{netg_forward.18} parent=31 // loop_exit
                _
            $region32: #{netg_forward.18} parent=23 // pred_fallthru
              _
          $region24: #{netg_forward.18} parent=19 // pred_fallthru
            _
          %174 = vnop
        $region20: #{netg_forward.18} parent=15 // pred_fallthru
          _
      $region16: #{netg_forward.18} parent=5 // pred_fallthru
        _
      %p175 = scmp.le.s32.totalorder 1, %s9
      %p176 = scmp.lt.s32.totalorder %s9, 3
      %p177 = pnand %p175, %p176
      %p178 = pneg %p177
      // Predicated region
      $region58: #{netg_forward.18} parent=5 // pred_check
        _
      $region59: #{netg_forward.18} parent=5 // pred_check_branch
        %180 = sbr.rel (%p177) target = $region61
      $region60: #{netg_forward.18} parent=5 // pred_region
        %s181 = ssub.s32 %s9, 1
        %s182 = sand.u32 %s36, 1
        %s183 = sand.u32 %s36, 1
        %s184 = smul.addr %s183, 8
        %s185 = scalar_lea.vmem [#allocation2], %s184
        // Predicated region
        $region62: #{netg_forward.18} parent=60 // pred_check
          %p186 = pneg %p49
        $region63: #{netg_forward.18} parent=60 // pred_check_branch
          %188 = sbr.rel (%p186) target = $region65
        $region64: #{netg_forward.18} parent=60 // pred_region
          _
        $region65: #{netg_forward.18} parent=60 // pred_fallthru
          _
        %s189 = sand.u32 %s36, 1
        %s190 = sand.u32 %s36, 1
        %s191 = smul.addr %s190, 8
        %s192 = scalar_lea.vmem [#allocation2], %s191
        %p193 = pneg %p49
        %p194 = pneg %p46
        %p195 = pneg %p75
        %p196 = pneg %p72
        %p197 = scmp.lt.s32.totalorder %s18, 1
        %s198 = scalar_select %p197, %s18, 1
        %s199 = scalar_lea.vmem %s1, %s198
        %p200 = pneg %p101
        %p201 = pneg %p98
        %p202 = scmp.lt.s32.totalorder %s18, 1
        %s203 = scalar_select %p202, %s18, 1
        %s204 = scalar_lea.vmem %s2, %s203
        %s205 = smul.u32 2, %s19
        %p206 = scmp.lt.s32.totalorder %s18, 1
        %s207 = scalar_select %p206, %s18, 1
        %s208 = scalar_lea.vmem %s1, %s207
        %p209 = scmp.lt.s32.totalorder %s18, 1
        %s210 = scalar_select %p209, %s18, 1
        %s211 = scalar_lea.vmem %s2, %s210
        %p212 = scmp.eq.s32.totalorder %s19, 0
        // Predicated region
        $region66: #{netg_forward.18} parent=60 // pred_check
          %p213 = pneg %p212
        $region67: #{netg_forward.18} parent=60 // pred_check_branch
          %215 = sbr.rel (%p213) target = $region69
        $region68: #{netg_forward.18} parent=60 // pred_region
          %216 = vst [vmem:[%s208] sm:$0x1] 0.0
          %217 = vst [vmem:[%s211] sm:$0x1] 0.0
        $region69: #{netg_forward.18} parent=60 // pred_fallthru
          _
        %v218 = vld [vmem:[%s185] sm:$0xf]
        %v219 = vld [vmem:[%s185 + $0x4] sm:$0xf]
        %v220 = vunpack.c.l.bf16 %v218
        %v221 = vunpack.c.l.bf16 %v219
        %v222 = vld [vmem:[%s208] sm:$0x1]
        %v223 = vadd.f32 %v220, %v221
        %v224 = vrot.slane %v223, 4
        %v225 = vadd.f32 %v223, %v224
        %v226 = vrot.slane %v225, 2
        %v227 = vadd.f32 %v225, %v226
        %v228 = vrot.slane %v227, 1
        %v229 = vadd.f32 %v227, %v228
        %v230 = vadd.f32 %v222, %v229
        %231 = vst [vmem:[%s208] sm:$0x1] %v230
        %v232 = vld [vmem:[%s211] sm:$0x1]
        %v233 = vmul.f32 %v220, %v220
        %v234 = vmul.f32 %v221, %v221
        %v235 = vadd.f32 %v233, %v234
        %v236 = vrot.slane %v235, 4
        %v237 = vadd.f32 %v235, %v236
        %v238 = vrot.slane %v237, 2
        %v239 = vadd.f32 %v237, %v238
        %v240 = vrot.slane %v239, 1
        %v241 = vadd.f32 %v239, %v240
        %v242 = vadd.f32 %v232, %v241
        %243 = vst [vmem:[%s211] sm:$0x1] %v242
        %p244 = scmp.lt.s32.totalorder %s18, 1
        %s245 = scalar_select %p244, %s18, 1
        %s246 = scalar_lea.vmem %s1, %s245
        %p247 = scmp.lt.s32.totalorder %s18, 1
        %s248 = scalar_select %p247, %s18, 1
        %s249 = scalar_lea.vmem %s2, %s248
        // Predicated region
        $region70: #{netg_forward.18} parent=60 // pred_check
          %p250 = pneg %p72
        $region71: #{netg_forward.18} parent=60 // pred_check_branch
          %252 = sbr.rel (%p250) target = $region73
        $region72: #{netg_forward.18} parent=60 // pred_region
          _
        $region73: #{netg_forward.18} parent=60 // pred_fallthru
          _
        // Predicated region
        $region74: #{netg_forward.18} parent=60 // pred_check
          %p253 = pneg %p98
        $region75: #{netg_forward.18} parent=60 // pred_check_branch
          %255 = sbr.rel (%p253) target = $region77
        $region76: #{netg_forward.18} parent=60 // pred_region
          _
        $region77: #{netg_forward.18} parent=60 // pred_fallthru
          _
      $region61: #{netg_forward.18} parent=5 // pred_fallthru
        _
      %p256 = scmp.le.s32.totalorder 2, %s9
      // Predicated region
      $region78: #{netg_forward.18} parent=5 // pred_check
        %p257 = pneg %p256
      $region79: #{netg_forward.18} parent=5 // pred_check_branch
        %259 = sbr.rel (%p257) target = $region81
      $region80: #{netg_forward.18} parent=5 // pred_region
        %s260 = ssub.s32 %s9, 2
        // Predicated region
        $region82: #{netg_forward.18} parent=80 // pred_check
          %p261 = pneg %p78
        $region83: #{netg_forward.18} parent=80 // pred_check_branch
          %263 = sbr.rel (%p261) target = $region85
        $region84: #{netg_forward.18} parent=80 // pred_region
          %p264 = scmp.lt.s32.totalorder %s20, 1
          %s265 = scalar_select %p264, %s20, 1
          %s266 = scalar_lea.vmem %s1, %s265
        $region85: #{netg_forward.18} parent=80 // pred_fallthru
          _
        // Predicated region
        $region86: #{netg_forward.18} parent=80 // pred_check
          %p267 = pneg %p104
        $region87: #{netg_forward.18} parent=80 // pred_check_branch
          %269 = sbr.rel (%p267) target = $region89
        $region88: #{netg_forward.18} parent=80 // pred_region
          %p270 = scmp.lt.s32.totalorder %s20, 1
          %s271 = scalar_select %p270, %s20, 1
          %s272 = scalar_lea.vmem %s2, %s271
        $region89: #{netg_forward.18} parent=80 // pred_fallthru
          _
      $region81: #{netg_forward.18} parent=5 // pred_fallthru
        _
    $region6: #{netg_forward.18} parent=1 // loop_footer
      %s13 = sadd.s32 1, %s9
    $region7: #{netg_forward.18} parent=1 // loop_footer_branch
      %8 = sbr.rel target = $region3
    $region8: #{netg_forward.18} parent=1 // loop_exit
      _

// kernel: netg_forward.19
$region0: #{netg_forward.19}
  #allocation0 [shape = 'u32[]', space=smem, size = 0x4, offset = 0x4, fixed_abs, tag = 'smem constant byte address 0x4 - core index']
  #allocation1 [shape = 'u32[144,128]{1,0:T(1,128)}', space=vmem, size = 0x12000, scoped, tag = 'internal scratch']
  %s0 = inlined_call_operand.vmem [shape: bf16[16,256], index: 0, kind: input, shape index: {}]
  %s1 = inlined_call_operand.vmem [shape: f32[1,256], index: 1, kind: input, shape index: {}]
  %s2 = inlined_call_operand.vmem [shape: f32[1,256], index: 2, kind: input, shape index: {}]
  %s3 = inlined_call_operand.vmem [shape: bf16[16,256], index: 3, kind: output, shape index: {}]
  %s4 = sld [smem:[#allocation0]]
  $region22: #{netg_forward.19} parent=0
    _
  %s6 = ssub.s32 1, %s4
  %s7 = scalar_select 0, %s6, %s4
  // Predicated region
  $region2: #{netg_forward.19} parent=0 // pred_check
    _
  $region3: #{netg_forward.19} parent=0 // pred_check_branch
    %9 = sbr.rel (0) target = $region5
  $region4: #{netg_forward.19} parent=0 // pred_region
    _
  $region5: #{netg_forward.19} parent=0 // pred_fallthru
    _
  // Predicated region
  $region6: #{netg_forward.19} parent=0 // pred_check
    _
  $region7: #{netg_forward.19} parent=0 // pred_check_branch
    %11 = sbr.rel (0) target = $region9
  $region8: #{netg_forward.19} parent=0 // pred_region
    _
  $region9: #{netg_forward.19} parent=0 // pred_fallthru
    _
  // Predicated region
  $region10: #{netg_forward.19} parent=0 // pred_check
    _
  $region11: #{netg_forward.19} parent=0 // pred_check_branch
    %13 = sbr.rel (0) target = $region13
  $region12: #{netg_forward.19} parent=0 // pred_region
    _
  $region13: #{netg_forward.19} parent=0 // pred_fallthru
    _
  %v14 = vld [vmem:[%s0] sm:$0xff]
  %v15 = vld [vmem:[%s0 + $0x8] sm:$0xff]
  %v16 = vunpack.c.l.bf16 %v14
  %v17 = vunpack.c.h.bf16 %v14
  %v18 = vunpack.c.l.bf16 %v15
  %v19 = vunpack.c.h.bf16 %v15
  %v20 = vld [vmem:[%s1] sm:$0x3]
  %v22 = vlaneseq
  %v23 = vshrl.u32 %v22, 7
  %v24 = vsub.s32 0, %v23
  %v25 = vrot.slane %v20, %v24
  %v26 = vlaneseq
  %v27 = vshrl.u32 %v26, 7
  %v28 = vsub.s32 1, %v27
  %v29 = vrot.slane %v20, %v28
  %v32 = vmul.f32 %v16, %v25
  %v33 = vmul.f32 %v17, %v29
  %v34 = vmul.f32 %v18, %v25
  %v35 = vmul.f32 %v19, %v29
  %v36 = vld [vmem:[%s2] sm:$0x3]
  %v38 = vlaneseq
  %v39 = vshrl.u32 %v38, 7
  %v40 = vsub.s32 0, %v39
  %v41 = vrot.slane %v36, %v40
  %v42 = vlaneseq
  %v43 = vshrl.u32 %v42, 7
  %v44 = vsub.s32 1, %v43
  %v45 = vrot.slane %v36, %v44
  %v48 = vadd.f32 %v32, %v41
  %v49 = vadd.f32 %v33, %v45
  %v50 = vadd.f32 %v34, %v41
  %v51 = vadd.f32 %v35, %v45
  %v52 = vmax.f32 %v48, 0.0
  %v53 = vmax.f32 %v49, 0.0
  %v54 = vmax.f32 %v50, 0.0
  %v55 = vmax.f32 %v51, 0.0
  %v56 = vpack.c.bf16 %v54, %v52
  %v57 = vpack.c.bf16 %v55, %v53
  %v60 = vunpack.c.l.b16 %v56
  %v61 = vunpack.c.l.b16 %v57
  %v62 = vunpack.c.h.b16 %v56
  %v63 = vunpack.c.h.b16 %v57
  %v64 = vpack.c.b16 %v61, %v60
  %v65 = vpack.c.b16 %v63, %v62
  %68 = vst [vmem:[%s3] sm:$0xff] %v64
  %69 = vst [vmem:[%s3 + $0x8] sm:$0xff] %v65
  // Predicated region
  $region14: #{netg_forward.19} parent=0 // pred_check
    _
  $region15: #{netg_forward.19} parent=0 // pred_check_branch
    %71 = sbr.rel (0) target = $region17
  $region16: #{netg_forward.19} parent=0 // pred_region
    _
  $region17: #{netg_forward.19} parent=0 // pred_fallthru
    _
  // Predicated region
  $region18: #{netg_forward.19} parent=0 // pred_check
    _
  $region19: #{netg_forward.19} parent=0 // pred_check_branch
    %73 = sbr.rel (0) target = $region21
  $region20: #{netg_forward.19} parent=0 // pred_region
    _
  $region21: #{netg_forward.19} parent=0 // pred_fallthru
    _

// kernel: netg_forward.20
$region0: #{netg_forward.20}
  #allocation0 [shape = 'u32[]', space=smem, size = 0x4, offset = 0x4, fixed_abs, tag = 'smem constant byte address 0x4 - core index']
  #allocation1 [shape = 'u32[144,128]{1,0:T(1,128)}', space=vmem, size = 0x12000, scoped, tag = 'internal scratch']
  %s0 = inlined_call_operand.vmem [shape: bf16[128,32], index: 0, kind: input, shape index: {}]
  %s1 = inlined_call_operand.vmem [shape: bf16[32,256], index: 1, kind: input, shape index: {}]
  %s2 = inlined_call_operand.vmem [shape: bf16[128,256], index: 2, kind: output, shape index: {}]
  %s3 = sld [smem:[#allocation0]]
  $region18: #{netg_forward.20} parent=0
    _
  %s5 = ssub.s32 1, %s3
  %s6 = scalar_select 0, %s5, %s3
  // Predicated region
  $region2: #{netg_forward.20} parent=0 // pred_check
    _
  $region3: #{netg_forward.20} parent=0 // pred_check_branch
    %8 = sbr.rel (0) target = $region5
  $region4: #{netg_forward.20} parent=0 // pred_region
    _
  $region5: #{netg_forward.20} parent=0 // pred_fallthru
    _
  // Predicated region
  $region6: #{netg_forward.20} parent=0 // pred_check
    _
  $region7: #{netg_forward.20} parent=0 // pred_check_branch
    %10 = sbr.rel (0) target = $region9
  $region8: #{netg_forward.20} parent=0 // pred_region
    _
  $region9: #{netg_forward.20} parent=0 // pred_fallthru
    _
  %v12 = vld [vmem:[%s0] sm:$0xf]
  %v13 = vld [vmem:[%s0 + $0x4] sm:$0xf]
  %v14 = vld [vmem:[%s0 + $0x8] sm:$0xf]
  %v15 = vld [vmem:[%s0 + $0xc] sm:$0xf]
  %v16 = vld [vmem:[%s0 + $0x10] sm:$0xf]
  %v17 = vld [vmem:[%s0 + $0x14] sm:$0xf]
  %v18 = vld [vmem:[%s0 + $0x18] sm:$0xf]
  %v19 = vld [vmem:[%s0 + $0x1c] sm:$0xf]
  %v20 = vld [vmem:[%s0 + $0x20] sm:$0xf]
  %v21 = vld [vmem:[%s0 + $0x24] sm:$0xf]
  %v22 = vld [vmem:[%s0 + $0x28] sm:$0xf]
  %v23 = vld [vmem:[%s0 + $0x2c] sm:$0xf]
  %v24 = vld [vmem:[%s0 + $0x30] sm:$0xf]
  %v25 = vld [vmem:[%s0 + $0x34] sm:$0xf]
  %v26 = vld [vmem:[%s0 + $0x38] sm:$0xf]
  %v27 = vld [vmem:[%s0 + $0x3c] sm:$0xf]
  %v28 = vld [vmem:[%s1] sm:$0xff]
  %v29 = vld [vmem:[%s1 + $0x8] sm:$0xff]
  %v30 = vld [vmem:[%s1 + $0x10] sm:$0xff]
  %v31 = vld [vmem:[%s1 + $0x18] sm:$0xff]
  %v48 = vunpack.c.l.b16 %v12
  %v49 = vunpack.c.l.b16 %v13
  %v50 = vunpack.c.l.b16 %v14
  %v51 = vunpack.c.l.b16 %v15
  %v52 = vunpack.c.l.b16 %v16
  %v53 = vunpack.c.l.b16 %v17
  %v54 = vunpack.c.l.b16 %v18
  %v55 = vunpack.c.l.b16 %v19
  %v56 = vunpack.c.l.b16 %v20
  %v57 = vunpack.c.l.b16 %v21
  %v58 = vunpack.c.l.b16 %v22
  %v59 = vunpack.c.l.b16 %v23
  %v60 = vunpack.c.l.b16 %v24
  %v61 = vunpack.c.l.b16 %v25
  %v62 = vunpack.c.l.b16 %v26
  %v63 = vunpack.c.l.b16 %v27
  %v64 = vpack.c.b16 %v49, %v48
  %v65 = vpack.c.b16 %v51, %v50
  %v66 = vpack.c.b16 %v53, %v52
  %v67 = vpack.c.b16 %v55, %v54
  %v68 = vpack.c.b16 %v57, %v56
  %v69 = vpack.c.b16 %v59, %v58
  %v70 = vpack.c.b16 %v61, %v60
  %v71 = vpack.c.b16 %v63, %v62
  %v76 = vunpack.c.l.b16 %v28
  %v77 = vunpack.c.h.b16 %v28
  %v78 = vunpack.c.l.b16 %v29
  %v79 = vunpack.c.h.b16 %v29
  %v80 = vunpack.c.l.b16 %v30
  %v81 = vunpack.c.h.b16 %v30
  %v82 = vunpack.c.l.b16 %v31
  %v83 = vunpack.c.h.b16 %v31
  %v84 = vpack.c.b16 %v78, %v76
  %v85 = vpack.c.b16 %v79, %v77
  %v86 = vpack.c.b16 %v82, %v80
  %v87 = vpack.c.b16 %v83, %v81
  %vm92 = vcmask 261120
  %v94 = vsel %vm92, %v64, 0
  %v97 = vsel %vm92, %v65, 0
  %v100 = vsel %vm92, %v66, 0
  %v103 = vsel %vm92, %v67, 0
  %v106 = vsel %vm92, %v68, 0
  %v109 = vsel %vm92, %v69, 0
  %v112 = vsel %vm92, %v70, 0
  %v115 = vsel %vm92, %v71, 0
  %117 = vmatprep.subr.bf16.mxu0 %v85
  %118 = vmatpush1.bf16.msra.mxu0 %v84
  %119 = vmatprep.subr.bf16.mxu0 %v87
  %120 = vmatpush1.bf16.msra.mxu0 %v86
  %121 = vmatprep.subr.bf16.mxu0 0
  %122 = vmatpush1.bf16.msra.mxu0 0
  %123 = vmatprep.subr.bf16.mxu0 0
  %124 = vmatpush1.bf16.msra.mxu0 0
  %125 = vmatprep.subr.bf16.mxu0 0
  %126 = vmatpush1.bf16.msra.mxu0 0
  %127 = vmatprep.subr.bf16.mxu0 0
  %128 = vmatpush1.bf16.msra.mxu0 0
  %129 = vmatprep.subr.bf16.mxu0 0
  %130 = vmatpush1.bf16.msra.mxu0 0
  %131 = vmatprep.subr.bf16.mxu0 0
  %132 = vmatpush1.bf16.msra.mxu0 0
  %133 = vmatprep.subr.bf16.mxu0 0
  %134 = vmatpush1.bf16.msra.mxu0 0
  %135 = vmatprep.subr.bf16.mxu0 0
  %136 = vmatpush1.bf16.msra.mxu0 0
  %137 = vmatprep.subr.bf16.mxu0 0
  %138 = vmatpush1.bf16.msra.mxu0 0
  %139 = vmatprep.subr.bf16.mxu0 0
  %140 = vmatpush1.bf16.msra.mxu0 0
  %141 = vmatprep.subr.bf16.mxu0 0
  %142 = vmatpush1.bf16.msra.mxu0 0
  %143 = vmatprep.subr.bf16.mxu0 0
  %144 = vmatpush1.bf16.msra.mxu0 0
  %145 = vmatprep.subr.bf16.mxu0 0
  %146 = vmatpush1.bf16.msra.mxu0 0
  %147 = vmatprep.subr.bf16.mxu0 0
  %148 = vmatpush1.bf16.msra.mxu0 0
  %149 = vmatprep.mubr.bf16.mxu0 0
  %150 = vmatmul.mubr.bf16.gmra.mrb[0].mxu0 %v94
  %v151 = vpop.f32.mrb[0].mxu0
  %v152 = vadd.f32 0.0, %v151
  %v153 = vpop.f32.mrb[0].mxu0
  %v154 = vadd.f32 0.0, %v153
  %v155 = vpop.f32.mrb[0].mxu0
  %v156 = vadd.f32 0.0, %v155
  %v157 = vpop.f32.mrb[0].mxu0
  %v158 = vadd.f32 0.0, %v157
  %159 = vmatprep.mubr.bf16.mxu0 0
  %160 = vmatmul.mubr.bf16.gmra.mrb[0].mxu0 %v97
  %v161 = vpop.f32.mrb[0].mxu0
  %v162 = vadd.f32 0.0, %v161
  %v163 = vpop.f32.mrb[0].mxu0
  %v164 = vadd.f32 0.0, %v163
  %v165 = vpop.f32.mrb[0].mxu0
  %v166 = vadd.f32 0.0, %v165
  %v167 = vpop.f32.mrb[0].mxu0
  %v168 = vadd.f32 0.0, %v167
  %169 = vmatprep.mubr.bf16.mxu0 0
  %170 = vmatmul.mubr.bf16.gmra.mrb[0].mxu0 %v100
  %v171 = vpop.f32.mrb[0].mxu0
  %v172 = vadd.f32 0.0, %v171
  %v173 = vpop.f32.mrb[0].mxu0
  %v174 = vadd.f32 0.0, %v173
  %v175 = vpop.f32.mrb[0].mxu0
  %v176 = vadd.f32 0.0, %v175
  %v177 = vpop.f32.mrb[0].mxu0
  %v178 = vadd.f32 0.0, %v177
  %179 = vmatprep.mubr.bf16.mxu0 0
  %180 = vmatmul.mubr.bf16.gmra.mrb[0].mxu0 %v103
  %v181 = vpop.f32.mrb[0].mxu0
  %v182 = vadd.f32 0.0, %v181
  %v183 = vpop.f32.mrb[0].mxu0
  %v184 = vadd.f32 0.0, %v183
  %v185 = vpop.f32.mrb[0].mxu0
  %v186 = vadd.f32 0.0, %v185
  %v187 = vpop.f32.mrb[0].mxu0
  %v188 = vadd.f32 0.0, %v187
  %189 = vmatprep.mubr.bf16.mxu0 0
  %190 = vmatmul.mubr.bf16.gmra.mrb[0].mxu0 %v106
  %v191 = vpop.f32.mrb[0].mxu0
  %v192 = vadd.f32 0.0, %v191
  %v193 = vpop.f32.mrb[0].mxu0
  %v194 = vadd.f32 0.0, %v193
  %v195 = vpop.f32.mrb[0].mxu0
  %v196 = vadd.f32 0.0, %v195
  %v197 = vpop.f32.mrb[0].mxu0
  %v198 = vadd.f32 0.0, %v197
  %199 = vmatprep.mubr.bf16.mxu0 0
  %200 = vmatmul.mubr.bf16.gmra.mrb[0].mxu0 %v109
  %v201 = vpop.f32.mrb[0].mxu0
  %v202 = vadd.f32 0.0, %v201
  %v203 = vpop.f32.mrb[0].mxu0
  %v204 = vadd.f32 0.0, %v203
  %v205 = vpop.f32.mrb[0].mxu0
  %v206 = vadd.f32 0.0, %v205
  %v207 = vpop.f32.mrb[0].mxu0
  %v208 = vadd.f32 0.0, %v207
  %209 = vmatprep.mubr.bf16.mxu0 0
  %210 = vmatmul.mubr.bf16.gmra.mrb[0].mxu0 %v112
  %v211 = vpop.f32.mrb[0].mxu0
  %v212 = vadd.f32 0.0, %v211
  %v213 = vpop.f32.mrb[0].mxu0
  %v214 = vadd.f32 0.0, %v213
  %v215 = vpop.f32.mrb[0].mxu0
  %v216 = vadd.f32 0.0, %v215
  %v217 = vpop.f32.mrb[0].mxu0
  %v218 = vadd.f32 0.0, %v217
  %219 = vmatprep.mubr.bf16.mxu0 0
  %220 = vmatmul.mubr.bf16.gmra.mrb[0].mxu0 %v115
  %v221 = vpop.f32.mrb[0].mxu0
  %v222 = vadd.f32 0.0, %v221
  %v223 = vpop.f32.mrb[0].mxu0
  %v224 = vadd.f32 0.0, %v223
  %v225 = vpop.f32.mrb[0].mxu0
  %v226 = vadd.f32 0.0, %v225
  %v227 = vpop.f32.mrb[0].mxu0
  %v228 = vadd.f32 0.0, %v227
  %229 = vdwg.mxu0
  %v230 = vpack.c.bf16 %v156, %v152
  %v231 = vpack.c.bf16 %v158, %v154
  %v232 = vpack.c.bf16 %v166, %v162
  %v233 = vpack.c.bf16 %v168, %v164
  %v234 = vpack.c.bf16 %v176, %v172
  %v235 = vpack.c.bf16 %v178, %v174
  %v236 = vpack.c.bf16 %v186, %v182
  %v237 = vpack.c.bf16 %v188, %v184
  %v238 = vpack.c.bf16 %v196, %v192
  %v239 = vpack.c.bf16 %v198, %v194
  %v240 = vpack.c.bf16 %v206, %v202
  %v241 = vpack.c.bf16 %v208, %v204
  %v242 = vpack.c.bf16 %v216, %v212
  %v243 = vpack.c.bf16 %v218, %v214
  %v244 = vpack.c.bf16 %v226, %v222
  %v245 = vpack.c.bf16 %v228, %v224
  %v262 = vunpack.c.l.b16 %v230
  %v263 = vunpack.c.l.b16 %v231
  %v264 = vunpack.c.h.b16 %v230
  %v265 = vunpack.c.h.b16 %v231
  %v266 = vunpack.c.l.b16 %v232
  %v267 = vunpack.c.l.b16 %v233
  %v268 = vunpack.c.h.b16 %v232
  %v269 = vunpack.c.h.b16 %v233
  %v270 = vunpack.c.l.b16 %v234
  %v271 = vunpack.c.l.b16 %v235
  %v272 = vunpack.c.h.b16 %v234
  %v273 = vunpack.c.h.b16 %v235
  %v274 = vunpack.c.l.b16 %v236
  %v275 = vunpack.c.l.b16 %v237
  %v276 = vunpack.c.h.b16 %v236
  %v277 = vunpack.c.h.b16 %v237
  %v278 = vunpack.c.l.b16 %v238
  %v279 = vunpack.c.l.b16 %v239
  %v280 = vunpack.c.h.b16 %v238
  %v281 = vunpack.c.h.b16 %v239
  %v282 = vunpack.c.l.b16 %v240
  %v283 = vunpack.c.l.b16 %v241
  %v284 = vunpack.c.h.b16 %v240
  %v285 = vunpack.c.h.b16 %v241
  %v286 = vunpack.c.l.b16 %v242
  %v287 = vunpack.c.l.b16 %v243
  %v288 = vunpack.c.h.b16 %v242
  %v289 = vunpack.c.h.b16 %v243
  %v290 = vunpack.c.l.b16 %v244
  %v291 = vunpack.c.l.b16 %v245
  %v292 = vunpack.c.h.b16 %v244
  %v293 = vunpack.c.h.b16 %v245
  %v294 = vpack.c.b16 %v263, %v262
  %v295 = vpack.c.b16 %v265, %v264
  %v296 = vpack.c.b16 %v267, %v266
  %v297 = vpack.c.b16 %v269, %v268
  %v298 = vpack.c.b16 %v271, %v270
  %v299 = vpack.c.b16 %v273, %v272
  %v300 = vpack.c.b16 %v275, %v274
  %v301 = vpack.c.b16 %v277, %v276
  %v302 = vpack.c.b16 %v279, %v278
  %v303 = vpack.c.b16 %v281, %v280
  %v304 = vpack.c.b16 %v283, %v282
  %v305 = vpack.c.b16 %v285, %v284
  %v306 = vpack.c.b16 %v287, %v286
  %v307 = vpack.c.b16 %v289, %v288
  %v308 = vpack.c.b16 %v291, %v290
  %v309 = vpack.c.b16 %v293, %v292
  %326 = vst [vmem:[%s2] sm:$0xff] %v294
  %327 = vst [vmem:[%s2 + $0x8] sm:$0xff] %v295
  %328 = vst [vmem:[%s2 + $0x10] sm:$0xff] %v296
  %329 = vst [vmem:[%s2 + $0x18] sm:$0xff] %v297
  %330 = vst [vmem:[%s2 + $0x20] sm:$0xff] %v298
  %331 = vst [vmem:[%s2 + $0x28] sm:$0xff] %v299
  %332 = vst [vmem:[%s2 + $0x30] sm:$0xff] %v300
  %333 = vst [vmem:[%s2 + $0x38] sm:$0xff] %v301
  %334 = vst [vmem:[%s2 + $0x40] sm:$0xff] %v302
  %335 = vst [vmem:[%s2 + $0x48] sm:$0xff] %v303
  %336 = vst [vmem:[%s2 + $0x50] sm:$0xff] %v304
  %337 = vst [vmem:[%s2 + $0x58] sm:$0xff] %v305
  %338 = vst [vmem:[%s2 + $0x60] sm:$0xff] %v306
  %339 = vst [vmem:[%s2 + $0x68] sm:$0xff] %v307
  %340 = vst [vmem:[%s2 + $0x70] sm:$0xff] %v308
  %341 = vst [vmem:[%s2 + $0x78] sm:$0xff] %v309
  // Predicated region
  $region10: #{netg_forward.20} parent=0 // pred_check
    _
  $region11: #{netg_forward.20} parent=0 // pred_check_branch
    %343 = sbr.rel (0) target = $region13
  $region12: #{netg_forward.20} parent=0 // pred_region
    _
  $region13: #{netg_forward.20} parent=0 // pred_fallthru
    _
  // Predicated region
  $region14: #{netg_forward.20} parent=0 // pred_check
    _
  $region15: #{netg_forward.20} parent=0 // pred_check_branch
    %345 = sbr.rel (0) target = $region17
  $region16: #{netg_forward.20} parent=0 // pred_region
    _
  $region17: #{netg_forward.20} parent=0 // pred_fallthru
    _

// kernel: netg_forward.21
$region0: #{netg_forward.21}
  #allocation0 [shape = 'u32[]', space=smem, size = 0x4, offset = 0x4, fixed_abs, tag = 'smem constant byte address 0x4 - core index']
  #allocation1 [shape = 'u32[144,128]{1,0:T(1,128)}', space=vmem, size = 0x12000, scoped, tag = 'internal scratch']
  %s0 = inlined_call_operand.vmem [shape: bf16[32,256], index: 0, kind: input, shape index: {}]
  %s1 = inlined_call_operand.vmem [shape: f32[1,256], index: 1, kind: output, shape index: {0}]
  %s2 = inlined_call_operand.vmem [shape: f32[1,256], index: 2, kind: output, shape index: {1}]
  %3 = xla_tuple %s1, %s2
  %s4 = sld [smem:[#allocation0]]
  $region90: #{netg_forward.21} parent=0
    _
  %s6 = ssub.s32 1, %s4
  %s7 = scalar_select 0, %s6, %s4
  $region1: #{netg_forward.21} parent=0
    #allocation2 [shape = 'u8[16384]{0}', space=vmem, size = 0x4000, scoped, tag = 'input window, operand 0']
    loop: start=0, step=1, limit=4
    $region2: #{netg_forward.21} parent=1 // loop_pre_header
      _
    $region3: #{netg_forward.21} parent=1 // loop_header
      %s9 = sphi 0, %s13
      %p10 = scmp.ge.s32.totalorder %s9, 4
      %s16 = sphi 0, %s28
      %s17 = sphi 0, %s24
      %s18 = sphi 0, %s16
      %s19 = sphi 0, %s17
      %s20 = sphi 0, %s18
      %s21 = sphi 0, %s19
      %s33 = sphi 0, %s35
      %s36 = sphi 0, %s33
      %s37 = sphi 0, %s36
      %s53 = sphi 0, %s37
      %s59 = sphi 0, %s61
      %s62 = sphi 0, %s59
      %s63 = sphi 0, %s62
      %s79 = sphi 0, %s63
      %s85 = sphi 0, %s87
      %s88 = sphi 0, %s85
      %s89 = sphi 0, %s88
      %s105 = sphi 0, %s89
    $region4: #{netg_forward.21} parent=1 // loop_header_branch
      %12 = sbr.rel (%p10) target = $region8
    $region5: #{netg_forward.21} parent=1 // loop_body
      %s14 = ssub.s32 %s9, 1
      %s15 = ssub.s32 %s9, 2
      %s22 = sadd.s32 1, %s17
      %p23 = scmp.ge.s32.totalorder %s22, 1
      %s24 = scalar_select %p23, 0, %s22
      %s25 = sadd.s32 1, %s16
      %s26 = scalar_select %p23, %s25, %s16
      %p27 = scmp.ge.s32.totalorder %s26, 2
      %s28 = scalar_select %p27, 0, %s26
      %s29 = ssub.s32 %s17, %s24
      %s30 = ssub.s32 %s16, %s28
      %s31 = sor.u32 %s29, %s30
      %p32 = scmp.eq.s32.totalorder %s31, 0
      %s34 = sadd.s32 %s33, 1
      %s35 = scalar_select %p32, %s33, %s34
      %p38 = pneg %p32
      %p39 = scmp.eq.s32.totalorder %s9, 1
      %p40 = por %p38, %p39
      %p41 = scmp.ne.s32.totalorder %s33, %s36
      %p42 = scmp.eq.s32.totalorder %s9, 0
      %p43 = por %p41, %p42
      %p44 = scmp.ne.s32.totalorder %s33, %s36
      %p45 = scmp.eq.s32.totalorder %s14, 1
      %p46 = por %p44, %p45
      %p47 = scmp.ne.s32.totalorder %s36, %s37
      %p48 = scmp.eq.s32.totalorder %s14, 0
      %p49 = por %p47, %p48
      %p50 = scmp.ne.s32.totalorder %s36, %s37
      %p51 = scmp.eq.s32.totalorder %s15, 1
      %p52 = por %p50, %p51
      %p54 = scmp.ne.s32.totalorder %s37, %s53
      %p55 = scmp.eq.s32.totalorder %s15, 0
      %p56 = por %p54, %p55
      %s57 = ssub.s32 %s16, %s28
      %p58 = scmp.eq.s32.totalorder %s57, 0
      %s60 = sadd.s32 %s59, 1
      %s61 = scalar_select %p58, %s59, %s60
      %p64 = pneg %p58
      %p65 = scmp.eq.s32.totalorder %s9, 1
      %p66 = por %p64, %p65
      %p67 = scmp.ne.s32.totalorder %s59, %s62
      %p68 = scmp.eq.s32.totalorder %s9, 0
      %p69 = por %p67, %p68
      %p70 = scmp.ne.s32.totalorder %s59, %s62
      %p71 = scmp.eq.s32.totalorder %s14, 1
      %p72 = por %p70, %p71
      %p73 = scmp.ne.s32.totalorder %s62, %s63
      %p74 = scmp.eq.s32.totalorder %s14, 0
      %p75 = por %p73, %p74
      %p76 = scmp.ne.s32.totalorder %s62, %s63
      %p77 = scmp.eq.s32.totalorder %s15, 1
      %p78 = por %p76, %p77
      %p80 = scmp.ne.s32.totalorder %s63, %s79
      %p81 = scmp.eq.s32.totalorder %s15, 0
      %p82 = por %p80, %p81
      %s83 = ssub.s32 %s16, %s28
      %p84 = scmp.eq.s32.totalorder %s83, 0
      %s86 = sadd.s32 %s85, 1
      %s87 = scalar_select %p84, %s85, %s86
      %p90 = pneg %p84
      %p91 = scmp.eq.s32.totalorder %s9, 1
      %p92 = por %p90, %p91
      %p93 = scmp.ne.s32.totalorder %s85, %s88
      %p94 = scmp.eq.s32.totalorder %s9, 0
      %p95 = por %p93, %p94
      %p96 = scmp.ne.s32.totalorder %s85, %s88
      %p97 = scmp.eq.s32.totalorder %s14, 1
      %p98 = por %p96, %p97
      %p99 = scmp.ne.s32.totalorder %s88, %s89
      %p100 = scmp.eq.s32.totalorder %s14, 0
      %p101 = por %p99, %p100
      %p102 = scmp.ne.s32.totalorder %s88, %s89
      %p103 = scmp.eq.s32.totalorder %s15, 1
      %p104 = por %p102, %p103
      %p106 = scmp.ne.s32.totalorder %s89, %s105
      %p107 = scmp.eq.s32.totalorder %s15, 0
      %p108 = por %p106, %p107
      %p109 = scmp.le.s32.totalorder 1, %s9
      %p110 = scmp.lt.s32.totalorder %s9, 3
      %p111 = pnand %p109, %p110
      %p112 = pneg %p111
      // Predicated region
      $region9: #{netg_forward.21} parent=5 // pred_check
        _
      $region10: #{netg_forward.21} parent=5 // pred_check_branch
        %114 = sbr.rel (%p111) target = $region12
      $region11: #{netg_forward.21} parent=5 // pred_region
        %s115 = ssub.s32 %s9, 1
      $region12: #{netg_forward.21} parent=5 // pred_fallthru
        _
      %p116 = scmp.lt.s32.totalorder %s9, 2
      // Predicated region
      $region13: #{netg_forward.21} parent=5 // pred_check
        %p117 = pneg %p116
      $region14: #{netg_forward.21} parent=5 // pred_check_branch
        %119 = sbr.rel (%p117) target = $region16
      $region15: #{netg_forward.21} parent=5 // pred_region
        // Predicated region
        $region17: #{netg_forward.21} parent=15 // pred_check
          %p120 = pneg %p43
        $region18: #{netg_forward.21} parent=15 // pred_check_branch
          %122 = sbr.rel (%p120) target = $region20
        $region19: #{netg_forward.21} parent=15 // pred_region
          %s123 = sand.u32 %s33, 1
          %s124 = sand.u32 %s33, 1
          %s125 = smul.addr %s124, 16
          %s126 = scalar_lea.vmem [#allocation2], %s125
          %s127 = smul.u32 4, %s17
          %s128 = smul.addr %s127, 2
          %s129 = sadd.s32 %s16, %s128
          %s130 = smul.addr %s129, 4
          %s131 = scalar_lea.vmem %s0, %s130
          // Predicated region
          $region21: #{netg_forward.21} parent=19 // pred_check
            _
          $region22: #{netg_forward.21} parent=19 // pred_check_branch
            %133 = sbr.rel (0) target = $region24
          $region23: #{netg_forward.21} parent=19 // pred_region
            // Predicated region
            $region25: #{netg_forward.21} parent=23 // pred_check
              _
            $region26: #{netg_forward.21} parent=23 // pred_check_branch
              %135 = sbr.rel target = $region28
            $region27: #{netg_forward.21} parent=23 // pred_region
              // Predicated region
              $region40: #{netg_forward.21} parent=27 // pred_check
                _
              $region41: #{netg_forward.21} parent=27 // pred_check_branch
                %156 = sbr.rel (0) target = $region43
              $region42: #{netg_forward.21} parent=27 // pred_region
                loop: start=0, step=1, limit=1
                $region44: #{netg_forward.21} parent=42 // loop_pre_header
                  _
                $region45: #{netg_forward.21} parent=42 // loop_header
                  %s158 = sphi 0, %s162
                  %p159 = scmp.ge.s32.totalorder %s158, 1
                  %s163 = sphi %s131, %s131
                  %s164 = sphi %s126, %s126
                $region46: #{netg_forward.21} parent=42 // loop_header_branch
                  %161 = sbr.rel (%p159) target = $region50
                $region47: #{netg_forward.21} parent=42 // loop_body
                  _
                $region48: #{netg_forward.21} parent=42 // loop_footer
                  %s162 = sadd.s32 1, %s158
                $region49: #{netg_forward.21} parent=42 // loop_footer_branch
                  %157 = sbr.rel target = $region45
                $region50: #{netg_forward.21} parent=42 // loop_exit
                  _
                loop: start=0, step=1, limit=1
                $region51: #{netg_forward.21} parent=42 // loop_pre_header
                  _
                $region52: #{netg_forward.21} parent=42 // loop_header
                  %s167 = sphi 0, %s171
                  %p168 = scmp.ge.s32.totalorder %s167, 1
                  %s172 = sphi %s131, %s131
                  %s173 = sphi %s126, %s126
                $region53: #{netg_forward.21} parent=42 // loop_header_branch
                  %170 = sbr.rel (%p168) target = $region57
                $region54: #{netg_forward.21} parent=42 // loop_body
                  %v174 = vld [vmem:[%s172] sm:$0xf]
                  %175 = vst [vmem:[%s173] sm:$0xf] %v174
                  %v176 = vld [vmem:[%s172 + $0x8] sm:$0xf]
                  %177 = vst [vmem:[%s173 + $0x4] sm:$0xf] %v176
                  %v178 = vld [vmem:[%s172 + $0x10] sm:$0xf]
                  %179 = vst [vmem:[%s173 + $0x8] sm:$0xf] %v178
                  %v180 = vld [vmem:[%s172 + $0x18] sm:$0xf]
                  %181 = vst [vmem:[%s173 + $0xc] sm:$0xf] %v180
                $region55: #{netg_forward.21} parent=42 // loop_footer
                  %s171 = sadd.s32 1, %s167
                $region56: #{netg_forward.21} parent=42 // loop_footer_branch
                  %166 = sbr.rel target = $region52
                $region57: #{netg_forward.21} parent=42 // loop_exit
                  _
              $region43: #{netg_forward.21} parent=27 // pred_fallthru
                _
            $region28: #{netg_forward.21} parent=23 // pred_fallthru
              _
            // Predicated region
            $region29: #{netg_forward.21} parent=23 // pred_check
              _
            $region30: #{netg_forward.21} parent=23 // pred_check_branch
              %137 = sbr.rel (0) target = $region32
            $region31: #{netg_forward.21} parent=23 // pred_region
              loop: start=0, step=1, limit=1
              $region33: #{netg_forward.21} parent=31 // loop_pre_header
                _
              $region34: #{netg_forward.21} parent=31 // loop_header
                %s140 = sphi 0, %s144
                %p141 = scmp.ge.s32.totalorder %s140, 1
                %s145 = sphi %s131, %s131
                %s146 = sphi %s126, %s126
              $region35: #{netg_forward.21} parent=31 // loop_header_branch
                %143 = sbr.rel (%p141) target = $region39
              $region36: #{netg_forward.21} parent=31 // loop_body
                %v147 = vld [vmem:[%s145] sm:$0xf]
                %148 = vst [vmem:[%s146] sm:$0xf] %v147
                %v149 = vld [vmem:[%s145 + $0x8] sm:$0xf]
                %150 = vst [vmem:[%s146 + $0x4] sm:$0xf] %v149
                %v151 = vld [vmem:[%s145 + $0x10] sm:$0xf]
                %152 = vst [vmem:[%s146 + $0x8] sm:$0xf] %v151
                %v153 = vld [vmem:[%s145 + $0x18] sm:$0xf]
                %154 = vst [vmem:[%s146 + $0xc] sm:$0xf] %v153
              $region37: #{netg_forward.21} parent=31 // loop_footer
                %s144 = sadd.s32 1, %s140
              $region38: #{netg_forward.21} parent=31 // loop_footer_branch
                %139 = sbr.rel target = $region34
              $region39: #{netg_forward.21} parent=31 // loop_exit
                _
            $region32: #{netg_forward.21} parent=23 // pred_fallthru
              _
          $region24: #{netg_forward.21} parent=19 // pred_fallthru
            _
          %182 = vnop
        $region20: #{netg_forward.21} parent=15 // pred_fallthru
          _
      $region16: #{netg_forward.21} parent=5 // pred_fallthru
        _
      %p183 = scmp.le.s32.totalorder 1, %s9
      %p184 = scmp.lt.s32.totalorder %s9, 3
      %p185 = pnand %p183, %p184
      %p186 = pneg %p185
      // Predicated region
      $region58: #{netg_forward.21} parent=5 // pred_check
        _
      $region59: #{netg_forward.21} parent=5 // pred_check_branch
        %188 = sbr.rel (%p185) target = $region61
      $region60: #{netg_forward.21} parent=5 // pred_region
        %s189 = ssub.s32 %s9, 1
        %s190 = sand.u32 %s36, 1
        %s191 = sand.u32 %s36, 1
        %s192 = smul.addr %s191, 16
        %s193 = scalar_lea.vmem [#allocation2], %s192
        // Predicated region
        $region62: #{netg_forward.21} parent=60 // pred_check
          %p194 = pneg %p49
        $region63: #{netg_forward.21} parent=60 // pred_check_branch
          %196 = sbr.rel (%p194) target = $region65
        $region64: #{netg_forward.21} parent=60 // pred_region
          _
        $region65: #{netg_forward.21} parent=60 // pred_fallthru
          _
        %s197 = sand.u32 %s36, 1
        %s198 = sand.u32 %s36, 1
        %s199 = smul.addr %s198, 16
        %s200 = scalar_lea.vmem [#allocation2], %s199
        %p201 = pneg %p49
        %p202 = pneg %p46
        %p203 = pneg %p75
        %p204 = pneg %p72
        %p205 = scmp.lt.s32.totalorder %s18, 1
        %s206 = scalar_select %p205, %s18, 1
        %s207 = scalar_lea.vmem %s1, %s206
        %p208 = pneg %p101
        %p209 = pneg %p98
        %p210 = scmp.lt.s32.totalorder %s18, 1
        %s211 = scalar_select %p210, %s18, 1
        %s212 = scalar_lea.vmem %s2, %s211
        %s213 = smul.u32 4, %s19
        %p214 = scmp.lt.s32.totalorder %s18, 1
        %s215 = scalar_select %p214, %s18, 1
        %s216 = scalar_lea.vmem %s1, %s215
        %p217 = scmp.lt.s32.totalorder %s18, 1
        %s218 = scalar_select %p217, %s18, 1
        %s219 = scalar_lea.vmem %s2, %s218
        %p220 = scmp.eq.s32.totalorder %s19, 0
        // Predicated region
        $region66: #{netg_forward.21} parent=60 // pred_check
          %p221 = pneg %p220
        $region67: #{netg_forward.21} parent=60 // pred_check_branch
          %223 = sbr.rel (%p221) target = $region69
        $region68: #{netg_forward.21} parent=60 // pred_region
          %224 = vst [vmem:[%s216] sm:$0x1] 0.0
          %225 = vst [vmem:[%s219] sm:$0x1] 0.0
        $region69: #{netg_forward.21} parent=60 // pred_fallthru
          _
        %v226 = vld [vmem:[%s193] sm:$0xf]
        %v227 = vld [vmem:[%s193 + $0x4] sm:$0xf]
        %v228 = vld [vmem:[%s193 + $0x8] sm:$0xf]
        %v229 = vld [vmem:[%s193 + $0xc] sm:$0xf]
        %v230 = vunpack.c.l.bf16 %v226
        %v231 = vunpack.c.l.bf16 %v227
        %v232 = vunpack.c.l.bf16 %v228
        %v233 = vunpack.c.l.bf16 %v229
        %v234 = vld [vmem:[%s216] sm:$0x1]
        %v235 = vadd.f32 %v230, %v231
        %v236 = vadd.f32 %v235, %v232
        %v237 = vadd.f32 %v236, %v233
        %v238 = vrot.slane %v237, 4
        %v239 = vadd.f32 %v237, %v238
        %v240 = vrot.slane %v239, 2
        %v241 = vadd.f32 %v239, %v240
        %v242 = vrot.slane %v241, 1
        %v243 = vadd.f32 %v241, %v242
        %v244 = vadd.f32 %v234, %v243
        %245 = vst [vmem:[%s216] sm:$0x1] %v244
        %v246 = vld [vmem:[%s219] sm:$0x1]
        %v247 = vmul.f32 %v230, %v230
        %v248 = vmul.f32 %v231, %v231
        %v249 = vmul.f32 %v232, %v232
        %v250 = vmul.f32 %v233, %v233
        %v251 = vadd.f32 %v247, %v248
        %v252 = vadd.f32 %v251, %v249
        %v253 = vadd.f32 %v252, %v250
        %v254 = vrot.slane %v253, 4
        %v255 = vadd.f32 %v253, %v254
        %v256 = vrot.slane %v255, 2
        %v257 = vadd.f32 %v255, %v256
        %v258 = vrot.slane %v257, 1
        %v259 = vadd.f32 %v257, %v258
        %v260 = vadd.f32 %v246, %v259
        %261 = vst [vmem:[%s219] sm:$0x1] %v260
        %p262 = scmp.lt.s32.totalorder %s18, 1
        %s263 = scalar_select %p262, %s18, 1
        %s264 = scalar_lea.vmem %s1, %s263
        %p265 = scmp.lt.s32.totalorder %s18, 1
        %s266 = scalar_select %p265, %s18, 1
        %s267 = scalar_lea.vmem %s2, %s266
        // Predicated region
        $region70: #{netg_forward.21} parent=60 // pred_check
          %p268 = pneg %p72
        $region71: #{netg_forward.21} parent=60 // pred_check_branch
          %270 = sbr.rel (%p268) target = $region73
        $region72: #{netg_forward.21} parent=60 // pred_region
          _
        $region73: #{netg_forward.21} parent=60 // pred_fallthru
          _
        // Predicated region
        $region74: #{netg_forward.21} parent=60 // pred_check
          %p271 = pneg %p98
        $region75: #{netg_forward.21} parent=60 // pred_check_branch
          %273 = sbr.rel (%p271) target = $region77
        $region76: #{netg_forward.21} parent=60 // pred_region
          _
        $region77: #{netg_forward.21} parent=60 // pred_fallthru
          _
      $region61: #{netg_forward.21} parent=5 // pred_fallthru
        _
      %p274 = scmp.le.s32.totalorder 2, %s9
      // Predicated region
      $region78: #{netg_forward.21} parent=5 // pred_check
        %p275 = pneg %p274
      $region79: #{netg_forward.21} parent=5 // pred_check_branch
        %277 = sbr.rel (%p275) target = $region81
      $region80: #{netg_forward.21} parent=5 // pred_region
        %s278 = ssub.s32 %s9, 2
        // Predicated region
        $region82: #{netg_forward.21} parent=80 // pred_check
          %p279 = pneg %p78
        $region83: #{netg_forward.21} parent=80 // pred_check_branch
          %281 = sbr.rel (%p279) target = $region85
        $region84: #{netg_forward.21} parent=80 // pred_region
          %p282 = scmp.lt.s32.totalorder %s20, 1
          %s283 = scalar_select %p282, %s20, 1
          %s284 = scalar_lea.vmem %s1, %s283
        $region85: #{netg_forward.21} parent=80 // pred_fallthru
          _
        // Predicated region
        $region86: #{netg_forward.21} parent=80 // pred_check
          %p285 = pneg %p104
        $region87: #{netg_forward.21} parent=80 // pred_check_branch
          %287 = sbr.rel (%p285) target = $region89
        $region88: #{netg_forward.21} parent=80 // pred_region
          %p288 = scmp.lt.s32.totalorder %s20, 1
          %s289 = scalar_select %p288, %s20, 1
          %s290 = scalar_lea.vmem %s2, %s289
        $region89: #{netg_forward.21} parent=80 // pred_fallthru
          _
      $region81: #{netg_forward.21} parent=5 // pred_fallthru
        _
    $region6: #{netg_forward.21} parent=1 // loop_footer
      %s13 = sadd.s32 1, %s9
    $region7: #{netg_forward.21} parent=1 // loop_footer_branch
      %8 = sbr.rel target = $region3
    $region8: #{netg_forward.21} parent=1 // loop_exit
      _

// kernel: tile.67
$region0: #{tile.67}
  #allocation0 [shape = 's32[1]{0}', space=sflag, size = 0x4, scoped, tag = 'scoped memory for tile.67']
  %s0 = inlined_call_operand.vmem [shape: f32[16], index: 0, kind: input, shape index: {}]
  %s1 = inlined_call_operand.vmem [shape: f32[16,16], index: 1, kind: output, shape index: {}]
  // Predicated region
  $region2: #{tile.67} parent=0 // pred_check
    _
  $region3: #{tile.67} parent=0 // pred_check_branch
    %3 = sbr.rel (0) target = $region5
  $region4: #{tile.67} parent=0 // pred_region
    _
  $region5: #{tile.67} parent=0 // pred_fallthru
    _
  %v4 = vld [vmem:[%s0] ss:$0 sm:$0xff]
  %5 = vst [vmem:[%s1] sm:$0xff] %v4
  %s6 = scalar_lea.vmem %s1, 8
  %7 = vst [vmem:[%s6] sm:$0xff] %v4

// kernel: tile.68
$region0: #{tile.68}
  %s0 = inlined_call_operand.vmem [shape: f32[16,16], index: 0, kind: input, shape index: {}]
  %s1 = inlined_call_operand.vmem [shape: f32[1,256], index: 1, kind: output, shape index: {}]
  $region1: #{tile.68} parent=0
    #allocation0 [shape = 'u8[8192]{0}', space=vmem, size = 0x2000, scoped, tag = 'scoped mem for output reshape']
    %s2 = smov 3
    %v3 = vld [vmem:[%s0] ss:$8 sm:%s2]
    %vm4 = vcmask 130048
    %5 = vst.msk [vmem:[#allocation0] ss:$8 sm:$0x3] %vm4, %v3
    %s6 = scalar_lea.vmem %s0, 7
    %s7 = smov 3
    %v8 = vld [vmem:[%s6] ss:$8 sm:%s7]
    %9 = vrot.lane.b32.xlu0 %v8, 112
    %v10 = vpop.permute.xlu0 %9
    %vm11 = vcmask 1048448
    %12 = vst.msk [vmem:[#allocation0] ss:$8 sm:$0x3] %vm11, %v10
    %s13 = scalar_lea.vmem %s0, 6
    %s14 = smov 3
    %v15 = vld [vmem:[%s13] ss:$8 sm:%s14]
    %16 = vrot.lane.b32.xlu0 %v15, 96
    %v17 = vpop.permute.xlu0 %16
    %vm18 = vcmask 917248
    %19 = vst.msk [vmem:[#allocation0] ss:$8 sm:$0x3] %vm18, %v17
    %s20 = scalar_lea.vmem %s0, 5
    %s21 = smov 3
    %v22 = vld [vmem:[%s20] ss:$8 sm:%s21]
    %23 = vrot.lane.b32.xlu0 %v22, 80
    %v24 = vpop.permute.xlu0 %23
    %vm25 = vcmask 786048
    %26 = vst.msk [vmem:[#allocation0] ss:$8 sm:$0x3] %vm25, %v24
    %s27 = scalar_lea.vmem %s0, 4
    %s28 = smov 3
    %v29 = vld [vmem:[%s27] ss:$8 sm:%s28]
    %30 = vrot.lane.b32.xlu0 %v29, 64
    %v31 = vpop.permute.xlu0 %30
    %vm32 = vcmask 654848
    %33 = vst.msk [vmem:[#allocation0] ss:$8 sm:$0x3] %vm32, %v31
    %s34 = scalar_lea.vmem %s0, 3
    %s35 = smov 3
    %v36 = vld [vmem:[%s34] ss:$8 sm:%s35]
    %37 = vrot.lane.b32.xlu0 %v36, 48
    %v38 = vpop.permute.xlu0 %37
    %vm39 = vcmask 523648
    %40 = vst.msk [vmem:[#allocation0] ss:$8 sm:$0x3] %vm39, %v38
    %s41 = scalar_lea.vmem %s0, 2
    %s42 = smov 3
    %v43 = vld [vmem:[%s41] ss:$8 sm:%s42]
    %44 = vrot.lane.b32.xlu0 %v43, 32
    %v45 = vpop.permute.xlu0 %44
    %vm46 = vcmask 392448
    %47 = vst.msk [vmem:[#allocation0] ss:$8 sm:$0x3] %vm46, %v45
    %s48 = scalar_lea.vmem %s0, 1
    %s49 = smov 3
    %v50 = vld [vmem:[%s48] ss:$8 sm:%s49]
    %51 = vrot.lane.b32.xlu0 %v50, 16
    %v52 = vpop.permute.xlu0 %51
    %vm53 = vcmask 261248
    %54 = vst.msk [vmem:[#allocation0] ss:$8 sm:$0x3] %vm53, %v52
    %s56 = sshllo.u32 0, 1
    %v58 = vld [vmem:[#allocation0] sm:%s56]
    %s59 = sshllo.u32 0, 1
    %60 = vst [vmem:[%s1] sm:%s59] %v58
    %s61 = scalar_lea.vmem [#allocation0], 8
    %v62 = vld [vmem:[%s61] sm:%s56]
    %s63 = sshllo.u32 0, 1
    %s64 = scalar_lea.vmem %s1, 1
    %65 = vst [vmem:[%s64] sm:%s63] %v62

// kernel: netg_forward.22
$region0: #{netg_forward.22}
  #allocation0 [shape = 'u32[]', space=smem, size = 0x4, offset = 0x4, fixed_abs, tag = 'smem constant byte address 0x4 - core index']
  #allocation1 [shape = 'u32[144,128]{1,0:T(1,128)}', space=vmem, size = 0x12000, scoped, tag = 'internal scratch']
  %s0 = inlined_call_operand.vmem [shape: bf16[32,256], index: 0, kind: input, shape index: {}]
  %s1 = inlined_call_operand.vmem [shape: f32[1,256], index: 1, kind: input, shape index: {}]
  %s2 = inlined_call_operand.vmem [shape: f32[1,256], index: 2, kind: input, shape index: {}]
  %s3 = inlined_call_operand.vmem [shape: bf16[32,256], index: 3, kind: output, shape index: {}]
  %s4 = sld [smem:[#allocation0]]
  $region22: #{netg_forward.22} parent=0
    _
  %s6 = ssub.s32 1, %s4
  %s7 = scalar_select 0, %s6, %s4
  // Predicated region
  $region2: #{netg_forward.22} parent=0 // pred_check
    _
  $region3: #{netg_forward.22} parent=0 // pred_check_branch
    %9 = sbr.rel (0) target = $region5
  $region4: #{netg_forward.22} parent=0 // pred_region
    _
  $region5: #{netg_forward.22} parent=0 // pred_fallthru
    _
  // Predicated region
  $region6: #{netg_forward.22} parent=0 // pred_check
    _
  $region7: #{netg_forward.22} parent=0 // pred_check_branch
    %11 = sbr.rel (0) target = $region9
  $region8: #{netg_forward.22} parent=0 // pred_region
    _
  $region9: #{netg_forward.22} parent=0 // pred_fallthru
    _
  // Predicated region
  $region10: #{netg_forward.22} parent=0 // pred_check
    _
  $region11: #{netg_forward.22} parent=0 // pred_check_branch
    %13 = sbr.rel (0) target = $region13
  $region12: #{netg_forward.22} parent=0 // pred_region
    _
  $region13: #{netg_forward.22} parent=0 // pred_fallthru
    _
  %v14 = vld [vmem:[%s0] sm:$0xff]
  %v15 = vld [vmem:[%s0 + $0x8] sm:$0xff]
  %v16 = vld [vmem:[%s0 + $0x10] sm:$0xff]
  %v17 = vld [vmem:[%s0 + $0x18] sm:$0xff]
  %v18 = vunpack.c.l.bf16 %v14
  %v19 = vunpack.c.h.bf16 %v14
  %v20 = vunpack.c.l.bf16 %v15
  %v21 = vunpack.c.h.bf16 %v15
  %v22 = vunpack.c.l.bf16 %v16
  %v23 = vunpack.c.h.bf16 %v16
  %v24 = vunpack.c.l.bf16 %v17
  %v25 = vunpack.c.h.bf16 %v17
  %v26 = vld [vmem:[%s1] sm:$0x3]
  %v28 = vlaneseq
  %v29 = vshrl.u32 %v28, 7
  %v30 = vsub.s32 0, %v29
  %v31 = vrot.slane %v26, %v30
  %v32 = vlaneseq
  %v33 = vshrl.u32 %v32, 7
  %v34 = vsub.s32 1, %v33
  %v35 = vrot.slane %v26, %v34
  %v38 = vmul.f32 %v18, %v31
  %v39 = vmul.f32 %v19, %v35
  %v40 = vmul.f32 %v20, %v31
  %v41 = vmul.f32 %v21, %v35
  %v42 = vmul.f32 %v22, %v31
  %v43 = vmul.f32 %v23, %v35
  %v44 = vmul.f32 %v24, %v31
  %v45 = vmul.f32 %v25, %v35
  %v46 = vld [vmem:[%s2] sm:$0x3]
  %v48 = vlaneseq
  %v49 = vshrl.u32 %v48, 7
  %v50 = vsub.s32 0, %v49
  %v51 = vrot.slane %v46, %v50
  %v52 = vlaneseq
  %v53 = vshrl.u32 %v52, 7
  %v54 = vsub.s32 1, %v53
  %v55 = vrot.slane %v46, %v54
  %v58 = vadd.f32 %v38, %v51
  %v59 = vadd.f32 %v39, %v55
  %v60 = vadd.f32 %v40, %v51
  %v61 = vadd.f32 %v41, %v55
  %v62 = vadd.f32 %v42, %v51
  %v63 = vadd.f32 %v43, %v55
  %v64 = vadd.f32 %v44, %v51
  %v65 = vadd.f32 %v45, %v55
  %v66 = vmax.f32 %v58, 0.0
  %v67 = vmax.f32 %v59, 0.0
  %v68 = vmax.f32 %v60, 0.0
  %v69 = vmax.f32 %v61, 0.0
  %v70 = vmax.f32 %v62, 0.0
  %v71 = vmax.f32 %v63, 0.0
  %v72 = vmax.f32 %v64, 0.0
  %v73 = vmax.f32 %v65, 0.0
  %v74 = vpack.c.bf16 %v68, %v66
  %v75 = vpack.c.bf16 %v69, %v67
  %v76 = vpack.c.bf16 %v72, %v70
  %v77 = vpack.c.bf16 %v73, %v71
  %v82 = vunpack.c.l.b16 %v74
  %v83 = vunpack.c.l.b16 %v75
  %v84 = vunpack.c.h.b16 %v74
  %v85 = vunpack.c.h.b16 %v75
  %v86 = vunpack.c.l.b16 %v76
  %v87 = vunpack.c.l.b16 %v77
  %v88 = vunpack.c.h.b16 %v76
  %v89 = vunpack.c.h.b16 %v77
  %v90 = vpack.c.b16 %v83, %v82
  %v91 = vpack.c.b16 %v85, %v84
  %v92 = vpack.c.b16 %v87, %v86
  %v93 = vpack.c.b16 %v89, %v88
  %98 = vst [vmem:[%s3] sm:$0xff] %v90
  %99 = vst [vmem:[%s3 + $0x8] sm:$0xff] %v91
  %100 = vst [vmem:[%s3 + $0x10] sm:$0xff] %v92
  %101 = vst [vmem:[%s3 + $0x18] sm:$0xff] %v93
  // Predicated region
  $region14: #{netg_forward.22} parent=0 // pred_check
    _
  $region15: #{netg_forward.22} parent=0 // pred_check_branch
    %103 = sbr.rel (0) target = $region17
  $region16: #{netg_forward.22} parent=0 // pred_region
    _
  $region17: #{netg_forward.22} parent=0 // pred_fallthru
    _
  // Predicated region
  $region18: #{netg_forward.22} parent=0 // pred_check
    _
  $region19: #{netg_forward.22} parent=0 // pred_check_branch
    %105 = sbr.rel (0) target = $region21
  $region20: #{netg_forward.22} parent=0 // pred_region
    _
  $region21: #{netg_forward.22} parent=0 // pred_fallthru
    _

// kernel: netg_forward.23
$region0: #{netg_forward.23}
  #allocation0 [shape = 'u32[]', space=smem, size = 0x4, offset = 0x4, fixed_abs, tag = 'smem constant byte address 0x4 - core index']
  #allocation1 [shape = 'u32[144,128]{1,0:T(1,128)}', space=vmem, size = 0x12000, scoped, tag = 'internal scratch']
  %s0 = inlined_call_operand.vmem [shape: bf16[512,16], index: 0, kind: input, shape index: {}]
  %s1 = inlined_call_operand.vmem [shape: bf16[16,256], index: 1, kind: input, shape index: {}]
  %s2 = inlined_call_operand.vmem [shape: bf16[512,256], index: 2, kind: output, shape index: {}]
  %s3 = sld [smem:[#allocation0]]
  $region18: #{netg_forward.23} parent=0
    _
  %s5 = ssub.s32 1, %s3
  %s6 = scalar_select 0, %s5, %s3
  // Predicated region
  $region2: #{netg_forward.23} parent=0 // pred_check
    _
  $region3: #{netg_forward.23} parent=0 // pred_check_branch
    %8 = sbr.rel (0) target = $region5
  $region4: #{netg_forward.23} parent=0 // pred_region
    _
  $region5: #{netg_forward.23} parent=0 // pred_fallthru
    _
  // Predicated region
  $region6: #{netg_forward.23} parent=0 // pred_check
    _
  $region7: #{netg_forward.23} parent=0 // pred_check_branch
    %10 = sbr.rel (0) target = $region9
  $region8: #{netg_forward.23} parent=0 // pred_region
    _
  $region9: #{netg_forward.23} parent=0 // pred_fallthru
    _
  %v12 = vld [vmem:[%s0] sm:$0xf]
  %v13 = vld [vmem:[%s0 + $0x4] sm:$0xf]
  %v14 = vld [vmem:[%s0 + $0x8] sm:$0xf]
  %v15 = vld [vmem:[%s0 + $0xc] sm:$0xf]
  %v16 = vld [vmem:[%s0 + $0x10] sm:$0xf]
  %v17 = vld [vmem:[%s0 + $0x14] sm:$0xf]
  %v18 = vld [vmem:[%s0 + $0x18] sm:$0xf]
  %v19 = vld [vmem:[%s0 + $0x1c] sm:$0xf]
  %v20 = vld [vmem:[%s0 + $0x20] sm:$0xf]
  %v21 = vld [vmem:[%s0 + $0x24] sm:$0xf]
  %v22 = vld [vmem:[%s0 + $0x28] sm:$0xf]
  %v23 = vld [vmem:[%s0 + $0x2c] sm:$0xf]
  %v24 = vld [vmem:[%s0 + $0x30] sm:$0xf]
  %v25 = vld [vmem:[%s0 + $0x34] sm:$0xf]
  %v26 = vld [vmem:[%s0 + $0x38] sm:$0xf]
  %v27 = vld [vmem:[%s0 + $0x3c] sm:$0xf]
  %v28 = vld [vmem:[%s0 + $0x40] sm:$0xf]
  %v29 = vld [vmem:[%s0 + $0x44] sm:$0xf]
  %v30 = vld [vmem:[%s0 + $0x48] sm:$0xf]
  %v31 = vld [vmem:[%s0 + $0x4c] sm:$0xf]
  %v32 = vld [vmem:[%s0 + $0x50] sm:$0xf]
  %v33 = vld [vmem:[%s0 + $0x54] sm:$0xf]
  %v34 = vld [vmem:[%s0 + $0x58] sm:$0xf]
  %v35 = vld [vmem:[%s0 + $0x5c] sm:$0xf]
  %v36 = vld [vmem:[%s0 + $0x60] sm:$0xf]
  %v37 = vld [vmem:[%s0 + $0x64] sm:$0xf]
  %v38 = vld [vmem:[%s0 + $0x68] sm:$0xf]
  %v39 = vld [vmem:[%s0 + $0x6c] sm:$0xf]
  %v40 = vld [vmem:[%s0 + $0x70] sm:$0xf]
  %v41 = vld [vmem:[%s0 + $0x74] sm:$0xf]
  %v42 = vld [vmem:[%s0 + $0x78] sm:$0xf]
  %v43 = vld [vmem:[%s0 + $0x7c] sm:$0xf]
  %v44 = vld [vmem:[%s0 + $0x80] sm:$0xf]
  %v45 = vld [vmem:[%s0 + $0x84] sm:$0xf]
  %v46 = vld [vmem:[%s0 + $0x88] sm:$0xf]
  %v47 = vld [vmem:[%s0 + $0x8c] sm:$0xf]
  %v48 = vld [vmem:[%s0 + $0x90] sm:$0xf]
  %v49 = vld [vmem:[%s0 + $0x94] sm:$0xf]
  %v50 = vld [vmem:[%s0 + $0x98] sm:$0xf]
  %v51 = vld [vmem:[%s0 + $0x9c] sm:$0xf]
  %v52 = vld [vmem:[%s0 + $0xa0] sm:$0xf]
  %v53 = vld [vmem:[%s0 + $0xa4] sm:$0xf]
  %v54 = vld [vmem:[%s0 + $0xa8] sm:$0xf]
  %v55 = vld [vmem:[%s0 + $0xac] sm:$0xf]
  %v56 = vld [vmem:[%s0 + $0xb0] sm:$0xf]
  %v57 = vld [vmem:[%s0 + $0xb4] sm:$0xf]
  %v58 = vld [vmem:[%s0 + $0xb8] sm:$0xf]
  %v59 = vld [vmem:[%s0 + $0xbc] sm:$0xf]
  %v60 = vld [vmem:[%s0 + $0xc0] sm:$0xf]
  %v61 = vld [vmem:[%s0 + $0xc4] sm:$0xf]
  %v62 = vld [vmem:[%s0 + $0xc8] sm:$0xf]
  %v63 = vld [vmem:[%s0 + $0xcc] sm:$0xf]
  %v64 = vld [vmem:[%s0 + $0xd0] sm:$0xf]
  %v65 = vld [vmem:[%s0 + $0xd4] sm:$0xf]
  %v66 = vld [vmem:[%s0 + $0xd8] sm:$0xf]
  %v67 = vld [vmem:[%s0 + $0xdc] sm:$0xf]
  %v68 = vld [vmem:[%s0 + $0xe0] sm:$0xf]
  %v69 = vld [vmem:[%s0 + $0xe4] sm:$0xf]
  %v70 = vld [vmem:[%s0 + $0xe8] sm:$0xf]
  %v71 = vld [vmem:[%s0 + $0xec] sm:$0xf]
  %v72 = vld [vmem:[%s0 + $0xf0] sm:$0xf]
  %v73 = vld [vmem:[%s0 + $0xf4] sm:$0xf]
  %v74 = vld [vmem:[%s0 + $0xf8] sm:$0xf]
  %v75 = vld [vmem:[%s0 + $0xfc] sm:$0xf]
  %v76 = vld [vmem:[%s1] sm:$0xff]
  %v77 = vld [vmem:[%s1 + $0x8] sm:$0xff]
  %v142 = vunpack.c.l.b16 %v12
  %v143 = vunpack.c.l.b16 %v13
  %v144 = vunpack.c.l.b16 %v14
  %v145 = vunpack.c.l.b16 %v15
  %v146 = vunpack.c.l.b16 %v16
  %v147 = vunpack.c.l.b16 %v17
  %v148 = vunpack.c.l.b16 %v18
  %v149 = vunpack.c.l.b16 %v19
  %v150 = vunpack.c.l.b16 %v20
  %v151 = vunpack.c.l.b16 %v21
  %v152 = vunpack.c.l.b16 %v22
  %v153 = vunpack.c.l.b16 %v23
  %v154 = vunpack.c.l.b16 %v24
  %v155 = vunpack.c.l.b16 %v25
  %v156 = vunpack.c.l.b16 %v26
  %v157 = vunpack.c.l.b16 %v27
  %v158 = vunpack.c.l.b16 %v28
  %v159 = vunpack.c.l.b16 %v29
  %v160 = vunpack.c.l.b16 %v30
  %v161 = vunpack.c.l.b16 %v31
  %v162 = vunpack.c.l.b16 %v32
  %v163 = vunpack.c.l.b16 %v33
  %v164 = vunpack.c.l.b16 %v34
  %v165 = vunpack.c.l.b16 %v35
  %v166 = vunpack.c.l.b16 %v36
  %v167 = vunpack.c.l.b16 %v37
  %v168 = vunpack.c.l.b16 %v38
  %v169 = vunpack.c.l.b16 %v39
  %v170 = vunpack.c.l.b16 %v40
  %v171 = vunpack.c.l.b16 %v41
  %v172 = vunpack.c.l.b16 %v42
  %v173 = vunpack.c.l.b16 %v43
  %v174 = vunpack.c.l.b16 %v44
  %v175 = vunpack.c.l.b16 %v45
  %v176 = vunpack.c.l.b16 %v46
  %v177 = vunpack.c.l.b16 %v47
  %v178 = vunpack.c.l.b16 %v48
  %v179 = vunpack.c.l.b16 %v49
  %v180 = vunpack.c.l.b16 %v50
  %v181 = vunpack.c.l.b16 %v51
  %v182 = vunpack.c.l.b16 %v52
  %v183 = vunpack.c.l.b16 %v53
  %v184 = vunpack.c.l.b16 %v54
  %v185 = vunpack.c.l.b16 %v55
  %v186 = vunpack.c.l.b16 %v56
  %v187 = vunpack.c.l.b16 %v57
  %v188 = vunpack.c.l.b16 %v58
  %v189 = vunpack.c.l.b16 %v59
  %v190 = vunpack.c.l.b16 %v60
  %v191 = vunpack.c.l.b16 %v61
  %v192 = vunpack.c.l.b16 %v62
  %v193 = vunpack.c.l.b16 %v63
  %v194 = vunpack.c.l.b16 %v64
  %v195 = vunpack.c.l.b16 %v65
  %v196 = vunpack.c.l.b16 %v66
  %v197 = vunpack.c.l.b16 %v67
  %v198 = vunpack.c.l.b16 %v68
  %v199 = vunpack.c.l.b16 %v69
  %v200 = vunpack.c.l.b16 %v70
  %v201 = vunpack.c.l.b16 %v71
  %v202 = vunpack.c.l.b16 %v72
  %v203 = vunpack.c.l.b16 %v73
  %v204 = vunpack.c.l.b16 %v74
  %v205 = vunpack.c.l.b16 %v75
  %v206 = vpack.c.b16 %v143, %v142
  %v207 = vpack.c.b16 %v145, %v144
  %v208 = vpack.c.b16 %v147, %v146
  %v209 = vpack.c.b16 %v149, %v148
  %v210 = vpack.c.b16 %v151, %v150
  %v211 = vpack.c.b16 %v153, %v152
  %v212 = vpack.c.b16 %v155, %v154
  %v213 = vpack.c.b16 %v157, %v156
  %v214 = vpack.c.b16 %v159, %v158
  %v215 = vpack.c.b16 %v161, %v160
  %v216 = vpack.c.b16 %v163, %v162
  %v217 = vpack.c.b16 %v165, %v164
  %v218 = vpack.c.b16 %v167, %v166
  %v219 = vpack.c.b16 %v169, %v168
  %v220 = vpack.c.b16 %v171, %v170
  %v221 = vpack.c.b16 %v173, %v172
  %v222 = vpack.c.b16 %v175, %v174
  %v223 = vpack.c.b16 %v177, %v176
  %v224 = vpack.c.b16 %v179, %v178
  %v225 = vpack.c.b16 %v181, %v180
  %v226 = vpack.c.b16 %v183, %v182
  %v227 = vpack.c.b16 %v185, %v184
  %v228 = vpack.c.b16 %v187, %v186
  %v229 = vpack.c.b16 %v189, %v188
  %v230 = vpack.c.b16 %v191, %v190
  %v231 = vpack.c.b16 %v193, %v192
  %v232 = vpack.c.b16 %v195, %v194
  %v233 = vpack.c.b16 %v197, %v196
  %v234 = vpack.c.b16 %v199, %v198
  %v235 = vpack.c.b16 %v201, %v200
  %v236 = vpack.c.b16 %v203, %v202
  %v237 = vpack.c.b16 %v205, %v204
  %v240 = vunpack.c.l.b16 %v76
  %v241 = vunpack.c.h.b16 %v76
  %v242 = vunpack.c.l.b16 %v77
  %v243 = vunpack.c.h.b16 %v77
  %v244 = vpack.c.b16 %v242, %v240
  %v245 = vpack.c.b16 %v243, %v241
  %vm248 = vcmask 130048
  %v250 = vsel %vm248, %v206, 0
  %v253 = vsel %vm248, %v207, 0
  %v256 = vsel %vm248, %v208, 0
  %v259 = vsel %vm248, %v209, 0
  %v262 = vsel %vm248, %v210, 0
  %v265 = vsel %vm248, %v211, 0
  %v268 = vsel %vm248, %v212, 0
  %v271 = vsel %vm248, %v213, 0
  %v274 = vsel %vm248, %v214, 0
  %v277 = vsel %vm248, %v215, 0
  %v280 = vsel %vm248, %v216, 0
  %v283 = vsel %vm248, %v217, 0
  %v286 = vsel %vm248, %v218, 0
  %v289 = vsel %vm248, %v219, 0
  %v292 = vsel %vm248, %v220, 0
  %v295 = vsel %vm248, %v221, 0
  %v298 = vsel %vm248, %v222, 0
  %v301 = vsel %vm248, %v223, 0
  %v304 = vsel %vm248, %v224, 0
  %v307 = vsel %vm248, %v225, 0
  %v310 = vsel %vm248, %v226, 0
  %v313 = vsel %vm248, %v227, 0
  %v316 = vsel %vm248, %v228, 0
  %v319 = vsel %vm248, %v229, 0
  %v322 = vsel %vm248, %v230, 0
  %v325 = vsel %vm248, %v231, 0
  %v328 = vsel %vm248, %v232, 0
  %v331 = vsel %vm248, %v233, 0
  %v334 = vsel %vm248, %v234, 0
  %v337 = vsel %vm248, %v235, 0
  %v340 = vsel %vm248, %v236, 0
  %v343 = vsel %vm248, %v237, 0
  %345 = vmatprep.subr.bf16.mxu0 %v245
  %346 = vmatpush1.bf16.msra.mxu0 %v244
  %347 = vmatprep.subr.bf16.mxu0 0
  %348 = vmatpush1.bf16.msra.mxu0 0
  %349 = vmatprep.subr.bf16.mxu0 0
  %350 = vmatpush1.bf16.msra.mxu0 0
  %351 = vmatprep.subr.bf16.mxu0 0
  %352 = vmatpush1.bf16.msra.mxu0 0
  %353 = vmatprep.subr.bf16.mxu0 0
  %354 = vmatpush1.bf16.msra.mxu0 0
  %355 = vmatprep.subr.bf16.mxu0 0
  %356 = vmatpush1.bf16.msra.mxu0 0
  %357 = vmatprep.subr.bf16.mxu0 0
  %358 = vmatpush1.bf16.msra.mxu0 0
  %359 = vmatprep.subr.bf16.mxu0 0
  %360 = vmatpush1.bf16.msra.mxu0 0
  %361 = vmatprep.subr.bf16.mxu0 0
  %362 = vmatpush1.bf16.msra.mxu0 0
  %363 = vmatprep.subr.bf16.mxu0 0
  %364 = vmatpush1.bf16.msra.mxu0 0
  %365 = vmatprep.subr.bf16.mxu0 0
  %366 = vmatpush1.bf16.msra.mxu0 0
  %367 = vmatprep.subr.bf16.mxu0 0
  %368 = vmatpush1.bf16.msra.mxu0 0
  %369 = vmatprep.subr.bf16.mxu0 0
  %370 = vmatpush1.bf16.msra.mxu0 0
  %371 = vmatprep.subr.bf16.mxu0 0
  %372 = vmatpush1.bf16.msra.mxu0 0
  %373 = vmatprep.subr.bf16.mxu0 0
  %374 = vmatpush1.bf16.msra.mxu0 0
  %375 = vmatprep.subr.bf16.mxu0 0
  %376 = vmatpush1.bf16.msra.mxu0 0
  %377 = vmatprep.mubr.bf16.mxu0 0
  %378 = vmatmul.mubr.bf16.gmra.mrb[0].mxu0 %v250
  %v379 = vpop.f32.mrb[0].mxu0
  %v380 = vadd.f32 0.0, %v379
  %v381 = vpop.f32.mrb[0].mxu0
  %v382 = vadd.f32 0.0, %v381
  %v383 = vpop.f32.mrb[0].mxu0
  %v384 = vadd.f32 0.0, %v383
  %v385 = vpop.f32.mrb[0].mxu0
  %v386 = vadd.f32 0.0, %v385
  %387 = vmatprep.mubr.bf16.mxu0 0
  %388 = vmatmul.mubr.bf16.gmra.mrb[0].mxu0 %v253
  %v389 = vpop.f32.mrb[0].mxu0
  %v390 = vadd.f32 0.0, %v389
  %v391 = vpop.f32.mrb[0].mxu0
  %v392 = vadd.f32 0.0, %v391
  %v393 = vpop.f32.mrb[0].mxu0
  %v394 = vadd.f32 0.0, %v393
  %v395 = vpop.f32.mrb[0].mxu0
  %v396 = vadd.f32 0.0, %v395
  %397 = vmatprep.mubr.bf16.mxu0 0
  %398 = vmatmul.mubr.bf16.gmra.mrb[0].mxu0 %v256
  %v399 = vpop.f32.mrb[0].mxu0
  %v400 = vadd.f32 0.0, %v399
  %v401 = vpop.f32.mrb[0].mxu0
  %v402 = vadd.f32 0.0, %v401
  %v403 = vpop.f32.mrb[0].mxu0
  %v404 = vadd.f32 0.0, %v403
  %v405 = vpop.f32.mrb[0].mxu0
  %v406 = vadd.f32 0.0, %v405
  %407 = vmatprep.mubr.bf16.mxu0 0
  %408 = vmatmul.mubr.bf16.gmra.mrb[0].mxu0 %v259
  %v409 = vpop.f32.mrb[0].mxu0
  %v410 = vadd.f32 0.0, %v409
  %v411 = vpop.f32.mrb[0].mxu0
  %v412 = vadd.f32 0.0, %v411
  %v413 = vpop.f32.mrb[0].mxu0
  %v414 = vadd.f32 0.0, %v413
  %v415 = vpop.f32.mrb[0].mxu0
  %v416 = vadd.f32 0.0, %v415
  %417 = vmatprep.mubr.bf16.mxu0 0
  %418 = vmatmul.mubr.bf16.gmra.mrb[0].mxu0 %v262
  %v419 = vpop.f32.mrb[0].mxu0
  %v420 = vadd.f32 0.0, %v419
  %v421 = vpop.f32.mrb[0].mxu0
  %v422 = vadd.f32 0.0, %v421
  %v423 = vpop.f32.mrb[0].mxu0
  %v424 = vadd.f32 0.0, %v423
  %v425 = vpop.f32.mrb[0].mxu0
  %v426 = vadd.f32 0.0, %v425
  %427 = vmatprep.mubr.bf16.mxu0 0
  %428 = vmatmul.mubr.bf16.gmra.mrb[0].mxu0 %v265
  %v429 = vpop.f32.mrb[0].mxu0
  %v430 = vadd.f32 0.0, %v429
  %v431 = vpop.f32.mrb[0].mxu0
  %v432 = vadd.f32 0.0, %v431
  %v433 = vpop.f32.mrb[0].mxu0
  %v434 = vadd.f32 0.0, %v433
  %v435 = vpop.f32.mrb[0].mxu0
  %v436 = vadd.f32 0.0, %v435
  %437 = vmatprep.mubr.bf16.mxu0 0
  %438 = vmatmul.mubr.bf16.gmra.mrb[0].mxu0 %v268
  %v439 = vpop.f32.mrb[0].mxu0
  %v440 = vadd.f32 0.0, %v439
  %v441 = vpop.f32.mrb[0].mxu0
  %v442 = vadd.f32 0.0, %v441
  %v443 = vpop.f32.mrb[0].mxu0
  %v444 = vadd.f32 0.0, %v443
  %v445 = vpop.f32.mrb[0].mxu0
  %v446 = vadd.f32 0.0, %v445
  %447 = vmatprep.mubr.bf16.mxu0 0
  %448 = vmatmul.mubr.bf16.gmra.mrb[0].mxu0 %v271
  %v449 = vpop.f32.mrb[0].mxu0
  %v450 = vadd.f32 0.0, %v449
  %v451 = vpop.f32.mrb[0].mxu0
  %v452 = vadd.f32 0.0, %v451
  %v453 = vpop.f32.mrb[0].mxu0
  %v454 = vadd.f32 0.0, %v453
  %v455 = vpop.f32.mrb[0].mxu0
  %v456 = vadd.f32 0.0, %v455
  %457 = vmatprep.mubr.bf16.mxu0 0
  %458 = vmatmul.mubr.bf16.gmra.mrb[0].mxu0 %v274
  %v459 = vpop.f32.mrb[0].mxu0
  %v460 = vadd.f32 0.0, %v459
  %v461 = vpop.f32.mrb[0].mxu0
  %v462 = vadd.f32 0.0, %v461
  %v463 = vpop.f32.mrb[0].mxu0
  %v464 = vadd.f32 0.0, %v463
  %v465 = vpop.f32.mrb[0].mxu0
  %v466 = vadd.f32 0.0, %v465
  %467 = vmatprep.mubr.bf16.mxu0 0
  %468 = vmatmul.mubr.bf16.gmra.mrb[0].mxu0 %v277
  %v469 = vpop.f32.mrb[0].mxu0
  %v470 = vadd.f32 0.0, %v469
  %v471 = vpop.f32.mrb[0].mxu0
  %v472 = vadd.f32 0.0, %v471
  %v473 = vpop.f32.mrb[0].mxu0
  %v474 = vadd.f32 0.0, %v473
  %v475 = vpop.f32.mrb[0].mxu0
  %v476 = vadd.f32 0.0, %v475
  %477 = vmatprep.mubr.bf16.mxu0 0
  %478 = vmatmul.mubr.bf16.gmra.mrb[0].mxu0 %v280
  %v479 = vpop.f32.mrb[0].mxu0
  %v480 = vadd.f32 0.0, %v479
  %v481 = vpop.f32.mrb[0].mxu0
  %v482 = vadd.f32 0.0, %v481
  %v483 = vpop.f32.mrb[0].mxu0
  %v484 = vadd.f32 0.0, %v483
  %v485 = vpop.f32.mrb[0].mxu0
  %v486 = vadd.f32 0.0, %v485
  %487 = vmatprep.mubr.bf16.mxu0 0
  %488 = vmatmul.mubr.bf16.gmra.mrb[0].mxu0 %v283
  %v489 = vpop.f32.mrb[0].mxu0
  %v490 = vadd.f32 0.0, %v489
  %v491 = vpop.f32.mrb[0].mxu0
  %v492 = vadd.f32 0.0, %v491
  %v493 = vpop.f32.mrb[0].mxu0
  %v494 = vadd.f32 0.0, %v493
  %v495 = vpop.f32.mrb[0].mxu0
  %v496 = vadd.f32 0.0, %v495
  %497 = vmatprep.mubr.bf16.mxu0 0
  %498 = vmatmul.mubr.bf16.gmra.mrb[0].mxu0 %v286
  %v499 = vpop.f32.mrb[0].mxu0
  %v500 = vadd.f32 0.0, %v499
  %v501 = vpop.f32.mrb[0].mxu0
  %v502 = vadd.f32 0.0, %v501
  %v503 = vpop.f32.mrb[0].mxu0
  %v504 = vadd.f32 0.0, %v503
  %v505 = vpop.f32.mrb[0].mxu0
  %v506 = vadd.f32 0.0, %v505
  %507 = vmatprep.mubr.bf16.mxu0 0
  %508 = vmatmul.mubr.bf16.gmra.mrb[0].mxu0 %v289
  %v509 = vpop.f32.mrb[0].mxu0
  %v510 = vadd.f32 0.0, %v509
  %v511 = vpop.f32.mrb[0].mxu0
  %v512 = vadd.f32 0.0, %v511
  %v513 = vpop.f32.mrb[0].mxu0
  %v514 = vadd.f32 0.0, %v513
  %v515 = vpop.f32.mrb[0].mxu0
  %v516 = vadd.f32 0.0, %v515
  %517 = vmatprep.mubr.bf16.mxu0 0
  %518 = vmatmul.mubr.bf16.gmra.mrb[0].mxu0 %v292
  %v519 = vpop.f32.mrb[0].mxu0
  %v520 = vadd.f32 0.0, %v519
  %v521 = vpop.f32.mrb[0].mxu0
  %v522 = vadd.f32 0.0, %v521
  %v523 = vpop.f32.mrb[0].mxu0
  %v524 = vadd.f32 0.0, %v523
  %v525 = vpop.f32.mrb[0].mxu0
  %v526 = vadd.f32 0.0, %v525
  %527 = vmatprep.mubr.bf16.mxu0 0
  %528 = vmatmul.mubr.bf16.gmra.mrb[0].mxu0 %v295
  %v529 = vpop.f32.mrb[0].mxu0
  %v530 = vadd.f32 0.0, %v529
  %v531 = vpop.f32.mrb[0].mxu0
  %v532 = vadd.f32 0.0, %v531
  %v533 = vpop.f32.mrb[0].mxu0
  %v534 = vadd.f32 0.0, %v533
  %v535 = vpop.f32.mrb[0].mxu0
  %v536 = vadd.f32 0.0, %v535
  %537 = vmatprep.mubr.bf16.mxu0 0
  %538 = vmatmul.mubr.bf16.gmra.mrb[0].mxu0 %v298
  %v539 = vpop.f32.mrb[0].mxu0
  %v540 = vadd.f32 0.0, %v539
  %v541 = vpop.f32.mrb[0].mxu0
  %v542 = vadd.f32 0.0, %v541
  %v543 = vpop.f32.mrb[0].mxu0
  %v544 = vadd.f32 0.0, %v543
  %v545 = vpop.f32.mrb[0].mxu0
  %v546 = vadd.f32 0.0, %v545
  %547 = vmatprep.mubr.bf16.mxu0 0
  %548 = vmatmul.mubr.bf16.gmra.mrb[0].mxu0 %v301
  %v549 = vpop.f32.mrb[0].mxu0
  %v550 = vadd.f32 0.0, %v549
  %v551 = vpop.f32.mrb[0].mxu0
  %v552 = vadd.f32 0.0, %v551
  %v553 = vpop.f32.mrb[0].mxu0
  %v554 = vadd.f32 0.0, %v553
  %v555 = vpop.f32.mrb[0].mxu0
  %v556 = vadd.f32 0.0, %v555
  %557 = vmatprep.mubr.bf16.mxu0 0
  %558 = vmatmul.mubr.bf16.gmra.mrb[0].mxu0 %v304
  %v559 = vpop.f32.mrb[0].mxu0
  %v560 = vadd.f32 0.0, %v559
  %v561 = vpop.f32.mrb[0].mxu0
  %v562 = vadd.f32 0.0, %v561
  %v563 = vpop.f32.mrb[0].mxu0
  %v564 = vadd.f32 0.0, %v563
  %v565 = vpop.f32.mrb[0].mxu0
  %v566 = vadd.f32 0.0, %v565
  %567 = vmatprep.mubr.bf16.mxu0 0
  %568 = vmatmul.mubr.bf16.gmra.mrb[0].mxu0 %v307
  %v569 = vpop.f32.mrb[0].mxu0
  %v570 = vadd.f32 0.0, %v569
  %v571 = vpop.f32.mrb[0].mxu0
  %v572 = vadd.f32 0.0, %v571
  %v573 = vpop.f32.mrb[0].mxu0
  %v574 = vadd.f32 0.0, %v573
  %v575 = vpop.f32.mrb[0].mxu0
  %v576 = vadd.f32 0.0, %v575
  %577 = vmatprep.mubr.bf16.mxu0 0
  %578 = vmatmul.mubr.bf16.gmra.mrb[0].mxu0 %v310
  %v579 = vpop.f32.mrb[0].mxu0
  %v580 = vadd.f32 0.0, %v579
  %v581 = vpop.f32.mrb[0].mxu0
  %v582 = vadd.f32 0.0, %v581
  %v583 = vpop.f32.mrb[0].mxu0
  %v584 = vadd.f32 0.0, %v583
  %v585 = vpop.f32.mrb[0].mxu0
  %v586 = vadd.f32 0.0, %v585
  %587 = vmatprep.mubr.bf16.mxu0 0
  %588 = vmatmul.mubr.bf16.gmra.mrb[0].mxu0 %v313
  %v589 = vpop.f32.mrb[0].mxu0
  %v590 = vadd.f32 0.0, %v589
  %v591 = vpop.f32.mrb[0].mxu0
  %v592 = vadd.f32 0.0, %v591
  %v593 = vpop.f32.mrb[0].mxu0
  %v594 = vadd.f32 0.0, %v593
  %v595 = vpop.f32.mrb[0].mxu0
  %v596 = vadd.f32 0.0, %v595
  %597 = vmatprep.mubr.bf16.mxu0 0
  %598 = vmatmul.mubr.bf16.gmra.mrb[0].mxu0 %v316
  %v599 = vpop.f32.mrb[0].mxu0
  %v600 = vadd.f32 0.0, %v599
  %v601 = vpop.f32.mrb[0].mxu0
  %v602 = vadd.f32 0.0, %v601
  %v603 = vpop.f32.mrb[0].mxu0
  %v604 = vadd.f32 0.0, %v603
  %v605 = vpop.f32.mrb[0].mxu0
  %v606 = vadd.f32 0.0, %v605
  %607 = vmatprep.mubr.bf16.mxu0 0
  %608 = vmatmul.mubr.bf16.gmra.mrb[0].mxu0 %v319
  %v609 = vpop.f32.mrb[0].mxu0
  %v610 = vadd.f32 0.0, %v609
  %v611 = vpop.f32.mrb[0].mxu0
  %v612 = vadd.f32 0.0, %v611
  %v613 = vpop.f32.mrb[0].mxu0
  %v614 = vadd.f32 0.0, %v613
  %v615 = vpop.f32.mrb[0].mxu0
  %v616 = vadd.f32 0.0, %v615
  %617 = vmatprep.mubr.bf16.mxu0 0
  %618 = vmatmul.mubr.bf16.gmra.mrb[0].mxu0 %v322
  %v619 = vpop.f32.mrb[0].mxu0
  %v620 = vadd.f32 0.0, %v619
  %v621 = vpop.f32.mrb[0].mxu0
  %v622 = vadd.f32 0.0, %v621
  %v623 = vpop.f32.mrb[0].mxu0
  %v624 = vadd.f32 0.0, %v623
  %v625 = vpop.f32.mrb[0].mxu0
  %v626 = vadd.f32 0.0, %v625
  %627 = vmatprep.mubr.bf16.mxu0 0
  %628 = vmatmul.mubr.bf16.gmra.mrb[0].mxu0 %v325
  %v629 = vpop.f32.mrb[0].mxu0
  %v630 = vadd.f32 0.0, %v629
  %v631 = vpop.f32.mrb[0].mxu0
  %v632 = vadd.f32 0.0, %v631
  %v633 = vpop.f32.mrb[0].mxu0
  %v634 = vadd.f32 0.0, %v633
  %v635 = vpop.f32.mrb[0].mxu0
  %v636 = vadd.f32 0.0, %v635
  %637 = vmatprep.mubr.bf16.mxu0 0
  %638 = vmatmul.mubr.bf16.gmra.mrb[0].mxu0 %v328
  %v639 = vpop.f32.mrb[0].mxu0
  %v640 = vadd.f32 0.0, %v639
  %v641 = vpop.f32.mrb[0].mxu0
  %v642 = vadd.f32 0.0, %v641
  %v643 = vpop.f32.mrb[0].mxu0
  %v644 = vadd.f32 0.0, %v643
  %v645 = vpop.f32.mrb[0].mxu0
  %v646 = vadd.f32 0.0, %v645
  %647 = vmatprep.mubr.bf16.mxu0 0
  %648 = vmatmul.mubr.bf16.gmra.mrb[0].mxu0 %v331
  %v649 = vpop.f32.mrb[0].mxu0
  %v650 = vadd.f32 0.0, %v649
  %v651 = vpop.f32.mrb[0].mxu0
  %v652 = vadd.f32 0.0, %v651
  %v653 = vpop.f32.mrb[0].mxu0
  %v654 = vadd.f32 0.0, %v653
  %v655 = vpop.f32.mrb[0].mxu0
  %v656 = vadd.f32 0.0, %v655
  %657 = vmatprep.mubr.bf16.mxu0 0
  %658 = vmatmul.mubr.bf16.gmra.mrb[0].mxu0 %v334
  %v659 = vpop.f32.mrb[0].mxu0
  %v660 = vadd.f32 0.0, %v659
  %v661 = vpop.f32.mrb[0].mxu0
  %v662 = vadd.f32 0.0, %v661
  %v663 = vpop.f32.mrb[0].mxu0
  %v664 = vadd.f32 0.0, %v663
  %v665 = vpop.f32.mrb[0].mxu0
  %v666 = vadd.f32 0.0, %v665
  %667 = vmatprep.mubr.bf16.mxu0 0
  %668 = vmatmul.mubr.bf16.gmra.mrb[0].mxu0 %v337
  %v669 = vpop.f32.mrb[0].mxu0
  %v670 = vadd.f32 0.0, %v669
  %v671 = vpop.f32.mrb[0].mxu0
  %v672 = vadd.f32 0.0, %v671
  %v673 = vpop.f32.mrb[0].mxu0
  %v674 = vadd.f32 0.0, %v673
  %v675 = vpop.f32.mrb[0].mxu0
  %v676 = vadd.f32 0.0, %v675
  %677 = vmatprep.mubr.bf16.mxu0 0
  %678 = vmatmul.mubr.bf16.gmra.mrb[0].mxu0 %v340
  %v679 = vpop.f32.mrb[0].mxu0
  %v680 = vadd.f32 0.0, %v679
  %v681 = vpop.f32.mrb[0].mxu0
  %v682 = vadd.f32 0.0, %v681
  %v683 = vpop.f32.mrb[0].mxu0
  %v684 = vadd.f32 0.0, %v683
  %v685 = vpop.f32.mrb[0].mxu0
  %v686 = vadd.f32 0.0, %v685
  %687 = vmatprep.mubr.bf16.mxu0 0
  %688 = vmatmul.mubr.bf16.gmra.mrb[0].mxu0 %v343
  %v689 = vpop.f32.mrb[0].mxu0
  %v690 = vadd.f32 0.0, %v689
  %v691 = vpop.f32.mrb[0].mxu0
  %v692 = vadd.f32 0.0, %v691
  %v693 = vpop.f32.mrb[0].mxu0
  %v694 = vadd.f32 0.0, %v693
  %v695 = vpop.f32.mrb[0].mxu0
  %v696 = vadd.f32 0.0, %v695
  %697 = vdwg.mxu0
  %v698 = vpack.c.bf16 %v384, %v380
  %v699 = vpack.c.bf16 %v386, %v382
  %v700 = vpack.c.bf16 %v394, %v390
  %v701 = vpack.c.bf16 %v396, %v392
  %v702 = vpack.c.bf16 %v404, %v400
  %v703 = vpack.c.bf16 %v406, %v402
  %v704 = vpack.c.bf16 %v414, %v410
  %v705 = vpack.c.bf16 %v416, %v412
  %v706 = vpack.c.bf16 %v424, %v420
  %v707 = vpack.c.bf16 %v426, %v422
  %v708 = vpack.c.bf16 %v434, %v430
  %v709 = vpack.c.bf16 %v436, %v432
  %v710 = vpack.c.bf16 %v444, %v440
  %v711 = vpack.c.bf16 %v446, %v442
  %v712 = vpack.c.bf16 %v454, %v450
  %v713 = vpack.c.bf16 %v456, %v452
  %v714 = vpack.c.bf16 %v464, %v460
  %v715 = vpack.c.bf16 %v466, %v462
  %v716 = vpack.c.bf16 %v474, %v470
  %v717 = vpack.c.bf16 %v476, %v472
  %v718 = vpack.c.bf16 %v484, %v480
  %v719 = vpack.c.bf16 %v486, %v482
  %v720 = vpack.c.bf16 %v494, %v490
  %v721 = vpack.c.bf16 %v496, %v492
  %v722 = vpack.c.bf16 %v504, %v500
  %v723 = vpack.c.bf16 %v506, %v502
  %v724 = vpack.c.bf16 %v514, %v510
  %v725 = vpack.c.bf16 %v516, %v512
  %v726 = vpack.c.bf16 %v524, %v520
  %v727 = vpack.c.bf16 %v526, %v522
  %v728 = vpack.c.bf16 %v534, %v530
  %v729 = vpack.c.bf16 %v536, %v532
  %v730 = vpack.c.bf16 %v544, %v540
  %v731 = vpack.c.bf16 %v546, %v542
  %v732 = vpack.c.bf16 %v554, %v550
  %v733 = vpack.c.bf16 %v556, %v552
  %v734 = vpack.c.bf16 %v564, %v560
  %v735 = vpack.c.bf16 %v566, %v562
  %v736 = vpack.c.bf16 %v574, %v570
  %v737 = vpack.c.bf16 %v576, %v572
  %v738 = vpack.c.bf16 %v584, %v580
  %v739 = vpack.c.bf16 %v586, %v582
  %v740 = vpack.c.bf16 %v594, %v590
  %v741 = vpack.c.bf16 %v596, %v592
  %v742 = vpack.c.bf16 %v604, %v600
  %v743 = vpack.c.bf16 %v606, %v602
  %v744 = vpack.c.bf16 %v614, %v610
  %v745 = vpack.c.bf16 %v616, %v612
  %v746 = vpack.c.bf16 %v624, %v620
  %v747 = vpack.c.bf16 %v626, %v622
  %v748 = vpack.c.bf16 %v634, %v630
  %v749 = vpack.c.bf16 %v636, %v632
  %v750 = vpack.c.bf16 %v644, %v640
  %v751 = vpack.c.bf16 %v646, %v642
  %v752 = vpack.c.bf16 %v654, %v650
  %v753 = vpack.c.bf16 %v656, %v652
  %v754 = vpack.c.bf16 %v664, %v660
  %v755 = vpack.c.bf16 %v666, %v662
  %v756 = vpack.c.bf16 %v674, %v670
  %v757 = vpack.c.bf16 %v676, %v672
  %v758 = vpack.c.bf16 %v684, %v680
  %v759 = vpack.c.bf16 %v686, %v682
  %v760 = vpack.c.bf16 %v694, %v690
  %v761 = vpack.c.bf16 %v696, %v692
  %v826 = vunpack.c.l.b16 %v698
  %v827 = vunpack.c.l.b16 %v699
  %v828 = vunpack.c.h.b16 %v698
  %v829 = vunpack.c.h.b16 %v699
  %v830 = vunpack.c.l.b16 %v700
  %v831 = vunpack.c.l.b16 %v701
  %v832 = vunpack.c.h.b16 %v700
  %v833 = vunpack.c.h.b16 %v701
  %v834 = vunpack.c.l.b16 %v702
  %v835 = vunpack.c.l.b16 %v703
  %v836 = vunpack.c.h.b16 %v702
  %v837 = vunpack.c.h.b16 %v703
  %v838 = vunpack.c.l.b16 %v704
  %v839 = vunpack.c.l.b16 %v705
  %v840 = vunpack.c.h.b16 %v704
  %v841 = vunpack.c.h.b16 %v705
  %v842 = vunpack.c.l.b16 %v706
  %v843 = vunpack.c.l.b16 %v707
  %v844 = vunpack.c.h.b16 %v706
  %v845 = vunpack.c.h.b16 %v707
  %v846 = vunpack.c.l.b16 %v708
  %v847 = vunpack.c.l.b16 %v709
  %v848 = vunpack.c.h.b16 %v708
  %v849 = vunpack.c.h.b16 %v709
  %v850 = vunpack.c.l.b16 %v710
  %v851 = vunpack.c.l.b16 %v711
  %v852 = vunpack.c.h.b16 %v710
  %v853 = vunpack.c.h.b16 %v711
  %v854 = vunpack.c.l.b16 %v712
  %v855 = vunpack.c.l.b16 %v713
  %v856 = vunpack.c.h.b16 %v712
  %v857 = vunpack.c.h.b16 %v713
  %v858 = vunpack.c.l.b16 %v714
  %v859 = vunpack.c.l.b16 %v715
  %v860 = vunpack.c.h.b16 %v714
  %v861 = vunpack.c.h.b16 %v715
  %v862 = vunpack.c.l.b16 %v716
  %v863 = vunpack.c.l.b16 %v717
  %v864 = vunpack.c.h.b16 %v716
  %v865 = vunpack.c.h.b16 %v717
  %v866 = vunpack.c.l.b16 %v718
  %v867 = vunpack.c.l.b16 %v719
  %v868 = vunpack.c.h.b16 %v718
  %v869 = vunpack.c.h.b16 %v719
  %v870 = vunpack.c.l.b16 %v720
  %v871 = vunpack.c.l.b16 %v721
  %v872 = vunpack.c.h.b16 %v720
  %v873 = vunpack.c.h.b16 %v721
  %v874 = vunpack.c.l.b16 %v722
  %v875 = vunpack.c.l.b16 %v723
  %v876 = vunpack.c.h.b16 %v722
  %v877 = vunpack.c.h.b16 %v723
  %v878 = vunpack.c.l.b16 %v724
  %v879 = vunpack.c.l.b16 %v725
  %v880 = vunpack.c.h.b16 %v724
  %v881 = vunpack.c.h.b16 %v725
  %v882 = vunpack.c.l.b16 %v726
  %v883 = vunpack.c.l.b16 %v727
  %v884 = vunpack.c.h.b16 %v726
  %v885 = vunpack.c.h.b16 %v727
  %v886 = vunpack.c.l.b16 %v728
  %v887 = vunpack.c.l.b16 %v729
  %v888 = vunpack.c.h.b16 %v728
  %v889 = vunpack.c.h.b16 %v729
  %v890 = vunpack.c.l.b16 %v730
  %v891 = vunpack.c.l.b16 %v731
  %v892 = vunpack.c.h.b16 %v730
  %v893 = vunpack.c.h.b16 %v731
  %v894 = vunpack.c.l.b16 %v732
  %v895 = vunpack.c.l.b16 %v733
  %v896 = vunpack.c.h.b16 %v732
  %v897 = vunpack.c.h.b16 %v733
  %v898 = vunpack.c.l.b16 %v734
  %v899 = vunpack.c.l.b16 %v735
  %v900 = vunpack.c.h.b16 %v734
  %v901 = vunpack.c.h.b16 %v735
  %v902 = vunpack.c.l.b16 %v736
  %v903 = vunpack.c.l.b16 %v737
  %v904 = vunpack.c.h.b16 %v736
  %v905 = vunpack.c.h.b16 %v737
  %v906 = vunpack.c.l.b16 %v738
  %v907 = vunpack.c.l.b16 %v739
  %v908 = vunpack.c.h.b16 %v738
  %v909 = vunpack.c.h.b16 %v739
  %v910 = vunpack.c.l.b16 %v740
  %v911 = vunpack.c.l.b16 %v741
  %v912 = vunpack.c.h.b16 %v740
  %v913 = vunpack.c.h.b16 %v741
  %v914 = vunpack.c.l.b16 %v742
  %v915 = vunpack.c.l.b16 %v743
  %v916 = vunpack.c.h.b16 %v742
  %v917 = vunpack.c.h.b16 %v743
  %v918 = vunpack.c.l.b16 %v744
  %v919 = vunpack.c.l.b16 %v745
  %v920 = vunpack.c.h.b16 %v744
  %v921 = vunpack.c.h.b16 %v745
  %v922 = vunpack.c.l.b16 %v746
  %v923 = vunpack.c.l.b16 %v747
  %v924 = vunpack.c.h.b16 %v746
  %v925 = vunpack.c.h.b16 %v747
  %v926 = vunpack.c.l.b16 %v748
  %v927 = vunpack.c.l.b16 %v749
  %v928 = vunpack.c.h.b16 %v748
  %v929 = vunpack.c.h.b16 %v749
  %v930 = vunpack.c.l.b16 %v750
  %v931 = vunpack.c.l.b16 %v751
  %v932 = vunpack.c.h.b16 %v750
  %v933 = vunpack.c.h.b16 %v751
  %v934 = vunpack.c.l.b16 %v752
  %v935 = vunpack.c.l.b16 %v753
  %v936 = vunpack.c.h.b16 %v752
  %v937 = vunpack.c.h.b16 %v753
  %v938 = vunpack.c.l.b16 %v754
  %v939 = vunpack.c.l.b16 %v755
  %v940 = vunpack.c.h.b16 %v754
  %v941 = vunpack.c.h.b16 %v755
  %v942 = vunpack.c.l.b16 %v756
  %v943 = vunpack.c.l.b16 %v757
  %v944 = vunpack.c.h.b16 %v756
  %v945 = vunpack.c.h.b16 %v757
  %v946 = vunpack.c.l.b16 %v758
  %v947 = vunpack.c.l.b16 %v759
  %v948 = vunpack.c.h.b16 %v758
  %v949 = vunpack.c.h.b16 %v759
  %v950 = vunpack.c.l.b16 %v760
  %v951 = vunpack.c.l.b16 %v761
  %v952 = vunpack.c.h.b16 %v760
  %v953 = vunpack.c.h.b16 %v761
  %v954 = vpack.c.b16 %v827, %v826
  %v955 = vpack.c.b16 %v829, %v828
  %v956 = vpack.c.b16 %v831, %v830
  %v957 = vpack.c.b16 %v833, %v832
  %v958 = vpack.c.b16 %v835, %v834
  %v959 = vpack.c.b16 %v837, %v836
  %v960 = vpack.c.b16 %v839, %v838
  %v961 = vpack.c.b16 %v841, %v840
  %v962 = vpack.c.b16 %v843, %v842
  %v963 = vpack.c.b16 %v845, %v844
  %v964 = vpack.c.b16 %v847, %v846
  %v965 = vpack.c.b16 %v849, %v848
  %v966 = vpack.c.b16 %v851, %v850
  %v967 = vpack.c.b16 %v853, %v852
  %v968 = vpack.c.b16 %v855, %v854
  %v969 = vpack.c.b16 %v857, %v856
  %v970 = vpack.c.b16 %v859, %v858
  %v971 = vpack.c.b16 %v861, %v860
  %v972 = vpack.c.b16 %v863, %v862
  %v973 = vpack.c.b16 %v865, %v864
  %v974 = vpack.c.b16 %v867, %v866
  %v975 = vpack.c.b16 %v869, %v868
  %v976 = vpack.c.b16 %v871, %v870
  %v977 = vpack.c.b16 %v873, %v872
  %v978 = vpack.c.b16 %v875, %v874
  %v979 = vpack.c.b16 %v877, %v876
  %v980 = vpack.c.b16 %v879, %v878
  %v981 = vpack.c.b16 %v881, %v880
  %v982 = vpack.c.b16 %v883, %v882
  %v983 = vpack.c.b16 %v885, %v884
  %v984 = vpack.c.b16 %v887, %v886
  %v985 = vpack.c.b16 %v889, %v888
  %v986 = vpack.c.b16 %v891, %v890
  %v987 = vpack.c.b16 %v893, %v892
  %v988 = vpack.c.b16 %v895, %v894
  %v989 = vpack.c.b16 %v897, %v896
  %v990 = vpack.c.b16 %v899, %v898
  %v991 = vpack.c.b16 %v901, %v900
  %v992 = vpack.c.b16 %v903, %v902
  %v993 = vpack.c.b16 %v905, %v904
  %v994 = vpack.c.b16 %v907, %v906
  %v995 = vpack.c.b16 %v909, %v908
  %v996 = vpack.c.b16 %v911, %v910
  %v997 = vpack.c.b16 %v913, %v912
  %v998 = vpack.c.b16 %v915, %v914
  %v999 = vpack.c.b16 %v917, %v916
  %v1000 = vpack.c.b16 %v919, %v918
  %v1001 = vpack.c.b16 %v921, %v920
  %v1002 = vpack.c.b16 %v923, %v922
  %v1003 = vpack.c.b16 %v925, %v924
  %v1004 = vpack.c.b16 %v927, %v926
  %v1005 = vpack.c.b16 %v929, %v928
  %v1006 = vpack.c.b16 %v931, %v930
  %v1007 = vpack.c.b16 %v933, %v932
  %v1008 = vpack.c.b16 %v935, %v934
  %v1009 = vpack.c.b16 %v937, %v936
  %v1010 = vpack.c.b16 %v939, %v938
  %v1011 = vpack.c.b16 %v941, %v940
  %v1012 = vpack.c.b16 %v943, %v942
  %v1013 = vpack.c.b16 %v945, %v944
  %v1014 = vpack.c.b16 %v947, %v946
  %v1015 = vpack.c.b16 %v949, %v948
  %v1016 = vpack.c.b16 %v951, %v950
  %v1017 = vpack.c.b16 %v953, %v952
  %1082 = vst [vmem:[%s2] sm:$0xff] %v954
  %1083 = vst [vmem:[%s2 + $0x8] sm:$0xff] %v955
  %1084 = vst [vmem:[%s2 + $0x10] sm:$0xff] %v956
  %1085 = vst [vmem:[%s2 + $0x18] sm:$0xff] %v957
  %1086 = vst [vmem:[%s2 + $0x20] sm:$0xff] %v958
  %1087 = vst [vmem:[%s2 + $0x28] sm:$0xff] %v959
  %1088 = vst [vmem:[%s2 + $0x30] sm:$0xff] %v960
  %1089 = vst [vmem:[%s2 + $0x38] sm:$0xff] %v961
  %1090 = vst [vmem:[%s2 + $0x40] sm:$0xff] %v962
  %1091 = vst [vmem:[%s2 + $0x48] sm:$0xff] %v963
  %1092 = vst [vmem:[%s2 + $0x50] sm:$0xff] %v964
  %1093 = vst [vmem:[%s2 + $0x58] sm:$0xff] %v965
  %1094 = vst [vmem:[%s2 + $0x60] sm:$0xff] %v966
  %1095 = vst [vmem:[%s2 + $0x68] sm:$0xff] %v967
  %1096 = vst [vmem:[%s2 + $0x70] sm:$0xff] %v968
  %1097 = vst [vmem:[%s2 + $0x78] sm:$0xff] %v969
  %1098 = vst [vmem:[%s2 + $0x80] sm:$0xff] %v970
  %1099 = vst [vmem:[%s2 + $0x88] sm:$0xff] %v971
  %1100 = vst [vmem:[%s2 + $0x90] sm:$0xff] %v972
  %1101 = vst [vmem:[%s2 + $0x98] sm:$0xff] %v973
  %1102 = vst [vmem:[%s2 + $0xa0] sm:$0xff] %v974
  %1103 = vst [vmem:[%s2 + $0xa8] sm:$0xff] %v975
  %1104 = vst [vmem:[%s2 + $0xb0] sm:$0xff] %v976
  %1105 = vst [vmem:[%s2 + $0xb8] sm:$0xff] %v977
  %1106 = vst [vmem:[%s2 + $0xc0] sm:$0xff] %v978
  %1107 = vst [vmem:[%s2 + $0xc8] sm:$0xff] %v979
  %1108 = vst [vmem:[%s2 + $0xd0] sm:$0xff] %v980
  %1109 = vst [vmem:[%s2 + $0xd8] sm:$0xff] %v981
  %1110 = vst [vmem:[%s2 + $0xe0] sm:$0xff] %v982
  %1111 = vst [vmem:[%s2 + $0xe8] sm:$0xff] %v983
  %1112 = vst [vmem:[%s2 + $0xf0] sm:$0xff] %v984
  %1113 = vst [vmem:[%s2 + $0xf8] sm:$0xff] %v985
  %1114 = vst [vmem:[%s2 + $0x100] sm:$0xff] %v986
  %1115 = vst [vmem:[%s2 + $0x108] sm:$0xff] %v987
  %1116 = vst [vmem:[%s2 + $0x110] sm:$0xff] %v988
  %1117 = vst [vmem:[%s2 + $0x118] sm:$0xff] %v989
  %1118 = vst [vmem:[%s2 + $0x120] sm:$0xff] %v990
  %1119 = vst [vmem:[%s2 + $0x128] sm:$0xff] %v991
  %1120 = vst [vmem:[%s2 + $0x130] sm:$0xff] %v992
  %1121 = vst [vmem:[%s2 + $0x138] sm:$0xff] %v993
  %1122 = vst [vmem:[%s2 + $0x140] sm:$0xff] %v994
  %1123 = vst [vmem:[%s2 + $0x148] sm:$0xff] %v995
  %1124 = vst [vmem:[%s2 + $0x150] sm:$0xff] %v996
  %1125 = vst [vmem:[%s2 + $0x158] sm:$0xff] %v997
  %1126 = vst [vmem:[%s2 + $0x160] sm:$0xff] %v998
  %1127 = vst [vmem:[%s2 + $0x168] sm:$0xff] %v999
  %1128 = vst [vmem:[%s2 + $0x170] sm:$0xff] %v1000
  %1129 = vst [vmem:[%s2 + $0x178] sm:$0xff] %v1001
  %1130 = vst [vmem:[%s2 + $0x180] sm:$0xff] %v1002
  %1131 = vst [vmem:[%s2 + $0x188] sm:$0xff] %v1003
  %1132 = vst [vmem:[%s2 + $0x190] sm:$0xff] %v1004
  %1133 = vst [vmem:[%s2 + $0x198] sm:$0xff] %v1005
  %1134 = vst [vmem:[%s2 + $0x1a0] sm:$0xff] %v1006
  %1135 = vst [vmem:[%s2 + $0x1a8] sm:$0xff] %v1007
  %1136 = vst [vmem:[%s2 + $0x1b0] sm:$0xff] %v1008
  %1137 = vst [vmem:[%s2 + $0x1b8] sm:$0xff] %v1009
  %1138 = vst [vmem:[%s2 + $0x1c0] sm:$0xff] %v1010
  %1139 = vst [vmem:[%s2 + $0x1c8] sm:$0xff] %v1011
  %1140 = vst [vmem:[%s2 + $0x1d0] sm:$0xff] %v1012
  %1141 = vst [vmem:[%s2 + $0x1d8] sm:$0xff] %v1013
  %1142 = vst [vmem:[%s2 + $0x1e0] sm:$0xff] %v1014
  %1143 = vst [vmem:[%s2 + $0x1e8] sm:$0xff] %v1015
  %1144 = vst [vmem:[%s2 + $0x1f0] sm:$0xff] %v1016
  %1145 = vst [vmem:[%s2 + $0x1f8] sm:$0xff] %v1017
  // Predicated region
  $region10: #{netg_forward.23} parent=0 // pred_check
    _
  $region11: #{netg_forward.23} parent=0 // pred_check_branch
    %1147 = sbr.rel (0) target = $region13
  $region12: #{netg_forward.23} parent=0 // pred_region
    _
  $region13: #{netg_forward.23} parent=0 // pred_fallthru
    _
  // Predicated region
  $region14: #{netg_forward.23} parent=0 // pred_check
    _
  $region15: #{netg_forward.23} parent=0 // pred_check_branch
    %1149 = sbr.rel (0) target = $region17
  $region16: #{netg_forward.23} parent=0 // pred_region
    _
  $region17: #{netg_forward.23} parent=0 // pred_fallthru
    _

// kernel: netg_forward.24
$region0: #{netg_forward.24}
  #allocation0 [shape = 'u32[]', space=smem, size = 0x4, offset = 0x4, fixed_abs, tag = 'smem constant byte address 0x4 - core index']
  #allocation1 [shape = 'u32[144,128]{1,0:T(1,128)}', space=vmem, size = 0x12000, scoped, tag = 'internal scratch']
  %s0 = inlined_call_operand.vmem [shape: bf16[64,256], index: 0, kind: input, shape index: {}]
  %s1 = inlined_call_operand.vmem [shape: f32[1,256], index: 1, kind: output, shape index: {0}]
  %s2 = inlined_call_operand.vmem [shape: f32[1,256], index: 2, kind: output, shape index: {1}]
  %3 = xla_tuple %s1, %s2
  %s4 = sld [smem:[#allocation0]]
  $region90: #{netg_forward.24} parent=0
    _
  %s6 = ssub.s32 1, %s4
  %s7 = scalar_select 0, %s6, %s4
  $region1: #{netg_forward.24} parent=0
    #allocation2 [shape = 'u8[32768]{0}', space=vmem, size = 0x8000, scoped, tag = 'input window, operand 0']
    loop: start=0, step=1, limit=4
    $region2: #{netg_forward.24} parent=1 // loop_pre_header
      _
    $region3: #{netg_forward.24} parent=1 // loop_header
      %s9 = sphi 0, %s13
      %p10 = scmp.ge.s32.totalorder %s9, 4
      %s16 = sphi 0, %s28
      %s17 = sphi 0, %s24
      %s18 = sphi 0, %s16
      %s19 = sphi 0, %s17
      %s20 = sphi 0, %s18
      %s21 = sphi 0, %s19
      %s33 = sphi 0, %s35
      %s36 = sphi 0, %s33
      %s37 = sphi 0, %s36
      %s53 = sphi 0, %s37
      %s59 = sphi 0, %s61
      %s62 = sphi 0, %s59
      %s63 = sphi 0, %s62
      %s79 = sphi 0, %s63
      %s85 = sphi 0, %s87
      %s88 = sphi 0, %s85
      %s89 = sphi 0, %s88
      %s105 = sphi 0, %s89
    $region4: #{netg_forward.24} parent=1 // loop_header_branch
      %12 = sbr.rel (%p10) target = $region8
    $region5: #{netg_forward.24} parent=1 // loop_body
      %s14 = ssub.s32 %s9, 1
      %s15 = ssub.s32 %s9, 2
      %s22 = sadd.s32 1, %s17
      %p23 = scmp.ge.s32.totalorder %s22, 1
      %s24 = scalar_select %p23, 0, %s22
      %s25 = sadd.s32 1, %s16
      %s26 = scalar_select %p23, %s25, %s16
      %p27 = scmp.ge.s32.totalorder %s26, 2
      %s28 = scalar_select %p27, 0, %s26
      %s29 = ssub.s32 %s17, %s24
      %s30 = ssub.s32 %s16, %s28
      %s31 = sor.u32 %s29, %s30
      %p32 = scmp.eq.s32.totalorder %s31, 0
      %s34 = sadd.s32 %s33, 1
      %s35 = scalar_select %p32, %s33, %s34
      %p38 = pneg %p32
      %p39 = scmp.eq.s32.totalorder %s9, 1
      %p40 = por %p38, %p39
      %p41 = scmp.ne.s32.totalorder %s33, %s36
      %p42 = scmp.eq.s32.totalorder %s9, 0
      %p43 = por %p41, %p42
      %p44 = scmp.ne.s32.totalorder %s33, %s36
      %p45 = scmp.eq.s32.totalorder %s14, 1
      %p46 = por %p44, %p45
      %p47 = scmp.ne.s32.totalorder %s36, %s37
      %p48 = scmp.eq.s32.totalorder %s14, 0
      %p49 = por %p47, %p48
      %p50 = scmp.ne.s32.totalorder %s36, %s37
      %p51 = scmp.eq.s32.totalorder %s15, 1
      %p52 = por %p50, %p51
      %p54 = scmp.ne.s32.totalorder %s37, %s53
      %p55 = scmp.eq.s32.totalorder %s15, 0
      %p56 = por %p54, %p55
      %s57 = ssub.s32 %s16, %s28
      %p58 = scmp.eq.s32.totalorder %s57, 0
      %s60 = sadd.s32 %s59, 1
      %s61 = scalar_select %p58, %s59, %s60
      %p64 = pneg %p58
      %p65 = scmp.eq.s32.totalorder %s9, 1
      %p66 = por %p64, %p65
      %p67 = scmp.ne.s32.totalorder %s59, %s62
      %p68 = scmp.eq.s32.totalorder %s9, 0
      %p69 = por %p67, %p68
      %p70 = scmp.ne.s32.totalorder %s59, %s62
      %p71 = scmp.eq.s32.totalorder %s14, 1
      %p72 = por %p70, %p71
      %p73 = scmp.ne.s32.totalorder %s62, %s63
      %p74 = scmp.eq.s32.totalorder %s14, 0
      %p75 = por %p73, %p74
      %p76 = scmp.ne.s32.totalorder %s62, %s63
      %p77 = scmp.eq.s32.totalorder %s15, 1
      %p78 = por %p76, %p77
      %p80 = scmp.ne.s32.totalorder %s63, %s79
      %p81 = scmp.eq.s32.totalorder %s15, 0
      %p82 = por %p80, %p81
      %s83 = ssub.s32 %s16, %s28
      %p84 = scmp.eq.s32.totalorder %s83, 0
      %s86 = sadd.s32 %s85, 1
      %s87 = scalar_select %p84, %s85, %s86
      %p90 = pneg %p84
      %p91 = scmp.eq.s32.totalorder %s9, 1
      %p92 = por %p90, %p91
      %p93 = scmp.ne.s32.totalorder %s85, %s88
      %p94 = scmp.eq.s32.totalorder %s9, 0
      %p95 = por %p93, %p94
      %p96 = scmp.ne.s32.totalorder %s85, %s88
      %p97 = scmp.eq.s32.totalorder %s14, 1
      %p98 = por %p96, %p97
      %p99 = scmp.ne.s32.totalorder %s88, %s89
      %p100 = scmp.eq.s32.totalorder %s14, 0
      %p101 = por %p99, %p100
      %p102 = scmp.ne.s32.totalorder %s88, %s89
      %p103 = scmp.eq.s32.totalorder %s15, 1
      %p104 = por %p102, %p103
      %p106 = scmp.ne.s32.totalorder %s89, %s105
      %p107 = scmp.eq.s32.totalorder %s15, 0
      %p108 = por %p106, %p107
      %p109 = scmp.le.s32.totalorder 1, %s9
      %p110 = scmp.lt.s32.totalorder %s9, 3
      %p111 = pnand %p109, %p110
      %p112 = pneg %p111
      // Predicated region
      $region9: #{netg_forward.24} parent=5 // pred_check
        _
      $region10: #{netg_forward.24} parent=5 // pred_check_branch
        %114 = sbr.rel (%p111) target = $region12
      $region11: #{netg_forward.24} parent=5 // pred_region
        %s115 = ssub.s32 %s9, 1
      $region12: #{netg_forward.24} parent=5 // pred_fallthru
        _
      %p116 = scmp.lt.s32.totalorder %s9, 2
      // Predicated region
      $region13: #{netg_forward.24} parent=5 // pred_check
        %p117 = pneg %p116
      $region14: #{netg_forward.24} parent=5 // pred_check_branch
        %119 = sbr.rel (%p117) target = $region16
      $region15: #{netg_forward.24} parent=5 // pred_region
        // Predicated region
        $region17: #{netg_forward.24} parent=15 // pred_check
          %p120 = pneg %p43
        $region18: #{netg_forward.24} parent=15 // pred_check_branch
          %122 = sbr.rel (%p120) target = $region20
        $region19: #{netg_forward.24} parent=15 // pred_region
          %s123 = sand.u32 %s33, 1
          %s124 = sand.u32 %s33, 1
          %s125 = smul.addr %s124, 32
          %s126 = scalar_lea.vmem [#allocation2], %s125
          %s127 = smul.u32 8, %s17
          %s128 = smul.addr %s127, 2
          %s129 = sadd.s32 %s16, %s128
          %s130 = smul.addr %s129, 4
          %s131 = scalar_lea.vmem %s0, %s130
          // Predicated region
          $region21: #{netg_forward.24} parent=19 // pred_check
            _
          $region22: #{netg_forward.24} parent=19 // pred_check_branch
            %133 = sbr.rel (0) target = $region24
          $region23: #{netg_forward.24} parent=19 // pred_region
            // Predicated region
            $region25: #{netg_forward.24} parent=23 // pred_check
              _
            $region26: #{netg_forward.24} parent=23 // pred_check_branch
              %135 = sbr.rel target = $region28
            $region27: #{netg_forward.24} parent=23 // pred_region
              // Predicated region
              $region40: #{netg_forward.24} parent=27 // pred_check
                _
              $region41: #{netg_forward.24} parent=27 // pred_check_branch
                %164 = sbr.rel (0) target = $region43
              $region42: #{netg_forward.24} parent=27 // pred_region
                loop: start=0, step=1, limit=1
                $region44: #{netg_forward.24} parent=42 // loop_pre_header
                  _
                $region45: #{netg_forward.24} parent=42 // loop_header
                  %s166 = sphi 0, %s170
                  %p167 = scmp.ge.s32.totalorder %s166, 1
                  %s171 = sphi %s131, %s131
                  %s172 = sphi %s126, %s126
                $region46: #{netg_forward.24} parent=42 // loop_header_branch
                  %169 = sbr.rel (%p167) target = $region50
                $region47: #{netg_forward.24} parent=42 // loop_body
                  _
                $region48: #{netg_forward.24} parent=42 // loop_footer
                  %s170 = sadd.s32 1, %s166
                $region49: #{netg_forward.24} parent=42 // loop_footer_branch
                  %165 = sbr.rel target = $region45
                $region50: #{netg_forward.24} parent=42 // loop_exit
                  _
                loop: start=0, step=1, limit=1
                $region51: #{netg_forward.24} parent=42 // loop_pre_header
                  _
                $region52: #{netg_forward.24} parent=42 // loop_header
                  %s175 = sphi 0, %s179
                  %p176 = scmp.ge.s32.totalorder %s175, 1
                  %s180 = sphi %s131, %s131
                  %s181 = sphi %s126, %s126
                $region53: #{netg_forward.24} parent=42 // loop_header_branch
                  %178 = sbr.rel (%p176) target = $region57
                $region54: #{netg_forward.24} parent=42 // loop_body
                  %v182 = vld [vmem:[%s180] sm:$0xf]
                  %183 = vst [vmem:[%s181] sm:$0xf] %v182
                  %v184 = vld [vmem:[%s180 + $0x8] sm:$0xf]
                  %185 = vst [vmem:[%s181 + $0x4] sm:$0xf] %v184
                  %v186 = vld [vmem:[%s180 + $0x10] sm:$0xf]
                  %187 = vst [vmem:[%s181 + $0x8] sm:$0xf] %v186
                  %v188 = vld [vmem:[%s180 + $0x18] sm:$0xf]
                  %189 = vst [vmem:[%s181 + $0xc] sm:$0xf] %v188
                  %v190 = vld [vmem:[%s180 + $0x20] sm:$0xf]
                  %191 = vst [vmem:[%s181 + $0x10] sm:$0xf] %v190
                  %v192 = vld [vmem:[%s180 + $0x28] sm:$0xf]
                  %193 = vst [vmem:[%s181 + $0x14] sm:$0xf] %v192
                  %v194 = vld [vmem:[%s180 + $0x30] sm:$0xf]
                  %195 = vst [vmem:[%s181 + $0x18] sm:$0xf] %v194
                  %v196 = vld [vmem:[%s180 + $0x38] sm:$0xf]
                  %197 = vst [vmem:[%s181 + $0x1c] sm:$0xf] %v196
                $region55: #{netg_forward.24} parent=42 // loop_footer
                  %s179 = sadd.s32 1, %s175
                $region56: #{netg_forward.24} parent=42 // loop_footer_branch
                  %174 = sbr.rel target = $region52
                $region57: #{netg_forward.24} parent=42 // loop_exit
                  _
              $region43: #{netg_forward.24} parent=27 // pred_fallthru
                _
            $region28: #{netg_forward.24} parent=23 // pred_fallthru
              _
            // Predicated region
            $region29: #{netg_forward.24} parent=23 // pred_check
              _
            $region30: #{netg_forward.24} parent=23 // pred_check_branch
              %137 = sbr.rel (0) target = $region32
            $region31: #{netg_forward.24} parent=23 // pred_region
              loop: start=0, step=1, limit=1
              $region33: #{netg_forward.24} parent=31 // loop_pre_header
                _
              $region34: #{netg_forward.24} parent=31 // loop_header
                %s140 = sphi 0, %s144
                %p141 = scmp.ge.s32.totalorder %s140, 1
                %s145 = sphi %s131, %s131
                %s146 = sphi %s126, %s126
              $region35: #{netg_forward.24} parent=31 // loop_header_branch
                %143 = sbr.rel (%p141) target = $region39
              $region36: #{netg_forward.24} parent=31 // loop_body
                %v147 = vld [vmem:[%s145] sm:$0xf]
                %148 = vst [vmem:[%s146] sm:$0xf] %v147
                %v149 = vld [vmem:[%s145 + $0x8] sm:$0xf]
                %150 = vst [vmem:[%s146 + $0x4] sm:$0xf] %v149
                %v151 = vld [vmem:[%s145 + $0x10] sm:$0xf]
                %152 = vst [vmem:[%s146 + $0x8] sm:$0xf] %v151
                %v153 = vld [vmem:[%s145 + $0x18] sm:$0xf]
                %154 = vst [vmem:[%s146 + $0xc] sm:$0xf] %v153
                %v155 = vld [vmem:[%s145 + $0x20] sm:$0xf]
                %156 = vst [vmem:[%s146 + $0x10] sm:$0xf] %v155
                %v157 = vld [vmem:[%s145 + $0x28] sm:$0xf]
                %158 = vst [vmem:[%s146 + $0x14] sm:$0xf] %v157
                %v159 = vld [vmem:[%s145 + $0x30] sm:$0xf]
                %160 = vst [vmem:[%s146 + $0x18] sm:$0xf] %v159
                %v161 = vld [vmem:[%s145 + $0x38] sm:$0xf]
                %162 = vst [vmem:[%s146 + $0x1c] sm:$0xf] %v161
              $region37: #{netg_forward.24} parent=31 // loop_footer
                %s144 = sadd.s32 1, %s140
              $region38: #{netg_forward.24} parent=31 // loop_footer_branch
                %139 = sbr.rel target = $region34
              $region39: #{netg_forward.24} parent=31 // loop_exit
                _
            $region32: #{netg_forward.24} parent=23 // pred_fallthru
              _
          $region24: #{netg_forward.24} parent=19 // pred_fallthru
            _
          %198 = vnop
        $region20: #{netg_forward.24} parent=15 // pred_fallthru
          _
      $region16: #{netg_forward.24} parent=5 // pred_fallthru
        _
      %p199 = scmp.le.s32.totalorder 1, %s9
      %p200 = scmp.lt.s32.totalorder %s9, 3
      %p201 = pnand %p199, %p200
      %p202 = pneg %p201
      // Predicated region
      $region58: #{netg_forward.24} parent=5 // pred_check
        _
      $region59: #{netg_forward.24} parent=5 // pred_check_branch
        %204 = sbr.rel (%p201) target = $region61
      $region60: #{netg_forward.24} parent=5 // pred_region
        %s205 = ssub.s32 %s9, 1
        %s206 = sand.u32 %s36, 1
        %s207 = sand.u32 %s36, 1
        %s208 = smul.addr %s207, 32
        %s209 = scalar_lea.vmem [#allocation2], %s208
        // Predicated region
        $region62: #{netg_forward.24} parent=60 // pred_check
          %p210 = pneg %p49
        $region63: #{netg_forward.24} parent=60 // pred_check_branch
          %212 = sbr.rel (%p210) target = $region65
        $region64: #{netg_forward.24} parent=60 // pred_region
          _
        $region65: #{netg_forward.24} parent=60 // pred_fallthru
          _
        %s213 = sand.u32 %s36, 1
        %s214 = sand.u32 %s36, 1
        %s215 = smul.addr %s214, 32
        %s216 = scalar_lea.vmem [#allocation2], %s215
        %p217 = pneg %p49
        %p218 = pneg %p46
        %p219 = pneg %p75
        %p220 = pneg %p72
        %p221 = scmp.lt.s32.totalorder %s18, 1
        %s222 = scalar_select %p221, %s18, 1
        %s223 = scalar_lea.vmem %s1, %s222
        %p224 = pneg %p101
        %p225 = pneg %p98
        %p226 = scmp.lt.s32.totalorder %s18, 1
        %s227 = scalar_select %p226, %s18, 1
        %s228 = scalar_lea.vmem %s2, %s227
        %s229 = smul.u32 8, %s19
        %p230 = scmp.lt.s32.totalorder %s18, 1
        %s231 = scalar_select %p230, %s18, 1
        %s232 = scalar_lea.vmem %s1, %s231
        %p233 = scmp.lt.s32.totalorder %s18, 1
        %s234 = scalar_select %p233, %s18, 1
        %s235 = scalar_lea.vmem %s2, %s234
        %p236 = scmp.eq.s32.totalorder %s19, 0
        // Predicated region
        $region66: #{netg_forward.24} parent=60 // pred_check
          %p237 = pneg %p236
        $region67: #{netg_forward.24} parent=60 // pred_check_branch
          %239 = sbr.rel (%p237) target = $region69
        $region68: #{netg_forward.24} parent=60 // pred_region
          %240 = vst [vmem:[%s232] sm:$0x1] 0.0
          %241 = vst [vmem:[%s235] sm:$0x1] 0.0
        $region69: #{netg_forward.24} parent=60 // pred_fallthru
          _
        %v242 = vld [vmem:[%s209] sm:$0xf]
        %v243 = vld [vmem:[%s209 + $0x4] sm:$0xf]
        %v244 = vld [vmem:[%s209 + $0x8] sm:$0xf]
        %v245 = vld [vmem:[%s209 + $0xc] sm:$0xf]
        %v246 = vld [vmem:[%s209 + $0x10] sm:$0xf]
        %v247 = vld [vmem:[%s209 + $0x14] sm:$0xf]
        %v248 = vld [vmem:[%s209 + $0x18] sm:$0xf]
        %v249 = vld [vmem:[%s209 + $0x1c] sm:$0xf]
        %v250 = vunpack.c.l.bf16 %v242
        %v251 = vunpack.c.l.bf16 %v243
        %v252 = vunpack.c.l.bf16 %v244
        %v253 = vunpack.c.l.bf16 %v245
        %v254 = vunpack.c.l.bf16 %v246
        %v255 = vunpack.c.l.bf16 %v247
        %v256 = vunpack.c.l.bf16 %v248
        %v257 = vunpack.c.l.bf16 %v249
        %v258 = vld [vmem:[%s232] sm:$0x1]
        %v259 = vadd.f32 %v250, %v251
        %v260 = vadd.f32 %v259, %v252
        %v261 = vadd.f32 %v260, %v253
        %v262 = vadd.f32 %v261, %v254
        %v263 = vadd.f32 %v262, %v255
        %v264 = vadd.f32 %v263, %v256
        %v265 = vadd.f32 %v264, %v257
        %v266 = vrot.slane %v265, 4
        %v267 = vadd.f32 %v265, %v266
        %v268 = vrot.slane %v267, 2
        %v269 = vadd.f32 %v267, %v268
        %v270 = vrot.slane %v269, 1
        %v271 = vadd.f32 %v269, %v270
        %v272 = vadd.f32 %v258, %v271
        %273 = vst [vmem:[%s232] sm:$0x1] %v272
        %v274 = vld [vmem:[%s235] sm:$0x1]
        %v275 = vmul.f32 %v250, %v250
        %v276 = vmul.f32 %v251, %v251
        %v277 = vmul.f32 %v252, %v252
        %v278 = vmul.f32 %v253, %v253
        %v279 = vmul.f32 %v254, %v254
        %v280 = vmul.f32 %v255, %v255
        %v281 = vmul.f32 %v256, %v256
        %v282 = vmul.f32 %v257, %v257
        %v283 = vadd.f32 %v275, %v276
        %v284 = vadd.f32 %v283, %v277
        %v285 = vadd.f32 %v284, %v278
        %v286 = vadd.f32 %v285, %v279
        %v287 = vadd.f32 %v286, %v280
        %v288 = vadd.f32 %v287, %v281
        %v289 = vadd.f32 %v288, %v282
        %v290 = vrot.slane %v289, 4
        %v291 = vadd.f32 %v289, %v290
        %v292 = vrot.slane %v291, 2
        %v293 = vadd.f32 %v291, %v292
        %v294 = vrot.slane %v293, 1
        %v295 = vadd.f32 %v293, %v294
        %v296 = vadd.f32 %v274, %v295
        %297 = vst [vmem:[%s235] sm:$0x1] %v296
        %p298 = scmp.lt.s32.totalorder %s18, 1
        %s299 = scalar_select %p298, %s18, 1
        %s300 = scalar_lea.vmem %s1, %s299
        %p301 = scmp.lt.s32.totalorder %s18, 1
        %s302 = scalar_select %p301, %s18, 1
        %s303 = scalar_lea.vmem %s2, %s302
        // Predicated region
        $region70: #{netg_forward.24} parent=60 // pred_check
          %p304 = pneg %p72
        $region71: #{netg_forward.24} parent=60 // pred_check_branch
          %306 = sbr.rel (%p304) target = $region73
        $region72: #{netg_forward.24} parent=60 // pred_region
          _
        $region73: #{netg_forward.24} parent=60 // pred_fallthru
          _
        // Predicated region
        $region74: #{netg_forward.24} parent=60 // pred_check
          %p307 = pneg %p98
        $region75: #{netg_forward.24} parent=60 // pred_check_branch
          %309 = sbr.rel (%p307) target = $region77
        $region76: #{netg_forward.24} parent=60 // pred_region
          _
        $region77: #{netg_forward.24} parent=60 // pred_fallthru
          _
      $region61: #{netg_forward.24} parent=5 // pred_fallthru
        _
      %p310 = scmp.le.s32.totalorder 2, %s9
      // Predicated region
      $region78: #{netg_forward.24} parent=5 // pred_check
        %p311 = pneg %p310
      $region79: #{netg_forward.24} parent=5 // pred_check_branch
        %313 = sbr.rel (%p311) target = $region81
      $region80: #{netg_forward.24} parent=5 // pred_region
        %s314 = ssub.s32 %s9, 2
        // Predicated region
        $region82: #{netg_forward.24} parent=80 // pred_check
          %p315 = pneg %p78
        $region83: #{netg_forward.24} parent=80 // pred_check_branch
          %317 = sbr.rel (%p315) target = $region85
        $region84: #{netg_forward.24} parent=80 // pred_region
          %p318 = scmp.lt.s32.totalorder %s20, 1
          %s319 = scalar_select %p318, %s20, 1
          %s320 = scalar_lea.vmem %s1, %s319
        $region85: #{netg_forward.24} parent=80 // pred_fallthru
          _
        // Predicated region
        $region86: #{netg_forward.24} parent=80 // pred_check
          %p321 = pneg %p104
        $region87: #{netg_forward.24} parent=80 // pred_check_branch
          %323 = sbr.rel (%p321) target = $region89
        $region88: #{netg_forward.24} parent=80 // pred_region
          %p324 = scmp.lt.s32.totalorder %s20, 1
          %s325 = scalar_select %p324, %s20, 1
          %s326 = scalar_lea.vmem %s2, %s325
        $region89: #{netg_forward.24} parent=80 // pred_fallthru
          _
      $region81: #{netg_forward.24} parent=5 // pred_fallthru
        _
    $region6: #{netg_forward.24} parent=1 // loop_footer
      %s13 = sadd.s32 1, %s9
    $region7: #{netg_forward.24} parent=1 // loop_footer_branch
      %8 = sbr.rel target = $region3
    $region8: #{netg_forward.24} parent=1 // loop_exit
      _

// kernel: tile.77
$region0: #{tile.77}
  #allocation0 [shape = 's32[1]{0}', space=sflag, size = 0x4, scoped, tag = 'scoped memory for tile.77']
  %s0 = inlined_call_operand.vmem [shape: f32[8], index: 0, kind: input, shape index: {}]
  %s1 = inlined_call_operand.vmem [shape: f32[32,8], index: 1, kind: output, shape index: {}]
  // Predicated region
  $region2: #{tile.77} parent=0 // pred_check
    _
  $region3: #{tile.77} parent=0 // pred_check_branch
    %3 = sbr.rel (0) target = $region5
  $region4: #{tile.77} parent=0 // pred_region
    _
  $region5: #{tile.77} parent=0 // pred_fallthru
    _
  %v4 = vld [vmem:[%s0] ss:$0 sm:$0xff]
  %5 = vst [vmem:[%s1] sm:$0xff] %v4
  %s6 = scalar_lea.vmem %s1, 8
  %7 = vst [vmem:[%s6] sm:$0xff] %v4
  %s8 = scalar_lea.vmem %s1, 16
  %9 = vst [vmem:[%s8] sm:$0xff] %v4
  %s10 = scalar_lea.vmem %s1, 24
  %11 = vst [vmem:[%s10] sm:$0xff] %v4

// kernel: tile.78
$region0: #{tile.78}
  %s0 = inlined_call_operand.vmem [shape: f32[32,8], index: 0, kind: input, shape index: {}]
  %s1 = inlined_call_operand.vmem [shape: f32[1,256], index: 1, kind: output, shape index: {}]
  $region1: #{tile.78} parent=0
    #allocation0 [shape = 'u8[8192]{0}', space=vmem, size = 0x2000, scoped, tag = 'scoped mem for output reshape']
    %s2 = smov 3
    %v3 = vld [vmem:[%s0] ss:$16 sm:%s2]
    %vm4 = vcmask 64512
    %5 = vst.msk [vmem:[#allocation0] ss:$8 sm:$0x3] %vm4, %v3
    %s6 = scalar_lea.vmem %s0, 15
    %s7 = smov 3
    %v8 = vld [vmem:[%s6] ss:$16 sm:%s7]
    %9 = vrot.lane.b32.xlu0 %v8, 120
    %v10 = vpop.permute.xlu0 %9
    %vm11 = vcmask 1048512
    %12 = vst.msk [vmem:[#allocation0] ss:$8 sm:$0x3] %vm11, %v10
    %s13 = scalar_lea.vmem %s0, 14
    %s14 = smov 3
    %v15 = vld [vmem:[%s13] ss:$16 sm:%s14]
    %16 = vrot.lane.b32.xlu0 %v15, 112
    %v17 = vpop.permute.xlu0 %16
    %vm18 = vcmask 982912
    %19 = vst.msk [vmem:[#allocation0] ss:$8 sm:$0x3] %vm18, %v17
    %s20 = scalar_lea.vmem %s0, 13
    %s21 = smov 3
    %v22 = vld [vmem:[%s20] ss:$16 sm:%s21]
    %23 = vrot.lane.b32.xlu0 %v22, 104
    %v24 = vpop.permute.xlu0 %23
    %vm25 = vcmask 917312
    %26 = vst.msk [vmem:[#allocation0] ss:$8 sm:$0x3] %vm25, %v24
    %s27 = scalar_lea.vmem %s0, 12
    %s28 = smov 3
    %v29 = vld [vmem:[%s27] ss:$16 sm:%s28]
    %30 = vrot.lane.b32.xlu0 %v29, 96
    %v31 = vpop.permute.xlu0 %30
    %vm32 = vcmask 851712
    %33 = vst.msk [vmem:[#allocation0] ss:$8 sm:$0x3] %vm32, %v31
    %s34 = scalar_lea.vmem %s0, 11
    %s35 = smov 3
    %v36 = vld [vmem:[%s34] ss:$16 sm:%s35]
    %37 = vrot.lane.b32.xlu0 %v36, 88
    %v38 = vpop.permute.xlu0 %37
    %vm39 = vcmask 786112
    %40 = vst.msk [vmem:[#allocation0] ss:$8 sm:$0x3] %vm39, %v38
    %s41 = scalar_lea.vmem %s0, 10
    %s42 = smov 3
    %v43 = vld [vmem:[%s41] ss:$16 sm:%s42]
    %44 = vrot.lane.b32.xlu0 %v43, 80
    %v45 = vpop.permute.xlu0 %44
    %vm46 = vcmask 720512
    %47 = vst.msk [vmem:[#allocation0] ss:$8 sm:$0x3] %vm46, %v45
    %s48 = scalar_lea.vmem %s0, 9
    %s49 = smov 3
    %v50 = vld [vmem:[%s48] ss:$16 sm:%s49]
    %51 = vrot.lane.b32.xlu0 %v50, 72
    %v52 = vpop.permute.xlu0 %51
    %vm53 = vcmask 654912
    %54 = vst.msk [vmem:[#allocation0] ss:$8 sm:$0x3] %vm53, %v52
    %s55 = scalar_lea.vmem %s0, 8
    %s56 = smov 3
    %v57 = vld [vmem:[%s55] ss:$16 sm:%s56]
    %58 = vrot.lane.b32.xlu0 %v57, 64
    %v59 = vpop.permute.xlu0 %58
    %vm60 = vcmask 589312
    %61 = vst.msk [vmem:[#allocation0] ss:$8 sm:$0x3] %vm60, %v59
    %s62 = scalar_lea.vmem %s0, 7
    %s63 = smov 3
    %v64 = vld [vmem:[%s62] ss:$16 sm:%s63]
    %65 = vrot.lane.b32.xlu0 %v64, 56
    %v66 = vpop.permute.xlu0 %65
    %vm67 = vcmask 523712
    %68 = vst.msk [vmem:[#allocation0] ss:$8 sm:$0x3] %vm67, %v66
    %s69 = scalar_lea.vmem %s0, 6
    %s70 = smov 3
    %v71 = vld [vmem:[%s69] ss:$16 sm:%s70]
    %72 = vrot.lane.b32.xlu0 %v71, 48
    %v73 = vpop.permute.xlu0 %72
    %vm74 = vcmask 458112
    %75 = vst.msk [vmem:[#allocation0] ss:$8 sm:$0x3] %vm74, %v73
    %s76 = scalar_lea.vmem %s0, 5
    %s77 = smov 3
    %v78 = vld [vmem:[%s76] ss:$16 sm:%s77]
    %79 = vrot.lane.b32.xlu0 %v78, 40
    %v80 = vpop.permute.xlu0 %79
    %vm81 = vcmask 392512
    %82 = vst.msk [vmem:[#allocation0] ss:$8 sm:$0x3] %vm81, %v80
    %s83 = scalar_lea.vmem %s0, 4
    %s84 = smov 3
    %v85 = vld [vmem:[%s83] ss:$16 sm:%s84]
    %86 = vrot.lane.b32.xlu0 %v85, 32
    %v87 = vpop.permute.xlu0 %86
    %vm88 = vcmask 326912
    %89 = vst.msk [vmem:[#allocation0] ss:$8 sm:$0x3] %vm88, %v87
    %s90 = scalar_lea.vmem %s0, 3
    %s91 = smov 3
    %v92 = vld [vmem:[%s90] ss:$16 sm:%s91]
    %93 = vrot.lane.b32.xlu0 %v92, 24
    %v94 = vpop.permute.xlu0 %93
    %vm95 = vcmask 261312
    %96 = vst.msk [vmem:[#allocation0] ss:$8 sm:$0x3] %vm95, %v94
    %s97 = scalar_lea.vmem %s0, 2
    %s98 = smov 3
    %v99 = vld [vmem:[%s97] ss:$16 sm:%s98]
    %100 = vrot.lane.b32.xlu0 %v99, 16
    %v101 = vpop.permute.xlu0 %100
    %vm102 = vcmask 195712
    %103 = vst.msk [vmem:[#allocation0] ss:$8 sm:$0x3] %vm102, %v101
    %s104 = scalar_lea.vmem %s0, 1
    %s105 = smov 3
    %v106 = vld [vmem:[%s104] ss:$16 sm:%s105]
    %107 = vrot.lane.b32.xlu0 %v106, 8
    %v108 = vpop.permute.xlu0 %107
    %vm109 = vcmask 130112
    %110 = vst.msk [vmem:[#allocation0] ss:$8 sm:$0x3] %vm109, %v108
    %s112 = sshllo.u32 0, 1
    %v114 = vld [vmem:[#allocation0] sm:%s112]
    %s115 = sshllo.u32 0, 1
    %116 = vst [vmem:[%s1] sm:%s115] %v114
    %s117 = scalar_lea.vmem [#allocation0], 8
    %v118 = vld [vmem:[%s117] sm:%s112]
    %s119 = sshllo.u32 0, 1
    %s120 = scalar_lea.vmem %s1, 1
    %121 = vst [vmem:[%s120] sm:%s119] %v118

// kernel: netg_forward.25
$region0: #{netg_forward.25}
  #allocation0 [shape = 'u32[]', space=smem, size = 0x4, offset = 0x4, fixed_abs, tag = 'smem constant byte address 0x4 - core index']
  #allocation1 [shape = 'u32[144,128]{1,0:T(1,128)}', space=vmem, size = 0x12000, scoped, tag = 'internal scratch']
  %s0 = inlined_call_operand.vmem [shape: bf16[64,256], index: 0, kind: input, shape index: {}]
  %s1 = inlined_call_operand.vmem [shape: f32[1,256], index: 1, kind: input, shape index: {}]
  %s2 = inlined_call_operand.vmem [shape: f32[1,256], index: 2, kind: input, shape index: {}]
  %s3 = inlined_call_operand.vmem [shape: bf16[64,256], index: 3, kind: output, shape index: {}]
  %s4 = sld [smem:[#allocation0]]
  $region22: #{netg_forward.25} parent=0
    _
  %s6 = ssub.s32 1, %s4
  %s7 = scalar_select 0, %s6, %s4
  // Predicated region
  $region2: #{netg_forward.25} parent=0 // pred_check
    _
  $region3: #{netg_forward.25} parent=0 // pred_check_branch
    %9 = sbr.rel (0) target = $region5
  $region4: #{netg_forward.25} parent=0 // pred_region
    _
  $region5: #{netg_forward.25} parent=0 // pred_fallthru
    _
  // Predicated region
  $region6: #{netg_forward.25} parent=0 // pred_check
    _
  $region7: #{netg_forward.25} parent=0 // pred_check_branch
    %11 = sbr.rel (0) target = $region9
  $region8: #{netg_forward.25} parent=0 // pred_region
    _
  $region9: #{netg_forward.25} parent=0 // pred_fallthru
    _
  // Predicated region
  $region10: #{netg_forward.25} parent=0 // pred_check
    _
  $region11: #{netg_forward.25} parent=0 // pred_check_branch
    %13 = sbr.rel (0) target = $region13
  $region12: #{netg_forward.25} parent=0 // pred_region
    _
  $region13: #{netg_forward.25} parent=0 // pred_fallthru
    _
  %v14 = vld [vmem:[%s0] sm:$0xff]
  %v15 = vld [vmem:[%s0 + $0x8] sm:$0xff]
  %v16 = vld [vmem:[%s0 + $0x10] sm:$0xff]
  %v17 = vld [vmem:[%s0 + $0x18] sm:$0xff]
  %v18 = vld [vmem:[%s0 + $0x20] sm:$0xff]
  %v19 = vld [vmem:[%s0 + $0x28] sm:$0xff]
  %v20 = vld [vmem:[%s0 + $0x30] sm:$0xff]
  %v21 = vld [vmem:[%s0 + $0x38] sm:$0xff]
  %v22 = vunpack.c.l.bf16 %v14
  %v23 = vunpack.c.h.bf16 %v14
  %v24 = vunpack.c.l.bf16 %v15
  %v25 = vunpack.c.h.bf16 %v15
  %v26 = vunpack.c.l.bf16 %v16
  %v27 = vunpack.c.h.bf16 %v16
  %v28 = vunpack.c.l.bf16 %v17
  %v29 = vunpack.c.h.bf16 %v17
  %v30 = vunpack.c.l.bf16 %v18
  %v31 = vunpack.c.h.bf16 %v18
  %v32 = vunpack.c.l.bf16 %v19
  %v33 = vunpack.c.h.bf16 %v19
  %v34 = vunpack.c.l.bf16 %v20
  %v35 = vunpack.c.h.bf16 %v20
  %v36 = vunpack.c.l.bf16 %v21
  %v37 = vunpack.c.h.bf16 %v21
  %v38 = vld [vmem:[%s1] sm:$0x3]
  %v40 = vlaneseq
  %v41 = vshrl.u32 %v40, 7
  %v42 = vsub.s32 0, %v41
  %v43 = vrot.slane %v38, %v42
  %v44 = vlaneseq
  %v45 = vshrl.u32 %v44, 7
  %v46 = vsub.s32 1, %v45
  %v47 = vrot.slane %v38, %v46
  %v50 = vmul.f32 %v22, %v43
  %v51 = vmul.f32 %v23, %v47
  %v52 = vmul.f32 %v24, %v43
  %v53 = vmul.f32 %v25, %v47
  %v54 = vmul.f32 %v26, %v43
  %v55 = vmul.f32 %v27, %v47
  %v56 = vmul.f32 %v28, %v43
  %v57 = vmul.f32 %v29, %v47
  %v58 = vmul.f32 %v30, %v43
  %v59 = vmul.f32 %v31, %v47
  %v60 = vmul.f32 %v32, %v43
  %v61 = vmul.f32 %v33, %v47
  %v62 = vmul.f32 %v34, %v43
  %v63 = vmul.f32 %v35, %v47
  %v64 = vmul.f32 %v36, %v43
  %v65 = vmul.f32 %v37, %v47
  %v66 = vld [vmem:[%s2] sm:$0x3]
  %v68 = vlaneseq
  %v69 = vshrl.u32 %v68, 7
  %v70 = vsub.s32 0, %v69
  %v71 = vrot.slane %v66, %v70
  %v72 = vlaneseq
  %v73 = vshrl.u32 %v72, 7
  %v74 = vsub.s32 1, %v73
  %v75 = vrot.slane %v66, %v74
  %v78 = vadd.f32 %v50, %v71
  %v79 = vadd.f32 %v51, %v75
  %v80 = vadd.f32 %v52, %v71
  %v81 = vadd.f32 %v53, %v75
  %v82 = vadd.f32 %v54, %v71
  %v83 = vadd.f32 %v55, %v75
  %v84 = vadd.f32 %v56, %v71
  %v85 = vadd.f32 %v57, %v75
  %v86 = vadd.f32 %v58, %v71
  %v87 = vadd.f32 %v59, %v75
  %v88 = vadd.f32 %v60, %v71
  %v89 = vadd.f32 %v61, %v75
  %v90 = vadd.f32 %v62, %v71
  %v91 = vadd.f32 %v63, %v75
  %v92 = vadd.f32 %v64, %v71
  %v93 = vadd.f32 %v65, %v75
  %v94 = vmax.f32 %v78, 0.0
  %v95 = vmax.f32 %v79, 0.0
  %v96 = vmax.f32 %v80, 0.0
  %v97 = vmax.f32 %v81, 0.0
  %v98 = vmax.f32 %v82, 0.0
  %v99 = vmax.f32 %v83, 0.0
  %v100 = vmax.f32 %v84, 0.0
  %v101 = vmax.f32 %v85, 0.0
  %v102 = vmax.f32 %v86, 0.0
  %v103 = vmax.f32 %v87, 0.0
  %v104 = vmax.f32 %v88, 0.0
  %v105 = vmax.f32 %v89, 0.0
  %v106 = vmax.f32 %v90, 0.0
  %v107 = vmax.f32 %v91, 0.0
  %v108 = vmax.f32 %v92, 0.0
  %v109 = vmax.f32 %v93, 0.0
  %v110 = vpack.c.bf16 %v96, %v94
  %v111 = vpack.c.bf16 %v97, %v95
  %v112 = vpack.c.bf16 %v100, %v98
  %v113 = vpack.c.bf16 %v101, %v99
  %v114 = vpack.c.bf16 %v104, %v102
  %v115 = vpack.c.bf16 %v105, %v103
  %v116 = vpack.c.bf16 %v108, %v106
  %v117 = vpack.c.bf16 %v109, %v107
  %v126 = vunpack.c.l.b16 %v110
  %v127 = vunpack.c.l.b16 %v111
  %v128 = vunpack.c.h.b16 %v110
  %v129 = vunpack.c.h.b16 %v111
  %v130 = vunpack.c.l.b16 %v112
  %v131 = vunpack.c.l.b16 %v113
  %v132 = vunpack.c.h.b16 %v112
  %v133 = vunpack.c.h.b16 %v113
  %v134 = vunpack.c.l.b16 %v114
  %v135 = vunpack.c.l.b16 %v115
  %v136 = vunpack.c.h.b16 %v114
  %v137 = vunpack.c.h.b16 %v115
  %v138 = vunpack.c.l.b16 %v116
  %v139 = vunpack.c.l.b16 %v117
  %v140 = vunpack.c.h.b16 %v116
  %v141 = vunpack.c.h.b16 %v117
  %v142 = vpack.c.b16 %v127, %v126
  %v143 = vpack.c.b16 %v129, %v128
  %v144 = vpack.c.b16 %v131, %v130
  %v145 = vpack.c.b16 %v133, %v132
  %v146 = vpack.c.b16 %v135, %v134
  %v147 = vpack.c.b16 %v137, %v136
  %v148 = vpack.c.b16 %v139, %v138
  %v149 = vpack.c.b16 %v141, %v140
  %158 = vst [vmem:[%s3] sm:$0xff] %v142
  %159 = vst [vmem:[%s3 + $0x8] sm:$0xff] %v143
  %160 = vst [vmem:[%s3 + $0x10] sm:$0xff] %v144
  %161 = vst [vmem:[%s3 + $0x18] sm:$0xff] %v145
  %162 = vst [vmem:[%s3 + $0x20] sm:$0xff] %v146
  %163 = vst [vmem:[%s3 + $0x28] sm:$0xff] %v147
  %164 = vst [vmem:[%s3 + $0x30] sm:$0xff] %v148
  %165 = vst [vmem:[%s3 + $0x38] sm:$0xff] %v149
  // Predicated region
  $region14: #{netg_forward.25} parent=0 // pred_check
    _
  $region15: #{netg_forward.25} parent=0 // pred_check_branch
    %167 = sbr.rel (0) target = $region17
  $region16: #{netg_forward.25} parent=0 // pred_region
    _
  $region17: #{netg_forward.25} parent=0 // pred_fallthru
    _
  // Predicated region
  $region18: #{netg_forward.25} parent=0 // pred_check
    _
  $region19: #{netg_forward.25} parent=0 // pred_check_branch
    %169 = sbr.rel (0) target = $region21
  $region20: #{netg_forward.25} parent=0 // pred_region
    _
  $region21: #{netg_forward.25} parent=0 // pred_fallthru
    _

// kernel: netg_forward.26
$region0: #{netg_forward.26}
  #allocation0 [shape = 'u32[]', space=smem, size = 0x4, offset = 0x4, fixed_abs, tag = 'smem constant byte address 0x4 - core index']
  #allocation1 [shape = 'u32[144,128]{1,0:T(1,128)}', space=vmem, size = 0x12000, scoped, tag = 'internal scratch']
  %s0 = inlined_call_operand.vmem [shape: bf16[2048,16], index: 0, kind: input, shape index: {}]
  %s1 = inlined_call_operand.vmem [shape: bf16[16,256], index: 1, kind: input, shape index: {}]
  %s2 = inlined_call_operand.vmem [shape: bf16[2048,256], index: 2, kind: output, shape index: {}]
  %s3 = sld [smem:[#allocation0]]
  $region41: #{netg_forward.26} parent=0
    _
  %s5 = ssub.s32 1, %s3
  %s6 = scalar_select 0, %s5, %s3
  loop: start=0, step=1, limit=4
  $region2: #{netg_forward.26} parent=0 // loop_pre_header
    _
  $region3: #{netg_forward.26} parent=0 // loop_header
    %s8 = sphi 0, %s12
    %p9 = scmp.ge.s32.totalorder %s8, 4
    %s18 = sphi 0, %s20
    %s21 = sphi 0, %s18
    %s22 = sphi 0, %s21
    %s38 = sphi 0, %s22
    %s42 = sphi 0, %s42
    %s44 = sphi 0, %s42
    %s45 = sphi 0, %s44
    %s59 = sphi 0, %s45
    %s65 = sphi 0, %s67
    %s68 = sphi 0, %s65
    %s69 = sphi 0, %s68
    %s85 = sphi 0, %s69
  $region4: #{netg_forward.26} parent=0 // loop_header_branch
    %11 = sbr.rel (%p9) target = $region8
  $region5: #{netg_forward.26} parent=0 // loop_body
    %s13 = ssub.s32 %s8, 1
    %s14 = ssub.s32 %s8, 2
    %s15 = sadd.s32 %s8, 1
    %s16 = ssub.s32 %s8, %s15
    %p17 = scmp.eq.s32.totalorder %s16, 0
    %s19 = sadd.s32 %s18, 1
    %s20 = scalar_select %p17, %s18, %s19
    %p23 = pneg %p17
    %p24 = scmp.eq.s32.totalorder %s8, 1
    %p25 = por %p23, %p24
    %p26 = scmp.ne.s32.totalorder %s18, %s21
    %p27 = scmp.eq.s32.totalorder %s8, 0
    %p28 = por %p26, %p27
    %p29 = scmp.ne.s32.totalorder %s18, %s21
    %p30 = scmp.eq.s32.totalorder %s13, 1
    %p31 = por %p29, %p30
    %p32 = scmp.ne.s32.totalorder %s21, %s22
    %p33 = scmp.eq.s32.totalorder %s13, 0
    %p34 = por %p32, %p33
    %p35 = scmp.ne.s32.totalorder %s21, %s22
    %p36 = scmp.eq.s32.totalorder %s14, 1
    %p37 = por %p35, %p36
    %p39 = scmp.ne.s32.totalorder %s22, %s38
    %p40 = scmp.eq.s32.totalorder %s14, 0
    %p41 = por %p39, %p40
    %s43 = sadd.s32 %s42, 1
    %p46 = scmp.eq.s32.totalorder %s8, 1
    %p47 = scmp.ne.s32.totalorder %s42, %s44
    %p48 = scmp.eq.s32.totalorder %s8, 0
    %p49 = por %p47, %p48
    %p50 = scmp.ne.s32.totalorder %s42, %s44
    %p51 = scmp.eq.s32.totalorder %s13, 1
    %p52 = por %p50, %p51
    %p53 = scmp.ne.s32.totalorder %s44, %s45
    %p54 = scmp.eq.s32.totalorder %s13, 0
    %p55 = por %p53, %p54
    %p56 = scmp.ne.s32.totalorder %s44, %s45
    %p57 = scmp.eq.s32.totalorder %s14, 1
    %p58 = por %p56, %p57
    %p60 = scmp.ne.s32.totalorder %s45, %s59
    %p61 = scmp.eq.s32.totalorder %s14, 0
    %p62 = por %p60, %p61
    %s63 = ssub.s32 %s8, %s15
    %p64 = scmp.eq.s32.totalorder %s63, 0
    %s66 = sadd.s32 %s65, 1
    %s67 = scalar_select %p64, %s65, %s66
    %p70 = pneg %p64
    %p71 = scmp.eq.s32.totalorder %s8, 1
    %p72 = por %p70, %p71
    %p73 = scmp.ne.s32.totalorder %s65, %s68
    %p74 = scmp.eq.s32.totalorder %s8, 0
    %p75 = por %p73, %p74
    %p76 = scmp.ne.s32.totalorder %s65, %s68
    %p77 = scmp.eq.s32.totalorder %s13, 1
    %p78 = por %p76, %p77
    %p79 = scmp.ne.s32.totalorder %s68, %s69
    %p80 = scmp.eq.s32.totalorder %s13, 0
    %p81 = por %p79, %p80
    %p82 = scmp.ne.s32.totalorder %s68, %s69
    %p83 = scmp.eq.s32.totalorder %s14, 1
    %p84 = por %p82, %p83
    %p86 = scmp.ne.s32.totalorder %s69, %s85
    %p87 = scmp.eq.s32.totalorder %s14, 0
    %p88 = por %p86, %p87
    %p89 = scmp.le.s32.totalorder 1, %s8
    %p90 = scmp.lt.s32.totalorder %s8, 3
    %p91 = pnand %p89, %p90
    %p92 = pneg %p91
    // Predicated region
    $region9: #{netg_forward.26} parent=5 // pred_check
      _
    $region10: #{netg_forward.26} parent=5 // pred_check_branch
      %94 = sbr.rel (%p91) target = $region12
    $region11: #{netg_forward.26} parent=5 // pred_region
      %s95 = ssub.s32 %s8, 1
      // Predicated region
      $region13: #{netg_forward.26} parent=11 // pred_check
        %p96 = pneg %p55
      $region14: #{netg_forward.26} parent=11 // pred_check_branch
        %98 = sbr.rel (%p96) target = $region16
      $region15: #{netg_forward.26} parent=11 // pred_region
        _
      $region16: #{netg_forward.26} parent=11 // pred_fallthru
        _
    $region12: #{netg_forward.26} parent=5 // pred_fallthru
      _
    %p99 = scmp.lt.s32.totalorder %s8, 2
    // Predicated region
    $region17: #{netg_forward.26} parent=5 // pred_check
      %p100 = pneg %p99
    $region18: #{netg_forward.26} parent=5 // pred_check_branch
      %102 = sbr.rel (%p100) target = $region20
    $region19: #{netg_forward.26} parent=5 // pred_region
      // Predicated region
      $region21: #{netg_forward.26} parent=19 // pred_check
        %p103 = pneg %p28
      $region22: #{netg_forward.26} parent=19 // pred_check_branch
        %105 = sbr.rel (%p103) target = $region24
      $region23: #{netg_forward.26} parent=19 // pred_region
        %s106 = smul.u32 128, %s8
        %p107 = scmp.lt.s32.totalorder %s106, 255
        %s108 = scalar_select %p107, %s106, 255
        %s109 = smul.addr %s108, 4
        %s110 = scalar_lea.vmem %s0, %s109
        %s111 = smul.u32 128, %s8
      $region24: #{netg_forward.26} parent=19 // pred_fallthru
        _
    $region20: #{netg_forward.26} parent=5 // pred_fallthru
      _
    %p112 = scmp.le.s32.totalorder 1, %s8
    %p113 = scmp.lt.s32.totalorder %s8, 3
    %p114 = pnand %p112, %p113
    %p115 = pneg %p114
    // Predicated region
    $region25: #{netg_forward.26} parent=5 // pred_check
      _
    $region26: #{netg_forward.26} parent=5 // pred_check_branch
      %117 = sbr.rel (%p114) target = $region28
    $region27: #{netg_forward.26} parent=5 // pred_region
      %s118 = ssub.s32 %s8, 1
      %s119 = smul.u32 128, %s13
      %p120 = scmp.lt.s32.totalorder %s119, 255
      %s121 = scalar_select %p120, %s119, 255
      %s122 = smul.addr %s121, 4
      %s123 = scalar_lea.vmem %s0, %s122
      %p124 = pneg %p34
      %p125 = pneg %p31
      %p126 = pneg %p55
      %p127 = pneg %p52
      %p128 = pneg %p81
      %p129 = pneg %p78
      %s130 = smul.u32 128, %s13
      %p131 = scmp.lt.s32.totalorder %s130, 255
      %s132 = scalar_select %p131, %s130, 255
      %s133 = smul.addr %s132, 2
      %s134 = smul.addr %s133, 4
      %s135 = scalar_lea.vmem %s2, %s134
      %s136 = smul.u32 128, %s13
      %p137 = scmp.lt.s32.totalorder %s136, 255
      %s138 = scalar_select %p137, %s136, 255
      %s139 = smul.addr %s138, 4
      %s140 = scalar_lea.vmem %s0, %s139
      %s141 = smul.u32 128, %s13
      %s142 = smul.u32 128, %s13
      %p143 = scmp.lt.s32.totalorder %s142, 255
      %s144 = scalar_select %p143, %s142, 255
      %s145 = smul.addr %s144, 2
      %s146 = smul.addr %s145, 4
      %s147 = scalar_lea.vmem %s2, %s146
      %s148 = smul.u32 128, %s13
      %v150 = vld [vmem:[%s140] sm:$0xf]
      %v151 = vld [vmem:[%s140 + $0x4] sm:$0xf]
      %v152 = vld [vmem:[%s140 + $0x8] sm:$0xf]
      %v153 = vld [vmem:[%s140 + $0xc] sm:$0xf]
      %v154 = vld [vmem:[%s140 + $0x10] sm:$0xf]
      %v155 = vld [vmem:[%s140 + $0x14] sm:$0xf]
      %v156 = vld [vmem:[%s140 + $0x18] sm:$0xf]
      %v157 = vld [vmem:[%s140 + $0x1c] sm:$0xf]
      %v158 = vld [vmem:[%s140 + $0x20] sm:$0xf]
      %v159 = vld [vmem:[%s140 + $0x24] sm:$0xf]
      %v160 = vld [vmem:[%s140 + $0x28] sm:$0xf]
      %v161 = vld [vmem:[%s140 + $0x2c] sm:$0xf]
      %v162 = vld [vmem:[%s140 + $0x30] sm:$0xf]
      %v163 = vld [vmem:[%s140 + $0x34] sm:$0xf]
      %v164 = vld [vmem:[%s140 + $0x38] sm:$0xf]
      %v165 = vld [vmem:[%s140 + $0x3c] sm:$0xf]
      %v166 = vld [vmem:[%s140 + $0x40] sm:$0xf]
      %v167 = vld [vmem:[%s140 + $0x44] sm:$0xf]
      %v168 = vld [vmem:[%s140 + $0x48] sm:$0xf]
      %v169 = vld [vmem:[%s140 + $0x4c] sm:$0xf]
      %v170 = vld [vmem:[%s140 + $0x50] sm:$0xf]
      %v171 = vld [vmem:[%s140 + $0x54] sm:$0xf]
      %v172 = vld [vmem:[%s140 + $0x58] sm:$0xf]
      %v173 = vld [vmem:[%s140 + $0x5c] sm:$0xf]
      %v174 = vld [vmem:[%s140 + $0x60] sm:$0xf]
      %v175 = vld [vmem:[%s140 + $0x64] sm:$0xf]
      %v176 = vld [vmem:[%s140 + $0x68] sm:$0xf]
      %v177 = vld [vmem:[%s140 + $0x6c] sm:$0xf]
      %v178 = vld [vmem:[%s140 + $0x70] sm:$0xf]
      %v179 = vld [vmem:[%s140 + $0x74] sm:$0xf]
      %v180 = vld [vmem:[%s140 + $0x78] sm:$0xf]
      %v181 = vld [vmem:[%s140 + $0x7c] sm:$0xf]
      %v182 = vld [vmem:[%s140 + $0x80] sm:$0xf]
      %v183 = vld [vmem:[%s140 + $0x84] sm:$0xf]
      %v184 = vld [vmem:[%s140 + $0x88] sm:$0xf]
      %v185 = vld [vmem:[%s140 + $0x8c] sm:$0xf]
      %v186 = vld [vmem:[%s140 + $0x90] sm:$0xf]
      %v187 = vld [vmem:[%s140 + $0x94] sm:$0xf]
      %v188 = vld [vmem:[%s140 + $0x98] sm:$0xf]
      %v189 = vld [vmem:[%s140 + $0x9c] sm:$0xf]
      %v190 = vld [vmem:[%s140 + $0xa0] sm:$0xf]
      %v191 = vld [vmem:[%s140 + $0xa4] sm:$0xf]
      %v192 = vld [vmem:[%s140 + $0xa8] sm:$0xf]
      %v193 = vld [vmem:[%s140 + $0xac] sm:$0xf]
      %v194 = vld [vmem:[%s140 + $0xb0] sm:$0xf]
      %v195 = vld [vmem:[%s140 + $0xb4] sm:$0xf]
      %v196 = vld [vmem:[%s140 + $0xb8] sm:$0xf]
      %v197 = vld [vmem:[%s140 + $0xbc] sm:$0xf]
      %v198 = vld [vmem:[%s140 + $0xc0] sm:$0xf]
      %v199 = vld [vmem:[%s140 + $0xc4] sm:$0xf]
      %v200 = vld [vmem:[%s140 + $0xc8] sm:$0xf]
      %v201 = vld [vmem:[%s140 + $0xcc] sm:$0xf]
      %v202 = vld [vmem:[%s140 + $0xd0] sm:$0xf]
      %v203 = vld [vmem:[%s140 + $0xd4] sm:$0xf]
      %v204 = vld [vmem:[%s140 + $0xd8] sm:$0xf]
      %v205 = vld [vmem:[%s140 + $0xdc] sm:$0xf]
      %v206 = vld [vmem:[%s140 + $0xe0] sm:$0xf]
      %v207 = vld [vmem:[%s140 + $0xe4] sm:$0xf]
      %v208 = vld [vmem:[%s140 + $0xe8] sm:$0xf]
      %v209 = vld [vmem:[%s140 + $0xec] sm:$0xf]
      %v210 = vld [vmem:[%s140 + $0xf0] sm:$0xf]
      %v211 = vld [vmem:[%s140 + $0xf4] sm:$0xf]
      %v212 = vld [vmem:[%s140 + $0xf8] sm:$0xf]
      %v213 = vld [vmem:[%s140 + $0xfc] sm:$0xf]
      %v214 = vld [vmem:[%s140 + $0x100] sm:$0xf]
      %v215 = vld [vmem:[%s140 + $0x104] sm:$0xf]
      %v216 = vld [vmem:[%s140 + $0x108] sm:$0xf]
      %v217 = vld [vmem:[%s140 + $0x10c] sm:$0xf]
      %v218 = vld [vmem:[%s140 + $0x110] sm:$0xf]
      %v219 = vld [vmem:[%s140 + $0x114] sm:$0xf]
      %v220 = vld [vmem:[%s140 + $0x118] sm:$0xf]
      %v221 = vld [vmem:[%s140 + $0x11c] sm:$0xf]
      %v222 = vld [vmem:[%s140 + $0x120] sm:$0xf]
      %v223 = vld [vmem:[%s140 + $0x124] sm:$0xf]
      %v224 = vld [vmem:[%s140 + $0x128] sm:$0xf]
      %v225 = vld [vmem:[%s140 + $0x12c] sm:$0xf]
      %v226 = vld [vmem:[%s140 + $0x130] sm:$0xf]
      %v227 = vld [vmem:[%s140 + $0x134] sm:$0xf]
      %v228 = vld [vmem:[%s140 + $0x138] sm:$0xf]
      %v229 = vld [vmem:[%s140 + $0x13c] sm:$0xf]
      %v230 = vld [vmem:[%s140 + $0x140] sm:$0xf]
      %v231 = vld [vmem:[%s140 + $0x144] sm:$0xf]
      %v232 = vld [vmem:[%s140 + $0x148] sm:$0xf]
      %v233 = vld [vmem:[%s140 + $0x14c] sm:$0xf]
      %v234 = vld [vmem:[%s140 + $0x150] sm:$0xf]
      %v235 = vld [vmem:[%s140 + $0x154] sm:$0xf]
      %v236 = vld [vmem:[%s140 + $0x158] sm:$0xf]
      %v237 = vld [vmem:[%s140 + $0x15c] sm:$0xf]
      %v238 = vld [vmem:[%s140 + $0x160] sm:$0xf]
      %v239 = vld [vmem:[%s140 + $0x164] sm:$0xf]
      %v240 = vld [vmem:[%s140 + $0x168] sm:$0xf]
      %v241 = vld [vmem:[%s140 + $0x16c] sm:$0xf]
      %v242 = vld [vmem:[%s140 + $0x170] sm:$0xf]
      %v243 = vld [vmem:[%s140 + $0x174] sm:$0xf]
      %v244 = vld [vmem:[%s140 + $0x178] sm:$0xf]
      %v245 = vld [vmem:[%s140 + $0x17c] sm:$0xf]
      %v246 = vld [vmem:[%s140 + $0x180] sm:$0xf]
      %v247 = vld [vmem:[%s140 + $0x184] sm:$0xf]
      %v248 = vld [vmem:[%s140 + $0x188] sm:$0xf]
      %v249 = vld [vmem:[%s140 + $0x18c] sm:$0xf]
      %v250 = vld [vmem:[%s140 + $0x190] sm:$0xf]
      %v251 = vld [vmem:[%s140 + $0x194] sm:$0xf]
      %v252 = vld [vmem:[%s140 + $0x198] sm:$0xf]
      %v253 = vld [vmem:[%s140 + $0x19c] sm:$0xf]
      %v254 = vld [vmem:[%s140 + $0x1a0] sm:$0xf]
      %v255 = vld [vmem:[%s140 + $0x1a4] sm:$0xf]
      %v256 = vld [vmem:[%s140 + $0x1a8] sm:$0xf]
      %v257 = vld [vmem:[%s140 + $0x1ac] sm:$0xf]
      %v258 = vld [vmem:[%s140 + $0x1b0] sm:$0xf]
      %v259 = vld [vmem:[%s140 + $0x1b4] sm:$0xf]
      %v260 = vld [vmem:[%s140 + $0x1b8] sm:$0xf]
      %v261 = vld [vmem:[%s140 + $0x1bc] sm:$0xf]
      %v262 = vld [vmem:[%s140 + $0x1c0] sm:$0xf]
      %v263 = vld [vmem:[%s140 + $0x1c4] sm:$0xf]
      %v264 = vld [vmem:[%s140 + $0x1c8] sm:$0xf]
      %v265 = vld [vmem:[%s140 + $0x1cc] sm:$0xf]
      %v266 = vld [vmem:[%s140 + $0x1d0] sm:$0xf]
      %v267 = vld [vmem:[%s140 + $0x1d4] sm:$0xf]
      %v268 = vld [vmem:[%s140 + $0x1d8] sm:$0xf]
      %v269 = vld [vmem:[%s140 + $0x1dc] sm:$0xf]
      %v270 = vld [vmem:[%s140 + $0x1e0] sm:$0xf]
      %v271 = vld [vmem:[%s140 + $0x1e4] sm:$0xf]
      %v272 = vld [vmem:[%s140 + $0x1e8] sm:$0xf]
      %v273 = vld [vmem:[%s140 + $0x1ec] sm:$0xf]
      %v274 = vld [vmem:[%s140 + $0x1f0] sm:$0xf]
      %v275 = vld [vmem:[%s140 + $0x1f4] sm:$0xf]
      %v276 = vld [vmem:[%s140 + $0x1f8] sm:$0xf]
      %v277 = vld [vmem:[%s140 + $0x1fc] sm:$0xf]
      %v278 = vld [vmem:[%s1] sm:$0xff]
      %v279 = vld [vmem:[%s1 + $0x8] sm:$0xff]
      %v408 = vunpack.c.l.b16 %v150
      %v409 = vunpack.c.l.b16 %v151
      %v410 = vunpack.c.l.b16 %v152
      %v411 = vunpack.c.l.b16 %v153
      %v412 = vunpack.c.l.b16 %v154
      %v413 = vunpack.c.l.b16 %v155
      %v414 = vunpack.c.l.b16 %v156
      %v415 = vunpack.c.l.b16 %v157
      %v416 = vunpack.c.l.b16 %v158
      %v417 = vunpack.c.l.b16 %v159
      %v418 = vunpack.c.l.b16 %v160
      %v419 = vunpack.c.l.b16 %v161
      %v420 = vunpack.c.l.b16 %v162
      %v421 = vunpack.c.l.b16 %v163
      %v422 = vunpack.c.l.b16 %v164
      %v423 = vunpack.c.l.b16 %v165
      %v424 = vunpack.c.l.b16 %v166
      %v425 = vunpack.c.l.b16 %v167
      %v426 = vunpack.c.l.b16 %v168
      %v427 = vunpack.c.l.b16 %v169
      %v428 = vunpack.c.l.b16 %v170
      %v429 = vunpack.c.l.b16 %v171
      %v430 = vunpack.c.l.b16 %v172
      %v431 = vunpack.c.l.b16 %v173
      %v432 = vunpack.c.l.b16 %v174
      %v433 = vunpack.c.l.b16 %v175
      %v434 = vunpack.c.l.b16 %v176
      %v435 = vunpack.c.l.b16 %v177
      %v436 = vunpack.c.l.b16 %v178
      %v437 = vunpack.c.l.b16 %v179
      %v438 = vunpack.c.l.b16 %v180
      %v439 = vunpack.c.l.b16 %v181
      %v440 = vunpack.c.l.b16 %v182
      %v441 = vunpack.c.l.b16 %v183
      %v442 = vunpack.c.l.b16 %v184
      %v443 = vunpack.c.l.b16 %v185
      %v444 = vunpack.c.l.b16 %v186
      %v445 = vunpack.c.l.b16 %v187
      %v446 = vunpack.c.l.b16 %v188
      %v447 = vunpack.c.l.b16 %v189
      %v448 = vunpack.c.l.b16 %v190
      %v449 = vunpack.c.l.b16 %v191
      %v450 = vunpack.c.l.b16 %v192
      %v451 = vunpack.c.l.b16 %v193
      %v452 = vunpack.c.l.b16 %v194
      %v453 = vunpack.c.l.b16 %v195
      %v454 = vunpack.c.l.b16 %v196
      %v455 = vunpack.c.l.b16 %v197
      %v456 = vunpack.c.l.b16 %v198
      %v457 = vunpack.c.l.b16 %v199
      %v458 = vunpack.c.l.b16 %v200
      %v459 = vunpack.c.l.b16 %v201
      %v460 = vunpack.c.l.b16 %v202
      %v461 = vunpack.c.l.b16 %v203
      %v462 = vunpack.c.l.b16 %v204
      %v463 = vunpack.c.l.b16 %v205
      %v464 = vunpack.c.l.b16 %v206
      %v465 = vunpack.c.l.b16 %v207
      %v466 = vunpack.c.l.b16 %v208
      %v467 = vunpack.c.l.b16 %v209
      %v468 = vunpack.c.l.b16 %v210
      %v469 = vunpack.c.l.b16 %v211
      %v470 = vunpack.c.l.b16 %v212
      %v471 = vunpack.c.l.b16 %v213
      %v472 = vunpack.c.l.b16 %v214
      %v473 = vunpack.c.l.b16 %v215
      %v474 = vunpack.c.l.b16 %v216
      %v475 = vunpack.c.l.b16 %v217
      %v476 = vunpack.c.l.b16 %v218
      %v477 = vunpack.c.l.b16 %v219
      %v478 = vunpack.c.l.b16 %v220
      %v479 = vunpack.c.l.b16 %v221
      %v480 = vunpack.c.l.b16 %v222
      %v481 = vunpack.c.l.b16 %v223
      %v482 = vunpack.c.l.b16 %v224
      %v483 = vunpack.c.l.b16 %v225
      %v484 = vunpack.c.l.b16 %v226
      %v485 = vunpack.c.l.b16 %v227
      %v486 = vunpack.c.l.b16 %v228
      %v487 = vunpack.c.l.b16 %v229
      %v488 = vunpack.c.l.b16 %v230
      %v489 = vunpack.c.l.b16 %v231
      %v490 = vunpack.c.l.b16 %v232
      %v491 = vunpack.c.l.b16 %v233
      %v492 = vunpack.c.l.b16 %v234
      %v493 = vunpack.c.l.b16 %v235
      %v494 = vunpack.c.l.b16 %v236
      %v495 = vunpack.c.l.b16 %v237
      %v496 = vunpack.c.l.b16 %v238
      %v497 = vunpack.c.l.b16 %v239
      %v498 = vunpack.c.l.b16 %v240
      %v499 = vunpack.c.l.b16 %v241
      %v500 = vunpack.c.l.b16 %v242
      %v501 = vunpack.c.l.b16 %v243
      %v502 = vunpack.c.l.b16 %v244
      %v503 = vunpack.c.l.b16 %v245
      %v504 = vunpack.c.l.b16 %v246
      %v505 = vunpack.c.l.b16 %v247
      %v506 = vunpack.c.l.b16 %v248
      %v507 = vunpack.c.l.b16 %v249
      %v508 = vunpack.c.l.b16 %v250
      %v509 = vunpack.c.l.b16 %v251
      %v510 = vunpack.c.l.b16 %v252
      %v511 = vunpack.c.l.b16 %v253
      %v512 = vunpack.c.l.b16 %v254
      %v513 = vunpack.c.l.b16 %v255
      %v514 = vunpack.c.l.b16 %v256
      %v515 = vunpack.c.l.b16 %v257
      %v516 = vunpack.c.l.b16 %v258
      %v517 = vunpack.c.l.b16 %v259
      %v518 = vunpack.c.l.b16 %v260
      %v519 = vunpack.c.l.b16 %v261
      %v520 = vunpack.c.l.b16 %v262
      %v521 = vunpack.c.l.b16 %v263
      %v522 = vunpack.c.l.b16 %v264
      %v523 = vunpack.c.l.b16 %v265
      %v524 = vunpack.c.l.b16 %v266
      %v525 = vunpack.c.l.b16 %v267
      %v526 = vunpack.c.l.b16 %v268
      %v527 = vunpack.c.l.b16 %v269
      %v528 = vunpack.c.l.b16 %v270
      %v529 = vunpack.c.l.b16 %v271
      %v530 = vunpack.c.l.b16 %v272
      %v531 = vunpack.c.l.b16 %v273
      %v532 = vunpack.c.l.b16 %v274
      %v533 = vunpack.c.l.b16 %v275
      %v534 = vunpack.c.l.b16 %v276
      %v535 = vunpack.c.l.b16 %v277
      %v536 = vpack.c.b16 %v409, %v408
      %v537 = vpack.c.b16 %v411, %v410
      %v538 = vpack.c.b16 %v413, %v412
      %v539 = vpack.c.b16 %v415, %v414
      %v540 = vpack.c.b16 %v417, %v416
      %v541 = vpack.c.b16 %v419, %v418
      %v542 = vpack.c.b16 %v421, %v420
      %v543 = vpack.c.b16 %v423, %v422
      %v544 = vpack.c.b16 %v425, %v424
      %v545 = vpack.c.b16 %v427, %v426
      %v546 = vpack.c.b16 %v429, %v428
      %v547 = vpack.c.b16 %v431, %v430
      %v548 = vpack.c.b16 %v433, %v432
      %v549 = vpack.c.b16 %v435, %v434
      %v550 = vpack.c.b16 %v437, %v436
      %v551 = vpack.c.b16 %v439, %v438
      %v552 = vpack.c.b16 %v441, %v440
      %v553 = vpack.c.b16 %v443, %v442
      %v554 = vpack.c.b16 %v445, %v444
      %v555 = vpack.c.b16 %v447, %v446
      %v556 = vpack.c.b16 %v449, %v448
      %v557 = vpack.c.b16 %v451, %v450
      %v558 = vpack.c.b16 %v453, %v452
      %v559 = vpack.c.b16 %v455, %v454
      %v560 = vpack.c.b16 %v457, %v456
      %v561 = vpack.c.b16 %v459, %v458
      %v562 = vpack.c.b16 %v461, %v460
      %v563 = vpack.c.b16 %v463, %v462
      %v564 = vpack.c.b16 %v465, %v464
      %v565 = vpack.c.b16 %v467, %v466
      %v566 = vpack.c.b16 %v469, %v468
      %v567 = vpack.c.b16 %v471, %v470
      %v568 = vpack.c.b16 %v473, %v472
      %v569 = vpack.c.b16 %v475, %v474
      %v570 = vpack.c.b16 %v477, %v476
      %v571 = vpack.c.b16 %v479, %v478
      %v572 = vpack.c.b16 %v481, %v480
      %v573 = vpack.c.b16 %v483, %v482
      %v574 = vpack.c.b16 %v485, %v484
      %v575 = vpack.c.b16 %v487, %v486
      %v576 = vpack.c.b16 %v489, %v488
      %v577 = vpack.c.b16 %v491, %v490
      %v578 = vpack.c.b16 %v493, %v492
      %v579 = vpack.c.b16 %v495, %v494
      %v580 = vpack.c.b16 %v497, %v496
      %v581 = vpack.c.b16 %v499, %v498
      %v582 = vpack.c.b16 %v501, %v500
      %v583 = vpack.c.b16 %v503, %v502
      %v584 = vpack.c.b16 %v505, %v504
      %v585 = vpack.c.b16 %v507, %v506
      %v586 = vpack.c.b16 %v509, %v508
      %v587 = vpack.c.b16 %v511, %v510
      %v588 = vpack.c.b16 %v513, %v512
      %v589 = vpack.c.b16 %v515, %v514
      %v590 = vpack.c.b16 %v517, %v516
      %v591 = vpack.c.b16 %v519, %v518
      %v592 = vpack.c.b16 %v521, %v520
      %v593 = vpack.c.b16 %v523, %v522
      %v594 = vpack.c.b16 %v525, %v524
      %v595 = vpack.c.b16 %v527, %v526
      %v596 = vpack.c.b16 %v529, %v528
      %v597 = vpack.c.b16 %v531, %v530
      %v598 = vpack.c.b16 %v533, %v532
      %v599 = vpack.c.b16 %v535, %v534
      %v602 = vunpack.c.l.b16 %v278
      %v603 = vunpack.c.h.b16 %v278
      %v604 = vunpack.c.l.b16 %v279
      %v605 = vunpack.c.h.b16 %v279
      %v606 = vpack.c.b16 %v604, %v602
      %v607 = vpack.c.b16 %v605, %v603
      %vm610 = vcmask 130048
      %v612 = vsel %vm610, %v536, 0
      %v615 = vsel %vm610, %v537, 0
      %v618 = vsel %vm610, %v538, 0
      %v621 = vsel %vm610, %v539, 0
      %v624 = vsel %vm610, %v540, 0
      %v627 = vsel %vm610, %v541, 0
      %v630 = vsel %vm610, %v542, 0
      %v633 = vsel %vm610, %v543, 0
      %v636 = vsel %vm610, %v544, 0
      %v639 = vsel %vm610, %v545, 0
      %v642 = vsel %vm610, %v546, 0
      %v645 = vsel %vm610, %v547, 0
      %v648 = vsel %vm610, %v548, 0
      %v651 = vsel %vm610, %v549, 0
      %v654 = vsel %vm610, %v550, 0
      %v657 = vsel %vm610, %v551, 0
      %v660 = vsel %vm610, %v552, 0
      %v663 = vsel %vm610, %v553, 0
      %v666 = vsel %vm610, %v554, 0
      %v669 = vsel %vm610, %v555, 0
      %v672 = vsel %vm610, %v556, 0
      %v675 = vsel %vm610, %v557, 0
      %v678 = vsel %vm610, %v558, 0
      %v681 = vsel %vm610, %v559, 0
      %v684 = vsel %vm610, %v560, 0
      %v687 = vsel %vm610, %v561, 0
      %v690 = vsel %vm610, %v562, 0
      %v693 = vsel %vm610, %v563, 0
      %v696 = vsel %vm610, %v564, 0
      %v699 = vsel %vm610, %v565, 0
      %v702 = vsel %vm610, %v566, 0
      %v705 = vsel %vm610, %v567, 0
      %v708 = vsel %vm610, %v568, 0
      %v711 = vsel %vm610, %v569, 0
      %v714 = vsel %vm610, %v570, 0
      %v717 = vsel %vm610, %v571, 0
      %v720 = vsel %vm610, %v572, 0
      %v723 = vsel %vm610, %v573, 0
      %v726 = vsel %vm610, %v574, 0
      %v729 = vsel %vm610, %v575, 0
      %v732 = vsel %vm610, %v576, 0
      %v735 = vsel %vm610, %v577, 0
      %v738 = vsel %vm610, %v578, 0
      %v741 = vsel %vm610, %v579, 0
      %v744 = vsel %vm610, %v580, 0
      %v747 = vsel %vm610, %v581, 0
      %v750 = vsel %vm610, %v582, 0
      %v753 = vsel %vm610, %v583, 0
      %v756 = vsel %vm610, %v584, 0
      %v759 = vsel %vm610, %v585, 0
      %v762 = vsel %vm610, %v586, 0
      %v765 = vsel %vm610, %v587, 0
      %v768 = vsel %vm610, %v588, 0
      %v771 = vsel %vm610, %v589, 0
      %v774 = vsel %vm610, %v590, 0
      %v777 = vsel %vm610, %v591, 0
      %v780 = vsel %vm610, %v592, 0
      %v783 = vsel %vm610, %v593, 0
      %v786 = vsel %vm610, %v594, 0
      %v789 = vsel %vm610, %v595, 0
      %v792 = vsel %vm610, %v596, 0
      %v795 = vsel %vm610, %v597, 0
      %v798 = vsel %vm610, %v598, 0
      %v801 = vsel %vm610, %v599, 0
      %803 = vmatprep.subr.bf16.mxu0 %v607
      %804 = vmatpush1.bf16.msra.mxu0 %v606
      %805 = vmatprep.subr.bf16.mxu0 0
      %806 = vmatpush1.bf16.msra.mxu0 0
      %807 = vmatprep.subr.bf16.mxu0 0
      %808 = vmatpush1.bf16.msra.mxu0 0
      %809 = vmatprep.subr.bf16.mxu0 0
      %810 = vmatpush1.bf16.msra.mxu0 0
      %811 = vmatprep.subr.bf16.mxu0 0
      %812 = vmatpush1.bf16.msra.mxu0 0
      %813 = vmatprep.subr.bf16.mxu0 0
      %814 = vmatpush1.bf16.msra.mxu0 0
      %815 = vmatprep.subr.bf16.mxu0 0
      %816 = vmatpush1.bf16.msra.mxu0 0
      %817 = vmatprep.subr.bf16.mxu0 0
      %818 = vmatpush1.bf16.msra.mxu0 0
      %819 = vmatprep.subr.bf16.mxu0 0
      %820 = vmatpush1.bf16.msra.mxu0 0
      %821 = vmatprep.subr.bf16.mxu0 0
      %822 = vmatpush1.bf16.msra.mxu0 0
      %823 = vmatprep.subr.bf16.mxu0 0
      %824 = vmatpush1.bf16.msra.mxu0 0
      %825 = vmatprep.subr.bf16.mxu0 0
      %826 = vmatpush1.bf16.msra.mxu0 0
      %827 = vmatprep.subr.bf16.mxu0 0
      %828 = vmatpush1.bf16.msra.mxu0 0
      %829 = vmatprep.subr.bf16.mxu0 0
      %830 = vmatpush1.bf16.msra.mxu0 0
      %831 = vmatprep.subr.bf16.mxu0 0
      %832 = vmatpush1.bf16.msra.mxu0 0
      %833 = vmatprep.subr.bf16.mxu0 0
      %834 = vmatpush1.bf16.msra.mxu0 0
      %835 = vmatprep.mubr.bf16.mxu0 0
      %836 = vmatmul.mubr.bf16.gmra.mrb[0].mxu0 %v612
      %v837 = vpop.f32.mrb[0].mxu0
      %v838 = vadd.f32 0.0, %v837
      %v839 = vpop.f32.mrb[0].mxu0
      %v840 = vadd.f32 0.0, %v839
      %v841 = vpop.f32.mrb[0].mxu0
      %v842 = vadd.f32 0.0, %v841
      %v843 = vpop.f32.mrb[0].mxu0
      %v844 = vadd.f32 0.0, %v843
      %845 = vmatprep.mubr.bf16.mxu0 0
      %846 = vmatmul.mubr.bf16.gmra.mrb[0].mxu0 %v615
      %v847 = vpop.f32.mrb[0].mxu0
      %v848 = vadd.f32 0.0, %v847
      %v849 = vpop.f32.mrb[0].mxu0
      %v850 = vadd.f32 0.0, %v849
      %v851 = vpop.f32.mrb[0].mxu0
      %v852 = vadd.f32 0.0, %v851
      %v853 = vpop.f32.mrb[0].mxu0
      %v854 = vadd.f32 0.0, %v853
      %855 = vmatprep.mubr.bf16.mxu0 0
      %856 = vmatmul.mubr.bf16.gmra.mrb[0].mxu0 %v618
      %v857 = vpop.f32.mrb[0].mxu0
      %v858 = vadd.f32 0.0, %v857
      %v859 = vpop.f32.mrb[0].mxu0
      %v860 = vadd.f32 0.0, %v859
      %v861 = vpop.f32.mrb[0].mxu0
      %v862 = vadd.f32 0.0, %v861
      %v863 = vpop.f32.mrb[0].mxu0
      %v864 = vadd.f32 0.0, %v863
      %865 = vmatprep.mubr.bf16.mxu0 0
      %866 = vmatmul.mubr.bf16.gmra.mrb[0].mxu0 %v621
      %v867 = vpop.f32.mrb[0].mxu0
      %v868 = vadd.f32 0.0, %v867
      %v869 = vpop.f32.mrb[0].mxu0
      %v870 = vadd.f32 0.0, %v869
      %v871 = vpop.f32.mrb[0].mxu0
      %v872 = vadd.f32 0.0, %v871
      %v873 = vpop.f32.mrb[0].mxu0
      %v874 = vadd.f32 0.0, %v873
      %875 = vmatprep.mubr.bf16.mxu0 0
      %876 = vmatmul.mubr.bf16.gmra.mrb[0].mxu0 %v624
      %v877 = vpop.f32.mrb[0].mxu0
      %v878 = vadd.f32 0.0, %v877
      %v879 = vpop.f32.mrb[0].mxu0
      %v880 = vadd.f32 0.0, %v879
      %v881 = vpop.f32.mrb[0].mxu0
      %v882 = vadd.f32 0.0, %v881
      %v883 = vpop.f32.mrb[0].mxu0
      %v884 = vadd.f32 0.0, %v883
      %885 = vmatprep.mubr.bf16.mxu0 0
      %886 = vmatmul.mubr.bf16.gmra.mrb[0].mxu0 %v627
      %v887 = vpop.f32.mrb[0].mxu0
      %v888 = vadd.f32 0.0, %v887
      %v889 = vpop.f32.mrb[0].mxu0
      %v890 = vadd.f32 0.0, %v889
      %v891 = vpop.f32.mrb[0].mxu0
      %v892 = vadd.f32 0.0, %v891
      %v893 = vpop.f32.mrb[0].mxu0
      %v894 = vadd.f32 0.0, %v893
      %895 = vmatprep.mubr.bf16.mxu0 0
      %896 = vmatmul.mubr.bf16.gmra.mrb[0].mxu0 %v630
      %v897 = vpop.f32.mrb[0].mxu0
      %v898 = vadd.f32 0.0, %v897
      %v899 = vpop.f32.mrb[0].mxu0
      %v900 = vadd.f32 0.0, %v899
      %v901 = vpop.f32.mrb[0].mxu0
      %v902 = vadd.f32 0.0, %v901
      %v903 = vpop.f32.mrb[0].mxu0
      %v904 = vadd.f32 0.0, %v903
      %905 = vmatprep.mubr.bf16.mxu0 0
      %906 = vmatmul.mubr.bf16.gmra.mrb[0].mxu0 %v633
      %v907 = vpop.f32.mrb[0].mxu0
      %v908 = vadd.f32 0.0, %v907
      %v909 = vpop.f32.mrb[0].mxu0
      %v910 = vadd.f32 0.0, %v909
      %v911 = vpop.f32.mrb[0].mxu0
      %v912 = vadd.f32 0.0, %v911
      %v913 = vpop.f32.mrb[0].mxu0
      %v914 = vadd.f32 0.0, %v913
      %915 = vmatprep.mubr.bf16.mxu0 0
      %916 = vmatmul.mubr.bf16.gmra.mrb[0].mxu0 %v636
      %v917 = vpop.f32.mrb[0].mxu0
      %v918 = vadd.f32 0.0, %v917
      %v919 = vpop.f32.mrb[0].mxu0
      %v920 = vadd.f32 0.0, %v919
      %v921 = vpop.f32.mrb[0].mxu0
      %v922 = vadd.f32 0.0, %v921
      %v923 = vpop.f32.mrb[0].mxu0
      %v924 = vadd.f32 0.0, %v923
      %925 = vmatprep.mubr.bf16.mxu0 0
      %926 = vmatmul.mubr.bf16.gmra.mrb[0].mxu0 %v639
      %v927 = vpop.f32.mrb[0].mxu0
      %v928 = vadd.f32 0.0, %v927
      %v929 = vpop.f32.mrb[0].mxu0
      %v930 = vadd.f32 0.0, %v929
      %v931 = vpop.f32.mrb[0].mxu0
      %v932 = vadd.f32 0.0, %v931
      %v933 = vpop.f32.mrb[0].mxu0
      %v934 = vadd.f32 0.0, %v933
      %935 = vmatprep.mubr.bf16.mxu0 0
      %936 = vmatmul.mubr.bf16.gmra.mrb[0].mxu0 %v642
      %v937 = vpop.f32.mrb[0].mxu0
      %v938 = vadd.f32 0.0, %v937
      %v939 = vpop.f32.mrb[0].mxu0
      %v940 = vadd.f32 0.0, %v939
      %v941 = vpop.f32.mrb[0].mxu0
      %v942 = vadd.f32 0.0, %v941
      %v943 = vpop.f32.mrb[0].mxu0
      %v944 = vadd.f32 0.0, %v943
      %945 = vmatprep.mubr.bf16.mxu0 0
      %946 = vmatmul.mubr.bf16.gmra.mrb[0].mxu0 %v645
      %v947 = vpop.f32.mrb[0].mxu0
      %v948 = vadd.f32 0.0, %v947
      %v949 = vpop.f32.mrb[0].mxu0
      %v950 = vadd.f32 0.0, %v949
      %v951 = vpop.f32.mrb[0].mxu0
      %v952 = vadd.f32 0.0, %v951
      %v953 = vpop.f32.mrb[0].mxu0
      %v954 = vadd.f32 0.0, %v953
      %955 = vmatprep.mubr.bf16.mxu0 0
      %956 = vmatmul.mubr.bf16.gmra.mrb[0].mxu0 %v648
      %v957 = vpop.f32.mrb[0].mxu0
      %v958 = vadd.f32 0.0, %v957
      %v959 = vpop.f32.mrb[0].mxu0
      %v960 = vadd.f32 0.0, %v959
      %v961 = vpop.f32.mrb[0].mxu0
      %v962 = vadd.f32 0.0, %v961
      %v963 = vpop.f32.mrb[0].mxu0
      %v964 = vadd.f32 0.0, %v963
      %965 = vmatprep.mubr.bf16.mxu0 0
      %966 = vmatmul.mubr.bf16.gmra.mrb[0].mxu0 %v651
      %v967 = vpop.f32.mrb[0].mxu0
      %v968 = vadd.f32 0.0, %v967
      %v969 = vpop.f32.mrb[0].mxu0
      %v970 = vadd.f32 0.0, %v969
      %v971 = vpop.f32.mrb[0].mxu0
      %v972 = vadd.f32 0.0, %v971
      %v973 = vpop.f32.mrb[0].mxu0
      %v974 = vadd.f32 0.0, %v973
      %975 = vmatprep.mubr.bf16.mxu0 0
      %976 = vmatmul.mubr.bf16.gmra.mrb[0].mxu0 %v654
      %v977 = vpop.f32.mrb[0].mxu0
      %v978 = vadd.f32 0.0, %v977
      %v979 = vpop.f32.mrb[0].mxu0
      %v980 = vadd.f32 0.0, %v979
      %v981 = vpop.f32.mrb[0].mxu0
      %v982 = vadd.f32 0.0, %v981
      %v983 = vpop.f32.mrb[0].mxu0
      %v984 = vadd.f32 0.0, %v983
      %985 = vmatprep.mubr.bf16.mxu0 0
      %986 = vmatmul.mubr.bf16.gmra.mrb[0].mxu0 %v657
      %v987 = vpop.f32.mrb[0].mxu0
      %v988 = vadd.f32 0.0, %v987
      %v989 = vpop.f32.mrb[0].mxu0
      %v990 = vadd.f32 0.0, %v989
      %v991 = vpop.f32.mrb[0].mxu0
      %v992 = vadd.f32 0.0, %v991
      %v993 = vpop.f32.mrb[0].mxu0
      %v994 = vadd.f32 0.0, %v993
      %995 = vmatprep.mubr.bf16.mxu0 0
      %996 = vmatmul.mubr.bf16.gmra.mrb[0].mxu0 %v660
      %v997 = vpop.f32.mrb[0].mxu0
      %v998 = vadd.f32 0.0, %v997
      %v999 = vpop.f32.mrb[0].mxu0
      %v1000 = vadd.f32 0.0, %v999
      %v1001 = vpop.f32.mrb[0].mxu0
      %v1002 = vadd.f32 0.0, %v1001
      %v1003 = vpop.f32.mrb[0].mxu0
      %v1004 = vadd.f32 0.0, %v1003
      %1005 = vmatprep.mubr.bf16.mxu0 0
      %1006 = vmatmul.mubr.bf16.gmra.mrb[0].mxu0 %v663
      %v1007 = vpop.f32.mrb[0].mxu0
      %v1008 = vadd.f32 0.0, %v1007
      %v1009 = vpop.f32.mrb[0].mxu0
      %v1010 = vadd.f32 0.0, %v1009
      %v1011 = vpop.f32.mrb[0].mxu0
      %v1012 = vadd.f32 0.0, %v1011
      %v1013 = vpop.f32.mrb[0].mxu0
      %v1014 = vadd.f32 0.0, %v1013
      %1015 = vmatprep.mubr.bf16.mxu0 0
      %1016 = vmatmul.mubr.bf16.gmra.mrb[0].mxu0 %v666
      %v1017 = vpop.f32.mrb[0].mxu0
      %v1018 = vadd.f32 0.0, %v1017
      %v1019 = vpop.f32.mrb[0].mxu0
      %v1020 = vadd.f32 0.0, %v1019
      %v1021 = vpop.f32.mrb[0].mxu0
      %v1022 = vadd.f32 0.0, %v1021
      %v1023 = vpop.f32.mrb[0].mxu0
      %v1024 = vadd.f32 0.0, %v1023
      %1025 = vmatprep.mubr.bf16.mxu0 0
      %1026 = vmatmul.mubr.bf16.gmra.mrb[0].mxu0 %v669
      %v1027 = vpop.f32.mrb[0].mxu0
      %v1028 = vadd.f32 0.0, %v1027
      %v1029 = vpop.f32.mrb[0].mxu0
      %v1030 = vadd.f32 0.0, %v1029
      %v1031 = vpop.f32.mrb[0].mxu0
      %v1032 = vadd.f32 0.0, %v1031
      %v1033 = vpop.f32.mrb[0].mxu0
      %v1034 = vadd.f32 0.0, %v1033
      %1035 = vmatprep.mubr.bf16.mxu0 0
      %1036 = vmatmul.mubr.bf16.gmra.mrb[0].mxu0 %v672
      %v1037 = vpop.f32.mrb[0].mxu0
      %v1038 = vadd.f32 0.0, %v1037
      %v1039 = vpop.f32.mrb[0].mxu0
      %v1040 = vadd.f32 0.0, %v1039
      %v1041 = vpop.f32.mrb[0].mxu0
      %v1042 = vadd.f32 0.0, %v1041
      %v1043 = vpop.f32.mrb[0].mxu0
      %v1044 = vadd.f32 0.0, %v1043
      %1045 = vmatprep.mubr.bf16.mxu0 0
      %1046 = vmatmul.mubr.bf16.gmra.mrb[0].mxu0 %v675
      %v1047 = vpop.f32.mrb[0].mxu0
      %v1048 = vadd.f32 0.0, %v1047
      %v1049 = vpop.f32.mrb[0].mxu0
      %v1050 = vadd.f32 0.0, %v1049
      %v1051 = vpop.f32.mrb[0].mxu0
      %v1052 = vadd.f32 0.0, %v1051
      %v1053 = vpop.f32.mrb[0].mxu0
      %v1054 = vadd.f32 0.0, %v1053
      %1055 = vmatprep.mubr.bf16.mxu0 0
      %1056 = vmatmul.mubr.bf16.gmra.mrb[0].mxu0 %v678
      %v1057 = vpop.f32.mrb[0].mxu0
      %v1058 = vadd.f32 0.0, %v1057
      %v1059 = vpop.f32.mrb[0].mxu0
      %v1060 = vadd.f32 0.0, %v1059
      %v1061 = vpop.f32.mrb[0].mxu0
      %v1062 = vadd.f32 0.0, %v1061
      %v1063 = vpop.f32.mrb[0].mxu0
      %v1064 = vadd.f32 0.0, %v1063
      %1065 = vmatprep.mubr.bf16.mxu0 0
      %1066 = vmatmul.mubr.bf16.gmra.mrb[0].mxu0 %v681
      %v1067 = vpop.f32.mrb[0].mxu0
      %v1068 = vadd.f32 0.0, %v1067
      %v1069 = vpop.f32.mrb[0].mxu0
      %v1070 = vadd.f32 0.0, %v1069
      %v1071 = vpop.f32.mrb[0].mxu0
      %v1072 = vadd.f32 0.0, %v1071
      %v1073 = vpop.f32.mrb[0].mxu0
      %v1074 = vadd.f32 0.0, %v1073
      %1075 = vmatprep.mubr.bf16.mxu0 0
      %1076 = vmatmul.mubr.bf16.gmra.mrb[0].mxu0 %v684
      %v1077 = vpop.f32.mrb[0].mxu0
      %v1078 = vadd.f32 0.0, %v1077
      %v1079 = vpop.f32.mrb[0].mxu0
      %v1080 = vadd.f32 0.0, %v1079
      %v1081 = vpop.f32.mrb[0].mxu0
      %v1082 = vadd.f32 0.0, %v1081
      %v1083 = vpop.f32.mrb[0].mxu0
      %v1084 = vadd.f32 0.0, %v1083
      %1085 = vmatprep.mubr.bf16.mxu0 0
      %1086 = vmatmul.mubr.bf16.gmra.mrb[0].mxu0 %v687
      %v1087 = vpop.f32.mrb[0].mxu0
      %v1088 = vadd.f32 0.0, %v1087
      %v1089 = vpop.f32.mrb[0].mxu0
      %v1090 = vadd.f32 0.0, %v1089
      %v1091 = vpop.f32.mrb[0].mxu0
      %v1092 = vadd.f32 0.0, %v1091
      %v1093 = vpop.f32.mrb[0].mxu0
      %v1094 = vadd.f32 0.0, %v1093
      %1095 = vmatprep.mubr.bf16.mxu0 0
      %1096 = vmatmul.mubr.bf16.gmra.mrb[0].mxu0 %v690
      %v1097 = vpop.f32.mrb[0].mxu0
      %v1098 = vadd.f32 0.0, %v1097
      %v1099 = vpop.f32.mrb[0].mxu0
      %v1100 = vadd.f32 0.0, %v1099
      %v1101 = vpop.f32.mrb[0].mxu0
      %v1102 = vadd.f32 0.0, %v1101
      %v1103 = vpop.f32.mrb[0].mxu0
      %v1104 = vadd.f32 0.0, %v1103
      %1105 = vmatprep.mubr.bf16.mxu0 0
      %1106 = vmatmul.mubr.bf16.gmra.mrb[0].mxu0 %v693
      %v1107 = vpop.f32.mrb[0].mxu0
      %v1108 = vadd.f32 0.0, %v1107
      %v1109 = vpop.f32.mrb[0].mxu0
      %v1110 = vadd.f32 0.0, %v1109
      %v1111 = vpop.f32.mrb[0].mxu0
      %v1112 = vadd.f32 0.0, %v1111
      %v1113 = vpop.f32.mrb[0].mxu0
      %v1114 = vadd.f32 0.0, %v1113
      %1115 = vmatprep.mubr.bf16.mxu0 0
      %1116 = vmatmul.mubr.bf16.gmra.mrb[0].mxu0 %v696
      %v1117 = vpop.f32.mrb[0].mxu0
      %v1118 = vadd.f32 0.0, %v1117
      %v1119 = vpop.f32.mrb[0].mxu0
      %v1120 = vadd.f32 0.0, %v1119
      %v1121 = vpop.f32.mrb[0].mxu0
      %v1122 = vadd.f32 0.0, %v1121
      %v1123 = vpop.f32.mrb[0].mxu0
      %v1124 = vadd.f32 0.0, %v1123
      %1125 = vmatprep.mubr.bf16.mxu0 0
      %1126 = vmatmul.mubr.bf16.gmra.mrb[0].mxu0 %v699
      %v1127 = vpop.f32.mrb[0].mxu0
      %v1128 = vadd.f32 0.0, %v1127
      %v1129 = vpop.f32.mrb[0].mxu0
      %v1130 = vadd.f32 0.0, %v1129
      %v1131 = vpop.f32.mrb[0].mxu0
      %v1132 = vadd.f32 0.0, %v1131
      %v1133 = vpop.f32.mrb[0].mxu0
      %v1134 = vadd.f32 0.0, %v1133
      %1135 = vmatprep.mubr.bf16.mxu0 0
      %1136 = vmatmul.mubr.bf16.gmra.mrb[0].mxu0 %v702
      %v1137 = vpop.f32.mrb[0].mxu0
      %v1138 = vadd.f32 0.0, %v1137
      %v1139 = vpop.f32.mrb[0].mxu0
      %v1140 = vadd.f32 0.0, %v1139
      %v1141 = vpop.f32.mrb[0].mxu0
      %v1142 = vadd.f32 0.0, %v1141
      %v1143 = vpop.f32.mrb[0].mxu0
      %v1144 = vadd.f32 0.0, %v1143
      %1145 = vmatprep.mubr.bf16.mxu0 0
      %1146 = vmatmul.mubr.bf16.gmra.mrb[0].mxu0 %v705
      %v1147 = vpop.f32.mrb[0].mxu0
      %v1148 = vadd.f32 0.0, %v1147
      %v1149 = vpop.f32.mrb[0].mxu0
      %v1150 = vadd.f32 0.0, %v1149
      %v1151 = vpop.f32.mrb[0].mxu0
      %v1152 = vadd.f32 0.0, %v1151
      %v1153 = vpop.f32.mrb[0].mxu0
      %v1154 = vadd.f32 0.0, %v1153
      %1155 = vmatprep.mubr.bf16.mxu0 0
      %1156 = vmatmul.mubr.bf16.gmra.mrb[0].mxu0 %v708
      %v1157 = vpop.f32.mrb[0].mxu0
      %v1158 = vadd.f32 0.0, %v1157
      %v1159 = vpop.f32.mrb[0].mxu0
      %v1160 = vadd.f32 0.0, %v1159
      %v1161 = vpop.f32.mrb[0].mxu0
      %v1162 = vadd.f32 0.0, %v1161
      %v1163 = vpop.f32.mrb[0].mxu0
      %v1164 = vadd.f32 0.0, %v1163
      %1165 = vmatprep.mubr.bf16.mxu0 0
      %1166 = vmatmul.mubr.bf16.gmra.mrb[0].mxu0 %v711
      %v1167 = vpop.f32.mrb[0].mxu0
      %v1168 = vadd.f32 0.0, %v1167
      %v1169 = vpop.f32.mrb[0].mxu0
      %v1170 = vadd.f32 0.0, %v1169
      %v1171 = vpop.f32.mrb[0].mxu0
      %v1172 = vadd.f32 0.0, %v1171
      %v1173 = vpop.f32.mrb[0].mxu0
      %v1174 = vadd.f32 0.0, %v1173
      %1175 = vmatprep.mubr.bf16.mxu0 0
      %1176 = vmatmul.mubr.bf16.gmra.mrb[0].mxu0 %v714
      %v1177 = vpop.f32.mrb[0].mxu0
      %v1178 = vadd.f32 0.0, %v1177
      %v1179 = vpop.f32.mrb[0].mxu0
      %v1180 = vadd.f32 0.0, %v1179
      %v1181 = vpop.f32.mrb[0].mxu0
      %v1182 = vadd.f32 0.0, %v1181
      %v1183 = vpop.f32.mrb[0].mxu0
      %v1184 = vadd.f32 0.0, %v1183
      %1185 = vmatprep.mubr.bf16.mxu0 0
      %1186 = vmatmul.mubr.bf16.gmra.mrb[0].mxu0 %v717
      %v1187 = vpop.f32.mrb[0].mxu0
      %v1188 = vadd.f32 0.0, %v1187
      %v1189 = vpop.f32.mrb[0].mxu0
      %v1190 = vadd.f32 0.0, %v1189
      %v1191 = vpop.f32.mrb[0].mxu0
      %v1192 = vadd.f32 0.0, %v1191
      %v1193 = vpop.f32.mrb[0].mxu0
      %v1194 = vadd.f32 0.0, %v1193
      %1195 = vmatprep.mubr.bf16.mxu0 0
      %1196 = vmatmul.mubr.bf16.gmra.mrb[0].mxu0 %v720
      %v1197 = vpop.f32.mrb[0].mxu0
      %v1198 = vadd.f32 0.0, %v1197
      %v1199 = vpop.f32.mrb[0].mxu0
      %v1200 = vadd.f32 0.0, %v1199
      %v1201 = vpop.f32.mrb[0].mxu0
      %v1202 = vadd.f32 0.0, %v1201
      %v1203 = vpop.f32.mrb[0].mxu0
      %v1204 = vadd.f32 0.0, %v1203
      %1205 = vmatprep.mubr.bf16.mxu0 0
      %1206 = vmatmul.mubr.bf16.gmra.mrb[0].mxu0 %v723
      %v1207 = vpop.f32.mrb[0].mxu0
      %v1208 = vadd.f32 0.0, %v1207
      %v1209 = vpop.f32.mrb[0].mxu0
      %v1210 = vadd.f32 0.0, %v1209
      %v1211 = vpop.f32.mrb[0].mxu0
      %v1212 = vadd.f32 0.0, %v1211
      %v1213 = vpop.f32.mrb[0].mxu0
      %v1214 = vadd.f32 0.0, %v1213
      %1215 = vmatprep.mubr.bf16.mxu0 0
      %1216 = vmatmul.mubr.bf16.gmra.mrb[0].mxu0 %v726
      %v1217 = vpop.f32.mrb[0].mxu0
      %v1218 = vadd.f32 0.0, %v1217
      %v1219 = vpop.f32.mrb[0].mxu0
      %v1220 = vadd.f32 0.0, %v1219
      %v1221 = vpop.f32.mrb[0].mxu0
      %v1222 = vadd.f32 0.0, %v1221
      %v1223 = vpop.f32.mrb[0].mxu0
      %v1224 = vadd.f32 0.0, %v1223
      %1225 = vmatprep.mubr.bf16.mxu0 0
      %1226 = vmatmul.mubr.bf16.gmra.mrb[0].mxu0 %v729
      %v1227 = vpop.f32.mrb[0].mxu0
      %v1228 = vadd.f32 0.0, %v1227
      %v1229 = vpop.f32.mrb[0].mxu0
      %v1230 = vadd.f32 0.0, %v1229
      %v1231 = vpop.f32.mrb[0].mxu0
      %v1232 = vadd.f32 0.0, %v1231
      %v1233 = vpop.f32.mrb[0].mxu0
      %v1234 = vadd.f32 0.0, %v1233
      %1235 = vmatprep.mubr.bf16.mxu0 0
      %1236 = vmatmul.mubr.bf16.gmra.mrb[0].mxu0 %v732
      %v1237 = vpop.f32.mrb[0].mxu0
      %v1238 = vadd.f32 0.0, %v1237
      %v1239 = vpop.f32.mrb[0].mxu0
      %v1240 = vadd.f32 0.0, %v1239
      %v1241 = vpop.f32.mrb[0].mxu0
      %v1242 = vadd.f32 0.0, %v1241
      %v1243 = vpop.f32.mrb[0].mxu0
      %v1244 = vadd.f32 0.0, %v1243
      %1245 = vmatprep.mubr.bf16.mxu0 0
      %1246 = vmatmul.mubr.bf16.gmra.mrb[0].mxu0 %v735
      %v1247 = vpop.f32.mrb[0].mxu0
      %v1248 = vadd.f32 0.0, %v1247
      %v1249 = vpop.f32.mrb[0].mxu0
      %v1250 = vadd.f32 0.0, %v1249
      %v1251 = vpop.f32.mrb[0].mxu0
      %v1252 = vadd.f32 0.0, %v1251
      %v1253 = vpop.f32.mrb[0].mxu0
      %v1254 = vadd.f32 0.0, %v1253
      %1255 = vmatprep.mubr.bf16.mxu0 0
      %1256 = vmatmul.mubr.bf16.gmra.mrb[0].mxu0 %v738
      %v1257 = vpop.f32.mrb[0].mxu0
      %v1258 = vadd.f32 0.0, %v1257
      %v1259 = vpop.f32.mrb[0].mxu0
      %v1260 = vadd.f32 0.0, %v1259
      %v1261 = vpop.f32.mrb[0].mxu0
      %v1262 = vadd.f32 0.0, %v1261
      %v1263 = vpop.f32.mrb[0].mxu0
      %v1264 = vadd.f32 0.0, %v1263
      %1265 = vmatprep.mubr.bf16.mxu0 0
      %1266 = vmatmul.mubr.bf16.gmra.mrb[0].mxu0 %v741
      %v1267 = vpop.f32.mrb[0].mxu0
      %v1268 = vadd.f32 0.0, %v1267
      %v1269 = vpop.f32.mrb[0].mxu0
      %v1270 = vadd.f32 0.0, %v1269
      %v1271 = vpop.f32.mrb[0].mxu0
      %v1272 = vadd.f32 0.0, %v1271
      %v1273 = vpop.f32.mrb[0].mxu0
      %v1274 = vadd.f32 0.0, %v1273
      %1275 = vmatprep.mubr.bf16.mxu0 0
      %1276 = vmatmul.mubr.bf16.gmra.mrb[0].mxu0 %v744
      %v1277 = vpop.f32.mrb[0].mxu0
      %v1278 = vadd.f32 0.0, %v1277
      %v1279 = vpop.f32.mrb[0].mxu0
      %v1280 = vadd.f32 0.0, %v1279
      %v1281 = vpop.f32.mrb[0].mxu0
      %v1282 = vadd.f32 0.0, %v1281
      %v1283 = vpop.f32.mrb[0].mxu0
      %v1284 = vadd.f32 0.0, %v1283
      %1285 = vmatprep.mubr.bf16.mxu0 0
      %1286 = vmatmul.mubr.bf16.gmra.mrb[0].mxu0 %v747
      %v1287 = vpop.f32.mrb[0].mxu0
      %v1288 = vadd.f32 0.0, %v1287
      %v1289 = vpop.f32.mrb[0].mxu0
      %v1290 = vadd.f32 0.0, %v1289
      %v1291 = vpop.f32.mrb[0].mxu0
      %v1292 = vadd.f32 0.0, %v1291
      %v1293 = vpop.f32.mrb[0].mxu0
      %v1294 = vadd.f32 0.0, %v1293
      %1295 = vmatprep.mubr.bf16.mxu0 0
      %1296 = vmatmul.mubr.bf16.gmra.mrb[0].mxu0 %v750
      %v1297 = vpop.f32.mrb[0].mxu0
      %v1298 = vadd.f32 0.0, %v1297
      %v1299 = vpop.f32.mrb[0].mxu0
      %v1300 = vadd.f32 0.0, %v1299
      %v1301 = vpop.f32.mrb[0].mxu0
      %v1302 = vadd.f32 0.0, %v1301
      %v1303 = vpop.f32.mrb[0].mxu0
      %v1304 = vadd.f32 0.0, %v1303
      %1305 = vmatprep.mubr.bf16.mxu0 0
      %1306 = vmatmul.mubr.bf16.gmra.mrb[0].mxu0 %v753
      %v1307 = vpop.f32.mrb[0].mxu0
      %v1308 = vadd.f32 0.0, %v1307
      %v1309 = vpop.f32.mrb[0].mxu0
      %v1310 = vadd.f32 0.0, %v1309
      %v1311 = vpop.f32.mrb[0].mxu0
      %v1312 = vadd.f32 0.0, %v1311
      %v1313 = vpop.f32.mrb[0].mxu0
      %v1314 = vadd.f32 0.0, %v1313
      %1315 = vmatprep.mubr.bf16.mxu0 0
      %1316 = vmatmul.mubr.bf16.gmra.mrb[0].mxu0 %v756
      %v1317 = vpop.f32.mrb[0].mxu0
      %v1318 = vadd.f32 0.0, %v1317
      %v1319 = vpop.f32.mrb[0].mxu0
      %v1320 = vadd.f32 0.0, %v1319
      %v1321 = vpop.f32.mrb[0].mxu0
      %v1322 = vadd.f32 0.0, %v1321
      %v1323 = vpop.f32.mrb[0].mxu0
      %v1324 = vadd.f32 0.0, %v1323
      %1325 = vmatprep.mubr.bf16.mxu0 0
      %1326 = vmatmul.mubr.bf16.gmra.mrb[0].mxu0 %v759
      %v1327 = vpop.f32.mrb[0].mxu0
      %v1328 = vadd.f32 0.0, %v1327
      %v1329 = vpop.f32.mrb[0].mxu0
      %v1330 = vadd.f32 0.0, %v1329
      %v1331 = vpop.f32.mrb[0].mxu0
      %v1332 = vadd.f32 0.0, %v1331
      %v1333 = vpop.f32.mrb[0].mxu0
      %v1334 = vadd.f32 0.0, %v1333
      %1335 = vmatprep.mubr.bf16.mxu0 0
      %1336 = vmatmul.mubr.bf16.gmra.mrb[0].mxu0 %v762
      %v1337 = vpop.f32.mrb[0].mxu0
      %v1338 = vadd.f32 0.0, %v1337
      %v1339 = vpop.f32.mrb[0].mxu0
      %v1340 = vadd.f32 0.0, %v1339
      %v1341 = vpop.f32.mrb[0].mxu0
      %v1342 = vadd.f32 0.0, %v1341
      %v1343 = vpop.f32.mrb[0].mxu0
      %v1344 = vadd.f32 0.0, %v1343
      %1345 = vmatprep.mubr.bf16.mxu0 0
      %1346 = vmatmul.mubr.bf16.gmra.mrb[0].mxu0 %v765
      %v1347 = vpop.f32.mrb[0].mxu0
      %v1348 = vadd.f32 0.0, %v1347
      %v1349 = vpop.f32.mrb[0].mxu0
      %v1350 = vadd.f32 0.0, %v1349
      %v1351 = vpop.f32.mrb[0].mxu0
      %v1352 = vadd.f32 0.0, %v1351
      %v1353 = vpop.f32.mrb[0].mxu0
      %v1354 = vadd.f32 0.0, %v1353
      %1355 = vmatprep.mubr.bf16.mxu0 0
      %1356 = vmatmul.mubr.bf16.gmra.mrb[0].mxu0 %v768
      %v1357 = vpop.f32.mrb[0].mxu0
      %v1358 = vadd.f32 0.0, %v1357
      %v1359 = vpop.f32.mrb[0].mxu0
      %v1360 = vadd.f32 0.0, %v1359
      %v1361 = vpop.f32.mrb[0].mxu0
      %v1362 = vadd.f32 0.0, %v1361
      %v1363 = vpop.f32.mrb[0].mxu0
      %v1364 = vadd.f32 0.0, %v1363
      %1365 = vmatprep.mubr.bf16.mxu0 0
      %1366 = vmatmul.mubr.bf16.gmra.mrb[0].mxu0 %v771
      %v1367 = vpop.f32.mrb[0].mxu0
      %v1368 = vadd.f32 0.0, %v1367
      %v1369 = vpop.f32.mrb[0].mxu0
      %v1370 = vadd.f32 0.0, %v1369
      %v1371 = vpop.f32.mrb[0].mxu0
      %v1372 = vadd.f32 0.0, %v1371
      %v1373 = vpop.f32.mrb[0].mxu0
      %v1374 = vadd.f32 0.0, %v1373
      %1375 = vmatprep.mubr.bf16.mxu0 0
      %1376 = vmatmul.mubr.bf16.gmra.mrb[0].mxu0 %v774
      %v1377 = vpop.f32.mrb[0].mxu0
      %v1378 = vadd.f32 0.0, %v1377
      %v1379 = vpop.f32.mrb[0].mxu0
      %v1380 = vadd.f32 0.0, %v1379
      %v1381 = vpop.f32.mrb[0].mxu0
      %v1382 = vadd.f32 0.0, %v1381
      %v1383 = vpop.f32.mrb[0].mxu0
      %v1384 = vadd.f32 0.0, %v1383
      %1385 = vmatprep.mubr.bf16.mxu0 0
      %1386 = vmatmul.mubr.bf16.gmra.mrb[0].mxu0 %v777
      %v1387 = vpop.f32.mrb[0].mxu0
      %v1388 = vadd.f32 0.0, %v1387
      %v1389 = vpop.f32.mrb[0].mxu0
      %v1390 = vadd.f32 0.0, %v1389
      %v1391 = vpop.f32.mrb[0].mxu0
      %v1392 = vadd.f32 0.0, %v1391
      %v1393 = vpop.f32.mrb[0].mxu0
      %v1394 = vadd.f32 0.0, %v1393
      %1395 = vmatprep.mubr.bf16.mxu0 0
      %1396 = vmatmul.mubr.bf16.gmra.mrb[0].mxu0 %v780
      %v1397 = vpop.f32.mrb[0].mxu0
      %v1398 = vadd.f32 0.0, %v1397
      %v1399 = vpop.f32.mrb[0].mxu0
      %v1400 = vadd.f32 0.0, %v1399
      %v1401 = vpop.f32.mrb[0].mxu0
      %v1402 = vadd.f32 0.0, %v1401
      %v1403 = vpop.f32.mrb[0].mxu0
      %v1404 = vadd.f32 0.0, %v1403
      %1405 = vmatprep.mubr.bf16.mxu0 0
      %1406 = vmatmul.mubr.bf16.gmra.mrb[0].mxu0 %v783
      %v1407 = vpop.f32.mrb[0].mxu0
      %v1408 = vadd.f32 0.0, %v1407
      %v1409 = vpop.f32.mrb[0].mxu0
      %v1410 = vadd.f32 0.0, %v1409
      %v1411 = vpop.f32.mrb[0].mxu0
      %v1412 = vadd.f32 0.0, %v1411
      %v1413 = vpop.f32.mrb[0].mxu0
      %v1414 = vadd.f32 0.0, %v1413
      %1415 = vmatprep.mubr.bf16.mxu0 0
      %1416 = vmatmul.mubr.bf16.gmra.mrb[0].mxu0 %v786
      %v1417 = vpop.f32.mrb[0].mxu0
      %v1418 = vadd.f32 0.0, %v1417
      %v1419 = vpop.f32.mrb[0].mxu0
      %v1420 = vadd.f32 0.0, %v1419
      %v1421 = vpop.f32.mrb[0].mxu0
      %v1422 = vadd.f32 0.0, %v1421
      %v1423 = vpop.f32.mrb[0].mxu0
      %v1424 = vadd.f32 0.0, %v1423
      %1425 = vmatprep.mubr.bf16.mxu0 0
      %1426 = vmatmul.mubr.bf16.gmra.mrb[0].mxu0 %v789
      %v1427 = vpop.f32.mrb[0].mxu0
      %v1428 = vadd.f32 0.0, %v1427
      %v1429 = vpop.f32.mrb[0].mxu0
      %v1430 = vadd.f32 0.0, %v1429
      %v1431 = vpop.f32.mrb[0].mxu0
      %v1432 = vadd.f32 0.0, %v1431
      %v1433 = vpop.f32.mrb[0].mxu0
      %v1434 = vadd.f32 0.0, %v1433
      %1435 = vmatprep.mubr.bf16.mxu0 0
      %1436 = vmatmul.mubr.bf16.gmra.mrb[0].mxu0 %v792
      %v1437 = vpop.f32.mrb[0].mxu0
      %v1438 = vadd.f32 0.0, %v1437
      %v1439 = vpop.f32.mrb[0].mxu0
      %v1440 = vadd.f32 0.0, %v1439
      %v1441 = vpop.f32.mrb[0].mxu0
      %v1442 = vadd.f32 0.0, %v1441
      %v1443 = vpop.f32.mrb[0].mxu0
      %v1444 = vadd.f32 0.0, %v1443
      %1445 = vmatprep.mubr.bf16.mxu0 0
      %1446 = vmatmul.mubr.bf16.gmra.mrb[0].mxu0 %v795
      %v1447 = vpop.f32.mrb[0].mxu0
      %v1448 = vadd.f32 0.0, %v1447
      %v1449 = vpop.f32.mrb[0].mxu0
      %v1450 = vadd.f32 0.0, %v1449
      %v1451 = vpop.f32.mrb[0].mxu0
      %v1452 = vadd.f32 0.0, %v1451
      %v1453 = vpop.f32.mrb[0].mxu0
      %v1454 = vadd.f32 0.0, %v1453
      %1455 = vmatprep.mubr.bf16.mxu0 0
      %1456 = vmatmul.mubr.bf16.gmra.mrb[0].mxu0 %v798
      %v1457 = vpop.f32.mrb[0].mxu0
      %v1458 = vadd.f32 0.0, %v1457
      %v1459 = vpop.f32.mrb[0].mxu0
      %v1460 = vadd.f32 0.0, %v1459
      %v1461 = vpop.f32.mrb[0].mxu0
      %v1462 = vadd.f32 0.0, %v1461
      %v1463 = vpop.f32.mrb[0].mxu0
      %v1464 = vadd.f32 0.0, %v1463
      %1465 = vmatprep.mubr.bf16.mxu0 0
      %1466 = vmatmul.mubr.bf16.gmra.mrb[0].mxu0 %v801
      %v1467 = vpop.f32.mrb[0].mxu0
      %v1468 = vadd.f32 0.0, %v1467
      %v1469 = vpop.f32.mrb[0].mxu0
      %v1470 = vadd.f32 0.0, %v1469
      %v1471 = vpop.f32.mrb[0].mxu0
      %v1472 = vadd.f32 0.0, %v1471
      %v1473 = vpop.f32.mrb[0].mxu0
      %v1474 = vadd.f32 0.0, %v1473
      %1475 = vdwg.mxu0
      %v1476 = vpack.c.bf16 %v842, %v838
      %v1477 = vpack.c.bf16 %v844, %v840
      %v1478 = vpack.c.bf16 %v852, %v848
      %v1479 = vpack.c.bf16 %v854, %v850
      %v1480 = vpack.c.bf16 %v862, %v858
      %v1481 = vpack.c.bf16 %v864, %v860
      %v1482 = vpack.c.bf16 %v872, %v868
      %v1483 = vpack.c.bf16 %v874, %v870
      %v1484 = vpack.c.bf16 %v882, %v878
      %v1485 = vpack.c.bf16 %v884, %v880
      %v1486 = vpack.c.bf16 %v892, %v888
      %v1487 = vpack.c.bf16 %v894, %v890
      %v1488 = vpack.c.bf16 %v902, %v898
      %v1489 = vpack.c.bf16 %v904, %v900
      %v1490 = vpack.c.bf16 %v912, %v908
      %v1491 = vpack.c.bf16 %v914, %v910
      %v1492 = vpack.c.bf16 %v922, %v918
      %v1493 = vpack.c.bf16 %v924, %v920
      %v1494 = vpack.c.bf16 %v932, %v928
      %v1495 = vpack.c.bf16 %v934, %v930
      %v1496 = vpack.c.bf16 %v942, %v938
      %v1497 = vpack.c.bf16 %v944, %v940
      %v1498 = vpack.c.bf16 %v952, %v948
      %v1499 = vpack.c.bf16 %v954, %v950
      %v1500 = vpack.c.bf16 %v962, %v958
      %v1501 = vpack.c.bf16 %v964, %v960
      %v1502 = vpack.c.bf16 %v972, %v968
      %v1503 = vpack.c.bf16 %v974, %v970
      %v1504 = vpack.c.bf16 %v982, %v978
      %v1505 = vpack.c.bf16 %v984, %v980
      %v1506 = vpack.c.bf16 %v992, %v988
      %v1507 = vpack.c.bf16 %v994, %v990
      %v1508 = vpack.c.bf16 %v1002, %v998
      %v1509 = vpack.c.bf16 %v1004, %v1000
      %v1510 = vpack.c.bf16 %v1012, %v1008
      %v1511 = vpack.c.bf16 %v1014, %v1010
      %v1512 = vpack.c.bf16 %v1022, %v1018
      %v1513 = vpack.c.bf16 %v1024, %v1020
      %v1514 = vpack.c.bf16 %v1032, %v1028
      %v1515 = vpack.c.bf16 %v1034, %v1030
      %v1516 = vpack.c.bf16 %v1042, %v1038
      %v1517 = vpack.c.bf16 %v1044, %v1040
      %v1518 = vpack.c.bf16 %v1052, %v1048
      %v1519 = vpack.c.bf16 %v1054, %v1050
      %v1520 = vpack.c.bf16 %v1062, %v1058
      %v1521 = vpack.c.bf16 %v1064, %v1060
      %v1522 = vpack.c.bf16 %v1072, %v1068
      %v1523 = vpack.c.bf16 %v1074, %v1070
      %v1524 = vpack.c.bf16 %v1082, %v1078
      %v1525 = vpack.c.bf16 %v1084, %v1080
      %v1526 = vpack.c.bf16 %v1092, %v1088
      %v1527 = vpack.c.bf16 %v1094, %v1090
      %v1528 = vpack.c.bf16 %v1102, %v1098
      %v1529 = vpack.c.bf16 %v1104, %v1100
      %v1530 = vpack.c.bf16 %v1112, %v1108
      %v1531 = vpack.c.bf16 %v1114, %v1110
      %v1532 = vpack.c.bf16 %v1122, %v1118
      %v1533 = vpack.c.bf16 %v1124, %v1120
      %v1534 = vpack.c.bf16 %v1132, %v1128
      %v1535 = vpack.c.bf16 %v1134, %v1130
      %v1536 = vpack.c.bf16 %v1142, %v1138
      %v1537 = vpack.c.bf16 %v1144, %v1140
      %v1538 = vpack.c.bf16 %v1152, %v1148
      %v1539 = vpack.c.bf16 %v1154, %v1150
      %v1540 = vpack.c.bf16 %v1162, %v1158
      %v1541 = vpack.c.bf16 %v1164, %v1160
      %v1542 = vpack.c.bf16 %v1172, %v1168
      %v1543 = vpack.c.bf16 %v1174, %v1170
      %v1544 = vpack.c.bf16 %v1182, %v1178
      %v1545 = vpack.c.bf16 %v1184, %v1180
      %v1546 = vpack.c.bf16 %v1192, %v1188
      %v1547 = vpack.c.bf16 %v1194, %v1190
      %v1548 = vpack.c.bf16 %v1202, %v1198
      %v1549 = vpack.c.bf16 %v1204, %v1200
      %v1550 = vpack.c.bf16 %v1212, %v1208
      %v1551 = vpack.c.bf16 %v1214, %v1210
      %v1552 = vpack.c.bf16 %v1222, %v1218
      %v1553 = vpack.c.bf16 %v1224, %v1220
      %v1554 = vpack.c.bf16 %v1232, %v1228
      %v1555 = vpack.c.bf16 %v1234, %v1230
      %v1556 = vpack.c.bf16 %v1242, %v1238
      %v1557 = vpack.c.bf16 %v1244, %v1240
      %v1558 = vpack.c.bf16 %v1252, %v1248
      %v1559 = vpack.c.bf16 %v1254, %v1250
      %v1560 = vpack.c.bf16 %v1262, %v1258
      %v1561 = vpack.c.bf16 %v1264, %v1260
      %v1562 = vpack.c.bf16 %v1272, %v1268
      %v1563 = vpack.c.bf16 %v1274, %v1270
      %v1564 = vpack.c.bf16 %v1282, %v1278
      %v1565 = vpack.c.bf16 %v1284, %v1280
      %v1566 = vpack.c.bf16 %v1292, %v1288
      %v1567 = vpack.c.bf16 %v1294, %v1290
      %v1568 = vpack.c.bf16 %v1302, %v1298
      %v1569 = vpack.c.bf16 %v1304, %v1300
      %v1570 = vpack.c.bf16 %v1312, %v1308
      %v1571 = vpack.c.bf16 %v1314, %v1310
      %v1572 = vpack.c.bf16 %v1322, %v1318
      %v1573 = vpack.c.bf16 %v1324, %v1320
      %v1574 = vpack.c.bf16 %v1332, %v1328
      %v1575 = vpack.c.bf16 %v1334, %v1330
      %v1576 = vpack.c.bf16 %v1342, %v1338
      %v1577 = vpack.c.bf16 %v1344, %v1340
      %v1578 = vpack.c.bf16 %v1352, %v1348
      %v1579 = vpack.c.bf16 %v1354, %v1350
      %v1580 = vpack.c.bf16 %v1362, %v1358
      %v1581 = vpack.c.bf16 %v1364, %v1360
      %v1582 = vpack.c.bf16 %v1372, %v1368
      %v1583 = vpack.c.bf16 %v1374, %v1370
      %v1584 = vpack.c.bf16 %v1382, %v1378
      %v1585 = vpack.c.bf16 %v1384, %v1380
      %v1586 = vpack.c.bf16 %v1392, %v1388
      %v1587 = vpack.c.bf16 %v1394, %v1390
      %v1588 = vpack.c.bf16 %v1402, %v1398
      %v1589 = vpack.c.bf16 %v1404, %v1400
      %v1590 = vpack.c.bf16 %v1412, %v1408
      %v1591 = vpack.c.bf16 %v1414, %v1410
      %v1592 = vpack.c.bf16 %v1422, %v1418
      %v1593 = vpack.c.bf16 %v1424, %v1420
      %v1594 = vpack.c.bf16 %v1432, %v1428
      %v1595 = vpack.c.bf16 %v1434, %v1430
      %v1596 = vpack.c.bf16 %v1442, %v1438
      %v1597 = vpack.c.bf16 %v1444, %v1440
      %v1598 = vpack.c.bf16 %v1452, %v1448
      %v1599 = vpack.c.bf16 %v1454, %v1450
      %v1600 = vpack.c.bf16 %v1462, %v1458
      %v1601 = vpack.c.bf16 %v1464, %v1460
      %v1602 = vpack.c.bf16 %v1472, %v1468
      %v1603 = vpack.c.bf16 %v1474, %v1470
      %v1732 = vunpack.c.l.b16 %v1476
      %v1733 = vunpack.c.l.b16 %v1477
      %v1734 = vunpack.c.h.b16 %v1476
      %v1735 = vunpack.c.h.b16 %v1477
      %v1736 = vunpack.c.l.b16 %v1478
      %v1737 = vunpack.c.l.b16 %v1479
      %v1738 = vunpack.c.h.b16 %v1478
      %v1739 = vunpack.c.h.b16 %v1479
      %v1740 = vunpack.c.l.b16 %v1480
      %v1741 = vunpack.c.l.b16 %v1481
      %v1742 = vunpack.c.h.b16 %v1480
      %v1743 = vunpack.c.h.b16 %v1481
      %v1744 = vunpack.c.l.b16 %v1482
      %v1745 = vunpack.c.l.b16 %v1483
      %v1746 = vunpack.c.h.b16 %v1482
      %v1747 = vunpack.c.h.b16 %v1483
      %v1748 = vunpack.c.l.b16 %v1484
      %v1749 = vunpack.c.l.b16 %v1485
      %v1750 = vunpack.c.h.b16 %v1484
      %v1751 = vunpack.c.h.b16 %v1485
      %v1752 = vunpack.c.l.b16 %v1486
      %v1753 = vunpack.c.l.b16 %v1487
      %v1754 = vunpack.c.h.b16 %v1486
      %v1755 = vunpack.c.h.b16 %v1487
      %v1756 = vunpack.c.l.b16 %v1488
      %v1757 = vunpack.c.l.b16 %v1489
      %v1758 = vunpack.c.h.b16 %v1488
      %v1759 = vunpack.c.h.b16 %v1489
      %v1760 = vunpack.c.l.b16 %v1490
      %v1761 = vunpack.c.l.b16 %v1491
      %v1762 = vunpack.c.h.b16 %v1490
      %v1763 = vunpack.c.h.b16 %v1491
      %v1764 = vunpack.c.l.b16 %v1492
      %v1765 = vunpack.c.l.b16 %v1493
      %v1766 = vunpack.c.h.b16 %v1492
      %v1767 = vunpack.c.h.b16 %v1493
      %v1768 = vunpack.c.l.b16 %v1494
      %v1769 = vunpack.c.l.b16 %v1495
      %v1770 = vunpack.c.h.b16 %v1494
      %v1771 = vunpack.c.h.b16 %v1495
      %v1772 = vunpack.c.l.b16 %v1496
      %v1773 = vunpack.c.l.b16 %v1497
      %v1774 = vunpack.c.h.b16 %v1496
      %v1775 = vunpack.c.h.b16 %v1497
      %v1776 = vunpack.c.l.b16 %v1498
      %v1777 = vunpack.c.l.b16 %v1499
      %v1778 = vunpack.c.h.b16 %v1498
      %v1779 = vunpack.c.h.b16 %v1499
      %v1780 = vunpack.c.l.b16 %v1500
      %v1781 = vunpack.c.l.b16 %v1501
      %v1782 = vunpack.c.h.b16 %v1500
      %v1783 = vunpack.c.h.b16 %v1501
      %v1784 = vunpack.c.l.b16 %v1502
      %v1785 = vunpack.c.l.b16 %v1503
      %v1786 = vunpack.c.h.b16 %v1502
      %v1787 = vunpack.c.h.b16 %v1503
      %v1788 = vunpack.c.l.b16 %v1504
      %v1789 = vunpack.c.l.b16 %v1505
      %v1790 = vunpack.c.h.b16 %v1504
      %v1791 = vunpack.c.h.b16 %v1505
      %v1792 = vunpack.c.l.b16 %v1506
      %v1793 = vunpack.c.l.b16 %v1507
      %v1794 = vunpack.c.h.b16 %v1506
      %v1795 = vunpack.c.h.b16 %v1507
      %v1796 = vunpack.c.l.b16 %v1508
      %v1797 = vunpack.c.l.b16 %v1509
      %v1798 = vunpack.c.h.b16 %v1508
      %v1799 = vunpack.c.h.b16 %v1509
      %v1800 = vunpack.c.l.b16 %v1510
      %v1801 = vunpack.c.l.b16 %v1511
      %v1802 = vunpack.c.h.b16 %v1510
      %v1803 = vunpack.c.h.b16 %v1511
      %v1804 = vunpack.c.l.b16 %v1512
      %v1805 = vunpack.c.l.b16 %v1513
      %v1806 = vunpack.c.h.b16 %v1512
      %v1807 = vunpack.c.h.b16 %v1513
      %v1808 = vunpack.c.l.b16 %v1514
      %v1809 = vunpack.c.l.b16 %v1515
      %v1810 = vunpack.c.h.b16 %v1514
      %v1811 = vunpack.c.h.b16 %v1515
      %v1812 = vunpack.c.l.b16 %v1516
      %v1813 = vunpack.c.l.b16 %v1517
      %v1814 = vunpack.c.h.b16 %v1516
      %v1815 = vunpack.c.h.b16 %v1517
      %v1816 = vunpack.c.l.b16 %v1518
      %v1817 = vunpack.c.l.b16 %v1519
      %v1818 = vunpack.c.h.b16 %v1518
      %v1819 = vunpack.c.h.b16 %v1519
      %v1820 = vunpack.c.l.b16 %v1520
      %v1821 = vunpack.c.l.b16 %v1521
      %v1822 = vunpack.c.h.b16 %v1520
      %v1823 = vunpack.c.h.b16 %v1521
      %v1824 = vunpack.c.l.b16 %v1522
      %v1825 = vunpack.c.l.b16 %v1523
      %v1826 = vunpack.c.h.b16 %v1522
      %v1827 = vunpack.c.h.b16 %v1523
      %v1828 = vunpack.c.l.b16 %v1524
      %v1829 = vunpack.c.l.b16 %v1525
      %v1830 = vunpack.c.h.b16 %v1524
      %v1831 = vunpack.c.h.b16 %v1525
      %v1832 = vunpack.c.l.b16 %v1526
      %v1833 = vunpack.c.l.b16 %v1527
      %v1834 = vunpack.c.h.b16 %v1526
      %v1835 = vunpack.c.h.b16 %v1527
      %v1836 = vunpack.c.l.b16 %v1528
      %v1837 = vunpack.c.l.b16 %v1529
      %v1838 = vunpack.c.h.b16 %v1528
      %v1839 = vunpack.c.h.b16 %v1529
      %v1840 = vunpack.c.l.b16 %v1530
      %v1841 = vunpack.c.l.b16 %v1531
      %v1842 = vunpack.c.h.b16 %v1530
      %v1843 = vunpack.c.h.b16 %v1531
      %v1844 = vunpack.c.l.b16 %v1532
      %v1845 = vunpack.c.l.b16 %v1533
      %v1846 = vunpack.c.h.b16 %v1532
      %v1847 = vunpack.c.h.b16 %v1533
      %v1848 = vunpack.c.l.b16 %v1534
      %v1849 = vunpack.c.l.b16 %v1535
      %v1850 = vunpack.c.h.b16 %v1534
      %v1851 = vunpack.c.h.b16 %v1535
      %v1852 = vunpack.c.l.b16 %v1536
      %v1853 = vunpack.c.l.b16 %v1537
      %v1854 = vunpack.c.h.b16 %v1536
      %v1855 = vunpack.c.h.b16 %v1537
      %v1856 = vunpack.c.l.b16 %v1538
      %v1857 = vunpack.c.l.b16 %v1539
      %v1858 = vunpack.c.h.b16 %v1538
      %v1859 = vunpack.c.h.b16 %v1539
      %v1860 = vunpack.c.l.b16 %v1540
      %v1861 = vunpack.c.l.b16 %v1541
      %v1862 = vunpack.c.h.b16 %v1540
      %v1863 = vunpack.c.h.b16 %v1541
      %v1864 = vunpack.c.l.b16 %v1542
      %v1865 = vunpack.c.l.b16 %v1543
      %v1866 = vunpack.c.h.b16 %v1542
      %v1867 = vunpack.c.h.b16 %v1543
      %v1868 = vunpack.c.l.b16 %v1544
      %v1869 = vunpack.c.l.b16 %v1545
      %v1870 = vunpack.c.h.b16 %v1544
      %v1871 = vunpack.c.h.b16 %v1545
      %v1872 = vunpack.c.l.b16 %v1546
      %v1873 = vunpack.c.l.b16 %v1547
      %v1874 = vunpack.c.h.b16 %v1546
      %v1875 = vunpack.c.h.b16 %v1547
      %v1876 = vunpack.c.l.b16 %v1548
      %v1877 = vunpack.c.l.b16 %v1549
      %v1878 = vunpack.c.h.b16 %v1548
      %v1879 = vunpack.c.h.b16 %v1549
      %v1880 = vunpack.c.l.b16 %v1550
      %v1881 = vunpack.c.l.b16 %v1551
      %v1882 = vunpack.c.h.b16 %v1550
      %v1883 = vunpack.c.h.b16 %v1551
      %v1884 = vunpack.c.l.b16 %v1552
      %v1885 = vunpack.c.l.b16 %v1553
      %v1886 = vunpack.c.h.b16 %v1552
      %v1887 = vunpack.c.h.b16 %v1553
      %v1888 = vunpack.c.l.b16 %v1554
      %v1889 = vunpack.c.l.b16 %v1555
      %v1890 = vunpack.c.h.b16 %v1554
      %v1891 = vunpack.c.h.b16 %v1555
      %v1892 = vunpack.c.l.b16 %v1556
      %v1893 = vunpack.c.l.b16 %v1557
      %v1894 = vunpack.c.h.b16 %v1556
      %v1895 = vunpack.c.h.b16 %v1557
      %v1896 = vunpack.c.l.b16 %v1558
      %v1897 = vunpack.c.l.b16 %v1559
      %v1898 = vunpack.c.h.b16 %v1558
      %v1899 = vunpack.c.h.b16 %v1559
      %v1900 = vunpack.c.l.b16 %v1560
      %v1901 = vunpack.c.l.b16 %v1561
      %v1902 = vunpack.c.h.b16 %v1560
      %v1903 = vunpack.c.h.b16 %v1561
      %v1904 = vunpack.c.l.b16 %v1562
      %v1905 = vunpack.c.l.b16 %v1563
      %v1906 = vunpack.c.h.b16 %v1562
      %v1907 = vunpack.c.h.b16 %v1563
      %v1908 = vunpack.c.l.b16 %v1564
      %v1909 = vunpack.c.l.b16 %v1565
      %v1910 = vunpack.c.h.b16 %v1564
      %v1911 = vunpack.c.h.b16 %v1565
      %v1912 = vunpack.c.l.b16 %v1566
      %v1913 = vunpack.c.l.b16 %v1567
      %v1914 = vunpack.c.h.b16 %v1566
      %v1915 = vunpack.c.h.b16 %v1567
      %v1916 = vunpack.c.l.b16 %v1568
      %v1917 = vunpack.c.l.b16 %v1569
      %v1918 = vunpack.c.h.b16 %v1568
      %v1919 = vunpack.c.h.b16 %v1569
      %v1920 = vunpack.c.l.b16 %v1570
      %v1921 = vunpack.c.l.b16 %v1571
      %v1922 = vunpack.c.h.b16 %v1570
      %v1923 = vunpack.c.h.b16 %v1571
      %v1924 = vunpack.c.l.b16 %v1572
      %v1925 = vunpack.c.l.b16 %v1573
      %v1926 = vunpack.c.h.b16 %v1572
      %v1927 = vunpack.c.h.b16 %v1573
      %v1928 = vunpack.c.l.b16 %v1574
      %v1929 = vunpack.c.l.b16 %v1575
      %v1930 = vunpack.c.h.b16 %v1574
      %v1931 = vunpack.c.h.b16 %v1575
      %v1932 = vunpack.c.l.b16 %v1576
      %v1933 = vunpack.c.l.b16 %v1577
      %v1934 = vunpack.c.h.b16 %v1576
      %v1935 = vunpack.c.h.b16 %v1577
      %v1936 = vunpack.c.l.b16 %v1578
      %v1937 = vunpack.c.l.b16 %v1579
      %v1938 = vunpack.c.h.b16 %v1578
      %v1939 = vunpack.c.h.b16 %v1579
      %v1940 = vunpack.c.l.b16 %v1580
      %v1941 = vunpack.c.l.b16 %v1581
      %v1942 = vunpack.c.h.b16 %v1580
      %v1943 = vunpack.c.h.b16 %v1581
      %v1944 = vunpack.c.l.b16 %v1582
      %v1945 = vunpack.c.l.b16 %v1583
      %v1946 = vunpack.c.h.b16 %v1582
      %v1947 = vunpack.c.h.b16 %v1583
      %v1948 = vunpack.c.l.b16 %v1584
      %v1949 = vunpack.c.l.b16 %v1585
      %v1950 = vunpack.c.h.b16 %v1584
      %v1951 = vunpack.c.h.b16 %v1585
      %v1952 = vunpack.c.l.b16 %v1586
      %v1953 = vunpack.c.l.b16 %v1587
      %v1954 = vunpack.c.h.b16 %v1586
      %v1955 = vunpack.c.h.b16 %v1587
      %v1956 = vunpack.c.l.b16 %v1588
      %v1957 = vunpack.c.l.b16 %v1589
      %v1958 = vunpack.c.h.b16 %v1588
      %v1959 = vunpack.c.h.b16 %v1589
      %v1960 = vunpack.c.l.b16 %v1590
      %v1961 = vunpack.c.l.b16 %v1591
      %v1962 = vunpack.c.h.b16 %v1590
      %v1963 = vunpack.c.h.b16 %v1591
      %v1964 = vunpack.c.l.b16 %v1592
      %v1965 = vunpack.c.l.b16 %v1593
      %v1966 = vunpack.c.h.b16 %v1592
      %v1967 = vunpack.c.h.b16 %v1593
      %v1968 = vunpack.c.l.b16 %v1594
      %v1969 = vunpack.c.l.b16 %v1595
      %v1970 = vunpack.c.h.b16 %v1594
      %v1971 = vunpack.c.h.b16 %v1595
      %v1972 = vunpack.c.l.b16 %v1596
      %v1973 = vunpack.c.l.b16 %v1597
      %v1974 = vunpack.c.h.b16 %v1596
      %v1975 = vunpack.c.h.b16 %v1597
      %v1976 = vunpack.c.l.b16 %v1598
      %v1977 = vunpack.c.l.b16 %v1599
      %v1978 = vunpack.c.h.b16 %v1598
      %v1979 = vunpack.c.h.b16 %v1599
      %v1980 = vunpack.c.l.b16 %v1600
      %v1981 = vunpack.c.l.b16 %v1601
      %v1982 = vunpack.c.h.b16 %v1600
      %v1983 = vunpack.c.h.b16 %v1601
      %v1984 = vunpack.c.l.b16 %v1602
      %v1985 = vunpack.c.l.b16 %v1603
      %v1986 = vunpack.c.h.b16 %v1602
      %v1987 = vunpack.c.h.b16 %v1603
      %v1988 = vpack.c.b16 %v1733, %v1732
      %v1989 = vpack.c.b16 %v1735, %v1734
      %v1990 = vpack.c.b16 %v1737, %v1736
      %v1991 = vpack.c.b16 %v1739, %v1738
      %v1992 = vpack.c.b16 %v1741, %v1740
      %v1993 = vpack.c.b16 %v1743, %v1742
      %v1994 = vpack.c.b16 %v1745, %v1744
      %v1995 = vpack.c.b16 %v1747, %v1746
      %v1996 = vpack.c.b16 %v1749, %v1748
      %v1997 = vpack.c.b16 %v1751, %v1750
      %v1998 = vpack.c.b16 %v1753, %v1752
      %v1999 = vpack.c.b16 %v1755, %v1754
      %v2000 = vpack.c.b16 %v1757, %v1756
      %v2001 = vpack.c.b16 %v1759, %v1758
      %v2002 = vpack.c.b16 %v1761, %v1760
      %v2003 = vpack.c.b16 %v1763, %v1762
      %v2004 = vpack.c.b16 %v1765, %v1764
      %v2005 = vpack.c.b16 %v1767, %v1766
      %v2006 = vpack.c.b16 %v1769, %v1768
      %v2007 = vpack.c.b16 %v1771, %v1770
      %v2008 = vpack.c.b16 %v1773, %v1772
      %v2009 = vpack.c.b16 %v1775, %v1774
      %v2010 = vpack.c.b16 %v1777, %v1776
      %v2011 = vpack.c.b16 %v1779, %v1778
      %v2012 = vpack.c.b16 %v1781, %v1780
      %v2013 = vpack.c.b16 %v1783, %v1782
      %v2014 = vpack.c.b16 %v1785, %v1784
      %v2015 = vpack.c.b16 %v1787, %v1786
      %v2016 = vpack.c.b16 %v1789, %v1788
      %v2017 = vpack.c.b16 %v1791, %v1790
      %v2018 = vpack.c.b16 %v1793, %v1792
      %v2019 = vpack.c.b16 %v1795, %v1794
      %v2020 = vpack.c.b16 %v1797, %v1796
      %v2021 = vpack.c.b16 %v1799, %v1798
      %v2022 = vpack.c.b16 %v1801, %v1800
      %v2023 = vpack.c.b16 %v1803, %v1802
      %v2024 = vpack.c.b16 %v1805, %v1804
      %v2025 = vpack.c.b16 %v1807, %v1806
      %v2026 = vpack.c.b16 %v1809, %v1808
      %v2027 = vpack.c.b16 %v1811, %v1810
      %v2028 = vpack.c.b16 %v1813, %v1812
      %v2029 = vpack.c.b16 %v1815, %v1814
      %v2030 = vpack.c.b16 %v1817, %v1816
      %v2031 = vpack.c.b16 %v1819, %v1818
      %v2032 = vpack.c.b16 %v1821, %v1820
      %v2033 = vpack.c.b16 %v1823, %v1822
      %v2034 = vpack.c.b16 %v1825, %v1824
      %v2035 = vpack.c.b16 %v1827, %v1826
      %v2036 = vpack.c.b16 %v1829, %v1828
      %v2037 = vpack.c.b16 %v1831, %v1830
      %v2038 = vpack.c.b16 %v1833, %v1832
      %v2039 = vpack.c.b16 %v1835, %v1834
      %v2040 = vpack.c.b16 %v1837, %v1836
      %v2041 = vpack.c.b16 %v1839, %v1838
      %v2042 = vpack.c.b16 %v1841, %v1840
      %v2043 = vpack.c.b16 %v1843, %v1842
      %v2044 = vpack.c.b16 %v1845, %v1844
      %v2045 = vpack.c.b16 %v1847, %v1846
      %v2046 = vpack.c.b16 %v1849, %v1848
      %v2047 = vpack.c.b16 %v1851, %v1850
      %v2048 = vpack.c.b16 %v1853, %v1852
      %v2049 = vpack.c.b16 %v1855, %v1854
      %v2050 = vpack.c.b16 %v1857, %v1856
      %v2051 = vpack.c.b16 %v1859, %v1858
      %v2052 = vpack.c.b16 %v1861, %v1860
      %v2053 = vpack.c.b16 %v1863, %v1862
      %v2054 = vpack.c.b16 %v1865, %v1864
      %v2055 = vpack.c.b16 %v1867, %v1866
      %v2056 = vpack.c.b16 %v1869, %v1868
      %v2057 = vpack.c.b16 %v1871, %v1870
      %v2058 = vpack.c.b16 %v1873, %v1872
      %v2059 = vpack.c.b16 %v1875, %v1874
      %v2060 = vpack.c.b16 %v1877, %v1876
      %v2061 = vpack.c.b16 %v1879, %v1878
      %v2062 = vpack.c.b16 %v1881, %v1880
      %v2063 = vpack.c.b16 %v1883, %v1882
      %v2064 = vpack.c.b16 %v1885, %v1884
      %v2065 = vpack.c.b16 %v1887, %v1886
      %v2066 = vpack.c.b16 %v1889, %v1888
      %v2067 = vpack.c.b16 %v1891, %v1890
      %v2068 = vpack.c.b16 %v1893, %v1892
      %v2069 = vpack.c.b16 %v1895, %v1894
      %v2070 = vpack.c.b16 %v1897, %v1896
      %v2071 = vpack.c.b16 %v1899, %v1898
      %v2072 = vpack.c.b16 %v1901, %v1900
      %v2073 = vpack.c.b16 %v1903, %v1902
      %v2074 = vpack.c.b16 %v1905, %v1904
      %v2075 = vpack.c.b16 %v1907, %v1906
      %v2076 = vpack.c.b16 %v1909, %v1908
      %v2077 = vpack.c.b16 %v1911, %v1910
      %v2078 = vpack.c.b16 %v1913, %v1912
      %v2079 = vpack.c.b16 %v1915, %v1914
      %v2080 = vpack.c.b16 %v1917, %v1916
      %v2081 = vpack.c.b16 %v1919, %v1918
      %v2082 = vpack.c.b16 %v1921, %v1920
      %v2083 = vpack.c.b16 %v1923, %v1922
      %v2084 = vpack.c.b16 %v1925, %v1924
      %v2085 = vpack.c.b16 %v1927, %v1926
      %v2086 = vpack.c.b16 %v1929, %v1928
      %v2087 = vpack.c.b16 %v1931, %v1930
      %v2088 = vpack.c.b16 %v1933, %v1932
      %v2089 = vpack.c.b16 %v1935, %v1934
      %v2090 = vpack.c.b16 %v1937, %v1936
      %v2091 = vpack.c.b16 %v1939, %v1938
      %v2092 = vpack.c.b16 %v1941, %v1940
      %v2093 = vpack.c.b16 %v1943, %v1942
      %v2094 = vpack.c.b16 %v1945, %v1944
      %v2095 = vpack.c.b16 %v1947, %v1946
      %v2096 = vpack.c.b16 %v1949, %v1948
      %v2097 = vpack.c.b16 %v1951, %v1950
      %v2098 = vpack.c.b16 %v1953, %v1952
      %v2099 = vpack.c.b16 %v1955, %v1954
      %v2100 = vpack.c.b16 %v1957, %v1956
      %v2101 = vpack.c.b16 %v1959, %v1958
      %v2102 = vpack.c.b16 %v1961, %v1960
      %v2103 = vpack.c.b16 %v1963, %v1962
      %v2104 = vpack.c.b16 %v1965, %v1964
      %v2105 = vpack.c.b16 %v1967, %v1966
      %v2106 = vpack.c.b16 %v1969, %v1968
      %v2107 = vpack.c.b16 %v1971, %v1970
      %v2108 = vpack.c.b16 %v1973, %v1972
      %v2109 = vpack.c.b16 %v1975, %v1974
      %v2110 = vpack.c.b16 %v1977, %v1976
      %v2111 = vpack.c.b16 %v1979, %v1978
      %v2112 = vpack.c.b16 %v1981, %v1980
      %v2113 = vpack.c.b16 %v1983, %v1982
      %v2114 = vpack.c.b16 %v1985, %v1984
      %v2115 = vpack.c.b16 %v1987, %v1986
      %2244 = vst [vmem:[%s147] sm:$0xff] %v1988
      %2245 = vst [vmem:[%s147 + $0x8] sm:$0xff] %v1989
      %2246 = vst [vmem:[%s147 + $0x10] sm:$0xff] %v1990
      %2247 = vst [vmem:[%s147 + $0x18] sm:$0xff] %v1991
      %2248 = vst [vmem:[%s147 + $0x20] sm:$0xff] %v1992
      %2249 = vst [vmem:[%s147 + $0x28] sm:$0xff] %v1993
      %2250 = vst [vmem:[%s147 + $0x30] sm:$0xff] %v1994
      %2251 = vst [vmem:[%s147 + $0x38] sm:$0xff] %v1995
      %2252 = vst [vmem:[%s147 + $0x40] sm:$0xff] %v1996
      %2253 = vst [vmem:[%s147 + $0x48] sm:$0xff] %v1997
      %2254 = vst [vmem:[%s147 + $0x50] sm:$0xff] %v1998
      %2255 = vst [vmem:[%s147 + $0x58] sm:$0xff] %v1999
      %2256 = vst [vmem:[%s147 + $0x60] sm:$0xff] %v2000
      %2257 = vst [vmem:[%s147 + $0x68] sm:$0xff] %v2001
      %2258 = vst [vmem:[%s147 + $0x70] sm:$0xff] %v2002
      %2259 = vst [vmem:[%s147 + $0x78] sm:$0xff] %v2003
      %2260 = vst [vmem:[%s147 + $0x80] sm:$0xff] %v2004
      %2261 = vst [vmem:[%s147 + $0x88] sm:$0xff] %v2005
      %2262 = vst [vmem:[%s147 + $0x90] sm:$0xff] %v2006
      %2263 = vst [vmem:[%s147 + $0x98] sm:$0xff] %v2007
      %2264 = vst [vmem:[%s147 + $0xa0] sm:$0xff] %v2008
      %2265 = vst [vmem:[%s147 + $0xa8] sm:$0xff] %v2009
      %2266 = vst [vmem:[%s147 + $0xb0] sm:$0xff] %v2010
      %2267 = vst [vmem:[%s147 + $0xb8] sm:$0xff] %v2011
      %2268 = vst [vmem:[%s147 + $0xc0] sm:$0xff] %v2012
      %2269 = vst [vmem:[%s147 + $0xc8] sm:$0xff] %v2013
      %2270 = vst [vmem:[%s147 + $0xd0] sm:$0xff] %v2014
      %2271 = vst [vmem:[%s147 + $0xd8] sm:$0xff] %v2015
      %2272 = vst [vmem:[%s147 + $0xe0] sm:$0xff] %v2016
      %2273 = vst [vmem:[%s147 + $0xe8] sm:$0xff] %v2017
      %2274 = vst [vmem:[%s147 + $0xf0] sm:$0xff] %v2018
      %2275 = vst [vmem:[%s147 + $0xf8] sm:$0xff] %v2019
      %2276 = vst [vmem:[%s147 + $0x100] sm:$0xff] %v2020
      %2277 = vst [vmem:[%s147 + $0x108] sm:$0xff] %v2021
      %2278 = vst [vmem:[%s147 + $0x110] sm:$0xff] %v2022
      %2279 = vst [vmem:[%s147 + $0x118] sm:$0xff] %v2023
      %2280 = vst [vmem:[%s147 + $0x120] sm:$0xff] %v2024
      %2281 = vst [vmem:[%s147 + $0x128] sm:$0xff] %v2025
      %2282 = vst [vmem:[%s147 + $0x130] sm:$0xff] %v2026
      %2283 = vst [vmem:[%s147 + $0x138] sm:$0xff] %v2027
      %2284 = vst [vmem:[%s147 + $0x140] sm:$0xff] %v2028
      %2285 = vst [vmem:[%s147 + $0x148] sm:$0xff] %v2029
      %2286 = vst [vmem:[%s147 + $0x150] sm:$0xff] %v2030
      %2287 = vst [vmem:[%s147 + $0x158] sm:$0xff] %v2031
      %2288 = vst [vmem:[%s147 + $0x160] sm:$0xff] %v2032
      %2289 = vst [vmem:[%s147 + $0x168] sm:$0xff] %v2033
      %2290 = vst [vmem:[%s147 + $0x170] sm:$0xff] %v2034
      %2291 = vst [vmem:[%s147 + $0x178] sm:$0xff] %v2035
      %2292 = vst [vmem:[%s147 + $0x180] sm:$0xff] %v2036
      %2293 = vst [vmem:[%s147 + $0x188] sm:$0xff] %v2037
      %2294 = vst [vmem:[%s147 + $0x190] sm:$0xff] %v2038
      %2295 = vst [vmem:[%s147 + $0x198] sm:$0xff] %v2039
      %2296 = vst [vmem:[%s147 + $0x1a0] sm:$0xff] %v2040
      %2297 = vst [vmem:[%s147 + $0x1a8] sm:$0xff] %v2041
      %2298 = vst [vmem:[%s147 + $0x1b0] sm:$0xff] %v2042
      %2299 = vst [vmem:[%s147 + $0x1b8] sm:$0xff] %v2043
      %2300 = vst [vmem:[%s147 + $0x1c0] sm:$0xff] %v2044
      %2301 = vst [vmem:[%s147 + $0x1c8] sm:$0xff] %v2045
      %2302 = vst [vmem:[%s147 + $0x1d0] sm:$0xff] %v2046
      %2303 = vst [vmem:[%s147 + $0x1d8] sm:$0xff] %v2047
      %2304 = vst [vmem:[%s147 + $0x1e0] sm:$0xff] %v2048
      %2305 = vst [vmem:[%s147 + $0x1e8] sm:$0xff] %v2049
      %2306 = vst [vmem:[%s147 + $0x1f0] sm:$0xff] %v2050
      %2307 = vst [vmem:[%s147 + $0x1f8] sm:$0xff] %v2051
      %2308 = vst [vmem:[%s147 + $0x200] sm:$0xff] %v2052
      %2309 = vst [vmem:[%s147 + $0x208] sm:$0xff] %v2053
      %2310 = vst [vmem:[%s147 + $0x210] sm:$0xff] %v2054
      %2311 = vst [vmem:[%s147 + $0x218] sm:$0xff] %v2055
      %2312 = vst [vmem:[%s147 + $0x220] sm:$0xff] %v2056
      %2313 = vst [vmem:[%s147 + $0x228] sm:$0xff] %v2057
      %2314 = vst [vmem:[%s147 + $0x230] sm:$0xff] %v2058
      %2315 = vst [vmem:[%s147 + $0x238] sm:$0xff] %v2059
      %2316 = vst [vmem:[%s147 + $0x240] sm:$0xff] %v2060
      %2317 = vst [vmem:[%s147 + $0x248] sm:$0xff] %v2061
      %2318 = vst [vmem:[%s147 + $0x250] sm:$0xff] %v2062
      %2319 = vst [vmem:[%s147 + $0x258] sm:$0xff] %v2063
      %2320 = vst [vmem:[%s147 + $0x260] sm:$0xff] %v2064
      %2321 = vst [vmem:[%s147 + $0x268] sm:$0xff] %v2065
      %2322 = vst [vmem:[%s147 + $0x270] sm:$0xff] %v2066
      %2323 = vst [vmem:[%s147 + $0x278] sm:$0xff] %v2067
      %2324 = vst [vmem:[%s147 + $0x280] sm:$0xff] %v2068
      %2325 = vst [vmem:[%s147 + $0x288] sm:$0xff] %v2069
      %2326 = vst [vmem:[%s147 + $0x290] sm:$0xff] %v2070
      %2327 = vst [vmem:[%s147 + $0x298] sm:$0xff] %v2071
      %2328 = vst [vmem:[%s147 + $0x2a0] sm:$0xff] %v2072
      %2329 = vst [vmem:[%s147 + $0x2a8] sm:$0xff] %v2073
      %2330 = vst [vmem:[%s147 + $0x2b0] sm:$0xff] %v2074
      %2331 = vst [vmem:[%s147 + $0x2b8] sm:$0xff] %v2075
      %2332 = vst [vmem:[%s147 + $0x2c0] sm:$0xff] %v2076
      %2333 = vst [vmem:[%s147 + $0x2c8] sm:$0xff] %v2077
      %2334 = vst [vmem:[%s147 + $0x2d0] sm:$0xff] %v2078
      %2335 = vst [vmem:[%s147 + $0x2d8] sm:$0xff] %v2079
      %2336 = vst [vmem:[%s147 + $0x2e0] sm:$0xff] %v2080
      %2337 = vst [vmem:[%s147 + $0x2e8] sm:$0xff] %v2081
      %2338 = vst [vmem:[%s147 + $0x2f0] sm:$0xff] %v2082
      %2339 = vst [vmem:[%s147 + $0x2f8] sm:$0xff] %v2083
      %2340 = vst [vmem:[%s147 + $0x300] sm:$0xff] %v2084
      %2341 = vst [vmem:[%s147 + $0x308] sm:$0xff] %v2085
      %2342 = vst [vmem:[%s147 + $0x310] sm:$0xff] %v2086
      %2343 = vst [vmem:[%s147 + $0x318] sm:$0xff] %v2087
      %2344 = vst [vmem:[%s147 + $0x320] sm:$0xff] %v2088
      %2345 = vst [vmem:[%s147 + $0x328] sm:$0xff] %v2089
      %2346 = vst [vmem:[%s147 + $0x330] sm:$0xff] %v2090
      %2347 = vst [vmem:[%s147 + $0x338] sm:$0xff] %v2091
      %2348 = vst [vmem:[%s147 + $0x340] sm:$0xff] %v2092
      %2349 = vst [vmem:[%s147 + $0x348] sm:$0xff] %v2093
      %2350 = vst [vmem:[%s147 + $0x350] sm:$0xff] %v2094
      %2351 = vst [vmem:[%s147 + $0x358] sm:$0xff] %v2095
      %2352 = vst [vmem:[%s147 + $0x360] sm:$0xff] %v2096
      %2353 = vst [vmem:[%s147 + $0x368] sm:$0xff] %v2097
      %2354 = vst [vmem:[%s147 + $0x370] sm:$0xff] %v2098
      %2355 = vst [vmem:[%s147 + $0x378] sm:$0xff] %v2099
      %2356 = vst [vmem:[%s147 + $0x380] sm:$0xff] %v2100
      %2357 = vst [vmem:[%s147 + $0x388] sm:$0xff] %v2101
      %2358 = vst [vmem:[%s147 + $0x390] sm:$0xff] %v2102
      %2359 = vst [vmem:[%s147 + $0x398] sm:$0xff] %v2103
      %2360 = vst [vmem:[%s147 + $0x3a0] sm:$0xff] %v2104
      %2361 = vst [vmem:[%s147 + $0x3a8] sm:$0xff] %v2105
      %2362 = vst [vmem:[%s147 + $0x3b0] sm:$0xff] %v2106
      %2363 = vst [vmem:[%s147 + $0x3b8] sm:$0xff] %v2107
      %2364 = vst [vmem:[%s147 + $0x3c0] sm:$0xff] %v2108
      %2365 = vst [vmem:[%s147 + $0x3c8] sm:$0xff] %v2109
      %2366 = vst [vmem:[%s147 + $0x3d0] sm:$0xff] %v2110
      %2367 = vst [vmem:[%s147 + $0x3d8] sm:$0xff] %v2111
      %2368 = vst [vmem:[%s147 + $0x3e0] sm:$0xff] %v2112
      %2369 = vst [vmem:[%s147 + $0x3e8] sm:$0xff] %v2113
      %2370 = vst [vmem:[%s147 + $0x3f0] sm:$0xff] %v2114
      %2371 = vst [vmem:[%s147 + $0x3f8] sm:$0xff] %v2115
      %s2372 = smul.u32 128, %s13
      %p2373 = scmp.lt.s32.totalorder %s2372, 255
      %s2374 = scalar_select %p2373, %s2372, 255
      %s2375 = smul.addr %s2374, 2
      %s2376 = smul.addr %s2375, 4
      %s2377 = scalar_lea.vmem %s2, %s2376
      // Predicated region
      $region29: #{netg_forward.26} parent=27 // pred_check
        %p2378 = pneg %p78
      $region30: #{netg_forward.26} parent=27 // pred_check_branch
        %2380 = sbr.rel (%p2378) target = $region32
      $region31: #{netg_forward.26} parent=27 // pred_region
        %s2381 = smul.u32 128, %s13
      $region32: #{netg_forward.26} parent=27 // pred_fallthru
        _
    $region28: #{netg_forward.26} parent=5 // pred_fallthru
      _
    %p2382 = scmp.le.s32.totalorder 2, %s8
    // Predicated region
    $region33: #{netg_forward.26} parent=5 // pred_check
      %p2383 = pneg %p2382
    $region34: #{netg_forward.26} parent=5 // pred_check_branch
      %2385 = sbr.rel (%p2383) target = $region36
    $region35: #{netg_forward.26} parent=5 // pred_region
      %s2386 = ssub.s32 %s8, 2
      // Predicated region
      $region37: #{netg_forward.26} parent=35 // pred_check
        %p2387 = pneg %p84
      $region38: #{netg_forward.26} parent=35 // pred_check_branch
        %2389 = sbr.rel (%p2387) target = $region40
      $region39: #{netg_forward.26} parent=35 // pred_region
        %s2390 = smul.u32 128, %s14
        %p2391 = scmp.lt.s32.totalorder %s2390, 255
        %s2392 = scalar_select %p2391, %s2390, 255
        %s2393 = smul.addr %s2392, 2
        %s2394 = smul.addr %s2393, 4
        %s2395 = scalar_lea.vmem %s2, %s2394
      $region40: #{netg_forward.26} parent=35 // pred_fallthru
        _
    $region36: #{netg_forward.26} parent=5 // pred_fallthru
      _
  $region6: #{netg_forward.26} parent=0 // loop_footer
    %s12 = sadd.s32 1, %s8
  $region7: #{netg_forward.26} parent=0 // loop_footer_branch
    %7 = sbr.rel target = $region3
  $region8: #{netg_forward.26} parent=0 // loop_exit
    _

// kernel: tile.42
$region0: #{tile.42}
  #allocation0 [shape = 's32[1]{0}', space=sflag, size = 0x4, scoped, tag = 'scoped memory for tile.42']
  %s0 = inlined_call_operand.<no memory space> [shape: f32[], index: 0, kind: input, shape index: {}]
  %s1 = inlined_call_operand.vmem [shape: f32[1,1024], index: 1, kind: output, shape index: {}]
  %v2 = vstv %s0
  %3 = vst [vmem:[%s1] sm:$0x1] %v2
  %s4 = scalar_lea.vmem %s1, 1
  %5 = vst [vmem:[%s4] sm:$0x1] %v2
  %s6 = scalar_lea.vmem %s1, 2
  %7 = vst [vmem:[%s6] sm:$0x1] %v2
  %s8 = scalar_lea.vmem %s1, 3
  %9 = vst [vmem:[%s8] sm:$0x1] %v2
  %s10 = scalar_lea.vmem %s1, 4
  %11 = vst [vmem:[%s10] sm:$0x1] %v2
  %s12 = scalar_lea.vmem %s1, 5
  %13 = vst [vmem:[%s12] sm:$0x1] %v2
  %s14 = scalar_lea.vmem %s1, 6
  %15 = vst [vmem:[%s14] sm:$0x1] %v2
  %s16 = scalar_lea.vmem %s1, 7
  %17 = vst [vmem:[%s16] sm:$0x1] %v2

// kernel: netg_forward.27
$region0: #{netg_forward.27}
  #allocation0 [shape = 'u32[]', space=smem, size = 0x4, offset = 0x4, fixed_abs, tag = 'smem constant byte address 0x4 - core index']
  #allocation1 [shape = 'u32[144,128]{1,0:T(1,128)}', space=vmem, size = 0x12000, scoped, tag = 'internal scratch']
  %s0 = inlined_call_operand.vmem [shape: bf16[128,1024], index: 0, kind: input, shape index: {}]
  %s1 = inlined_call_operand.vmem [shape: f32[1,1024], index: 1, kind: input, shape index: {}]
  %s2 = inlined_call_operand.vmem [shape: f32[1,1024], index: 2, kind: input, shape index: {}]
  %s3 = inlined_call_operand.vmem [shape: f32[128,1024], index: 3, kind: output, shape index: {}]
  %s4 = sld [smem:[#allocation0]]
  $region22: #{netg_forward.27} parent=0
    _
  %s6 = ssub.s32 1, %s4
  %s7 = scalar_select 0, %s6, %s4
  // Predicated region
  $region2: #{netg_forward.27} parent=0 // pred_check
    _
  $region3: #{netg_forward.27} parent=0 // pred_check_branch
    %9 = sbr.rel (0) target = $region5
  $region4: #{netg_forward.27} parent=0 // pred_region
    _
  $region5: #{netg_forward.27} parent=0 // pred_fallthru
    _
  // Predicated region
  $region6: #{netg_forward.27} parent=0 // pred_check
    _
  $region7: #{netg_forward.27} parent=0 // pred_check_branch
    %11 = sbr.rel (0) target = $region9
  $region8: #{netg_forward.27} parent=0 // pred_region
    _
  $region9: #{netg_forward.27} parent=0 // pred_fallthru
    _
  // Predicated region
  $region10: #{netg_forward.27} parent=0 // pred_check
    _
  $region11: #{netg_forward.27} parent=0 // pred_check_branch
    %13 = sbr.rel (0) target = $region13
  $region12: #{netg_forward.27} parent=0 // pred_region
    _
  $region13: #{netg_forward.27} parent=0 // pred_fallthru
    _
  %v14 = vld [vmem:[%s0] sm:$0xff]
  %v15 = vld [vmem:[%s0 + $0x8] sm:$0xff]
  %v16 = vld [vmem:[%s0 + $0x10] sm:$0xff]
  %v17 = vld [vmem:[%s0 + $0x18] sm:$0xff]
  %v18 = vld [vmem:[%s0 + $0x20] sm:$0xff]
  %v19 = vld [vmem:[%s0 + $0x28] sm:$0xff]
  %v20 = vld [vmem:[%s0 + $0x30] sm:$0xff]
  %v21 = vld [vmem:[%s0 + $0x38] sm:$0xff]
  %v22 = vld [vmem:[%s0 + $0x40] sm:$0xff]
  %v23 = vld [vmem:[%s0 + $0x48] sm:$0xff]
  %v24 = vld [vmem:[%s0 + $0x50] sm:$0xff]
  %v25 = vld [vmem:[%s0 + $0x58] sm:$0xff]
  %v26 = vld [vmem:[%s0 + $0x60] sm:$0xff]
  %v27 = vld [vmem:[%s0 + $0x68] sm:$0xff]
  %v28 = vld [vmem:[%s0 + $0x70] sm:$0xff]
  %v29 = vld [vmem:[%s0 + $0x78] sm:$0xff]
  %v30 = vld [vmem:[%s0 + $0x80] sm:$0xff]
  %v31 = vld [vmem:[%s0 + $0x88] sm:$0xff]
  %v32 = vld [vmem:[%s0 + $0x90] sm:$0xff]
  %v33 = vld [vmem:[%s0 + $0x98] sm:$0xff]
  %v34 = vld [vmem:[%s0 + $0xa0] sm:$0xff]
  %v35 = vld [vmem:[%s0 + $0xa8] sm:$0xff]
  %v36 = vld [vmem:[%s0 + $0xb0] sm:$0xff]
  %v37 = vld [vmem:[%s0 + $0xb8] sm:$0xff]
  %v38 = vld [vmem:[%s0 + $0xc0] sm:$0xff]
  %v39 = vld [vmem:[%s0 + $0xc8] sm:$0xff]
  %v40 = vld [vmem:[%s0 + $0xd0] sm:$0xff]
  %v41 = vld [vmem:[%s0 + $0xd8] sm:$0xff]
  %v42 = vld [vmem:[%s0 + $0xe0] sm:$0xff]
  %v43 = vld [vmem:[%s0 + $0xe8] sm:$0xff]
  %v44 = vld [vmem:[%s0 + $0xf0] sm:$0xff]
  %v45 = vld [vmem:[%s0 + $0xf8] sm:$0xff]
  %v46 = vld [vmem:[%s0 + $0x100] sm:$0xff]
  %v47 = vld [vmem:[%s0 + $0x108] sm:$0xff]
  %v48 = vld [vmem:[%s0 + $0x110] sm:$0xff]
  %v49 = vld [vmem:[%s0 + $0x118] sm:$0xff]
  %v50 = vld [vmem:[%s0 + $0x120] sm:$0xff]
  %v51 = vld [vmem:[%s0 + $0x128] sm:$0xff]
  %v52 = vld [vmem:[%s0 + $0x130] sm:$0xff]
  %v53 = vld [vmem:[%s0 + $0x138] sm:$0xff]
  %v54 = vld [vmem:[%s0 + $0x140] sm:$0xff]
  %v55 = vld [vmem:[%s0 + $0x148] sm:$0xff]
  %v56 = vld [vmem:[%s0 + $0x150] sm:$0xff]
  %v57 = vld [vmem:[%s0 + $0x158] sm:$0xff]
  %v58 = vld [vmem:[%s0 + $0x160] sm:$0xff]
  %v59 = vld [vmem:[%s0 + $0x168] sm:$0xff]
  %v60 = vld [vmem:[%s0 + $0x170] sm:$0xff]
  %v61 = vld [vmem:[%s0 + $0x178] sm:$0xff]
  %v62 = vld [vmem:[%s0 + $0x180] sm:$0xff]
  %v63 = vld [vmem:[%s0 + $0x188] sm:$0xff]
  %v64 = vld [vmem:[%s0 + $0x190] sm:$0xff]
  %v65 = vld [vmem:[%s0 + $0x198] sm:$0xff]
  %v66 = vld [vmem:[%s0 + $0x1a0] sm:$0xff]
  %v67 = vld [vmem:[%s0 + $0x1a8] sm:$0xff]
  %v68 = vld [vmem:[%s0 + $0x1b0] sm:$0xff]
  %v69 = vld [vmem:[%s0 + $0x1b8] sm:$0xff]
  %v70 = vld [vmem:[%s0 + $0x1c0] sm:$0xff]
  %v71 = vld [vmem:[%s0 + $0x1c8] sm:$0xff]
  %v72 = vld [vmem:[%s0 + $0x1d0] sm:$0xff]
  %v73 = vld [vmem:[%s0 + $0x1d8] sm:$0xff]
  %v74 = vld [vmem:[%s0 + $0x1e0] sm:$0xff]
  %v75 = vld [vmem:[%s0 + $0x1e8] sm:$0xff]
  %v76 = vld [vmem:[%s0 + $0x1f0] sm:$0xff]
  %v77 = vld [vmem:[%s0 + $0x1f8] sm:$0xff]
  %v78 = vunpack.c.l.bf16 %v14
  %v79 = vunpack.c.h.bf16 %v14
  %v80 = vunpack.c.l.bf16 %v15
  %v81 = vunpack.c.h.bf16 %v15
  %v82 = vunpack.c.l.bf16 %v16
  %v83 = vunpack.c.h.bf16 %v16
  %v84 = vunpack.c.l.bf16 %v17
  %v85 = vunpack.c.h.bf16 %v17
  %v86 = vunpack.c.l.bf16 %v18
  %v87 = vunpack.c.h.bf16 %v18
  %v88 = vunpack.c.l.bf16 %v19
  %v89 = vunpack.c.h.bf16 %v19
  %v90 = vunpack.c.l.bf16 %v20
  %v91 = vunpack.c.h.bf16 %v20
  %v92 = vunpack.c.l.bf16 %v21
  %v93 = vunpack.c.h.bf16 %v21
  %v94 = vunpack.c.l.bf16 %v22
  %v95 = vunpack.c.h.bf16 %v22
  %v96 = vunpack.c.l.bf16 %v23
  %v97 = vunpack.c.h.bf16 %v23
  %v98 = vunpack.c.l.bf16 %v24
  %v99 = vunpack.c.h.bf16 %v24
  %v100 = vunpack.c.l.bf16 %v25
  %v101 = vunpack.c.h.bf16 %v25
  %v102 = vunpack.c.l.bf16 %v26
  %v103 = vunpack.c.h.bf16 %v26
  %v104 = vunpack.c.l.bf16 %v27
  %v105 = vunpack.c.h.bf16 %v27
  %v106 = vunpack.c.l.bf16 %v28
  %v107 = vunpack.c.h.bf16 %v28
  %v108 = vunpack.c.l.bf16 %v29
  %v109 = vunpack.c.h.bf16 %v29
  %v110 = vunpack.c.l.bf16 %v30
  %v111 = vunpack.c.h.bf16 %v30
  %v112 = vunpack.c.l.bf16 %v31
  %v113 = vunpack.c.h.bf16 %v31
  %v114 = vunpack.c.l.bf16 %v32
  %v115 = vunpack.c.h.bf16 %v32
  %v116 = vunpack.c.l.bf16 %v33
  %v117 = vunpack.c.h.bf16 %v33
  %v118 = vunpack.c.l.bf16 %v34
  %v119 = vunpack.c.h.bf16 %v34
  %v120 = vunpack.c.l.bf16 %v35
  %v121 = vunpack.c.h.bf16 %v35
  %v122 = vunpack.c.l.bf16 %v36
  %v123 = vunpack.c.h.bf16 %v36
  %v124 = vunpack.c.l.bf16 %v37
  %v125 = vunpack.c.h.bf16 %v37
  %v126 = vunpack.c.l.bf16 %v38
  %v127 = vunpack.c.h.bf16 %v38
  %v128 = vunpack.c.l.bf16 %v39
  %v129 = vunpack.c.h.bf16 %v39
  %v130 = vunpack.c.l.bf16 %v40
  %v131 = vunpack.c.h.bf16 %v40
  %v132 = vunpack.c.l.bf16 %v41
  %v133 = vunpack.c.h.bf16 %v41
  %v134 = vunpack.c.l.bf16 %v42
  %v135 = vunpack.c.h.bf16 %v42
  %v136 = vunpack.c.l.bf16 %v43
  %v137 = vunpack.c.h.bf16 %v43
  %v138 = vunpack.c.l.bf16 %v44
  %v139 = vunpack.c.h.bf16 %v44
  %v140 = vunpack.c.l.bf16 %v45
  %v141 = vunpack.c.h.bf16 %v45
  %v142 = vunpack.c.l.bf16 %v46
  %v143 = vunpack.c.h.bf16 %v46
  %v144 = vunpack.c.l.bf16 %v47
  %v145 = vunpack.c.h.bf16 %v47
  %v146 = vunpack.c.l.bf16 %v48
  %v147 = vunpack.c.h.bf16 %v48
  %v148 = vunpack.c.l.bf16 %v49
  %v149 = vunpack.c.h.bf16 %v49
  %v150 = vunpack.c.l.bf16 %v50
  %v151 = vunpack.c.h.bf16 %v50
  %v152 = vunpack.c.l.bf16 %v51
  %v153 = vunpack.c.h.bf16 %v51
  %v154 = vunpack.c.l.bf16 %v52
  %v155 = vunpack.c.h.bf16 %v52
  %v156 = vunpack.c.l.bf16 %v53
  %v157 = vunpack.c.h.bf16 %v53
  %v158 = vunpack.c.l.bf16 %v54
  %v159 = vunpack.c.h.bf16 %v54
  %v160 = vunpack.c.l.bf16 %v55
  %v161 = vunpack.c.h.bf16 %v55
  %v162 = vunpack.c.l.bf16 %v56
  %v163 = vunpack.c.h.bf16 %v56
  %v164 = vunpack.c.l.bf16 %v57
  %v165 = vunpack.c.h.bf16 %v57
  %v166 = vunpack.c.l.bf16 %v58
  %v167 = vunpack.c.h.bf16 %v58
  %v168 = vunpack.c.l.bf16 %v59
  %v169 = vunpack.c.h.bf16 %v59
  %v170 = vunpack.c.l.bf16 %v60
  %v171 = vunpack.c.h.bf16 %v60
  %v172 = vunpack.c.l.bf16 %v61
  %v173 = vunpack.c.h.bf16 %v61
  %v174 = vunpack.c.l.bf16 %v62
  %v175 = vunpack.c.h.bf16 %v62
  %v176 = vunpack.c.l.bf16 %v63
  %v177 = vunpack.c.h.bf16 %v63
  %v178 = vunpack.c.l.bf16 %v64
  %v179 = vunpack.c.h.bf16 %v64
  %v180 = vunpack.c.l.bf16 %v65
  %v181 = vunpack.c.h.bf16 %v65
  %v182 = vunpack.c.l.bf16 %v66
  %v183 = vunpack.c.h.bf16 %v66
  %v184 = vunpack.c.l.bf16 %v67
  %v185 = vunpack.c.h.bf16 %v67
  %v186 = vunpack.c.l.bf16 %v68
  %v187 = vunpack.c.h.bf16 %v68
  %v188 = vunpack.c.l.bf16 %v69
  %v189 = vunpack.c.h.bf16 %v69
  %v190 = vunpack.c.l.bf16 %v70
  %v191 = vunpack.c.h.bf16 %v70
  %v192 = vunpack.c.l.bf16 %v71
  %v193 = vunpack.c.h.bf16 %v71
  %v194 = vunpack.c.l.bf16 %v72
  %v195 = vunpack.c.h.bf16 %v72
  %v196 = vunpack.c.l.bf16 %v73
  %v197 = vunpack.c.h.bf16 %v73
  %v198 = vunpack.c.l.bf16 %v74
  %v199 = vunpack.c.h.bf16 %v74
  %v200 = vunpack.c.l.bf16 %v75
  %v201 = vunpack.c.h.bf16 %v75
  %v202 = vunpack.c.l.bf16 %v76
  %v203 = vunpack.c.h.bf16 %v76
  %v204 = vunpack.c.l.bf16 %v77
  %v205 = vunpack.c.h.bf16 %v77
  %v206 = vld [vmem:[%s1] sm:$0xff]
  %v208 = vlaneseq
  %v209 = vshrl.u32 %v208, 7
  %v210 = vsub.s32 0, %v209
  %v211 = vrot.slane %v206, %v210
  %v212 = vlaneseq
  %v213 = vshrl.u32 %v212, 7
  %v214 = vsub.s32 1, %v213
  %v215 = vrot.slane %v206, %v214
  %v216 = vlaneseq
  %v217 = vshrl.u32 %v216, 7
  %v218 = vsub.s32 2, %v217
  %v219 = vrot.slane %v206, %v218
  %v220 = vlaneseq
  %v221 = vshrl.u32 %v220, 7
  %v222 = vsub.s32 3, %v221
  %v223 = vrot.slane %v206, %v222
  %v224 = vlaneseq
  %v225 = vshrl.u32 %v224, 7
  %v226 = vsub.s32 4, %v225
  %v227 = vrot.slane %v206, %v226
  %v228 = vlaneseq
  %v229 = vshrl.u32 %v228, 7
  %v230 = vsub.s32 5, %v229
  %v231 = vrot.slane %v206, %v230
  %v232 = vlaneseq
  %v233 = vshrl.u32 %v232, 7
  %v234 = vsub.s32 6, %v233
  %v235 = vrot.slane %v206, %v234
  %v236 = vlaneseq
  %v237 = vshrl.u32 %v236, 7
  %v238 = vsub.s32 7, %v237
  %v239 = vrot.slane %v206, %v238
  %v248 = vmul.f32 %v78, %v211
  %v249 = vmul.f32 %v79, %v215
  %v250 = vmul.f32 %v80, %v219
  %v251 = vmul.f32 %v81, %v223
  %v252 = vmul.f32 %v82, %v227
  %v253 = vmul.f32 %v83, %v231
  %v254 = vmul.f32 %v84, %v235
  %v255 = vmul.f32 %v85, %v239
  %v256 = vmul.f32 %v86, %v211
  %v257 = vmul.f32 %v87, %v215
  %v258 = vmul.f32 %v88, %v219
  %v259 = vmul.f32 %v89, %v223
  %v260 = vmul.f32 %v90, %v227
  %v261 = vmul.f32 %v91, %v231
  %v262 = vmul.f32 %v92, %v235
  %v263 = vmul.f32 %v93, %v239
  %v264 = vmul.f32 %v94, %v211
  %v265 = vmul.f32 %v95, %v215
  %v266 = vmul.f32 %v96, %v219
  %v267 = vmul.f32 %v97, %v223
  %v268 = vmul.f32 %v98, %v227
  %v269 = vmul.f32 %v99, %v231
  %v270 = vmul.f32 %v100, %v235
  %v271 = vmul.f32 %v101, %v239
  %v272 = vmul.f32 %v102, %v211
  %v273 = vmul.f32 %v103, %v215
  %v274 = vmul.f32 %v104, %v219
  %v275 = vmul.f32 %v105, %v223
  %v276 = vmul.f32 %v106, %v227
  %v277 = vmul.f32 %v107, %v231
  %v278 = vmul.f32 %v108, %v235
  %v279 = vmul.f32 %v109, %v239
  %v280 = vmul.f32 %v110, %v211
  %v281 = vmul.f32 %v111, %v215
  %v282 = vmul.f32 %v112, %v219
  %v283 = vmul.f32 %v113, %v223
  %v284 = vmul.f32 %v114, %v227
  %v285 = vmul.f32 %v115, %v231
  %v286 = vmul.f32 %v116, %v235
  %v287 = vmul.f32 %v117, %v239
  %v288 = vmul.f32 %v118, %v211
  %v289 = vmul.f32 %v119, %v215
  %v290 = vmul.f32 %v120, %v219
  %v291 = vmul.f32 %v121, %v223
  %v292 = vmul.f32 %v122, %v227
  %v293 = vmul.f32 %v123, %v231
  %v294 = vmul.f32 %v124, %v235
  %v295 = vmul.f32 %v125, %v239
  %v296 = vmul.f32 %v126, %v211
  %v297 = vmul.f32 %v127, %v215
  %v298 = vmul.f32 %v128, %v219
  %v299 = vmul.f32 %v129, %v223
  %v300 = vmul.f32 %v130, %v227
  %v301 = vmul.f32 %v131, %v231
  %v302 = vmul.f32 %v132, %v235
  %v303 = vmul.f32 %v133, %v239
  %v304 = vmul.f32 %v134, %v211
  %v305 = vmul.f32 %v135, %v215
  %v306 = vmul.f32 %v136, %v219
  %v307 = vmul.f32 %v137, %v223
  %v308 = vmul.f32 %v138, %v227
  %v309 = vmul.f32 %v139, %v231
  %v310 = vmul.f32 %v140, %v235
  %v311 = vmul.f32 %v141, %v239
  %v312 = vmul.f32 %v142, %v211
  %v313 = vmul.f32 %v143, %v215
  %v314 = vmul.f32 %v144, %v219
  %v315 = vmul.f32 %v145, %v223
  %v316 = vmul.f32 %v146, %v227
  %v317 = vmul.f32 %v147, %v231
  %v318 = vmul.f32 %v148, %v235
  %v319 = vmul.f32 %v149, %v239
  %v320 = vmul.f32 %v150, %v211
  %v321 = vmul.f32 %v151, %v215
  %v322 = vmul.f32 %v152, %v219
  %v323 = vmul.f32 %v153, %v223
  %v324 = vmul.f32 %v154, %v227
  %v325 = vmul.f32 %v155, %v231
  %v326 = vmul.f32 %v156, %v235
  %v327 = vmul.f32 %v157, %v239
  %v328 = vmul.f32 %v158, %v211
  %v329 = vmul.f32 %v159, %v215
  %v330 = vmul.f32 %v160, %v219
  %v331 = vmul.f32 %v161, %v223
  %v332 = vmul.f32 %v162, %v227
  %v333 = vmul.f32 %v163, %v231
  %v334 = vmul.f32 %v164, %v235
  %v335 = vmul.f32 %v165, %v239
  %v336 = vmul.f32 %v166, %v211
  %v337 = vmul.f32 %v167, %v215
  %v338 = vmul.f32 %v168, %v219
  %v339 = vmul.f32 %v169, %v223
  %v340 = vmul.f32 %v170, %v227
  %v341 = vmul.f32 %v171, %v231
  %v342 = vmul.f32 %v172, %v235
  %v343 = vmul.f32 %v173, %v239
  %v344 = vmul.f32 %v174, %v211
  %v345 = vmul.f32 %v175, %v215
  %v346 = vmul.f32 %v176, %v219
  %v347 = vmul.f32 %v177, %v223
  %v348 = vmul.f32 %v178, %v227
  %v349 = vmul.f32 %v179, %v231
  %v350 = vmul.f32 %v180, %v235
  %v351 = vmul.f32 %v181, %v239
  %v352 = vmul.f32 %v182, %v211
  %v353 = vmul.f32 %v183, %v215
  %v354 = vmul.f32 %v184, %v219
  %v355 = vmul.f32 %v185, %v223
  %v356 = vmul.f32 %v186, %v227
  %v357 = vmul.f32 %v187, %v231
  %v358 = vmul.f32 %v188, %v235
  %v359 = vmul.f32 %v189, %v239
  %v360 = vmul.f32 %v190, %v211
  %v361 = vmul.f32 %v191, %v215
  %v362 = vmul.f32 %v192, %v219
  %v363 = vmul.f32 %v193, %v223
  %v364 = vmul.f32 %v194, %v227
  %v365 = vmul.f32 %v195, %v231
  %v366 = vmul.f32 %v196, %v235
  %v367 = vmul.f32 %v197, %v239
  %v368 = vmul.f32 %v198, %v211
  %v369 = vmul.f32 %v199, %v215
  %v370 = vmul.f32 %v200, %v219
  %v371 = vmul.f32 %v201, %v223
  %v372 = vmul.f32 %v202, %v227
  %v373 = vmul.f32 %v203, %v231
  %v374 = vmul.f32 %v204, %v235
  %v375 = vmul.f32 %v205, %v239
  %v376 = vld [vmem:[%s2] sm:$0xff]
  %v378 = vlaneseq
  %v379 = vshrl.u32 %v378, 7
  %v380 = vsub.s32 0, %v379
  %v381 = vrot.slane %v376, %v380
  %v382 = vlaneseq
  %v383 = vshrl.u32 %v382, 7
  %v384 = vsub.s32 1, %v383
  %v385 = vrot.slane %v376, %v384
  %v386 = vlaneseq
  %v387 = vshrl.u32 %v386, 7
  %v388 = vsub.s32 2, %v387
  %v389 = vrot.slane %v376, %v388
  %v390 = vlaneseq
  %v391 = vshrl.u32 %v390, 7
  %v392 = vsub.s32 3, %v391
  %v393 = vrot.slane %v376, %v392
  %v394 = vlaneseq
  %v395 = vshrl.u32 %v394, 7
  %v396 = vsub.s32 4, %v395
  %v397 = vrot.slane %v376, %v396
  %v398 = vlaneseq
  %v399 = vshrl.u32 %v398, 7
  %v400 = vsub.s32 5, %v399
  %v401 = vrot.slane %v376, %v400
  %v402 = vlaneseq
  %v403 = vshrl.u32 %v402, 7
  %v404 = vsub.s32 6, %v403
  %v405 = vrot.slane %v376, %v404
  %v406 = vlaneseq
  %v407 = vshrl.u32 %v406, 7
  %v408 = vsub.s32 7, %v407
  %v409 = vrot.slane %v376, %v408
  %v418 = vadd.f32 %v248, %v381
  %v419 = vadd.f32 %v249, %v385
  %v420 = vadd.f32 %v250, %v389
  %v421 = vadd.f32 %v251, %v393
  %v422 = vadd.f32 %v252, %v397
  %v423 = vadd.f32 %v253, %v401
  %v424 = vadd.f32 %v254, %v405
  %v425 = vadd.f32 %v255, %v409
  %v426 = vadd.f32 %v256, %v381
  %v427 = vadd.f32 %v257, %v385
  %v428 = vadd.f32 %v258, %v389
  %v429 = vadd.f32 %v259, %v393
  %v430 = vadd.f32 %v260, %v397
  %v431 = vadd.f32 %v261, %v401
  %v432 = vadd.f32 %v262, %v405
  %v433 = vadd.f32 %v263, %v409
  %v434 = vadd.f32 %v264, %v381
  %v435 = vadd.f32 %v265, %v385
  %v436 = vadd.f32 %v266, %v389
  %v437 = vadd.f32 %v267, %v393
  %v438 = vadd.f32 %v268, %v397
  %v439 = vadd.f32 %v269, %v401
  %v440 = vadd.f32 %v270, %v405
  %v441 = vadd.f32 %v271, %v409
  %v442 = vadd.f32 %v272, %v381
  %v443 = vadd.f32 %v273, %v385
  %v444 = vadd.f32 %v274, %v389
  %v445 = vadd.f32 %v275, %v393
  %v446 = vadd.f32 %v276, %v397
  %v447 = vadd.f32 %v277, %v401
  %v448 = vadd.f32 %v278, %v405
  %v449 = vadd.f32 %v279, %v409
  %v450 = vadd.f32 %v280, %v381
  %v451 = vadd.f32 %v281, %v385
  %v452 = vadd.f32 %v282, %v389
  %v453 = vadd.f32 %v283, %v393
  %v454 = vadd.f32 %v284, %v397
  %v455 = vadd.f32 %v285, %v401
  %v456 = vadd.f32 %v286, %v405
  %v457 = vadd.f32 %v287, %v409
  %v458 = vadd.f32 %v288, %v381
  %v459 = vadd.f32 %v289, %v385
  %v460 = vadd.f32 %v290, %v389
  %v461 = vadd.f32 %v291, %v393
  %v462 = vadd.f32 %v292, %v397
  %v463 = vadd.f32 %v293, %v401
  %v464 = vadd.f32 %v294, %v405
  %v465 = vadd.f32 %v295, %v409
  %v466 = vadd.f32 %v296, %v381
  %v467 = vadd.f32 %v297, %v385
  %v468 = vadd.f32 %v298, %v389
  %v469 = vadd.f32 %v299, %v393
  %v470 = vadd.f32 %v300, %v397
  %v471 = vadd.f32 %v301, %v401
  %v472 = vadd.f32 %v302, %v405
  %v473 = vadd.f32 %v303, %v409
  %v474 = vadd.f32 %v304, %v381
  %v475 = vadd.f32 %v305, %v385
  %v476 = vadd.f32 %v306, %v389
  %v477 = vadd.f32 %v307, %v393
  %v478 = vadd.f32 %v308, %v397
  %v479 = vadd.f32 %v309, %v401
  %v480 = vadd.f32 %v310, %v405
  %v481 = vadd.f32 %v311, %v409
  %v482 = vadd.f32 %v312, %v381
  %v483 = vadd.f32 %v313, %v385
  %v484 = vadd.f32 %v314, %v389
  %v485 = vadd.f32 %v315, %v393
  %v486 = vadd.f32 %v316, %v397
  %v487 = vadd.f32 %v317, %v401
  %v488 = vadd.f32 %v318, %v405
  %v489 = vadd.f32 %v319, %v409
  %v490 = vadd.f32 %v320, %v381
  %v491 = vadd.f32 %v321, %v385
  %v492 = vadd.f32 %v322, %v389
  %v493 = vadd.f32 %v323, %v393
  %v494 = vadd.f32 %v324, %v397
  %v495 = vadd.f32 %v325, %v401
  %v496 = vadd.f32 %v326, %v405
  %v497 = vadd.f32 %v327, %v409
  %v498 = vadd.f32 %v328, %v381
  %v499 = vadd.f32 %v329, %v385
  %v500 = vadd.f32 %v330, %v389
  %v501 = vadd.f32 %v331, %v393
  %v502 = vadd.f32 %v332, %v397
  %v503 = vadd.f32 %v333, %v401
  %v504 = vadd.f32 %v334, %v405
  %v505 = vadd.f32 %v335, %v409
  %v506 = vadd.f32 %v336, %v381
  %v507 = vadd.f32 %v337, %v385
  %v508 = vadd.f32 %v338, %v389
  %v509 = vadd.f32 %v339, %v393
  %v510 = vadd.f32 %v340, %v397
  %v511 = vadd.f32 %v341, %v401
  %v512 = vadd.f32 %v342, %v405
  %v513 = vadd.f32 %v343, %v409
  %v514 = vadd.f32 %v344, %v381
  %v515 = vadd.f32 %v345, %v385
  %v516 = vadd.f32 %v346, %v389
  %v517 = vadd.f32 %v347, %v393
  %v518 = vadd.f32 %v348, %v397
  %v519 = vadd.f32 %v349, %v401
  %v520 = vadd.f32 %v350, %v405
  %v521 = vadd.f32 %v351, %v409
  %v522 = vadd.f32 %v352, %v381
  %v523 = vadd.f32 %v353, %v385
  %v524 = vadd.f32 %v354, %v389
  %v525 = vadd.f32 %v355, %v393
  %v526 = vadd.f32 %v356, %v397
  %v527 = vadd.f32 %v357, %v401
  %v528 = vadd.f32 %v358, %v405
  %v529 = vadd.f32 %v359, %v409
  %v530 = vadd.f32 %v360, %v381
  %v531 = vadd.f32 %v361, %v385
  %v532 = vadd.f32 %v362, %v389
  %v533 = vadd.f32 %v363, %v393
  %v534 = vadd.f32 %v364, %v397
  %v535 = vadd.f32 %v365, %v401
  %v536 = vadd.f32 %v366, %v405
  %v537 = vadd.f32 %v367, %v409
  %v538 = vadd.f32 %v368, %v381
  %v539 = vadd.f32 %v369, %v385
  %v540 = vadd.f32 %v370, %v389
  %v541 = vadd.f32 %v371, %v393
  %v542 = vadd.f32 %v372, %v397
  %v543 = vadd.f32 %v373, %v401
  %v544 = vadd.f32 %v374, %v405
  %v545 = vadd.f32 %v375, %v409
  %v546 = vtanh.pop %v418
  %v547 = vtanh.pop %v419
  %v548 = vtanh.pop %v420
  %v549 = vtanh.pop %v421
  %v550 = vtanh.pop %v422
  %v551 = vtanh.pop %v423
  %v552 = vtanh.pop %v424
  %v553 = vtanh.pop %v425
  %v554 = vtanh.pop %v426
  %v555 = vtanh.pop %v427
  %v556 = vtanh.pop %v428
  %v557 = vtanh.pop %v429
  %v558 = vtanh.pop %v430
  %v559 = vtanh.pop %v431
  %v560 = vtanh.pop %v432
  %v561 = vtanh.pop %v433
  %v562 = vtanh.pop %v434
  %v563 = vtanh.pop %v435
  %v564 = vtanh.pop %v436
  %v565 = vtanh.pop %v437
  %v566 = vtanh.pop %v438
  %v567 = vtanh.pop %v439
  %v568 = vtanh.pop %v440
  %v569 = vtanh.pop %v441
  %v570 = vtanh.pop %v442
  %v571 = vtanh.pop %v443
  %v572 = vtanh.pop %v444
  %v573 = vtanh.pop %v445
  %v574 = vtanh.pop %v446
  %v575 = vtanh.pop %v447
  %v576 = vtanh.pop %v448
  %v577 = vtanh.pop %v449
  %v578 = vtanh.pop %v450
  %v579 = vtanh.pop %v451
  %v580 = vtanh.pop %v452
  %v581 = vtanh.pop %v453
  %v582 = vtanh.pop %v454
  %v583 = vtanh.pop %v455
  %v584 = vtanh.pop %v456
  %v585 = vtanh.pop %v457
  %v586 = vtanh.pop %v458
  %v587 = vtanh.pop %v459
  %v588 = vtanh.pop %v460
  %v589 = vtanh.pop %v461
  %v590 = vtanh.pop %v462
  %v591 = vtanh.pop %v463
  %v592 = vtanh.pop %v464
  %v593 = vtanh.pop %v465
  %v594 = vtanh.pop %v466
  %v595 = vtanh.pop %v467
  %v596 = vtanh.pop %v468
  %v597 = vtanh.pop %v469
  %v598 = vtanh.pop %v470
  %v599 = vtanh.pop %v471
  %v600 = vtanh.pop %v472
  %v601 = vtanh.pop %v473
  %v602 = vtanh.pop %v474
  %v603 = vtanh.pop %v475
  %v604 = vtanh.pop %v476
  %v605 = vtanh.pop %v477
  %v606 = vtanh.pop %v478
  %v607 = vtanh.pop %v479
  %v608 = vtanh.pop %v480
  %v609 = vtanh.pop %v481
  %v610 = vtanh.pop %v482
  %v611 = vtanh.pop %v483
  %v612 = vtanh.pop %v484
  %v613 = vtanh.pop %v485
  %v614 = vtanh.pop %v486
  %v615 = vtanh.pop %v487
  %v616 = vtanh.pop %v488
  %v617 = vtanh.pop %v489
  %v618 = vtanh.pop %v490
  %v619 = vtanh.pop %v491
  %v620 = vtanh.pop %v492
  %v621 = vtanh.pop %v493
  %v622 = vtanh.pop %v494
  %v623 = vtanh.pop %v495
  %v624 = vtanh.pop %v496
  %v625 = vtanh.pop %v497
  %v626 = vtanh.pop %v498
  %v627 = vtanh.pop %v499
  %v628 = vtanh.pop %v500
  %v629 = vtanh.pop %v501
  %v630 = vtanh.pop %v502
  %v631 = vtanh.pop %v503
  %v632 = vtanh.pop %v504
  %v633 = vtanh.pop %v505
  %v634 = vtanh.pop %v506
  %v635 = vtanh.pop %v507
  %v636 = vtanh.pop %v508
  %v637 = vtanh.pop %v509
  %v638 = vtanh.pop %v510
  %v639 = vtanh.pop %v511
  %v640 = vtanh.pop %v512
  %v641 = vtanh.pop %v513
  %v642 = vtanh.pop %v514
  %v643 = vtanh.pop %v515
  %v644 = vtanh.pop %v516
  %v645 = vtanh.pop %v517
  %v646 = vtanh.pop %v518
  %v647 = vtanh.pop %v519
  %v648 = vtanh.pop %v520
  %v649 = vtanh.pop %v521
  %v650 = vtanh.pop %v522
  %v651 = vtanh.pop %v523
  %v652 = vtanh.pop %v524
  %v653 = vtanh.pop %v525
  %v654 = vtanh.pop %v526
  %v655 = vtanh.pop %v527
  %v656 = vtanh.pop %v528
  %v657 = vtanh.pop %v529
  %v658 = vtanh.pop %v530
  %v659 = vtanh.pop %v531
  %v660 = vtanh.pop %v532
  %v661 = vtanh.pop %v533
  %v662 = vtanh.pop %v534
  %v663 = vtanh.pop %v535
  %v664 = vtanh.pop %v536
  %v665 = vtanh.pop %v537
  %v666 = vtanh.pop %v538
  %v667 = vtanh.pop %v539
  %v668 = vtanh.pop %v540
  %v669 = vtanh.pop %v541
  %v670 = vtanh.pop %v542
  %v671 = vtanh.pop %v543
  %v672 = vtanh.pop %v544
  %v673 = vtanh.pop %v545
  %674 = vst [vmem:[%s3] sm:$0xff] %v546
  %675 = vst [vmem:[%s3 + $0x8] sm:$0xff] %v547
  %676 = vst [vmem:[%s3 + $0x10] sm:$0xff] %v548
  %677 = vst [vmem:[%s3 + $0x18] sm:$0xff] %v549
  %678 = vst [vmem:[%s3 + $0x20] sm:$0xff] %v550
  %679 = vst [vmem:[%s3 + $0x28] sm:$0xff] %v551
  %680 = vst [vmem:[%s3 + $0x30] sm:$0xff] %v552
  %681 = vst [vmem:[%s3 + $0x38] sm:$0xff] %v553
  %682 = vst [vmem:[%s3 + $0x40] sm:$0xff] %v554
  %683 = vst [vmem:[%s3 + $0x48] sm:$0xff] %v555
  %684 = vst [vmem:[%s3 + $0x50] sm:$0xff] %v556
  %685 = vst [vmem:[%s3 + $0x58] sm:$0xff] %v557
  %686 = vst [vmem:[%s3 + $0x60] sm:$0xff] %v558
  %687 = vst [vmem:[%s3 + $0x68] sm:$0xff] %v559
  %688 = vst [vmem:[%s3 + $0x70] sm:$0xff] %v560
  %689 = vst [vmem:[%s3 + $0x78] sm:$0xff] %v561
  %690 = vst [vmem:[%s3 + $0x80] sm:$0xff] %v562
  %691 = vst [vmem:[%s3 + $0x88] sm:$0xff] %v563
  %692 = vst [vmem:[%s3 + $0x90] sm:$0xff] %v564
  %693 = vst [vmem:[%s3 + $0x98] sm:$0xff] %v565
  %694 = vst [vmem:[%s3 + $0xa0] sm:$0xff] %v566
  %695 = vst [vmem:[%s3 + $0xa8] sm:$0xff] %v567
  %696 = vst [vmem:[%s3 + $0xb0] sm:$0xff] %v568
  %697 = vst [vmem:[%s3 + $0xb8] sm:$0xff] %v569
  %698 = vst [vmem:[%s3 + $0xc0] sm:$0xff] %v570
  %699 = vst [vmem:[%s3 + $0xc8] sm:$0xff] %v571
  %700 = vst [vmem:[%s3 + $0xd0] sm:$0xff] %v572
  %701 = vst [vmem:[%s3 + $0xd8] sm:$0xff] %v573
  %702 = vst [vmem:[%s3 + $0xe0] sm:$0xff] %v574
  %703 = vst [vmem:[%s3 + $0xe8] sm:$0xff] %v575
  %704 = vst [vmem:[%s3 + $0xf0] sm:$0xff] %v576
  %705 = vst [vmem:[%s3 + $0xf8] sm:$0xff] %v577
  %706 = vst [vmem:[%s3 + $0x100] sm:$0xff] %v578
  %707 = vst [vmem:[%s3 + $0x108] sm:$0xff] %v579
  %708 = vst [vmem:[%s3 + $0x110] sm:$0xff] %v580
  %709 = vst [vmem:[%s3 + $0x118] sm:$0xff] %v581
  %710 = vst [vmem:[%s3 + $0x120] sm:$0xff] %v582
  %711 = vst [vmem:[%s3 + $0x128] sm:$0xff] %v583
  %712 = vst [vmem:[%s3 + $0x130] sm:$0xff] %v584
  %713 = vst [vmem:[%s3 + $0x138] sm:$0xff] %v585
  %714 = vst [vmem:[%s3 + $0x140] sm:$0xff] %v586
  %715 = vst [vmem:[%s3 + $0x148] sm:$0xff] %v587
  %716 = vst [vmem:[%s3 + $0x150] sm:$0xff] %v588
  %717 = vst [vmem:[%s3 + $0x158] sm:$0xff] %v589
  %718 = vst [vmem:[%s3 + $0x160] sm:$0xff] %v590
  %719 = vst [vmem:[%s3 + $0x168] sm:$0xff] %v591
  %720 = vst [vmem:[%s3 + $0x170] sm:$0xff] %v592
  %721 = vst [vmem:[%s3 + $0x178] sm:$0xff] %v593
  %722 = vst [vmem:[%s3 + $0x180] sm:$0xff] %v594
  %723 = vst [vmem:[%s3 + $0x188] sm:$0xff] %v595
  %724 = vst [vmem:[%s3 + $0x190] sm:$0xff] %v596
  %725 = vst [vmem:[%s3 + $0x198] sm:$0xff] %v597
  %726 = vst [vmem:[%s3 + $0x1a0] sm:$0xff] %v598
  %727 = vst [vmem:[%s3 + $0x1a8] sm:$0xff] %v599
  %728 = vst [vmem:[%s3 + $0x1b0] sm:$0xff] %v600
  %729 = vst [vmem:[%s3 + $0x1b8] sm:$0xff] %v601
  %730 = vst [vmem:[%s3 + $0x1c0] sm:$0xff] %v602
  %731 = vst [vmem:[%s3 + $0x1c8] sm:$0xff] %v603
  %732 = vst [vmem:[%s3 + $0x1d0] sm:$0xff] %v604
  %733 = vst [vmem:[%s3 + $0x1d8] sm:$0xff] %v605
  %734 = vst [vmem:[%s3 + $0x1e0] sm:$0xff] %v606
  %735 = vst [vmem:[%s3 + $0x1e8] sm:$0xff] %v607
  %736 = vst [vmem:[%s3 + $0x1f0] sm:$0xff] %v608
  %737 = vst [vmem:[%s3 + $0x1f8] sm:$0xff] %v609
  %738 = vst [vmem:[%s3 + $0x200] sm:$0xff] %v610
  %739 = vst [vmem:[%s3 + $0x208] sm:$0xff] %v611
  %740 = vst [vmem:[%s3 + $0x210] sm:$0xff] %v612
  %741 = vst [vmem:[%s3 + $0x218] sm:$0xff] %v613
  %742 = vst [vmem:[%s3 + $0x220] sm:$0xff] %v614
  %743 = vst [vmem:[%s3 + $0x228] sm:$0xff] %v615
  %744 = vst [vmem:[%s3 + $0x230] sm:$0xff] %v616
  %745 = vst [vmem:[%s3 + $0x238] sm:$0xff] %v617
  %746 = vst [vmem:[%s3 + $0x240] sm:$0xff] %v618
  %747 = vst [vmem:[%s3 + $0x248] sm:$0xff] %v619
  %748 = vst [vmem:[%s3 + $0x250] sm:$0xff] %v620
  %749 = vst [vmem:[%s3 + $0x258] sm:$0xff] %v621
  %750 = vst [vmem:[%s3 + $0x260] sm:$0xff] %v622
  %751 = vst [vmem:[%s3 + $0x268] sm:$0xff] %v623
  %752 = vst [vmem:[%s3 + $0x270] sm:$0xff] %v624
  %753 = vst [vmem:[%s3 + $0x278] sm:$0xff] %v625
  %754 = vst [vmem:[%s3 + $0x280] sm:$0xff] %v626
  %755 = vst [vmem:[%s3 + $0x288] sm:$0xff] %v627
  %756 = vst [vmem:[%s3 + $0x290] sm:$0xff] %v628
  %757 = vst [vmem:[%s3 + $0x298] sm:$0xff] %v629
  %758 = vst [vmem:[%s3 + $0x2a0] sm:$0xff] %v630
  %759 = vst [vmem:[%s3 + $0x2a8] sm:$0xff] %v631
  %760 = vst [vmem:[%s3 + $0x2b0] sm:$0xff] %v632
  %761 = vst [vmem:[%s3 + $0x2b8] sm:$0xff] %v633
  %762 = vst [vmem:[%s3 + $0x2c0] sm:$0xff] %v634
  %763 = vst [vmem:[%s3 + $0x2c8] sm:$0xff] %v635
  %764 = vst [vmem:[%s3 + $0x2d0] sm:$0xff] %v636
  %765 = vst [vmem:[%s3 + $0x2d8] sm:$0xff] %v637
  %766 = vst [vmem:[%s3 + $0x2e0] sm:$0xff] %v638
  %767 = vst [vmem:[%s3 + $0x2e8] sm:$0xff] %v639
  %768 = vst [vmem:[%s3 + $0x2f0] sm:$0xff] %v640
  %769 = vst [vmem:[%s3 + $0x2f8] sm:$0xff] %v641
  %770 = vst [vmem:[%s3 + $0x300] sm:$0xff] %v642
  %771 = vst [vmem:[%s3 + $0x308] sm:$0xff] %v643
  %772 = vst [vmem:[%s3 + $0x310] sm:$0xff] %v644
  %773 = vst [vmem:[%s3 + $0x318] sm:$0xff] %v645
  %774 = vst [vmem:[%s3 + $0x320] sm:$0xff] %v646
  %775 = vst [vmem:[%s3 + $0x328] sm:$0xff] %v647
  %776 = vst [vmem:[%s3 + $0x330] sm:$0xff] %v648
  %777 = vst [vmem:[%s3 + $0x338] sm:$0xff] %v649
  %778 = vst [vmem:[%s3 + $0x340] sm:$0xff] %v650
  %779 = vst [vmem:[%s3 + $0x348] sm:$0xff] %v651
  %780 = vst [vmem:[%s3 + $0x350] sm:$0xff] %v652
  %781 = vst [vmem:[%s3 + $0x358] sm:$0xff] %v653
  %782 = vst [vmem:[%s3 + $0x360] sm:$0xff] %v654
  %783 = vst [vmem:[%s3 + $0x368] sm:$0xff] %v655
  %784 = vst [vmem:[%s3 + $0x370] sm:$0xff] %v656
  %785 = vst [vmem:[%s3 + $0x378] sm:$0xff] %v657
  %786 = vst [vmem:[%s3 + $0x380] sm:$0xff] %v658
  %787 = vst [vmem:[%s3 + $0x388] sm:$0xff] %v659
  %788 = vst [vmem:[%s3 + $0x390] sm:$0xff] %v660
  %789 = vst [vmem:[%s3 + $0x398] sm:$0xff] %v661
  %790 = vst [vmem:[%s3 + $0x3a0] sm:$0xff] %v662
  %791 = vst [vmem:[%s3 + $0x3a8] sm:$0xff] %v663
  %792 = vst [vmem:[%s3 + $0x3b0] sm:$0xff] %v664
  %793 = vst [vmem:[%s3 + $0x3b8] sm:$0xff] %v665
  %794 = vst [vmem:[%s3 + $0x3c0] sm:$0xff] %v666
  %795 = vst [vmem:[%s3 + $0x3c8] sm:$0xff] %v667
  %796 = vst [vmem:[%s3 + $0x3d0] sm:$0xff] %v668
  %797 = vst [vmem:[%s3 + $0x3d8] sm:$0xff] %v669
  %798 = vst [vmem:[%s3 + $0x3e0] sm:$0xff] %v670
  %799 = vst [vmem:[%s3 + $0x3e8] sm:$0xff] %v671
  %800 = vst [vmem:[%s3 + $0x3f0] sm:$0xff] %v672
  %801 = vst [vmem:[%s3 + $0x3f8] sm:$0xff] %v673
  // Predicated region
  $region14: #{netg_forward.27} parent=0 // pred_check
    _
  $region15: #{netg_forward.27} parent=0 // pred_check_branch
    %803 = sbr.rel (0) target = $region17
  $region16: #{netg_forward.27} parent=0 // pred_region
    _
  $region17: #{netg_forward.27} parent=0 // pred_fallthru
    _
  // Predicated region
  $region18: #{netg_forward.27} parent=0 // pred_check
    _
  $region19: #{netg_forward.27} parent=0 // pred_check_branch
    %805 = sbr.rel (0) target = $region21
  $region20: #{netg_forward.27} parent=0 // pred_region
    _
  $region21: #{netg_forward.27} parent=0 // pred_fallthru
    _

</llo_original>
